<compile_context>
chip_gen: v5e
topology: v5e:2x2
jax: 0.10.0
libtpu: 0.0.40
codegen_flags: <defaults>
</compile_context>

<pallas_src>
import jax
import jax.numpy as jnp
from jax import lax
from jax.experimental import pallas as pl
from jax.experimental.pallas import tpu as pltpu

SEQ_LEN = 15
FEAT_DIM = 1024
N_CLASSES = 8
BLK = 16                  # samples per grid step
M = BLK * SEQ_LEN         # 240 rows per block


def _conv_layer(x_bf16, w_ref, b_ref, mask_lo, mask_hi):
    """Conv1d(k=3, 'same') + folded-BN bias + ReLU over a [M, Cin] slab.

    x_bf16:  [M, Cin]       bf16 activations (time-major, BLK samples stacked)
    w_ref:   [Cin, 3*Cout]  bf16 VMEM ref, taps stacked along output channels
    b_ref:   [1, Cout]      f32 VMEM ref (BatchNorm folded into conv)
    mask_lo: [M, 1]         f32, 0.0 on rows where t == 0 within a sample
    mask_hi: [M, 1]         f32, 0.0 on rows where t == SEQ_LEN - 1
    """
    cout = b_ref.shape[1]
    # One wide matmul for all 3 taps, f32 accumulation on the MXU.
    y = jnp.dot(x_bf16, w_ref[...], preferred_element_type=jnp.float32)
    y_prev = y[:, :cout]              # tap k=0 : multiplies x[t-1]
    y_mid = y[:, cout:2 * cout]       # tap k=1 : multiplies x[t]
    y_next = y[:, 2 * cout:]          # tap k=2 : multiplies x[t+1]
    acc = y_mid
    # out[r] += Y0[r-1]  (invalid when t == 0)  -> shift down by 1 row + mask.
    acc = acc + mask_lo * pltpu.roll(y_prev, shift=1, axis=0)
    # out[r] += Y2[r+1]  (invalid when t == 14) -> shift up by 1 row + mask.
    acc = acc + mask_hi * pltpu.roll(y_next, shift=M - 1, axis=0)
    return jnp.maximum(acc + b_ref[...], 0.0)


def _video_emotion_kernel(x_ref,
                          w0, b0, w1, b1, w2, b2, w3, b3,
                          wc, bc, avg_ref,
                          o_ref):
    # Per-sample boundary masks for the 15-frame sequences inside the slab.
    t = lax.broadcasted_iota(jnp.int32, (M, 1), 0) % SEQ_LEN
    mask_lo = (t != 0).astype(jnp.float32)
    mask_hi = (t != SEQ_LEN - 1).astype(jnp.float32)

    x = x_ref[...]                                                   # [M,1024] bf16
    h = _conv_layer(x, w0, b0, mask_lo, mask_hi)                     # [M, 64] f32
    h = _conv_layer(h.astype(jnp.bfloat16), w1, b1, mask_lo, mask_hi)  # [M, 64]
    h = _conv_layer(h.astype(jnp.bfloat16), w2, b2, mask_lo, mask_hi)  # [M,128]
    h = _conv_layer(h.astype(jnp.bfloat16), w3, b3, mask_lo, mask_hi)  # [M,128]

    # Segmented temporal mean as a tiny matmul: [BLK, M] @ [M, 128] -> [BLK, 128].
    feat = jnp.dot(avg_ref[...], h, preferred_element_type=jnp.float32)
    logits = jnp.dot(feat, wc[...], preferred_element_type=jnp.float32) + bc[...]
    o_ref[...] = logits                                              # [BLK, 8]


def _full_spec(shape):
    nd = len(shape)
    return pl.BlockSpec(shape, lambda i, _nd=nd: (0,) * _nd)


@jax.jit
def video_emotion_forward(features, params):
    """features: [B, 1024] f32, B % 15 == 0.  Returns [B // 15, 8] f32 logits."""
    B = features.shape[0]
    assert B % SEQ_LEN == 0, "Batch size is not a multiple of sequence length."
    n = B // SEQ_LEN
    n_blocks = (n + BLK - 1) // BLK
    n_pad = n_blocks * BLK

    x = features.astype(jnp.bfloat16)            # halve HBM->VMEM DMA bytes
    if n_pad != n:
        x = jnp.pad(x, ((0, (n_pad - n) * SEQ_LEN), (0, 0)))

    (w0, b0), (w1, b1), (w2, b2), (w3, b3), (wc, bc) = params

    # Constant segmented-averaging matrix: avg[s, r] = 1/15 if r // 15 == s.
    rows = jnp.arange(BLK, dtype=jnp.int32)[:, None]
    cols = jnp.arange(M, dtype=jnp.int32)[None, :]
    avg = jnp.where(cols // SEQ_LEN == rows, 1.0 / SEQ_LEN, 0.0).astype(jnp.float32)

    in_specs = [
        pl.BlockSpec((M, FEAT_DIM), lambda i: (i, 0)),
        _full_spec(w0.shape), _full_spec(b0.shape),
        _full_spec(w1.shape), _full_spec(b1.shape),
        _full_spec(w2.shape), _full_spec(b2.shape),
        _full_spec(w3.shape), _full_spec(b3.shape),
        _full_spec(wc.shape), _full_spec(bc.shape),
        _full_spec(avg.shape),
    ]

    conv_flops = 2 * SEQ_LEN * 3 * (FEAT_DIM * 64 + 64 * 64 + 64 * 128 + 128 * 128)
    head_flops = 2 * (SEQ_LEN * 128 + 128 * N_CLASSES)
    param_bytes = sum(int(p.size) * p.dtype.itemsize
                      for pair in params for p in pair)
    cost = pl.CostEstimate(
        flops=int(n_pad * (conv_flops + head_flops)),
        transcendentals=0,
        bytes_accessed=int(n_pad * SEQ_LEN * FEAT_DIM * 2
                           + param_bytes + n_pad * N_CLASSES * 4),
    )

    out = pl.pallas_call(
        _video_emotion_kernel,
        out_shape=jax.ShapeDtypeStruct((n_pad, N_CLASSES), jnp.float32),
        grid_spec=pltpu.PrefetchScalarGridSpec(
            num_scalar_prefetch=0,
            grid=(n_blocks,),
            in_specs=in_specs,
            out_specs=pl.BlockSpec((BLK, N_CLASSES), lambda i: (i, 0)),
        ),
        compiler_params=pltpu.CompilerParams(
            dimension_semantics=("parallel",)),
        cost_estimate=cost,
    )(x, w0, b0, w1, b1, w2, b2, w3, b3, wc, bc, avg)

    return out[:n]


# ---------------- parameter construction (deterministic, BN folded) ----------


def _make_conv_block_params(key, c_in, c_out, eps=1e-5):
    """Conv1d(c_in, c_out, 3) + BatchNorm1d(c_out) eval mode, BN folded.

    Returns (w_stack, b): w_stack [c_in, 3*c_out] bf16 (tap k in columns
    k*c_out:(k+1)*c_out, multiplying x[t + k - 1]); b [1, c_out] f32.
    """
    k_w, k_b, k_g, k_be, k_m, k_v = jax.random.split(key, 6)
    fan_in = c_in * 3
    conv_w = jax.random.normal(k_w, (c_out, c_in, 3), jnp.float32) / jnp.sqrt(fan_in)
    conv_b = jax.random.normal(k_b, (c_out,), jnp.float32) * 0.01
    gamma = 1.0 + 0.1 * jax.random.normal(k_g, (c_out,), jnp.float32)
    beta = 0.1 * jax.random.normal(k_be, (c_out,), jnp.float32)
    run_mean = 0.05 * jax.random.normal(k_m, (c_out,), jnp.float32)
    run_var = 1.0 + 0.1 * jnp.abs(jax.random.normal(k_v, (c_out,), jnp.float32))

    scale = gamma / jnp.sqrt(run_var + eps)                  # [c_out]
    w_folded = conv_w * scale[:, None, None]                 # [c_out, c_in, 3]
    b_folded = (conv_b - run_mean) * scale + beta            # [c_out]

    w_stack = jnp.concatenate(
        [jnp.transpose(w_folded[:, :, k]) for k in range(3)], axis=1)
    return (w_stack.astype(jnp.bfloat16),
            b_folded.reshape(1, c_out).astype(jnp.float32))


def make_params(key):
    keys = jax.random.split(key, 5)
    p0 = _make_conv_block_params(keys[0], FEAT_DIM, 64)
    p1 = _make_conv_block_params(keys[1], 64, 64)
    p2 = _make_conv_block_params(keys[2], 64, 128)
    p3 = _make_conv_block_params(keys[3], 128, 128)
    k_w, k_b = jax.random.split(keys[4])
    wc = jax.random.normal(k_w, (128, N_CLASSES), jnp.float32) / jnp.sqrt(128.0)
    bc = jax.random.normal(k_b, (N_CLASSES,), jnp.float32) * 0.01
    return (p0, p1, p2, p3, (wc, bc.reshape(1, N_CLASSES)))


# ---------------- pure-JAX reference (same math: bf16 operands, f32 acc) ------


def ref_forward(features, params):
    (w0, b0), (w1, b1), (w2, b2), (w3, b3), (wc, bc) = params
    n = features.shape[0] // SEQ_LEN
    h = features.astype(jnp.float32).reshape(n, SEQ_LEN, FEAT_DIM)
    for (w_stack, b) in ((w0, b0), (w1, b1), (w2, b2), (w3, b3)):
        cout = b.shape[-1]
        x16 = h.astype(jnp.bfloat16)
        hp = jnp.pad(x16, ((0, 0), (1, 1), (0, 0)))
        out = jnp.zeros((n, SEQ_LEN, cout), jnp.float32) + b
        for k in range(3):
            wk = w_stack[:, k * cout:(k + 1) * cout]
            out = out + jnp.einsum('ntc,cd->ntd', hp[:, k:k + SEQ_LEN], wk,
                                   preferred_element_type=jnp.float32)
        h = jnp.maximum(out, 0.0)
    feat = jnp.mean(h, axis=1)
    return feat @ wc + bc


if __name__ == "__main__":
    key = jax.random.PRNGKey(0)
    k_feat, k_par = jax.random.split(key)

    n_samples = 32                     # 2 grid steps of BLK=16 samples each
    features = jax.random.normal(k_feat, (n_samples * SEQ_LEN, FEAT_DIM),
                                 jnp.float32)
    params = make_params(k_par)

    out = video_emotion_forward(features, params)
    out = jax.block_until_ready(out)

    expected = ref_forward(features, params)
    assert out.shape == (n_samples, N_CLASSES), out.shape
    max_err = jnp.max(jnp.abs(out - expected))
    assert jnp.allclose(out, expected, atol=1e-3, rtol=1e-3), max_err

    print("KERNEL_OK")
</pallas_src>

<mosaic_0001>
module attributes {stable_mosaic.version = 11 : i64} {
  func.func @_video_emotion_kernel(%arg0: i32, %arg1: memref<240x1024xbf16, #tpu.memory_space<vmem>>, %arg2: memref<1024x192xbf16, #tpu.memory_space<vmem>>, %arg3: memref<1x64xf32, #tpu.memory_space<vmem>>, %arg4: memref<64x192xbf16, #tpu.memory_space<vmem>>, %arg5: memref<1x64xf32, #tpu.memory_space<vmem>>, %arg6: memref<64x384xbf16, #tpu.memory_space<vmem>>, %arg7: memref<1x128xf32, #tpu.memory_space<vmem>>, %arg8: memref<128x384xbf16, #tpu.memory_space<vmem>>, %arg9: memref<1x128xf32, #tpu.memory_space<vmem>>, %arg10: memref<128x8xf32, #tpu.memory_space<vmem>>, %arg11: memref<1x8xf32, #tpu.memory_space<vmem>>, %arg12: memref<16x240xf32, #tpu.memory_space<vmem>>, %arg13: memref<16x8xf32, #tpu.memory_space<vmem>>) attributes {dimension_semantics = [#tpu.dimension_semantics<parallel>], iteration_bounds = array<i64: 2>, scalar_prefetch = 0 : i64, scratch_operands = 0 : i64, tpu.core_type = #tpu.core_type<tc>, window_params = [{transform_indices = @transform_0, window_bounds = array<i64: 240, 1024>}, {pipeline_mode = #tpu.pipeline_mode<synchronous>, transform_indices = @transform_1, window_bounds = array<i64: 1024, 192>}, {pipeline_mode = #tpu.pipeline_mode<synchronous>, transform_indices = @transform_2, window_bounds = array<i64: 1, 64>}, {pipeline_mode = #tpu.pipeline_mode<synchronous>, transform_indices = @transform_3, window_bounds = array<i64: 64, 192>}, {pipeline_mode = #tpu.pipeline_mode<synchronous>, transform_indices = @transform_4, window_bounds = array<i64: 1, 64>}, {pipeline_mode = #tpu.pipeline_mode<synchronous>, transform_indices = @transform_5, window_bounds = array<i64: 64, 384>}, {pipeline_mode = #tpu.pipeline_mode<synchronous>, transform_indices = @transform_6, window_bounds = array<i64: 1, 128>}, {pipeline_mode = #tpu.pipeline_mode<synchronous>, transform_indices = @transform_7, window_bounds = array<i64: 128, 384>}, {pipeline_mode = #tpu.pipeline_mode<synchronous>, transform_indices = @transform_8, window_bounds = array<i64: 1, 128>}, {pipeline_mode = #tpu.pipeline_mode<synchronous>, transform_indices = @transform_9, window_bounds = array<i64: 128, 8>}, {pipeline_mode = #tpu.pipeline_mode<synchronous>, transform_indices = @transform_10, window_bounds = array<i64: 1, 8>}, {pipeline_mode = #tpu.pipeline_mode<synchronous>, transform_indices = @transform_11, window_bounds = array<i64: 16, 240>}, {transform_indices = @transform_12, window_bounds = array<i64: 16, 8>}]} {
    %0 = tpu.iota {dimensions = array<i32: 0>} : vector<240x1xi32>
    %c15_i32 = arith.constant 15 : i32
    %c0_i32 = arith.constant 0 : i32
    %1 = arith.cmpi eq, %c15_i32, %c0_i32 : i32
    %c1_i32 = arith.constant 1 : i32
    %2 = arith.select %1, %c1_i32, %c15_i32 : i32
    %3 = vector.broadcast %2 : i32 to vector<240x1xi32>
    %4 = arith.remsi %0, %3 : vector<240x1xi32>
    %c0_i32_0 = arith.constant 0 : i32
    %5 = vector.broadcast %c0_i32_0 : i32 to vector<240x1xi32>
    %6 = arith.cmpi ne, %4, %5 : vector<240x1xi32>
    %c0_i32_1 = arith.constant 0 : i32
    %7 = vector.broadcast %c0_i32_1 : i32 to vector<240x1xi32>
    %8 = arith.cmpi slt, %4, %7 : vector<240x1xi32>
    %c0_i32_2 = arith.constant 0 : i32
    %9 = arith.cmpi slt, %2, %c0_i32_2 : i32
    %10 = vector.broadcast %9 : i1 to vector<240x1xi1>
    %11 = vector.broadcast %10 : vector<240x1xi1> to vector<240x1xi1>
    %12 = arith.xori %8, %11 : vector<240x1xi1>
    %13 = arith.andi %12, %6 : vector<240x1xi1>
    %14 = vector.broadcast %2 : i32 to vector<240x1xi32>
    %15 = arith.addi %4, %14 : vector<240x1xi32>
    %16 = arith.select %13, %15, %4 : vector<240x1xi1>, vector<240x1xi32>
    %c0_i32_3 = arith.constant 0 : i32
    %17 = vector.broadcast %c0_i32_3 : i32 to vector<240x1xi32>
    %18 = arith.cmpi ne, %16, %17 : vector<240x1xi32>
    %19 = arith.extui %18 : vector<240x1xi1> to vector<240x1xi32>
    %20 = arith.sitofp %19 : vector<240x1xi32> to vector<240x1xf32>
    %c14_i32 = arith.constant 14 : i32
    %21 = vector.broadcast %c14_i32 : i32 to vector<240x1xi32>
    %22 = arith.cmpi ne, %16, %21 : vector<240x1xi32>
    %23 = arith.extui %22 : vector<240x1xi1> to vector<240x1xi32>
    %24 = arith.sitofp %23 : vector<240x1xi32> to vector<240x1xf32>
    %c0 = arith.constant 0 : index
    %c0_4 = arith.constant 0 : index
    %25 = vector.load %arg1[%c0, %c0_4] : memref<240x1024xbf16, #tpu.memory_space<vmem>>, vector<240x1024xbf16>
    %c0_5 = arith.constant 0 : index
    %c0_6 = arith.constant 0 : index
    %26 = vector.load %arg2[%c0_5, %c0_6] : memref<1024x192xbf16, #tpu.memory_space<vmem>>, vector<1024x192xbf16>
    %cst = arith.constant dense<0.000000e+00> : vector<240x192xf32>
    %27 = tpu.matmul %25, %26, %cst {dimension_numbers = #tpu.dot_dimension_numbers<[1], [0], [0], [1], [0, 0, 1, 1], [], []>} : vector<240x1024xbf16>, vector<1024x192xbf16>, vector<240x192xf32> -> vector<240x192xf32>
    %28 = vector.extract_strided_slice %27 {offsets = [0, 0], sizes = [240, 64], strides = [1, 1]} : vector<240x192xf32> to vector<240x64xf32>
    %29 = vector.extract_strided_slice %27 {offsets = [0, 64], sizes = [240, 64], strides = [1, 1]} : vector<240x192xf32> to vector<240x64xf32>
    %30 = vector.extract_strided_slice %27 {offsets = [0, 128], sizes = [240, 64], strides = [1, 1]} : vector<240x192xf32> to vector<240x64xf32>
    %c1_i32_7 = arith.constant 1 : i32
    %31 = tpu.dynamic_rotate %28 by %c1_i32_7 dim 0 : vector<240x64xf32>, i32 -> vector<240x64xf32>
    %32 = vector.broadcast %20 : vector<240x1xf32> to vector<240x64xf32>
    %33 = arith.mulf %32, %31 : vector<240x64xf32>
    %34 = arith.addf %29, %33 : vector<240x64xf32>
    %c239_i32 = arith.constant 239 : i32
    %35 = tpu.dynamic_rotate %30 by %c239_i32 dim 0 : vector<240x64xf32>, i32 -> vector<240x64xf32>
    %36 = vector.broadcast %24 : vector<240x1xf32> to vector<240x64xf32>
    %37 = arith.mulf %36, %35 : vector<240x64xf32>
    %38 = arith.addf %34, %37 : vector<240x64xf32>
    %c0_8 = arith.constant 0 : index
    %c0_9 = arith.constant 0 : index
    %39 = vector.load %arg3[%c0_8, %c0_9] : memref<1x64xf32, #tpu.memory_space<vmem>>, vector<1x64xf32>
    %40 = vector.broadcast %39 : vector<1x64xf32> to vector<240x64xf32>
    %41 = arith.addf %38, %40 : vector<240x64xf32>
    %cst_10 = arith.constant 0.000000e+00 : f32
    %42 = vector.broadcast %cst_10 : f32 to vector<240x64xf32>
    %43 = arith.maximumf %41, %42 : vector<240x64xf32>
    %44 = arith.truncf %43 : vector<240x64xf32> to vector<240x64xbf16>
    %c0_11 = arith.constant 0 : index
    %c0_12 = arith.constant 0 : index
    %45 = vector.load %arg4[%c0_11, %c0_12] : memref<64x192xbf16, #tpu.memory_space<vmem>>, vector<64x192xbf16>
    %cst_13 = arith.constant dense<0.000000e+00> : vector<240x192xf32>
    %46 = tpu.matmul %44, %45, %cst_13 {dimension_numbers = #tpu.dot_dimension_numbers<[1], [0], [0], [1], [0, 0, 1, 1], [], []>} : vector<240x64xbf16>, vector<64x192xbf16>, vector<240x192xf32> -> vector<240x192xf32>
    %47 = vector.extract_strided_slice %46 {offsets = [0, 0], sizes = [240, 64], strides = [1, 1]} : vector<240x192xf32> to vector<240x64xf32>
    %48 = vector.extract_strided_slice %46 {offsets = [0, 64], sizes = [240, 64], strides = [1, 1]} : vector<240x192xf32> to vector<240x64xf32>
    %49 = vector.extract_strided_slice %46 {offsets = [0, 128], sizes = [240, 64], strides = [1, 1]} : vector<240x192xf32> to vector<240x64xf32>
    %c1_i32_14 = arith.constant 1 : i32
    %50 = tpu.dynamic_rotate %47 by %c1_i32_14 dim 0 : vector<240x64xf32>, i32 -> vector<240x64xf32>
    %51 = vector.broadcast %20 : vector<240x1xf32> to vector<240x64xf32>
    %52 = arith.mulf %51, %50 : vector<240x64xf32>
    %53 = arith.addf %48, %52 : vector<240x64xf32>
    %c239_i32_15 = arith.constant 239 : i32
    %54 = tpu.dynamic_rotate %49 by %c239_i32_15 dim 0 : vector<240x64xf32>, i32 -> vector<240x64xf32>
    %55 = vector.broadcast %24 : vector<240x1xf32> to vector<240x64xf32>
    %56 = arith.mulf %55, %54 : vector<240x64xf32>
    %57 = arith.addf %53, %56 : vector<240x64xf32>
    %c0_16 = arith.constant 0 : index
    %c0_17 = arith.constant 0 : index
    %58 = vector.load %arg5[%c0_16, %c0_17] : memref<1x64xf32, #tpu.memory_space<vmem>>, vector<1x64xf32>
    %59 = vector.broadcast %58 : vector<1x64xf32> to vector<240x64xf32>
    %60 = arith.addf %57, %59 : vector<240x64xf32>
    %cst_18 = arith.constant 0.000000e+00 : f32
    %61 = vector.broadcast %cst_18 : f32 to vector<240x64xf32>
    %62 = arith.maximumf %60, %61 : vector<240x64xf32>
    %63 = arith.truncf %62 : vector<240x64xf32> to vector<240x64xbf16>
    %c0_19 = arith.constant 0 : index
    %c0_20 = arith.constant 0 : index
    %64 = vector.load %arg6[%c0_19, %c0_20] : memref<64x384xbf16, #tpu.memory_space<vmem>>, vector<64x384xbf16>
    %cst_21 = arith.constant dense<0.000000e+00> : vector<240x384xf32>
    %65 = tpu.matmul %63, %64, %cst_21 {dimension_numbers = #tpu.dot_dimension_numbers<[1], [0], [0], [1], [0, 0, 1, 1], [], []>} : vector<240x64xbf16>, vector<64x384xbf16>, vector<240x384xf32> -> vector<240x384xf32>
    %66 = vector.extract_strided_slice %65 {offsets = [0, 0], sizes = [240, 128], strides = [1, 1]} : vector<240x384xf32> to vector<240x128xf32>
    %67 = vector.extract_strided_slice %65 {offsets = [0, 128], sizes = [240, 128], strides = [1, 1]} : vector<240x384xf32> to vector<240x128xf32>
    %68 = vector.extract_strided_slice %65 {offsets = [0, 256], sizes = [240, 128], strides = [1, 1]} : vector<240x384xf32> to vector<240x128xf32>
    %c1_i32_22 = arith.constant 1 : i32
    %69 = tpu.dynamic_rotate %66 by %c1_i32_22 dim 0 : vector<240x128xf32>, i32 -> vector<240x128xf32>
    %70 = vector.broadcast %20 : vector<240x1xf32> to vector<240x128xf32>
    %71 = arith.mulf %70, %69 : vector<240x128xf32>
    %72 = arith.addf %67, %71 : vector<240x128xf32>
    %c239_i32_23 = arith.constant 239 : i32
    %73 = tpu.dynamic_rotate %68 by %c239_i32_23 dim 0 : vector<240x128xf32>, i32 -> vector<240x128xf32>
    %74 = vector.broadcast %24 : vector<240x1xf32> to vector<240x128xf32>
    %75 = arith.mulf %74, %73 : vector<240x128xf32>
    %76 = arith.addf %72, %75 : vector<240x128xf32>
    %c0_24 = arith.constant 0 : index
    %c0_25 = arith.constant 0 : index
    %77 = vector.load %arg7[%c0_24, %c0_25] : memref<1x128xf32, #tpu.memory_space<vmem>>, vector<1x128xf32>
    %78 = vector.broadcast %77 : vector<1x128xf32> to vector<240x128xf32>
    %79 = arith.addf %76, %78 : vector<240x128xf32>
    %cst_26 = arith.constant 0.000000e+00 : f32
    %80 = vector.broadcast %cst_26 : f32 to vector<240x128xf32>
    %81 = arith.maximumf %79, %80 : vector<240x128xf32>
    %82 = arith.truncf %81 : vector<240x128xf32> to vector<240x128xbf16>
    %c0_27 = arith.constant 0 : index
    %c0_28 = arith.constant 0 : index
    %83 = vector.load %arg8[%c0_27, %c0_28] : memref<128x384xbf16, #tpu.memory_space<vmem>>, vector<128x384xbf16>
    %cst_29 = arith.constant dense<0.000000e+00> : vector<240x384xf32>
    %84 = tpu.matmul %82, %83, %cst_29 {dimension_numbers = #tpu.dot_dimension_numbers<[1], [0], [0], [1], [0, 0, 1, 1], [], []>} : vector<240x128xbf16>, vector<128x384xbf16>, vector<240x384xf32> -> vector<240x384xf32>
    %85 = vector.extract_strided_slice %84 {offsets = [0, 0], sizes = [240, 128], strides = [1, 1]} : vector<240x384xf32> to vector<240x128xf32>
    %86 = vector.extract_strided_slice %84 {offsets = [0, 128], sizes = [240, 128], strides = [1, 1]} : vector<240x384xf32> to vector<240x128xf32>
    %87 = vector.extract_strided_slice %84 {offsets = [0, 256], sizes = [240, 128], strides = [1, 1]} : vector<240x384xf32> to vector<240x128xf32>
    %c1_i32_30 = arith.constant 1 : i32
    %88 = tpu.dynamic_rotate %85 by %c1_i32_30 dim 0 : vector<240x128xf32>, i32 -> vector<240x128xf32>
    %89 = vector.broadcast %20 : vector<240x1xf32> to vector<240x128xf32>
    %90 = arith.mulf %89, %88 : vector<240x128xf32>
    %91 = arith.addf %86, %90 : vector<240x128xf32>
    %c239_i32_31 = arith.constant 239 : i32
    %92 = tpu.dynamic_rotate %87 by %c239_i32_31 dim 0 : vector<240x128xf32>, i32 -> vector<240x128xf32>
    %93 = vector.broadcast %24 : vector<240x1xf32> to vector<240x128xf32>
    %94 = arith.mulf %93, %92 : vector<240x128xf32>
    %95 = arith.addf %91, %94 : vector<240x128xf32>
    %c0_32 = arith.constant 0 : index
    %c0_33 = arith.constant 0 : index
    %96 = vector.load %arg9[%c0_32, %c0_33] : memref<1x128xf32, #tpu.memory_space<vmem>>, vector<1x128xf32>
    %97 = vector.broadcast %96 : vector<1x128xf32> to vector<240x128xf32>
    %98 = arith.addf %95, %97 : vector<240x128xf32>
    %cst_34 = arith.constant 0.000000e+00 : f32
    %99 = vector.broadcast %cst_34 : f32 to vector<240x128xf32>
    %100 = arith.maximumf %98, %99 : vector<240x128xf32>
    %c0_35 = arith.constant 0 : index
    %c0_36 = arith.constant 0 : index
    %101 = vector.load %arg12[%c0_35, %c0_36] : memref<16x240xf32, #tpu.memory_space<vmem>>, vector<16x240xf32>
    %cst_37 = arith.constant dense<0.000000e+00> : vector<16x128xf32>
    %102 = tpu.matmul %101, %100, %cst_37 {dimension_numbers = #tpu.dot_dimension_numbers<[1], [0], [0], [1], [0, 0, 1, 1], [], []>} : vector<16x240xf32>, vector<240x128xf32>, vector<16x128xf32> -> vector<16x128xf32>
    %c0_38 = arith.constant 0 : index
    %c0_39 = arith.constant 0 : index
    %103 = vector.load %arg10[%c0_38, %c0_39] : memref<128x8xf32, #tpu.memory_space<vmem>>, vector<128x8xf32>
    %cst_40 = arith.constant dense<0.000000e+00> : vector<16x8xf32>
    %104 = tpu.matmul %102, %103, %cst_40 {dimension_numbers = #tpu.dot_dimension_numbers<[1], [0], [0], [1], [0, 0, 1, 1], [], []>} : vector<16x128xf32>, vector<128x8xf32>, vector<16x8xf32> -> vector<16x8xf32>
    %c0_41 = arith.constant 0 : index
    %c0_42 = arith.constant 0 : index
    %105 = vector.load %arg11[%c0_41, %c0_42] : memref<1x8xf32, #tpu.memory_space<vmem>>, vector<1x8xf32>
    %106 = vector.broadcast %105 : vector<1x8xf32> to vector<16x8xf32>
    %107 = arith.addf %104, %106 : vector<16x8xf32>
    %c0_43 = arith.constant 0 : index
    %c0_44 = arith.constant 0 : index
    %108 = vector.load %arg13[%c0_43, %c0_44] : memref<16x8xf32, #tpu.memory_space<vmem>>, vector<16x8xf32>
    tpu.vector_store %arg13[%c0_43, %c0_44], %107 {strides = array<i32>} : memref<16x8xf32, #tpu.memory_space<vmem>>, vector<16x8xf32>,
    return
  }
  func.func @transform_0(%arg0: i32) -> (i32, i32) {
    %c0_i32 = arith.constant 0 : i32
    %c0_i32_0 = arith.constant 0 : i32
    return %arg0, %c0_i32 : i32, i32
  }
  func.func @transform_1(%arg0: i32) -> (i32, i32) {
    %c0_i32 = arith.constant 0 : i32
    %c0_i32_0 = arith.constant 0 : i32
    %c0_i32_1 = arith.constant 0 : i32
    return %c0_i32, %c0_i32_0 : i32, i32
  }
  func.func @transform_2(%arg0: i32) -> (i32, i32) {
    %c0_i32 = arith.constant 0 : i32
    %c0_i32_0 = arith.constant 0 : i32
    %c0_i32_1 = arith.constant 0 : i32
    return %c0_i32, %c0_i32_0 : i32, i32
  }
  func.func @transform_3(%arg0: i32) -> (i32, i32) {
    %c0_i32 = arith.constant 0 : i32
    %c0_i32_0 = arith.constant 0 : i32
    %c0_i32_1 = arith.constant 0 : i32
    return %c0_i32, %c0_i32_0 : i32, i32
  }
  func.func @transform_4(%arg0: i32) -> (i32, i32) {
    %c0_i32 = arith.constant 0 : i32
    %c0_i32_0 = arith.constant 0 : i32
    %c0_i32_1 = arith.constant 0 : i32
    return %c0_i32, %c0_i32_0 : i32, i32
  }
  func.func @transform_5(%arg0: i32) -> (i32, i32) {
    %c0_i32 = arith.constant 0 : i32
    %c0_i32_0 = arith.constant 0 : i32
    %c0_i32_1 = arith.constant 0 : i32
    return %c0_i32, %c0_i32_0 : i32, i32
  }
  func.func @transform_6(%arg0: i32) -> (i32, i32) {
    %c0_i32 = arith.constant 0 : i32
    %c0_i32_0 = arith.constant 0 : i32
    %c0_i32_1 = arith.constant 0 : i32
    return %c0_i32, %c0_i32_0 : i32, i32
  }
  func.func @transform_7(%arg0: i32) -> (i32, i32) {
    %c0_i32 = arith.constant 0 : i32
    %c0_i32_0 = arith.constant 0 : i32
    %c0_i32_1 = arith.constant 0 : i32
    return %c0_i32, %c0_i32_0 : i32, i32
  }
  func.func @transform_8(%arg0: i32) -> (i32, i32) {
    %c0_i32 = arith.constant 0 : i32
    %c0_i32_0 = arith.constant 0 : i32
    %c0_i32_1 = arith.constant 0 : i32
    return %c0_i32, %c0_i32_0 : i32, i32
  }
  func.func @transform_9(%arg0: i32) -> (i32, i32) {
    %c0_i32 = arith.constant 0 : i32
    %c0_i32_0 = arith.constant 0 : i32
    %c0_i32_1 = arith.constant 0 : i32
    return %c0_i32, %c0_i32_0 : i32, i32
  }
  func.func @transform_10(%arg0: i32) -> (i32, i32) {
    %c0_i32 = arith.constant 0 : i32
    %c0_i32_0 = arith.constant 0 : i32
    %c0_i32_1 = arith.constant 0 : i32
    return %c0_i32, %c0_i32_0 : i32, i32
  }
  func.func @transform_11(%arg0: i32) -> (i32, i32) {
    %c0_i32 = arith.constant 0 : i32
    %c0_i32_0 = arith.constant 0 : i32
    %c0_i32_1 = arith.constant 0 : i32
    return %c0_i32, %c0_i32_0 : i32, i32
  }
  func.func @transform_12(%arg0: i32) -> (i32, i32) {
    %c0_i32 = arith.constant 0 : i32
    %c0_i32_0 = arith.constant 0 : i32
    return %arg0, %c0_i32 : i32, i32
  }
}

</mosaic_0001>

<llo_original>
// kernel: video_emotion_forward.1
$region0: #{video_emotion_forward.1}
  #allocation0 [shape = 'u32[]', space=smem, size = 0x4, offset = 0x4, fixed_abs, tag = 'smem constant byte address 0x4 - core index']
  #allocation1 [shape = 'u32[72,128]{1,0:T(1,128)}', space=vmem, size = 0x9000, scoped, tag = 'internal scratch']
  %s0 = inlined_call_operand.vmem [shape: bf16[480,1024], index: 0, kind: input, shape index: {}]
  %s1 = inlined_call_operand.vmem [shape: bf16[1024,192], index: 1, kind: input, shape index: {}]
  %s2 = inlined_call_operand.vmem [shape: f32[1,64], index: 2, kind: input, shape index: {}]
  %s3 = inlined_call_operand.vmem [shape: bf16[64,192], index: 3, kind: input, shape index: {}]
  %s4 = inlined_call_operand.vmem [shape: f32[1,64], index: 4, kind: input, shape index: {}]
  %s5 = inlined_call_operand.vmem [shape: bf16[64,384], index: 5, kind: input, shape index: {}]
  %s6 = inlined_call_operand.vmem [shape: f32[1,128], index: 6, kind: input, shape index: {}]
  %s7 = inlined_call_operand.vmem [shape: bf16[128,384], index: 7, kind: input, shape index: {}]
  %s8 = inlined_call_operand.vmem [shape: f32[1,128], index: 8, kind: input, shape index: {}]
  %s9 = inlined_call_operand.vmem [shape: f32[128,8], index: 9, kind: input, shape index: {}]
  %s10 = inlined_call_operand.vmem [shape: f32[1,8], index: 10, kind: input, shape index: {}]
  %s11 = inlined_call_operand.vmem [shape: f32[16,240], index: 11, kind: input, shape index: {}]
  %s12 = inlined_call_operand.vmem [shape: f32[32,8], index: 12, kind: output, shape index: {}]
  %s13 = sld [smem:[#allocation0]]
  $region81: #{video_emotion_forward.1} parent=0
    _
  %s15 = ssub.s32 1, %s13
  %s16 = scalar_select 0, %s15, %s13
  loop: start=0, step=1, limit=4
  $region2: #{video_emotion_forward.1} parent=0 // loop_pre_header
    _
  $region3: #{video_emotion_forward.1} parent=0 // loop_header
    %s18 = sphi 0, %s22
    %p19 = scmp.ge.s32.totalorder %s18, 4
    %s28 = sphi 0, %s30
    %s31 = sphi 0, %s28
    %s32 = sphi 0, %s31
    %s48 = sphi 0, %s32
    %s52 = sphi 0, %s52
    %s54 = sphi 0, %s52
    %s55 = sphi 0, %s54
    %s69 = sphi 0, %s55
    %s73 = sphi 0, %s73
    %s75 = sphi 0, %s73
    %s76 = sphi 0, %s75
    %s90 = sphi 0, %s76
    %s94 = sphi 0, %s94
    %s96 = sphi 0, %s94
    %s97 = sphi 0, %s96
    %s111 = sphi 0, %s97
    %s115 = sphi 0, %s115
    %s117 = sphi 0, %s115
    %s118 = sphi 0, %s117
    %s132 = sphi 0, %s118
    %s136 = sphi 0, %s136
    %s138 = sphi 0, %s136
    %s139 = sphi 0, %s138
    %s153 = sphi 0, %s139
    %s157 = sphi 0, %s157
    %s159 = sphi 0, %s157
    %s160 = sphi 0, %s159
    %s174 = sphi 0, %s160
    %s178 = sphi 0, %s178
    %s180 = sphi 0, %s178
    %s181 = sphi 0, %s180
    %s195 = sphi 0, %s181
    %s199 = sphi 0, %s199
    %s201 = sphi 0, %s199
    %s202 = sphi 0, %s201
    %s216 = sphi 0, %s202
    %s220 = sphi 0, %s220
    %s222 = sphi 0, %s220
    %s223 = sphi 0, %s222
    %s237 = sphi 0, %s223
    %s241 = sphi 0, %s241
    %s243 = sphi 0, %s241
    %s244 = sphi 0, %s243
    %s258 = sphi 0, %s244
    %s262 = sphi 0, %s262
    %s264 = sphi 0, %s262
    %s265 = sphi 0, %s264
    %s279 = sphi 0, %s265
    %s285 = sphi 0, %s287
    %s288 = sphi 0, %s285
    %s289 = sphi 0, %s288
    %s305 = sphi 0, %s289
  $region4: #{video_emotion_forward.1} parent=0 // loop_header_branch
    %21 = sbr.rel (%p19) target = $region8
  $region5: #{video_emotion_forward.1} parent=0 // loop_body
    %s23 = ssub.s32 %s18, 1
    %s24 = ssub.s32 %s18, 2
    %s25 = sadd.s32 %s18, 1
    %s26 = ssub.s32 %s18, %s25
    %p27 = scmp.eq.s32.totalorder %s26, 0
    %s29 = sadd.s32 %s28, 1
    %s30 = scalar_select %p27, %s28, %s29
    %p33 = pneg %p27
    %p34 = scmp.eq.s32.totalorder %s18, 1
    %p35 = por %p33, %p34
    %p36 = scmp.ne.s32.totalorder %s28, %s31
    %p37 = scmp.eq.s32.totalorder %s18, 0
    %p38 = por %p36, %p37
    %p39 = scmp.ne.s32.totalorder %s28, %s31
    %p40 = scmp.eq.s32.totalorder %s23, 1
    %p41 = por %p39, %p40
    %p42 = scmp.ne.s32.totalorder %s31, %s32
    %p43 = scmp.eq.s32.totalorder %s23, 0
    %p44 = por %p42, %p43
    %p45 = scmp.ne.s32.totalorder %s31, %s32
    %p46 = scmp.eq.s32.totalorder %s24, 1
    %p47 = por %p45, %p46
    %p49 = scmp.ne.s32.totalorder %s32, %s48
    %p50 = scmp.eq.s32.totalorder %s24, 0
    %p51 = por %p49, %p50
    %s53 = sadd.s32 %s52, 1
    %p56 = scmp.eq.s32.totalorder %s18, 1
    %p57 = scmp.ne.s32.totalorder %s52, %s54
    %p58 = scmp.eq.s32.totalorder %s18, 0
    %p59 = por %p57, %p58
    %p60 = scmp.ne.s32.totalorder %s52, %s54
    %p61 = scmp.eq.s32.totalorder %s23, 1
    %p62 = por %p60, %p61
    %p63 = scmp.ne.s32.totalorder %s54, %s55
    %p64 = scmp.eq.s32.totalorder %s23, 0
    %p65 = por %p63, %p64
    %p66 = scmp.ne.s32.totalorder %s54, %s55
    %p67 = scmp.eq.s32.totalorder %s24, 1
    %p68 = por %p66, %p67
    %p70 = scmp.ne.s32.totalorder %s55, %s69
    %p71 = scmp.eq.s32.totalorder %s24, 0
    %p72 = por %p70, %p71
    %s74 = sadd.s32 %s73, 1
    %p77 = scmp.eq.s32.totalorder %s18, 1
    %p78 = scmp.ne.s32.totalorder %s73, %s75
    %p79 = scmp.eq.s32.totalorder %s18, 0
    %p80 = por %p78, %p79
    %p81 = scmp.ne.s32.totalorder %s73, %s75
    %p82 = scmp.eq.s32.totalorder %s23, 1
    %p83 = por %p81, %p82
    %p84 = scmp.ne.s32.totalorder %s75, %s76
    %p85 = scmp.eq.s32.totalorder %s23, 0
    %p86 = por %p84, %p85
    %p87 = scmp.ne.s32.totalorder %s75, %s76
    %p88 = scmp.eq.s32.totalorder %s24, 1
    %p89 = por %p87, %p88
    %p91 = scmp.ne.s32.totalorder %s76, %s90
    %p92 = scmp.eq.s32.totalorder %s24, 0
    %p93 = por %p91, %p92
    %s95 = sadd.s32 %s94, 1
    %p98 = scmp.eq.s32.totalorder %s18, 1
    %p99 = scmp.ne.s32.totalorder %s94, %s96
    %p100 = scmp.eq.s32.totalorder %s18, 0
    %p101 = por %p99, %p100
    %p102 = scmp.ne.s32.totalorder %s94, %s96
    %p103 = scmp.eq.s32.totalorder %s23, 1
    %p104 = por %p102, %p103
    %p105 = scmp.ne.s32.totalorder %s96, %s97
    %p106 = scmp.eq.s32.totalorder %s23, 0
    %p107 = por %p105, %p106
    %p108 = scmp.ne.s32.totalorder %s96, %s97
    %p109 = scmp.eq.s32.totalorder %s24, 1
    %p110 = por %p108, %p109
    %p112 = scmp.ne.s32.totalorder %s97, %s111
    %p113 = scmp.eq.s32.totalorder %s24, 0
    %p114 = por %p112, %p113
    %s116 = sadd.s32 %s115, 1
    %p119 = scmp.eq.s32.totalorder %s18, 1
    %p120 = scmp.ne.s32.totalorder %s115, %s117
    %p121 = scmp.eq.s32.totalorder %s18, 0
    %p122 = por %p120, %p121
    %p123 = scmp.ne.s32.totalorder %s115, %s117
    %p124 = scmp.eq.s32.totalorder %s23, 1
    %p125 = por %p123, %p124
    %p126 = scmp.ne.s32.totalorder %s117, %s118
    %p127 = scmp.eq.s32.totalorder %s23, 0
    %p128 = por %p126, %p127
    %p129 = scmp.ne.s32.totalorder %s117, %s118
    %p130 = scmp.eq.s32.totalorder %s24, 1
    %p131 = por %p129, %p130
    %p133 = scmp.ne.s32.totalorder %s118, %s132
    %p134 = scmp.eq.s32.totalorder %s24, 0
    %p135 = por %p133, %p134
    %s137 = sadd.s32 %s136, 1
    %p140 = scmp.eq.s32.totalorder %s18, 1
    %p141 = scmp.ne.s32.totalorder %s136, %s138
    %p142 = scmp.eq.s32.totalorder %s18, 0
    %p143 = por %p141, %p142
    %p144 = scmp.ne.s32.totalorder %s136, %s138
    %p145 = scmp.eq.s32.totalorder %s23, 1
    %p146 = por %p144, %p145
    %p147 = scmp.ne.s32.totalorder %s138, %s139
    %p148 = scmp.eq.s32.totalorder %s23, 0
    %p149 = por %p147, %p148
    %p150 = scmp.ne.s32.totalorder %s138, %s139
    %p151 = scmp.eq.s32.totalorder %s24, 1
    %p152 = por %p150, %p151
    %p154 = scmp.ne.s32.totalorder %s139, %s153
    %p155 = scmp.eq.s32.totalorder %s24, 0
    %p156 = por %p154, %p155
    %s158 = sadd.s32 %s157, 1
    %p161 = scmp.eq.s32.totalorder %s18, 1
    %p162 = scmp.ne.s32.totalorder %s157, %s159
    %p163 = scmp.eq.s32.totalorder %s18, 0
    %p164 = por %p162, %p163
    %p165 = scmp.ne.s32.totalorder %s157, %s159
    %p166 = scmp.eq.s32.totalorder %s23, 1
    %p167 = por %p165, %p166
    %p168 = scmp.ne.s32.totalorder %s159, %s160
    %p169 = scmp.eq.s32.totalorder %s23, 0
    %p170 = por %p168, %p169
    %p171 = scmp.ne.s32.totalorder %s159, %s160
    %p172 = scmp.eq.s32.totalorder %s24, 1
    %p173 = por %p171, %p172
    %p175 = scmp.ne.s32.totalorder %s160, %s174
    %p176 = scmp.eq.s32.totalorder %s24, 0
    %p177 = por %p175, %p176
    %s179 = sadd.s32 %s178, 1
    %p182 = scmp.eq.s32.totalorder %s18, 1
    %p183 = scmp.ne.s32.totalorder %s178, %s180
    %p184 = scmp.eq.s32.totalorder %s18, 0
    %p185 = por %p183, %p184
    %p186 = scmp.ne.s32.totalorder %s178, %s180
    %p187 = scmp.eq.s32.totalorder %s23, 1
    %p188 = por %p186, %p187
    %p189 = scmp.ne.s32.totalorder %s180, %s181
    %p190 = scmp.eq.s32.totalorder %s23, 0
    %p191 = por %p189, %p190
    %p192 = scmp.ne.s32.totalorder %s180, %s181
    %p193 = scmp.eq.s32.totalorder %s24, 1
    %p194 = por %p192, %p193
    %p196 = scmp.ne.s32.totalorder %s181, %s195
    %p197 = scmp.eq.s32.totalorder %s24, 0
    %p198 = por %p196, %p197
    %s200 = sadd.s32 %s199, 1
    %p203 = scmp.eq.s32.totalorder %s18, 1
    %p204 = scmp.ne.s32.totalorder %s199, %s201
    %p205 = scmp.eq.s32.totalorder %s18, 0
    %p206 = por %p204, %p205
    %p207 = scmp.ne.s32.totalorder %s199, %s201
    %p208 = scmp.eq.s32.totalorder %s23, 1
    %p209 = por %p207, %p208
    %p210 = scmp.ne.s32.totalorder %s201, %s202
    %p211 = scmp.eq.s32.totalorder %s23, 0
    %p212 = por %p210, %p211
    %p213 = scmp.ne.s32.totalorder %s201, %s202
    %p214 = scmp.eq.s32.totalorder %s24, 1
    %p215 = por %p213, %p214
    %p217 = scmp.ne.s32.totalorder %s202, %s216
    %p218 = scmp.eq.s32.totalorder %s24, 0
    %p219 = por %p217, %p218
    %s221 = sadd.s32 %s220, 1
    %p224 = scmp.eq.s32.totalorder %s18, 1
    %p225 = scmp.ne.s32.totalorder %s220, %s222
    %p226 = scmp.eq.s32.totalorder %s18, 0
    %p227 = por %p225, %p226
    %p228 = scmp.ne.s32.totalorder %s220, %s222
    %p229 = scmp.eq.s32.totalorder %s23, 1
    %p230 = por %p228, %p229
    %p231 = scmp.ne.s32.totalorder %s222, %s223
    %p232 = scmp.eq.s32.totalorder %s23, 0
    %p233 = por %p231, %p232
    %p234 = scmp.ne.s32.totalorder %s222, %s223
    %p235 = scmp.eq.s32.totalorder %s24, 1
    %p236 = por %p234, %p235
    %p238 = scmp.ne.s32.totalorder %s223, %s237
    %p239 = scmp.eq.s32.totalorder %s24, 0
    %p240 = por %p238, %p239
    %s242 = sadd.s32 %s241, 1
    %p245 = scmp.eq.s32.totalorder %s18, 1
    %p246 = scmp.ne.s32.totalorder %s241, %s243
    %p247 = scmp.eq.s32.totalorder %s18, 0
    %p248 = por %p246, %p247
    %p249 = scmp.ne.s32.totalorder %s241, %s243
    %p250 = scmp.eq.s32.totalorder %s23, 1
    %p251 = por %p249, %p250
    %p252 = scmp.ne.s32.totalorder %s243, %s244
    %p253 = scmp.eq.s32.totalorder %s23, 0
    %p254 = por %p252, %p253
    %p255 = scmp.ne.s32.totalorder %s243, %s244
    %p256 = scmp.eq.s32.totalorder %s24, 1
    %p257 = por %p255, %p256
    %p259 = scmp.ne.s32.totalorder %s244, %s258
    %p260 = scmp.eq.s32.totalorder %s24, 0
    %p261 = por %p259, %p260
    %s263 = sadd.s32 %s262, 1
    %p266 = scmp.eq.s32.totalorder %s18, 1
    %p267 = scmp.ne.s32.totalorder %s262, %s264
    %p268 = scmp.eq.s32.totalorder %s18, 0
    %p269 = por %p267, %p268
    %p270 = scmp.ne.s32.totalorder %s262, %s264
    %p271 = scmp.eq.s32.totalorder %s23, 1
    %p272 = por %p270, %p271
    %p273 = scmp.ne.s32.totalorder %s264, %s265
    %p274 = scmp.eq.s32.totalorder %s23, 0
    %p275 = por %p273, %p274
    %p276 = scmp.ne.s32.totalorder %s264, %s265
    %p277 = scmp.eq.s32.totalorder %s24, 1
    %p278 = por %p276, %p277
    %p280 = scmp.ne.s32.totalorder %s265, %s279
    %p281 = scmp.eq.s32.totalorder %s24, 0
    %p282 = por %p280, %p281
    %s283 = ssub.s32 %s18, %s25
    %p284 = scmp.eq.s32.totalorder %s283, 0
    %s286 = sadd.s32 %s285, 1
    %s287 = scalar_select %p284, %s285, %s286
    %p290 = pneg %p284
    %p291 = scmp.eq.s32.totalorder %s18, 1
    %p292 = por %p290, %p291
    %p293 = scmp.ne.s32.totalorder %s285, %s288
    %p294 = scmp.eq.s32.totalorder %s18, 0
    %p295 = por %p293, %p294
    %p296 = scmp.ne.s32.totalorder %s285, %s288
    %p297 = scmp.eq.s32.totalorder %s23, 1
    %p298 = por %p296, %p297
    %p299 = scmp.ne.s32.totalorder %s288, %s289
    %p300 = scmp.eq.s32.totalorder %s23, 0
    %p301 = por %p299, %p300
    %p302 = scmp.ne.s32.totalorder %s288, %s289
    %p303 = scmp.eq.s32.totalorder %s24, 1
    %p304 = por %p302, %p303
    %p306 = scmp.ne.s32.totalorder %s289, %s305
    %p307 = scmp.eq.s32.totalorder %s24, 0
    %p308 = por %p306, %p307
    %p309 = scmp.le.s32.totalorder 1, %s18
    %p310 = scmp.lt.s32.totalorder %s18, 3
    %p311 = pnand %p309, %p310
    %p312 = pneg %p311
    // Predicated region
    $region9: #{video_emotion_forward.1} parent=5 // pred_check
      _
    $region10: #{video_emotion_forward.1} parent=5 // pred_check_branch
      %314 = sbr.rel (%p311) target = $region12
    $region11: #{video_emotion_forward.1} parent=5 // pred_region
      %s315 = ssub.s32 %s18, 1
      // Predicated region
      $region13: #{video_emotion_forward.1} parent=11 // pred_check
        %p316 = pneg %p65
      $region14: #{video_emotion_forward.1} parent=11 // pred_check_branch
        %318 = sbr.rel (%p316) target = $region16
      $region15: #{video_emotion_forward.1} parent=11 // pred_region
        _
      $region16: #{video_emotion_forward.1} parent=11 // pred_fallthru
        _
      // Predicated region
      $region17: #{video_emotion_forward.1} parent=11 // pred_check
        %p319 = pneg %p86
      $region18: #{video_emotion_forward.1} parent=11 // pred_check_branch
        %321 = sbr.rel (%p319) target = $region20
      $region19: #{video_emotion_forward.1} parent=11 // pred_region
        _
      $region20: #{video_emotion_forward.1} parent=11 // pred_fallthru
        _
      // Predicated region
      $region21: #{video_emotion_forward.1} parent=11 // pred_check
        %p322 = pneg %p107
      $region22: #{video_emotion_forward.1} parent=11 // pred_check_branch
        %324 = sbr.rel (%p322) target = $region24
      $region23: #{video_emotion_forward.1} parent=11 // pred_region
        _
      $region24: #{video_emotion_forward.1} parent=11 // pred_fallthru
        _
      // Predicated region
      $region25: #{video_emotion_forward.1} parent=11 // pred_check
        %p325 = pneg %p128
      $region26: #{video_emotion_forward.1} parent=11 // pred_check_branch
        %327 = sbr.rel (%p325) target = $region28
      $region27: #{video_emotion_forward.1} parent=11 // pred_region
        _
      $region28: #{video_emotion_forward.1} parent=11 // pred_fallthru
        _
      // Predicated region
      $region29: #{video_emotion_forward.1} parent=11 // pred_check
        %p328 = pneg %p149
      $region30: #{video_emotion_forward.1} parent=11 // pred_check_branch
        %330 = sbr.rel (%p328) target = $region32
      $region31: #{video_emotion_forward.1} parent=11 // pred_region
        _
      $region32: #{video_emotion_forward.1} parent=11 // pred_fallthru
        _
      // Predicated region
      $region33: #{video_emotion_forward.1} parent=11 // pred_check
        %p331 = pneg %p170
      $region34: #{video_emotion_forward.1} parent=11 // pred_check_branch
        %333 = sbr.rel (%p331) target = $region36
      $region35: #{video_emotion_forward.1} parent=11 // pred_region
        _
      $region36: #{video_emotion_forward.1} parent=11 // pred_fallthru
        _
      // Predicated region
      $region37: #{video_emotion_forward.1} parent=11 // pred_check
        %p334 = pneg %p191
      $region38: #{video_emotion_forward.1} parent=11 // pred_check_branch
        %336 = sbr.rel (%p334) target = $region40
      $region39: #{video_emotion_forward.1} parent=11 // pred_region
        _
      $region40: #{video_emotion_forward.1} parent=11 // pred_fallthru
        _
      // Predicated region
      $region41: #{video_emotion_forward.1} parent=11 // pred_check
        %p337 = pneg %p212
      $region42: #{video_emotion_forward.1} parent=11 // pred_check_branch
        %339 = sbr.rel (%p337) target = $region44
      $region43: #{video_emotion_forward.1} parent=11 // pred_region
        _
      $region44: #{video_emotion_forward.1} parent=11 // pred_fallthru
        _
      // Predicated region
      $region45: #{video_emotion_forward.1} parent=11 // pred_check
        %p340 = pneg %p233
      $region46: #{video_emotion_forward.1} parent=11 // pred_check_branch
        %342 = sbr.rel (%p340) target = $region48
      $region47: #{video_emotion_forward.1} parent=11 // pred_region
        _
      $region48: #{video_emotion_forward.1} parent=11 // pred_fallthru
        _
      // Predicated region
      $region49: #{video_emotion_forward.1} parent=11 // pred_check
        %p343 = pneg %p254
      $region50: #{video_emotion_forward.1} parent=11 // pred_check_branch
        %345 = sbr.rel (%p343) target = $region52
      $region51: #{video_emotion_forward.1} parent=11 // pred_region
        _
      $region52: #{video_emotion_forward.1} parent=11 // pred_fallthru
        _
      // Predicated region
      $region53: #{video_emotion_forward.1} parent=11 // pred_check
        %p346 = pneg %p275
      $region54: #{video_emotion_forward.1} parent=11 // pred_check_branch
        %348 = sbr.rel (%p346) target = $region56
      $region55: #{video_emotion_forward.1} parent=11 // pred_region
        _
      $region56: #{video_emotion_forward.1} parent=11 // pred_fallthru
        _
    $region12: #{video_emotion_forward.1} parent=5 // pred_fallthru
      _
    %p349 = scmp.lt.s32.totalorder %s18, 2
    // Predicated region
    $region57: #{video_emotion_forward.1} parent=5 // pred_check
      %p350 = pneg %p349
    $region58: #{video_emotion_forward.1} parent=5 // pred_check_branch
      %352 = sbr.rel (%p350) target = $region60
    $region59: #{video_emotion_forward.1} parent=5 // pred_region
      // Predicated region
      $region61: #{video_emotion_forward.1} parent=59 // pred_check
        %p353 = pneg %p38
      $region62: #{video_emotion_forward.1} parent=59 // pred_check_branch
        %355 = sbr.rel (%p353) target = $region64
      $region63: #{video_emotion_forward.1} parent=59 // pred_region
        %s356 = smul.u32 30, %s18
        %p357 = scmp.lt.s32.totalorder %s356, 59
        %s358 = scalar_select %p357, %s356, 59
        %s359 = smul.addr %s358, 8
        %s360 = smul.addr %s359, 4
        %s361 = scalar_lea.vmem %s0, %s360
        %s362 = smul.u32 30, %s18
      $region64: #{video_emotion_forward.1} parent=59 // pred_fallthru
        _
    $region60: #{video_emotion_forward.1} parent=5 // pred_fallthru
      _
    %p363 = scmp.le.s32.totalorder 1, %s18
    %p364 = scmp.lt.s32.totalorder %s18, 3
    %p365 = pnand %p363, %p364
    %p366 = pneg %p365
    // Predicated region
    $region65: #{video_emotion_forward.1} parent=5 // pred_check
      _
    $region66: #{video_emotion_forward.1} parent=5 // pred_check_branch
      %368 = sbr.rel (%p365) target = $region68
    $region67: #{video_emotion_forward.1} parent=5 // pred_region
      %s369 = ssub.s32 %s18, 1
      %s370 = smul.u32 30, %s23
      %p371 = scmp.lt.s32.totalorder %s370, 59
      %s372 = scalar_select %p371, %s370, 59
      %s373 = smul.addr %s372, 8
      %s374 = smul.addr %s373, 4
      %s375 = scalar_lea.vmem %s0, %s374
      %p376 = pneg %p44
      %p377 = pneg %p41
      %p378 = pneg %p65
      %p379 = pneg %p62
      %p380 = pneg %p86
      %p381 = pneg %p83
      %p382 = pneg %p107
      %p383 = pneg %p104
      %p384 = pneg %p128
      %p385 = pneg %p125
      %p386 = pneg %p149
      %p387 = pneg %p146
      %p388 = pneg %p170
      %p389 = pneg %p167
      %p390 = pneg %p191
      %p391 = pneg %p188
      %p392 = pneg %p212
      %p393 = pneg %p209
      %p394 = pneg %p233
      %p395 = pneg %p230
      %p396 = pneg %p254
      %p397 = pneg %p251
      %p398 = pneg %p275
      %p399 = pneg %p272
      %p400 = pneg %p301
      %p401 = pneg %p298
      %s402 = smul.u32 2, %s23
      %p403 = scmp.lt.s32.totalorder %s402, 3
      %s404 = scalar_select %p403, %s402, 3
      %s405 = smul.addr %s404, 8
      %s406 = scalar_lea.vmem %s12, %s405
      %s407 = smul.u32 30, %s23
      %p408 = scmp.lt.s32.totalorder %s407, 59
      %s409 = scalar_select %p408, %s407, 59
      %s410 = smul.addr %s409, 8
      %s411 = smul.addr %s410, 4
      %s412 = scalar_lea.vmem %s0, %s411
      %s413 = smul.u32 30, %s23
      %s414 = smul.u32 2, %s23
      %p415 = scmp.lt.s32.totalorder %s414, 3
      %s416 = scalar_select %p415, %s414, 3
      %s417 = smul.addr %s416, 8
      %s418 = scalar_lea.vmem %s12, %s417
      %s419 = smul.u32 2, %s23
      %v421 = vlaneseq
      %v422 = vshrl.u32 %v421, 7
      %v423 = vadd.s32 %v422, 8
      %v424 = vadd.s32 %v422, 16
      %v425 = vadd.s32 %v422, 24
      %v426 = vadd.s32 %v422, 32
      %v427 = vadd.s32 %v422, 40
      %v428 = vadd.s32 %v422, 48
      %v429 = vadd.s32 %v422, 56
      %v430 = vadd.s32 %v422, 64
      %v431 = vadd.s32 %v422, 72
      %v432 = vadd.s32 %v422, 80
      %v433 = vadd.s32 %v422, 88
      %v434 = vadd.s32 %v422, 96
      %v435 = vadd.s32 %v422, 104
      %v436 = vadd.s32 %v422, 112
      %v437 = vadd.s32 %v422, 120
      %v438 = vadd.s32 %v422, 128
      %v439 = vadd.s32 %v422, 136
      %v440 = vadd.s32 %v422, 144
      %v441 = vadd.s32 %v422, 152
      %v442 = vadd.s32 %v422, 160
      %v443 = vadd.s32 %v422, 168
      %v444 = vadd.s32 %v422, 176
      %v445 = vadd.s32 %v422, 184
      %v446 = vadd.s32 %v422, 192
      %v447 = vadd.s32 %v422, 200
      %v448 = vadd.s32 %v422, 208
      %v449 = vadd.s32 %v422, 216
      %v450 = vadd.s32 %v422, 224
      %v451 = vadd.s32 %v422, 232
      %vm452 = vcmp.lt.s32.totalorder %v422, 0
      %v453 = vsub.s32 0, %v422
      %v454 = vsel %vm452, %v453, %v422
      %v455 = vand.u32 %v454, 65535
      %v456 = vshrl.u32 %v454, 16
      %v458 = vmul.u32 %v455, 34953
      %v459 = vmul.u32 %v455, 34952
      %v460 = vmul.u32 %v456, 34953
      %v461 = vmul.u32 %v456, 34952
      %v462 = vshll.u32 %v459, 16
      %v463 = vshrl.u32 %v459, 16
      %v464 = vshll.u32 %v460, 16
      %v465 = vshrl.u32 %v460, 16
      %vm466 = vc.u32 %v458, %v462
      %v467 = vsel %vm466, 1, 0
      %v468 = vadd.s32 %v458, %v462
      %v469 = vadd.s32 %v461, %v467
      %vm470 = vc.u32 %v468, %v464
      %v471 = vsel %vm470, 1, 0
      %v472 = vadd.s32 %v468, %v464
      %v473 = vadd.s32 %v469, %v471
      %v474 = vadd.s32 %v473, %v463
      %v475 = vadd.s32 %v474, %v465
      %v476 = vshrl.u32 %v475, 3
      %v477 = vmul.u32 %v476, 15
      %v478 = vsub.s32 %v454, %v477
      %v479 = vsub.s32 0, %v478
      %v480 = vsel %vm452, %v479, %v478
      %vm481 = vcmp.lt.s32.totalorder %v423, 0
      %v482 = vsub.s32 0, %v423
      %v483 = vsel %vm481, %v482, %v423
      %v484 = vand.u32 %v483, 65535
      %v485 = vshrl.u32 %v483, 16
      %v487 = vmul.u32 %v484, 34953
      %v488 = vmul.u32 %v484, 34952
      %v489 = vmul.u32 %v485, 34953
      %v490 = vmul.u32 %v485, 34952
      %v491 = vshll.u32 %v488, 16
      %v492 = vshrl.u32 %v488, 16
      %v493 = vshll.u32 %v489, 16
      %v494 = vshrl.u32 %v489, 16
      %vm495 = vc.u32 %v487, %v491
      %v496 = vsel %vm495, 1, 0
      %v497 = vadd.s32 %v487, %v491
      %v498 = vadd.s32 %v490, %v496
      %vm499 = vc.u32 %v497, %v493
      %v500 = vsel %vm499, 1, 0
      %v501 = vadd.s32 %v497, %v493
      %v502 = vadd.s32 %v498, %v500
      %v503 = vadd.s32 %v502, %v492
      %v504 = vadd.s32 %v503, %v494
      %v505 = vshrl.u32 %v504, 3
      %v506 = vmul.u32 %v505, 15
      %v507 = vsub.s32 %v483, %v506
      %v508 = vsub.s32 0, %v507
      %v509 = vsel %vm481, %v508, %v507
      %vm510 = vcmp.lt.s32.totalorder %v424, 0
      %v511 = vsub.s32 0, %v424
      %v512 = vsel %vm510, %v511, %v424
      %v513 = vand.u32 %v512, 65535
      %v514 = vshrl.u32 %v512, 16
      %v516 = vmul.u32 %v513, 34953
      %v517 = vmul.u32 %v513, 34952
      %v518 = vmul.u32 %v514, 34953
      %v519 = vmul.u32 %v514, 34952
      %v520 = vshll.u32 %v517, 16
      %v521 = vshrl.u32 %v517, 16
      %v522 = vshll.u32 %v518, 16
      %v523 = vshrl.u32 %v518, 16
      %vm524 = vc.u32 %v516, %v520
      %v525 = vsel %vm524, 1, 0
      %v526 = vadd.s32 %v516, %v520
      %v527 = vadd.s32 %v519, %v525
      %vm528 = vc.u32 %v526, %v522
      %v529 = vsel %vm528, 1, 0
      %v530 = vadd.s32 %v526, %v522
      %v531 = vadd.s32 %v527, %v529
      %v532 = vadd.s32 %v531, %v521
      %v533 = vadd.s32 %v532, %v523
      %v534 = vshrl.u32 %v533, 3
      %v535 = vmul.u32 %v534, 15
      %v536 = vsub.s32 %v512, %v535
      %v537 = vsub.s32 0, %v536
      %v538 = vsel %vm510, %v537, %v536
      %vm539 = vcmp.lt.s32.totalorder %v425, 0
      %v540 = vsub.s32 0, %v425
      %v541 = vsel %vm539, %v540, %v425
      %v542 = vand.u32 %v541, 65535
      %v543 = vshrl.u32 %v541, 16
      %v545 = vmul.u32 %v542, 34953
      %v546 = vmul.u32 %v542, 34952
      %v547 = vmul.u32 %v543, 34953
      %v548 = vmul.u32 %v543, 34952
      %v549 = vshll.u32 %v546, 16
      %v550 = vshrl.u32 %v546, 16
      %v551 = vshll.u32 %v547, 16
      %v552 = vshrl.u32 %v547, 16
      %vm553 = vc.u32 %v545, %v549
      %v554 = vsel %vm553, 1, 0
      %v555 = vadd.s32 %v545, %v549
      %v556 = vadd.s32 %v548, %v554
      %vm557 = vc.u32 %v555, %v551
      %v558 = vsel %vm557, 1, 0
      %v559 = vadd.s32 %v555, %v551
      %v560 = vadd.s32 %v556, %v558
      %v561 = vadd.s32 %v560, %v550
      %v562 = vadd.s32 %v561, %v552
      %v563 = vshrl.u32 %v562, 3
      %v564 = vmul.u32 %v563, 15
      %v565 = vsub.s32 %v541, %v564
      %v566 = vsub.s32 0, %v565
      %v567 = vsel %vm539, %v566, %v565
      %vm568 = vcmp.lt.s32.totalorder %v426, 0
      %v569 = vsub.s32 0, %v426
      %v570 = vsel %vm568, %v569, %v426
      %v571 = vand.u32 %v570, 65535
      %v572 = vshrl.u32 %v570, 16
      %v574 = vmul.u32 %v571, 34953
      %v575 = vmul.u32 %v571, 34952
      %v576 = vmul.u32 %v572, 34953
      %v577 = vmul.u32 %v572, 34952
      %v578 = vshll.u32 %v575, 16
      %v579 = vshrl.u32 %v575, 16
      %v580 = vshll.u32 %v576, 16
      %v581 = vshrl.u32 %v576, 16
      %vm582 = vc.u32 %v574, %v578
      %v583 = vsel %vm582, 1, 0
      %v584 = vadd.s32 %v574, %v578
      %v585 = vadd.s32 %v577, %v583
      %vm586 = vc.u32 %v584, %v580
      %v587 = vsel %vm586, 1, 0
      %v588 = vadd.s32 %v584, %v580
      %v589 = vadd.s32 %v585, %v587
      %v590 = vadd.s32 %v589, %v579
      %v591 = vadd.s32 %v590, %v581
      %v592 = vshrl.u32 %v591, 3
      %v593 = vmul.u32 %v592, 15
      %v594 = vsub.s32 %v570, %v593
      %v595 = vsub.s32 0, %v594
      %v596 = vsel %vm568, %v595, %v594
      %vm597 = vcmp.lt.s32.totalorder %v427, 0
      %v598 = vsub.s32 0, %v427
      %v599 = vsel %vm597, %v598, %v427
      %v600 = vand.u32 %v599, 65535
      %v601 = vshrl.u32 %v599, 16
      %v603 = vmul.u32 %v600, 34953
      %v604 = vmul.u32 %v600, 34952
      %v605 = vmul.u32 %v601, 34953
      %v606 = vmul.u32 %v601, 34952
      %v607 = vshll.u32 %v604, 16
      %v608 = vshrl.u32 %v604, 16
      %v609 = vshll.u32 %v605, 16
      %v610 = vshrl.u32 %v605, 16
      %vm611 = vc.u32 %v603, %v607
      %v612 = vsel %vm611, 1, 0
      %v613 = vadd.s32 %v603, %v607
      %v614 = vadd.s32 %v606, %v612
      %vm615 = vc.u32 %v613, %v609
      %v616 = vsel %vm615, 1, 0
      %v617 = vadd.s32 %v613, %v609
      %v618 = vadd.s32 %v614, %v616
      %v619 = vadd.s32 %v618, %v608
      %v620 = vadd.s32 %v619, %v610
      %v621 = vshrl.u32 %v620, 3
      %v622 = vmul.u32 %v621, 15
      %v623 = vsub.s32 %v599, %v622
      %v624 = vsub.s32 0, %v623
      %v625 = vsel %vm597, %v624, %v623
      %vm626 = vcmp.lt.s32.totalorder %v428, 0
      %v627 = vsub.s32 0, %v428
      %v628 = vsel %vm626, %v627, %v428
      %v629 = vand.u32 %v628, 65535
      %v630 = vshrl.u32 %v628, 16
      %v632 = vmul.u32 %v629, 34953
      %v633 = vmul.u32 %v629, 34952
      %v634 = vmul.u32 %v630, 34953
      %v635 = vmul.u32 %v630, 34952
      %v636 = vshll.u32 %v633, 16
      %v637 = vshrl.u32 %v633, 16
      %v638 = vshll.u32 %v634, 16
      %v639 = vshrl.u32 %v634, 16
      %vm640 = vc.u32 %v632, %v636
      %v641 = vsel %vm640, 1, 0
      %v642 = vadd.s32 %v632, %v636
      %v643 = vadd.s32 %v635, %v641
      %vm644 = vc.u32 %v642, %v638
      %v645 = vsel %vm644, 1, 0
      %v646 = vadd.s32 %v642, %v638
      %v647 = vadd.s32 %v643, %v645
      %v648 = vadd.s32 %v647, %v637
      %v649 = vadd.s32 %v648, %v639
      %v650 = vshrl.u32 %v649, 3
      %v651 = vmul.u32 %v650, 15
      %v652 = vsub.s32 %v628, %v651
      %v653 = vsub.s32 0, %v652
      %v654 = vsel %vm626, %v653, %v652
      %vm655 = vcmp.lt.s32.totalorder %v429, 0
      %v656 = vsub.s32 0, %v429
      %v657 = vsel %vm655, %v656, %v429
      %v658 = vand.u32 %v657, 65535
      %v659 = vshrl.u32 %v657, 16
      %v661 = vmul.u32 %v658, 34953
      %v662 = vmul.u32 %v658, 34952
      %v663 = vmul.u32 %v659, 34953
      %v664 = vmul.u32 %v659, 34952
      %v665 = vshll.u32 %v662, 16
      %v666 = vshrl.u32 %v662, 16
      %v667 = vshll.u32 %v663, 16
      %v668 = vshrl.u32 %v663, 16
      %vm669 = vc.u32 %v661, %v665
      %v670 = vsel %vm669, 1, 0
      %v671 = vadd.s32 %v661, %v665
      %v672 = vadd.s32 %v664, %v670
      %vm673 = vc.u32 %v671, %v667
      %v674 = vsel %vm673, 1, 0
      %v675 = vadd.s32 %v671, %v667
      %v676 = vadd.s32 %v672, %v674
      %v677 = vadd.s32 %v676, %v666
      %v678 = vadd.s32 %v677, %v668
      %v679 = vshrl.u32 %v678, 3
      %v680 = vmul.u32 %v679, 15
      %v681 = vsub.s32 %v657, %v680
      %v682 = vsub.s32 0, %v681
      %v683 = vsel %vm655, %v682, %v681
      %vm684 = vcmp.lt.s32.totalorder %v430, 0
      %v685 = vsub.s32 0, %v430
      %v686 = vsel %vm684, %v685, %v430
      %v687 = vand.u32 %v686, 65535
      %v688 = vshrl.u32 %v686, 16
      %v690 = vmul.u32 %v687, 34953
      %v691 = vmul.u32 %v687, 34952
      %v692 = vmul.u32 %v688, 34953
      %v693 = vmul.u32 %v688, 34952
      %v694 = vshll.u32 %v691, 16
      %v695 = vshrl.u32 %v691, 16
      %v696 = vshll.u32 %v692, 16
      %v697 = vshrl.u32 %v692, 16
      %vm698 = vc.u32 %v690, %v694
      %v699 = vsel %vm698, 1, 0
      %v700 = vadd.s32 %v690, %v694
      %v701 = vadd.s32 %v693, %v699
      %vm702 = vc.u32 %v700, %v696
      %v703 = vsel %vm702, 1, 0
      %v704 = vadd.s32 %v700, %v696
      %v705 = vadd.s32 %v701, %v703
      %v706 = vadd.s32 %v705, %v695
      %v707 = vadd.s32 %v706, %v697
      %v708 = vshrl.u32 %v707, 3
      %v709 = vmul.u32 %v708, 15
      %v710 = vsub.s32 %v686, %v709
      %v711 = vsub.s32 0, %v710
      %v712 = vsel %vm684, %v711, %v710
      %vm713 = vcmp.lt.s32.totalorder %v431, 0
      %v714 = vsub.s32 0, %v431
      %v715 = vsel %vm713, %v714, %v431
      %v716 = vand.u32 %v715, 65535
      %v717 = vshrl.u32 %v715, 16
      %v719 = vmul.u32 %v716, 34953
      %v720 = vmul.u32 %v716, 34952
      %v721 = vmul.u32 %v717, 34953
      %v722 = vmul.u32 %v717, 34952
      %v723 = vshll.u32 %v720, 16
      %v724 = vshrl.u32 %v720, 16
      %v725 = vshll.u32 %v721, 16
      %v726 = vshrl.u32 %v721, 16
      %vm727 = vc.u32 %v719, %v723
      %v728 = vsel %vm727, 1, 0
      %v729 = vadd.s32 %v719, %v723
      %v730 = vadd.s32 %v722, %v728
      %vm731 = vc.u32 %v729, %v725
      %v732 = vsel %vm731, 1, 0
      %v733 = vadd.s32 %v729, %v725
      %v734 = vadd.s32 %v730, %v732
      %v735 = vadd.s32 %v734, %v724
      %v736 = vadd.s32 %v735, %v726
      %v737 = vshrl.u32 %v736, 3
      %v738 = vmul.u32 %v737, 15
      %v739 = vsub.s32 %v715, %v738
      %v740 = vsub.s32 0, %v739
      %v741 = vsel %vm713, %v740, %v739
      %vm742 = vcmp.lt.s32.totalorder %v432, 0
      %v743 = vsub.s32 0, %v432
      %v744 = vsel %vm742, %v743, %v432
      %v745 = vand.u32 %v744, 65535
      %v746 = vshrl.u32 %v744, 16
      %v748 = vmul.u32 %v745, 34953
      %v749 = vmul.u32 %v745, 34952
      %v750 = vmul.u32 %v746, 34953
      %v751 = vmul.u32 %v746, 34952
      %v752 = vshll.u32 %v749, 16
      %v753 = vshrl.u32 %v749, 16
      %v754 = vshll.u32 %v750, 16
      %v755 = vshrl.u32 %v750, 16
      %vm756 = vc.u32 %v748, %v752
      %v757 = vsel %vm756, 1, 0
      %v758 = vadd.s32 %v748, %v752
      %v759 = vadd.s32 %v751, %v757
      %vm760 = vc.u32 %v758, %v754
      %v761 = vsel %vm760, 1, 0
      %v762 = vadd.s32 %v758, %v754
      %v763 = vadd.s32 %v759, %v761
      %v764 = vadd.s32 %v763, %v753
      %v765 = vadd.s32 %v764, %v755
      %v766 = vshrl.u32 %v765, 3
      %v767 = vmul.u32 %v766, 15
      %v768 = vsub.s32 %v744, %v767
      %v769 = vsub.s32 0, %v768
      %v770 = vsel %vm742, %v769, %v768
      %vm771 = vcmp.lt.s32.totalorder %v433, 0
      %v772 = vsub.s32 0, %v433
      %v773 = vsel %vm771, %v772, %v433
      %v774 = vand.u32 %v773, 65535
      %v775 = vshrl.u32 %v773, 16
      %v777 = vmul.u32 %v774, 34953
      %v778 = vmul.u32 %v774, 34952
      %v779 = vmul.u32 %v775, 34953
      %v780 = vmul.u32 %v775, 34952
      %v781 = vshll.u32 %v778, 16
      %v782 = vshrl.u32 %v778, 16
      %v783 = vshll.u32 %v779, 16
      %v784 = vshrl.u32 %v779, 16
      %vm785 = vc.u32 %v777, %v781
      %v786 = vsel %vm785, 1, 0
      %v787 = vadd.s32 %v777, %v781
      %v788 = vadd.s32 %v780, %v786
      %vm789 = vc.u32 %v787, %v783
      %v790 = vsel %vm789, 1, 0
      %v791 = vadd.s32 %v787, %v783
      %v792 = vadd.s32 %v788, %v790
      %v793 = vadd.s32 %v792, %v782
      %v794 = vadd.s32 %v793, %v784
      %v795 = vshrl.u32 %v794, 3
      %v796 = vmul.u32 %v795, 15
      %v797 = vsub.s32 %v773, %v796
      %v798 = vsub.s32 0, %v797
      %v799 = vsel %vm771, %v798, %v797
      %vm800 = vcmp.lt.s32.totalorder %v434, 0
      %v801 = vsub.s32 0, %v434
      %v802 = vsel %vm800, %v801, %v434
      %v803 = vand.u32 %v802, 65535
      %v804 = vshrl.u32 %v802, 16
      %v806 = vmul.u32 %v803, 34953
      %v807 = vmul.u32 %v803, 34952
      %v808 = vmul.u32 %v804, 34953
      %v809 = vmul.u32 %v804, 34952
      %v810 = vshll.u32 %v807, 16
      %v811 = vshrl.u32 %v807, 16
      %v812 = vshll.u32 %v808, 16
      %v813 = vshrl.u32 %v808, 16
      %vm814 = vc.u32 %v806, %v810
      %v815 = vsel %vm814, 1, 0
      %v816 = vadd.s32 %v806, %v810
      %v817 = vadd.s32 %v809, %v815
      %vm818 = vc.u32 %v816, %v812
      %v819 = vsel %vm818, 1, 0
      %v820 = vadd.s32 %v816, %v812
      %v821 = vadd.s32 %v817, %v819
      %v822 = vadd.s32 %v821, %v811
      %v823 = vadd.s32 %v822, %v813
      %v824 = vshrl.u32 %v823, 3
      %v825 = vmul.u32 %v824, 15
      %v826 = vsub.s32 %v802, %v825
      %v827 = vsub.s32 0, %v826
      %v828 = vsel %vm800, %v827, %v826
      %vm829 = vcmp.lt.s32.totalorder %v435, 0
      %v830 = vsub.s32 0, %v435
      %v831 = vsel %vm829, %v830, %v435
      %v832 = vand.u32 %v831, 65535
      %v833 = vshrl.u32 %v831, 16
      %v835 = vmul.u32 %v832, 34953
      %v836 = vmul.u32 %v832, 34952
      %v837 = vmul.u32 %v833, 34953
      %v838 = vmul.u32 %v833, 34952
      %v839 = vshll.u32 %v836, 16
      %v840 = vshrl.u32 %v836, 16
      %v841 = vshll.u32 %v837, 16
      %v842 = vshrl.u32 %v837, 16
      %vm843 = vc.u32 %v835, %v839
      %v844 = vsel %vm843, 1, 0
      %v845 = vadd.s32 %v835, %v839
      %v846 = vadd.s32 %v838, %v844
      %vm847 = vc.u32 %v845, %v841
      %v848 = vsel %vm847, 1, 0
      %v849 = vadd.s32 %v845, %v841
      %v850 = vadd.s32 %v846, %v848
      %v851 = vadd.s32 %v850, %v840
      %v852 = vadd.s32 %v851, %v842
      %v853 = vshrl.u32 %v852, 3
      %v854 = vmul.u32 %v853, 15
      %v855 = vsub.s32 %v831, %v854
      %v856 = vsub.s32 0, %v855
      %v857 = vsel %vm829, %v856, %v855
      %vm858 = vcmp.lt.s32.totalorder %v436, 0
      %v859 = vsub.s32 0, %v436
      %v860 = vsel %vm858, %v859, %v436
      %v861 = vand.u32 %v860, 65535
      %v862 = vshrl.u32 %v860, 16
      %v864 = vmul.u32 %v861, 34953
      %v865 = vmul.u32 %v861, 34952
      %v866 = vmul.u32 %v862, 34953
      %v867 = vmul.u32 %v862, 34952
      %v868 = vshll.u32 %v865, 16
      %v869 = vshrl.u32 %v865, 16
      %v870 = vshll.u32 %v866, 16
      %v871 = vshrl.u32 %v866, 16
      %vm872 = vc.u32 %v864, %v868
      %v873 = vsel %vm872, 1, 0
      %v874 = vadd.s32 %v864, %v868
      %v875 = vadd.s32 %v867, %v873
      %vm876 = vc.u32 %v874, %v870
      %v877 = vsel %vm876, 1, 0
      %v878 = vadd.s32 %v874, %v870
      %v879 = vadd.s32 %v875, %v877
      %v880 = vadd.s32 %v879, %v869
      %v881 = vadd.s32 %v880, %v871
      %v882 = vshrl.u32 %v881, 3
      %v883 = vmul.u32 %v882, 15
      %v884 = vsub.s32 %v860, %v883
      %v885 = vsub.s32 0, %v884
      %v886 = vsel %vm858, %v885, %v884
      %vm887 = vcmp.lt.s32.totalorder %v437, 0
      %v888 = vsub.s32 0, %v437
      %v889 = vsel %vm887, %v888, %v437
      %v890 = vand.u32 %v889, 65535
      %v891 = vshrl.u32 %v889, 16
      %v893 = vmul.u32 %v890, 34953
      %v894 = vmul.u32 %v890, 34952
      %v895 = vmul.u32 %v891, 34953
      %v896 = vmul.u32 %v891, 34952
      %v897 = vshll.u32 %v894, 16
      %v898 = vshrl.u32 %v894, 16
      %v899 = vshll.u32 %v895, 16
      %v900 = vshrl.u32 %v895, 16
      %vm901 = vc.u32 %v893, %v897
      %v902 = vsel %vm901, 1, 0
      %v903 = vadd.s32 %v893, %v897
      %v904 = vadd.s32 %v896, %v902
      %vm905 = vc.u32 %v903, %v899
      %v906 = vsel %vm905, 1, 0
      %v907 = vadd.s32 %v903, %v899
      %v908 = vadd.s32 %v904, %v906
      %v909 = vadd.s32 %v908, %v898
      %v910 = vadd.s32 %v909, %v900
      %v911 = vshrl.u32 %v910, 3
      %v912 = vmul.u32 %v911, 15
      %v913 = vsub.s32 %v889, %v912
      %v914 = vsub.s32 0, %v913
      %v915 = vsel %vm887, %v914, %v913
      %vm916 = vcmp.lt.s32.totalorder %v438, 0
      %v917 = vsub.s32 0, %v438
      %v918 = vsel %vm916, %v917, %v438
      %v919 = vand.u32 %v918, 65535
      %v920 = vshrl.u32 %v918, 16
      %v922 = vmul.u32 %v919, 34953
      %v923 = vmul.u32 %v919, 34952
      %v924 = vmul.u32 %v920, 34953
      %v925 = vmul.u32 %v920, 34952
      %v926 = vshll.u32 %v923, 16
      %v927 = vshrl.u32 %v923, 16
      %v928 = vshll.u32 %v924, 16
      %v929 = vshrl.u32 %v924, 16
      %vm930 = vc.u32 %v922, %v926
      %v931 = vsel %vm930, 1, 0
      %v932 = vadd.s32 %v922, %v926
      %v933 = vadd.s32 %v925, %v931
      %vm934 = vc.u32 %v932, %v928
      %v935 = vsel %vm934, 1, 0
      %v936 = vadd.s32 %v932, %v928
      %v937 = vadd.s32 %v933, %v935
      %v938 = vadd.s32 %v937, %v927
      %v939 = vadd.s32 %v938, %v929
      %v940 = vshrl.u32 %v939, 3
      %v941 = vmul.u32 %v940, 15
      %v942 = vsub.s32 %v918, %v941
      %v943 = vsub.s32 0, %v942
      %v944 = vsel %vm916, %v943, %v942
      %vm945 = vcmp.lt.s32.totalorder %v439, 0
      %v946 = vsub.s32 0, %v439
      %v947 = vsel %vm945, %v946, %v439
      %v948 = vand.u32 %v947, 65535
      %v949 = vshrl.u32 %v947, 16
      %v951 = vmul.u32 %v948, 34953
      %v952 = vmul.u32 %v948, 34952
      %v953 = vmul.u32 %v949, 34953
      %v954 = vmul.u32 %v949, 34952
      %v955 = vshll.u32 %v952, 16
      %v956 = vshrl.u32 %v952, 16
      %v957 = vshll.u32 %v953, 16
      %v958 = vshrl.u32 %v953, 16
      %vm959 = vc.u32 %v951, %v955
      %v960 = vsel %vm959, 1, 0
      %v961 = vadd.s32 %v951, %v955
      %v962 = vadd.s32 %v954, %v960
      %vm963 = vc.u32 %v961, %v957
      %v964 = vsel %vm963, 1, 0
      %v965 = vadd.s32 %v961, %v957
      %v966 = vadd.s32 %v962, %v964
      %v967 = vadd.s32 %v966, %v956
      %v968 = vadd.s32 %v967, %v958
      %v969 = vshrl.u32 %v968, 3
      %v970 = vmul.u32 %v969, 15
      %v971 = vsub.s32 %v947, %v970
      %v972 = vsub.s32 0, %v971
      %v973 = vsel %vm945, %v972, %v971
      %vm974 = vcmp.lt.s32.totalorder %v440, 0
      %v975 = vsub.s32 0, %v440
      %v976 = vsel %vm974, %v975, %v440
      %v977 = vand.u32 %v976, 65535
      %v978 = vshrl.u32 %v976, 16
      %v980 = vmul.u32 %v977, 34953
      %v981 = vmul.u32 %v977, 34952
      %v982 = vmul.u32 %v978, 34953
      %v983 = vmul.u32 %v978, 34952
      %v984 = vshll.u32 %v981, 16
      %v985 = vshrl.u32 %v981, 16
      %v986 = vshll.u32 %v982, 16
      %v987 = vshrl.u32 %v982, 16
      %vm988 = vc.u32 %v980, %v984
      %v989 = vsel %vm988, 1, 0
      %v990 = vadd.s32 %v980, %v984
      %v991 = vadd.s32 %v983, %v989
      %vm992 = vc.u32 %v990, %v986
      %v993 = vsel %vm992, 1, 0
      %v994 = vadd.s32 %v990, %v986
      %v995 = vadd.s32 %v991, %v993
      %v996 = vadd.s32 %v995, %v985
      %v997 = vadd.s32 %v996, %v987
      %v998 = vshrl.u32 %v997, 3
      %v999 = vmul.u32 %v998, 15
      %v1000 = vsub.s32 %v976, %v999
      %v1001 = vsub.s32 0, %v1000
      %v1002 = vsel %vm974, %v1001, %v1000
      %vm1003 = vcmp.lt.s32.totalorder %v441, 0
      %v1004 = vsub.s32 0, %v441
      %v1005 = vsel %vm1003, %v1004, %v441
      %v1006 = vand.u32 %v1005, 65535
      %v1007 = vshrl.u32 %v1005, 16
      %v1009 = vmul.u32 %v1006, 34953
      %v1010 = vmul.u32 %v1006, 34952
      %v1011 = vmul.u32 %v1007, 34953
      %v1012 = vmul.u32 %v1007, 34952
      %v1013 = vshll.u32 %v1010, 16
      %v1014 = vshrl.u32 %v1010, 16
      %v1015 = vshll.u32 %v1011, 16
      %v1016 = vshrl.u32 %v1011, 16
      %vm1017 = vc.u32 %v1009, %v1013
      %v1018 = vsel %vm1017, 1, 0
      %v1019 = vadd.s32 %v1009, %v1013
      %v1020 = vadd.s32 %v1012, %v1018
      %vm1021 = vc.u32 %v1019, %v1015
      %v1022 = vsel %vm1021, 1, 0
      %v1023 = vadd.s32 %v1019, %v1015
      %v1024 = vadd.s32 %v1020, %v1022
      %v1025 = vadd.s32 %v1024, %v1014
      %v1026 = vadd.s32 %v1025, %v1016
      %v1027 = vshrl.u32 %v1026, 3
      %v1028 = vmul.u32 %v1027, 15
      %v1029 = vsub.s32 %v1005, %v1028
      %v1030 = vsub.s32 0, %v1029
      %v1031 = vsel %vm1003, %v1030, %v1029
      %vm1032 = vcmp.lt.s32.totalorder %v442, 0
      %v1033 = vsub.s32 0, %v442
      %v1034 = vsel %vm1032, %v1033, %v442
      %v1035 = vand.u32 %v1034, 65535
      %v1036 = vshrl.u32 %v1034, 16
      %v1038 = vmul.u32 %v1035, 34953
      %v1039 = vmul.u32 %v1035, 34952
      %v1040 = vmul.u32 %v1036, 34953
      %v1041 = vmul.u32 %v1036, 34952
      %v1042 = vshll.u32 %v1039, 16
      %v1043 = vshrl.u32 %v1039, 16
      %v1044 = vshll.u32 %v1040, 16
      %v1045 = vshrl.u32 %v1040, 16
      %vm1046 = vc.u32 %v1038, %v1042
      %v1047 = vsel %vm1046, 1, 0
      %v1048 = vadd.s32 %v1038, %v1042
      %v1049 = vadd.s32 %v1041, %v1047
      %vm1050 = vc.u32 %v1048, %v1044
      %v1051 = vsel %vm1050, 1, 0
      %v1052 = vadd.s32 %v1048, %v1044
      %v1053 = vadd.s32 %v1049, %v1051
      %v1054 = vadd.s32 %v1053, %v1043
      %v1055 = vadd.s32 %v1054, %v1045
      %v1056 = vshrl.u32 %v1055, 3
      %v1057 = vmul.u32 %v1056, 15
      %v1058 = vsub.s32 %v1034, %v1057
      %v1059 = vsub.s32 0, %v1058
      %v1060 = vsel %vm1032, %v1059, %v1058
      %vm1061 = vcmp.lt.s32.totalorder %v443, 0
      %v1062 = vsub.s32 0, %v443
      %v1063 = vsel %vm1061, %v1062, %v443
      %v1064 = vand.u32 %v1063, 65535
      %v1065 = vshrl.u32 %v1063, 16
      %v1067 = vmul.u32 %v1064, 34953
      %v1068 = vmul.u32 %v1064, 34952
      %v1069 = vmul.u32 %v1065, 34953
      %v1070 = vmul.u32 %v1065, 34952
      %v1071 = vshll.u32 %v1068, 16
      %v1072 = vshrl.u32 %v1068, 16
      %v1073 = vshll.u32 %v1069, 16
      %v1074 = vshrl.u32 %v1069, 16
      %vm1075 = vc.u32 %v1067, %v1071
      %v1076 = vsel %vm1075, 1, 0
      %v1077 = vadd.s32 %v1067, %v1071
      %v1078 = vadd.s32 %v1070, %v1076
      %vm1079 = vc.u32 %v1077, %v1073
      %v1080 = vsel %vm1079, 1, 0
      %v1081 = vadd.s32 %v1077, %v1073
      %v1082 = vadd.s32 %v1078, %v1080
      %v1083 = vadd.s32 %v1082, %v1072
      %v1084 = vadd.s32 %v1083, %v1074
      %v1085 = vshrl.u32 %v1084, 3
      %v1086 = vmul.u32 %v1085, 15
      %v1087 = vsub.s32 %v1063, %v1086
      %v1088 = vsub.s32 0, %v1087
      %v1089 = vsel %vm1061, %v1088, %v1087
      %vm1090 = vcmp.lt.s32.totalorder %v444, 0
      %v1091 = vsub.s32 0, %v444
      %v1092 = vsel %vm1090, %v1091, %v444
      %v1093 = vand.u32 %v1092, 65535
      %v1094 = vshrl.u32 %v1092, 16
      %v1096 = vmul.u32 %v1093, 34953
      %v1097 = vmul.u32 %v1093, 34952
      %v1098 = vmul.u32 %v1094, 34953
      %v1099 = vmul.u32 %v1094, 34952
      %v1100 = vshll.u32 %v1097, 16
      %v1101 = vshrl.u32 %v1097, 16
      %v1102 = vshll.u32 %v1098, 16
      %v1103 = vshrl.u32 %v1098, 16
      %vm1104 = vc.u32 %v1096, %v1100
      %v1105 = vsel %vm1104, 1, 0
      %v1106 = vadd.s32 %v1096, %v1100
      %v1107 = vadd.s32 %v1099, %v1105
      %vm1108 = vc.u32 %v1106, %v1102
      %v1109 = vsel %vm1108, 1, 0
      %v1110 = vadd.s32 %v1106, %v1102
      %v1111 = vadd.s32 %v1107, %v1109
      %v1112 = vadd.s32 %v1111, %v1101
      %v1113 = vadd.s32 %v1112, %v1103
      %v1114 = vshrl.u32 %v1113, 3
      %v1115 = vmul.u32 %v1114, 15
      %v1116 = vsub.s32 %v1092, %v1115
      %v1117 = vsub.s32 0, %v1116
      %v1118 = vsel %vm1090, %v1117, %v1116
      %vm1119 = vcmp.lt.s32.totalorder %v445, 0
      %v1120 = vsub.s32 0, %v445
      %v1121 = vsel %vm1119, %v1120, %v445
      %v1122 = vand.u32 %v1121, 65535
      %v1123 = vshrl.u32 %v1121, 16
      %v1125 = vmul.u32 %v1122, 34953
      %v1126 = vmul.u32 %v1122, 34952
      %v1127 = vmul.u32 %v1123, 34953
      %v1128 = vmul.u32 %v1123, 34952
      %v1129 = vshll.u32 %v1126, 16
      %v1130 = vshrl.u32 %v1126, 16
      %v1131 = vshll.u32 %v1127, 16
      %v1132 = vshrl.u32 %v1127, 16
      %vm1133 = vc.u32 %v1125, %v1129
      %v1134 = vsel %vm1133, 1, 0
      %v1135 = vadd.s32 %v1125, %v1129
      %v1136 = vadd.s32 %v1128, %v1134
      %vm1137 = vc.u32 %v1135, %v1131
      %v1138 = vsel %vm1137, 1, 0
      %v1139 = vadd.s32 %v1135, %v1131
      %v1140 = vadd.s32 %v1136, %v1138
      %v1141 = vadd.s32 %v1140, %v1130
      %v1142 = vadd.s32 %v1141, %v1132
      %v1143 = vshrl.u32 %v1142, 3
      %v1144 = vmul.u32 %v1143, 15
      %v1145 = vsub.s32 %v1121, %v1144
      %v1146 = vsub.s32 0, %v1145
      %v1147 = vsel %vm1119, %v1146, %v1145
      %vm1148 = vcmp.lt.s32.totalorder %v446, 0
      %v1149 = vsub.s32 0, %v446
      %v1150 = vsel %vm1148, %v1149, %v446
      %v1151 = vand.u32 %v1150, 65535
      %v1152 = vshrl.u32 %v1150, 16
      %v1154 = vmul.u32 %v1151, 34953
      %v1155 = vmul.u32 %v1151, 34952
      %v1156 = vmul.u32 %v1152, 34953
      %v1157 = vmul.u32 %v1152, 34952
      %v1158 = vshll.u32 %v1155, 16
      %v1159 = vshrl.u32 %v1155, 16
      %v1160 = vshll.u32 %v1156, 16
      %v1161 = vshrl.u32 %v1156, 16
      %vm1162 = vc.u32 %v1154, %v1158
      %v1163 = vsel %vm1162, 1, 0
      %v1164 = vadd.s32 %v1154, %v1158
      %v1165 = vadd.s32 %v1157, %v1163
      %vm1166 = vc.u32 %v1164, %v1160
      %v1167 = vsel %vm1166, 1, 0
      %v1168 = vadd.s32 %v1164, %v1160
      %v1169 = vadd.s32 %v1165, %v1167
      %v1170 = vadd.s32 %v1169, %v1159
      %v1171 = vadd.s32 %v1170, %v1161
      %v1172 = vshrl.u32 %v1171, 3
      %v1173 = vmul.u32 %v1172, 15
      %v1174 = vsub.s32 %v1150, %v1173
      %v1175 = vsub.s32 0, %v1174
      %v1176 = vsel %vm1148, %v1175, %v1174
      %vm1177 = vcmp.lt.s32.totalorder %v447, 0
      %v1178 = vsub.s32 0, %v447
      %v1179 = vsel %vm1177, %v1178, %v447
      %v1180 = vand.u32 %v1179, 65535
      %v1181 = vshrl.u32 %v1179, 16
      %v1183 = vmul.u32 %v1180, 34953
      %v1184 = vmul.u32 %v1180, 34952
      %v1185 = vmul.u32 %v1181, 34953
      %v1186 = vmul.u32 %v1181, 34952
      %v1187 = vshll.u32 %v1184, 16
      %v1188 = vshrl.u32 %v1184, 16
      %v1189 = vshll.u32 %v1185, 16
      %v1190 = vshrl.u32 %v1185, 16
      %vm1191 = vc.u32 %v1183, %v1187
      %v1192 = vsel %vm1191, 1, 0
      %v1193 = vadd.s32 %v1183, %v1187
      %v1194 = vadd.s32 %v1186, %v1192
      %vm1195 = vc.u32 %v1193, %v1189
      %v1196 = vsel %vm1195, 1, 0
      %v1197 = vadd.s32 %v1193, %v1189
      %v1198 = vadd.s32 %v1194, %v1196
      %v1199 = vadd.s32 %v1198, %v1188
      %v1200 = vadd.s32 %v1199, %v1190
      %v1201 = vshrl.u32 %v1200, 3
      %v1202 = vmul.u32 %v1201, 15
      %v1203 = vsub.s32 %v1179, %v1202
      %v1204 = vsub.s32 0, %v1203
      %v1205 = vsel %vm1177, %v1204, %v1203
      %vm1206 = vcmp.lt.s32.totalorder %v448, 0
      %v1207 = vsub.s32 0, %v448
      %v1208 = vsel %vm1206, %v1207, %v448
      %v1209 = vand.u32 %v1208, 65535
      %v1210 = vshrl.u32 %v1208, 16
      %v1212 = vmul.u32 %v1209, 34953
      %v1213 = vmul.u32 %v1209, 34952
      %v1214 = vmul.u32 %v1210, 34953
      %v1215 = vmul.u32 %v1210, 34952
      %v1216 = vshll.u32 %v1213, 16
      %v1217 = vshrl.u32 %v1213, 16
      %v1218 = vshll.u32 %v1214, 16
      %v1219 = vshrl.u32 %v1214, 16
      %vm1220 = vc.u32 %v1212, %v1216
      %v1221 = vsel %vm1220, 1, 0
      %v1222 = vadd.s32 %v1212, %v1216
      %v1223 = vadd.s32 %v1215, %v1221
      %vm1224 = vc.u32 %v1222, %v1218
      %v1225 = vsel %vm1224, 1, 0
      %v1226 = vadd.s32 %v1222, %v1218
      %v1227 = vadd.s32 %v1223, %v1225
      %v1228 = vadd.s32 %v1227, %v1217
      %v1229 = vadd.s32 %v1228, %v1219
      %v1230 = vshrl.u32 %v1229, 3
      %v1231 = vmul.u32 %v1230, 15
      %v1232 = vsub.s32 %v1208, %v1231
      %v1233 = vsub.s32 0, %v1232
      %v1234 = vsel %vm1206, %v1233, %v1232
      %vm1235 = vcmp.lt.s32.totalorder %v449, 0
      %v1236 = vsub.s32 0, %v449
      %v1237 = vsel %vm1235, %v1236, %v449
      %v1238 = vand.u32 %v1237, 65535
      %v1239 = vshrl.u32 %v1237, 16
      %v1241 = vmul.u32 %v1238, 34953
      %v1242 = vmul.u32 %v1238, 34952
      %v1243 = vmul.u32 %v1239, 34953
      %v1244 = vmul.u32 %v1239, 34952
      %v1245 = vshll.u32 %v1242, 16
      %v1246 = vshrl.u32 %v1242, 16
      %v1247 = vshll.u32 %v1243, 16
      %v1248 = vshrl.u32 %v1243, 16
      %vm1249 = vc.u32 %v1241, %v1245
      %v1250 = vsel %vm1249, 1, 0
      %v1251 = vadd.s32 %v1241, %v1245
      %v1252 = vadd.s32 %v1244, %v1250
      %vm1253 = vc.u32 %v1251, %v1247
      %v1254 = vsel %vm1253, 1, 0
      %v1255 = vadd.s32 %v1251, %v1247
      %v1256 = vadd.s32 %v1252, %v1254
      %v1257 = vadd.s32 %v1256, %v1246
      %v1258 = vadd.s32 %v1257, %v1248
      %v1259 = vshrl.u32 %v1258, 3
      %v1260 = vmul.u32 %v1259, 15
      %v1261 = vsub.s32 %v1237, %v1260
      %v1262 = vsub.s32 0, %v1261
      %v1263 = vsel %vm1235, %v1262, %v1261
      %vm1264 = vcmp.lt.s32.totalorder %v450, 0
      %v1265 = vsub.s32 0, %v450
      %v1266 = vsel %vm1264, %v1265, %v450
      %v1267 = vand.u32 %v1266, 65535
      %v1268 = vshrl.u32 %v1266, 16
      %v1270 = vmul.u32 %v1267, 34953
      %v1271 = vmul.u32 %v1267, 34952
      %v1272 = vmul.u32 %v1268, 34953
      %v1273 = vmul.u32 %v1268, 34952
      %v1274 = vshll.u32 %v1271, 16
      %v1275 = vshrl.u32 %v1271, 16
      %v1276 = vshll.u32 %v1272, 16
      %v1277 = vshrl.u32 %v1272, 16
      %vm1278 = vc.u32 %v1270, %v1274
      %v1279 = vsel %vm1278, 1, 0
      %v1280 = vadd.s32 %v1270, %v1274
      %v1281 = vadd.s32 %v1273, %v1279
      %vm1282 = vc.u32 %v1280, %v1276
      %v1283 = vsel %vm1282, 1, 0
      %v1284 = vadd.s32 %v1280, %v1276
      %v1285 = vadd.s32 %v1281, %v1283
      %v1286 = vadd.s32 %v1285, %v1275
      %v1287 = vadd.s32 %v1286, %v1277
      %v1288 = vshrl.u32 %v1287, 3
      %v1289 = vmul.u32 %v1288, 15
      %v1290 = vsub.s32 %v1266, %v1289
      %v1291 = vsub.s32 0, %v1290
      %v1292 = vsel %vm1264, %v1291, %v1290
      %vm1293 = vcmp.lt.s32.totalorder %v451, 0
      %v1294 = vsub.s32 0, %v451
      %v1295 = vsel %vm1293, %v1294, %v451
      %v1296 = vand.u32 %v1295, 65535
      %v1297 = vshrl.u32 %v1295, 16
      %v1299 = vmul.u32 %v1296, 34953
      %v1300 = vmul.u32 %v1296, 34952
      %v1301 = vmul.u32 %v1297, 34953
      %v1302 = vmul.u32 %v1297, 34952
      %v1303 = vshll.u32 %v1300, 16
      %v1304 = vshrl.u32 %v1300, 16
      %v1305 = vshll.u32 %v1301, 16
      %v1306 = vshrl.u32 %v1301, 16
      %vm1307 = vc.u32 %v1299, %v1303
      %v1308 = vsel %vm1307, 1, 0
      %v1309 = vadd.s32 %v1299, %v1303
      %v1310 = vadd.s32 %v1302, %v1308
      %vm1311 = vc.u32 %v1309, %v1305
      %v1312 = vsel %vm1311, 1, 0
      %v1313 = vadd.s32 %v1309, %v1305
      %v1314 = vadd.s32 %v1310, %v1312
      %v1315 = vadd.s32 %v1314, %v1304
      %v1316 = vadd.s32 %v1315, %v1306
      %v1317 = vshrl.u32 %v1316, 3
      %v1318 = vmul.u32 %v1317, 15
      %v1319 = vsub.s32 %v1295, %v1318
      %v1320 = vsub.s32 0, %v1319
      %v1321 = vsel %vm1293, %v1320, %v1319
      %vm1322 = vcmp.ne.s32.totalorder %v480, 0
      %vm1323 = vcmp.ne.s32.totalorder %v509, 0
      %vm1324 = vcmp.ne.s32.totalorder %v538, 0
      %vm1325 = vcmp.ne.s32.totalorder %v567, 0
      %vm1326 = vcmp.ne.s32.totalorder %v596, 0
      %vm1327 = vcmp.ne.s32.totalorder %v625, 0
      %vm1328 = vcmp.ne.s32.totalorder %v654, 0
      %vm1329 = vcmp.ne.s32.totalorder %v683, 0
      %vm1330 = vcmp.ne.s32.totalorder %v712, 0
      %vm1331 = vcmp.ne.s32.totalorder %v741, 0
      %vm1332 = vcmp.ne.s32.totalorder %v770, 0
      %vm1333 = vcmp.ne.s32.totalorder %v799, 0
      %vm1334 = vcmp.ne.s32.totalorder %v828, 0
      %vm1335 = vcmp.ne.s32.totalorder %v857, 0
      %vm1336 = vcmp.ne.s32.totalorder %v886, 0
      %vm1337 = vcmp.ne.s32.totalorder %v915, 0
      %vm1338 = vcmp.ne.s32.totalorder %v944, 0
      %vm1339 = vcmp.ne.s32.totalorder %v973, 0
      %vm1340 = vcmp.ne.s32.totalorder %v1002, 0
      %vm1341 = vcmp.ne.s32.totalorder %v1031, 0
      %vm1342 = vcmp.ne.s32.totalorder %v1060, 0
      %vm1343 = vcmp.ne.s32.totalorder %v1089, 0
      %vm1344 = vcmp.ne.s32.totalorder %v1118, 0
      %vm1345 = vcmp.ne.s32.totalorder %v1147, 0
      %vm1346 = vcmp.ne.s32.totalorder %v1176, 0
      %vm1347 = vcmp.ne.s32.totalorder %v1205, 0
      %vm1348 = vcmp.ne.s32.totalorder %v1234, 0
      %vm1349 = vcmp.ne.s32.totalorder %v1263, 0
      %vm1350 = vcmp.ne.s32.totalorder %v1292, 0
      %vm1351 = vcmp.ne.s32.totalorder %v1321, 0
      %vm1352 = vcmp.lt.s32.totalorder %v480, 0
      %vm1353 = vcmp.lt.s32.totalorder %v509, 0
      %vm1354 = vcmp.lt.s32.totalorder %v538, 0
      %vm1355 = vcmp.lt.s32.totalorder %v567, 0
      %vm1356 = vcmp.lt.s32.totalorder %v596, 0
      %vm1357 = vcmp.lt.s32.totalorder %v625, 0
      %vm1358 = vcmp.lt.s32.totalorder %v654, 0
      %vm1359 = vcmp.lt.s32.totalorder %v683, 0
      %vm1360 = vcmp.lt.s32.totalorder %v712, 0
      %vm1361 = vcmp.lt.s32.totalorder %v741, 0
      %vm1362 = vcmp.lt.s32.totalorder %v770, 0
      %vm1363 = vcmp.lt.s32.totalorder %v799, 0
      %vm1364 = vcmp.lt.s32.totalorder %v828, 0
      %vm1365 = vcmp.lt.s32.totalorder %v857, 0
      %vm1366 = vcmp.lt.s32.totalorder %v886, 0
      %vm1367 = vcmp.lt.s32.totalorder %v915, 0
      %vm1368 = vcmp.lt.s32.totalorder %v944, 0
      %vm1369 = vcmp.lt.s32.totalorder %v973, 0
      %vm1370 = vcmp.lt.s32.totalorder %v1002, 0
      %vm1371 = vcmp.lt.s32.totalorder %v1031, 0
      %vm1372 = vcmp.lt.s32.totalorder %v1060, 0
      %vm1373 = vcmp.lt.s32.totalorder %v1089, 0
      %vm1374 = vcmp.lt.s32.totalorder %v1118, 0
      %vm1375 = vcmp.lt.s32.totalorder %v1147, 0
      %vm1376 = vcmp.lt.s32.totalorder %v1176, 0
      %vm1377 = vcmp.lt.s32.totalorder %v1205, 0
      %vm1378 = vcmp.lt.s32.totalorder %v1234, 0
      %vm1379 = vcmp.lt.s32.totalorder %v1263, 0
      %vm1380 = vcmp.lt.s32.totalorder %v1292, 0
      %vm1381 = vcmp.lt.s32.totalorder %v1321, 0
      %vm1382 = vmand %vm1352, %vm1322
      %vm1383 = vmand %vm1353, %vm1323
      %vm1384 = vmand %vm1354, %vm1324
      %vm1385 = vmand %vm1355, %vm1325
      %vm1386 = vmand %vm1356, %vm1326
      %vm1387 = vmand %vm1357, %vm1327
      %vm1388 = vmand %vm1358, %vm1328
      %vm1389 = vmand %vm1359, %vm1329
      %vm1390 = vmand %vm1360, %vm1330
      %vm1391 = vmand %vm1361, %vm1331
      %vm1392 = vmand %vm1362, %vm1332
      %vm1393 = vmand %vm1363, %vm1333
      %vm1394 = vmand %vm1364, %vm1334
      %vm1395 = vmand %vm1365, %vm1335
      %vm1396 = vmand %vm1366, %vm1336
      %vm1397 = vmand %vm1367, %vm1337
      %vm1398 = vmand %vm1368, %vm1338
      %vm1399 = vmand %vm1369, %vm1339
      %vm1400 = vmand %vm1370, %vm1340
      %vm1401 = vmand %vm1371, %vm1341
      %vm1402 = vmand %vm1372, %vm1342
      %vm1403 = vmand %vm1373, %vm1343
      %vm1404 = vmand %vm1374, %vm1344
      %vm1405 = vmand %vm1375, %vm1345
      %vm1406 = vmand %vm1376, %vm1346
      %vm1407 = vmand %vm1377, %vm1347
      %vm1408 = vmand %vm1378, %vm1348
      %vm1409 = vmand %vm1379, %vm1349
      %vm1410 = vmand %vm1380, %vm1350
      %vm1411 = vmand %vm1381, %vm1351
      %v1412 = vadd.s32 %v480, 15
      %v1413 = vadd.s32 %v509, 15
      %v1414 = vadd.s32 %v538, 15
      %v1415 = vadd.s32 %v567, 15
      %v1416 = vadd.s32 %v596, 15
      %v1417 = vadd.s32 %v625, 15
      %v1418 = vadd.s32 %v654, 15
      %v1419 = vadd.s32 %v683, 15
      %v1420 = vadd.s32 %v712, 15
      %v1421 = vadd.s32 %v741, 15
      %v1422 = vadd.s32 %v770, 15
      %v1423 = vadd.s32 %v799, 15
      %v1424 = vadd.s32 %v828, 15
      %v1425 = vadd.s32 %v857, 15
      %v1426 = vadd.s32 %v886, 15
      %v1427 = vadd.s32 %v915, 15
      %v1428 = vadd.s32 %v944, 15
      %v1429 = vadd.s32 %v973, 15
      %v1430 = vadd.s32 %v1002, 15
      %v1431 = vadd.s32 %v1031, 15
      %v1432 = vadd.s32 %v1060, 15
      %v1433 = vadd.s32 %v1089, 15
      %v1434 = vadd.s32 %v1118, 15
      %v1435 = vadd.s32 %v1147, 15
      %v1436 = vadd.s32 %v1176, 15
      %v1437 = vadd.s32 %v1205, 15
      %v1438 = vadd.s32 %v1234, 15
      %v1439 = vadd.s32 %v1263, 15
      %v1440 = vadd.s32 %v1292, 15
      %v1441 = vadd.s32 %v1321, 15
      %v1442 = vsel %vm1382, %v1412, %v480
      %v1443 = vsel %vm1383, %v1413, %v509
      %v1444 = vsel %vm1384, %v1414, %v538
      %v1445 = vsel %vm1385, %v1415, %v567
      %v1446 = vsel %vm1386, %v1416, %v596
      %v1447 = vsel %vm1387, %v1417, %v625
      %v1448 = vsel %vm1388, %v1418, %v654
      %v1449 = vsel %vm1389, %v1419, %v683
      %v1450 = vsel %vm1390, %v1420, %v712
      %v1451 = vsel %vm1391, %v1421, %v741
      %v1452 = vsel %vm1392, %v1422, %v770
      %v1453 = vsel %vm1393, %v1423, %v799
      %v1454 = vsel %vm1394, %v1424, %v828
      %v1455 = vsel %vm1395, %v1425, %v857
      %v1456 = vsel %vm1396, %v1426, %v886
      %v1457 = vsel %vm1397, %v1427, %v915
      %v1458 = vsel %vm1398, %v1428, %v944
      %v1459 = vsel %vm1399, %v1429, %v973
      %v1460 = vsel %vm1400, %v1430, %v1002
      %v1461 = vsel %vm1401, %v1431, %v1031
      %v1462 = vsel %vm1402, %v1432, %v1060
      %v1463 = vsel %vm1403, %v1433, %v1089
      %v1464 = vsel %vm1404, %v1434, %v1118
      %v1465 = vsel %vm1405, %v1435, %v1147
      %v1466 = vsel %vm1406, %v1436, %v1176
      %v1467 = vsel %vm1407, %v1437, %v1205
      %v1468 = vsel %vm1408, %v1438, %v1234
      %v1469 = vsel %vm1409, %v1439, %v1263
      %v1470 = vsel %vm1410, %v1440, %v1292
      %v1471 = vsel %vm1411, %v1441, %v1321
      %vm1472 = vcmp.ne.s32.totalorder %v1442, 0
      %vm1473 = vcmp.ne.s32.totalorder %v1443, 0
      %vm1474 = vcmp.ne.s32.totalorder %v1444, 0
      %vm1475 = vcmp.ne.s32.totalorder %v1445, 0
      %vm1476 = vcmp.ne.s32.totalorder %v1446, 0
      %vm1477 = vcmp.ne.s32.totalorder %v1447, 0
      %vm1478 = vcmp.ne.s32.totalorder %v1448, 0
      %vm1479 = vcmp.ne.s32.totalorder %v1449, 0
      %vm1480 = vcmp.ne.s32.totalorder %v1450, 0
      %vm1481 = vcmp.ne.s32.totalorder %v1451, 0
      %vm1482 = vcmp.ne.s32.totalorder %v1452, 0
      %vm1483 = vcmp.ne.s32.totalorder %v1453, 0
      %vm1484 = vcmp.ne.s32.totalorder %v1454, 0
      %vm1485 = vcmp.ne.s32.totalorder %v1455, 0
      %vm1486 = vcmp.ne.s32.totalorder %v1456, 0
      %vm1487 = vcmp.ne.s32.totalorder %v1457, 0
      %vm1488 = vcmp.ne.s32.totalorder %v1458, 0
      %vm1489 = vcmp.ne.s32.totalorder %v1459, 0
      %vm1490 = vcmp.ne.s32.totalorder %v1460, 0
      %vm1491 = vcmp.ne.s32.totalorder %v1461, 0
      %vm1492 = vcmp.ne.s32.totalorder %v1462, 0
      %vm1493 = vcmp.ne.s32.totalorder %v1463, 0
      %vm1494 = vcmp.ne.s32.totalorder %v1464, 0
      %vm1495 = vcmp.ne.s32.totalorder %v1465, 0
      %vm1496 = vcmp.ne.s32.totalorder %v1466, 0
      %vm1497 = vcmp.ne.s32.totalorder %v1467, 0
      %vm1498 = vcmp.ne.s32.totalorder %v1468, 0
      %vm1499 = vcmp.ne.s32.totalorder %v1469, 0
      %vm1500 = vcmp.ne.s32.totalorder %v1470, 0
      %vm1501 = vcmp.ne.s32.totalorder %v1471, 0
      %v1502 = vsel %vm1472, 1, 0
      %v1503 = vsel %vm1473, 1, 0
      %v1504 = vsel %vm1474, 1, 0
      %v1505 = vsel %vm1475, 1, 0
      %v1506 = vsel %vm1476, 1, 0
      %v1507 = vsel %vm1477, 1, 0
      %v1508 = vsel %vm1478, 1, 0
      %v1509 = vsel %vm1479, 1, 0
      %v1510 = vsel %vm1480, 1, 0
      %v1511 = vsel %vm1481, 1, 0
      %v1512 = vsel %vm1482, 1, 0
      %v1513 = vsel %vm1483, 1, 0
      %v1514 = vsel %vm1484, 1, 0
      %v1515 = vsel %vm1485, 1, 0
      %v1516 = vsel %vm1486, 1, 0
      %v1517 = vsel %vm1487, 1, 0
      %v1518 = vsel %vm1488, 1, 0
      %v1519 = vsel %vm1489, 1, 0
      %v1520 = vsel %vm1490, 1, 0
      %v1521 = vsel %vm1491, 1, 0
      %v1522 = vsel %vm1492, 1, 0
      %v1523 = vsel %vm1493, 1, 0
      %v1524 = vsel %vm1494, 1, 0
      %v1525 = vsel %vm1495, 1, 0
      %v1526 = vsel %vm1496, 1, 0
      %v1527 = vsel %vm1497, 1, 0
      %v1528 = vsel %vm1498, 1, 0
      %v1529 = vsel %vm1499, 1, 0
      %v1530 = vsel %vm1500, 1, 0
      %v1531 = vsel %vm1501, 1, 0
      %v1532 = vcvt.s32.f32 %v1502
      %v1533 = vcvt.s32.f32 %v1503
      %v1534 = vcvt.s32.f32 %v1504
      %v1535 = vcvt.s32.f32 %v1505
      %v1536 = vcvt.s32.f32 %v1506
      %v1537 = vcvt.s32.f32 %v1507
      %v1538 = vcvt.s32.f32 %v1508
      %v1539 = vcvt.s32.f32 %v1509
      %v1540 = vcvt.s32.f32 %v1510
      %v1541 = vcvt.s32.f32 %v1511
      %v1542 = vcvt.s32.f32 %v1512
      %v1543 = vcvt.s32.f32 %v1513
      %v1544 = vcvt.s32.f32 %v1514
      %v1545 = vcvt.s32.f32 %v1515
      %v1546 = vcvt.s32.f32 %v1516
      %v1547 = vcvt.s32.f32 %v1517
      %v1548 = vcvt.s32.f32 %v1518
      %v1549 = vcvt.s32.f32 %v1519
      %v1550 = vcvt.s32.f32 %v1520
      %v1551 = vcvt.s32.f32 %v1521
      %v1552 = vcvt.s32.f32 %v1522
      %v1553 = vcvt.s32.f32 %v1523
      %v1554 = vcvt.s32.f32 %v1524
      %v1555 = vcvt.s32.f32 %v1525
      %v1556 = vcvt.s32.f32 %v1526
      %v1557 = vcvt.s32.f32 %v1527
      %v1558 = vcvt.s32.f32 %v1528
      %v1559 = vcvt.s32.f32 %v1529
      %v1560 = vcvt.s32.f32 %v1530
      %v1561 = vcvt.s32.f32 %v1531
      %vm1562 = vcmp.ne.s32.totalorder %v1442, 14
      %vm1563 = vcmp.ne.s32.totalorder %v1443, 14
      %vm1564 = vcmp.ne.s32.totalorder %v1444, 14
      %vm1565 = vcmp.ne.s32.totalorder %v1445, 14
      %vm1566 = vcmp.ne.s32.totalorder %v1446, 14
      %vm1567 = vcmp.ne.s32.totalorder %v1447, 14
      %vm1568 = vcmp.ne.s32.totalorder %v1448, 14
      %vm1569 = vcmp.ne.s32.totalorder %v1449, 14
      %vm1570 = vcmp.ne.s32.totalorder %v1450, 14
      %vm1571 = vcmp.ne.s32.totalorder %v1451, 14
      %vm1572 = vcmp.ne.s32.totalorder %v1452, 14
      %vm1573 = vcmp.ne.s32.totalorder %v1453, 14
      %vm1574 = vcmp.ne.s32.totalorder %v1454, 14
      %vm1575 = vcmp.ne.s32.totalorder %v1455, 14
      %vm1576 = vcmp.ne.s32.totalorder %v1456, 14
      %vm1577 = vcmp.ne.s32.totalorder %v1457, 14
      %vm1578 = vcmp.ne.s32.totalorder %v1458, 14
      %vm1579 = vcmp.ne.s32.totalorder %v1459, 14
      %vm1580 = vcmp.ne.s32.totalorder %v1460, 14
      %vm1581 = vcmp.ne.s32.totalorder %v1461, 14
      %vm1582 = vcmp.ne.s32.totalorder %v1462, 14
      %vm1583 = vcmp.ne.s32.totalorder %v1463, 14
      %vm1584 = vcmp.ne.s32.totalorder %v1464, 14
      %vm1585 = vcmp.ne.s32.totalorder %v1465, 14
      %vm1586 = vcmp.ne.s32.totalorder %v1466, 14
      %vm1587 = vcmp.ne.s32.totalorder %v1467, 14
      %vm1588 = vcmp.ne.s32.totalorder %v1468, 14
      %vm1589 = vcmp.ne.s32.totalorder %v1469, 14
      %vm1590 = vcmp.ne.s32.totalorder %v1470, 14
      %vm1591 = vcmp.ne.s32.totalorder %v1471, 14
      %v1592 = vsel %vm1562, 1, 0
      %v1593 = vsel %vm1563, 1, 0
      %v1594 = vsel %vm1564, 1, 0
      %v1595 = vsel %vm1565, 1, 0
      %v1596 = vsel %vm1566, 1, 0
      %v1597 = vsel %vm1567, 1, 0
      %v1598 = vsel %vm1568, 1, 0
      %v1599 = vsel %vm1569, 1, 0
      %v1600 = vsel %vm1570, 1, 0
      %v1601 = vsel %vm1571, 1, 0
      %v1602 = vsel %vm1572, 1, 0
      %v1603 = vsel %vm1573, 1, 0
      %v1604 = vsel %vm1574, 1, 0
      %v1605 = vsel %vm1575, 1, 0
      %v1606 = vsel %vm1576, 1, 0
      %v1607 = vsel %vm1577, 1, 0
      %v1608 = vsel %vm1578, 1, 0
      %v1609 = vsel %vm1579, 1, 0
      %v1610 = vsel %vm1580, 1, 0
      %v1611 = vsel %vm1581, 1, 0
      %v1612 = vsel %vm1582, 1, 0
      %v1613 = vsel %vm1583, 1, 0
      %v1614 = vsel %vm1584, 1, 0
      %v1615 = vsel %vm1585, 1, 0
      %v1616 = vsel %vm1586, 1, 0
      %v1617 = vsel %vm1587, 1, 0
      %v1618 = vsel %vm1588, 1, 0
      %v1619 = vsel %vm1589, 1, 0
      %v1620 = vsel %vm1590, 1, 0
      %v1621 = vsel %vm1591, 1, 0
      %v1622 = vcvt.s32.f32 %v1592
      %v1623 = vcvt.s32.f32 %v1593
      %v1624 = vcvt.s32.f32 %v1594
      %v1625 = vcvt.s32.f32 %v1595
      %v1626 = vcvt.s32.f32 %v1596
      %v1627 = vcvt.s32.f32 %v1597
      %v1628 = vcvt.s32.f32 %v1598
      %v1629 = vcvt.s32.f32 %v1599
      %v1630 = vcvt.s32.f32 %v1600
      %v1631 = vcvt.s32.f32 %v1601
      %v1632 = vcvt.s32.f32 %v1602
      %v1633 = vcvt.s32.f32 %v1603
      %v1634 = vcvt.s32.f32 %v1604
      %v1635 = vcvt.s32.f32 %v1605
      %v1636 = vcvt.s32.f32 %v1606
      %v1637 = vcvt.s32.f32 %v1607
      %v1638 = vcvt.s32.f32 %v1608
      %v1639 = vcvt.s32.f32 %v1609
      %v1640 = vcvt.s32.f32 %v1610
      %v1641 = vcvt.s32.f32 %v1611
      %v1642 = vcvt.s32.f32 %v1612
      %v1643 = vcvt.s32.f32 %v1613
      %v1644 = vcvt.s32.f32 %v1614
      %v1645 = vcvt.s32.f32 %v1615
      %v1646 = vcvt.s32.f32 %v1616
      %v1647 = vcvt.s32.f32 %v1617
      %v1648 = vcvt.s32.f32 %v1618
      %v1649 = vcvt.s32.f32 %v1619
      %v1650 = vcvt.s32.f32 %v1620
      %v1651 = vcvt.s32.f32 %v1621
      %v1652 = vld [vmem:[%s412] sm:$0xff]
      %v1653 = vld [vmem:[%s412 + $0x8] sm:$0xff]
      %v1654 = vld [vmem:[%s412 + $0x10] sm:$0xff]
      %v1655 = vld [vmem:[%s412 + $0x18] sm:$0xff]
      %v1656 = vld [vmem:[%s412 + $0x20] sm:$0xff]
      %v1657 = vld [vmem:[%s412 + $0x28] sm:$0xff]
      %v1658 = vld [vmem:[%s412 + $0x30] sm:$0xff]
      %v1659 = vld [vmem:[%s412 + $0x38] sm:$0xff]
      %v1660 = vld [vmem:[%s412 + $0x40] sm:$0xff]
      %v1661 = vld [vmem:[%s412 + $0x48] sm:$0xff]
      %v1662 = vld [vmem:[%s412 + $0x50] sm:$0xff]
      %v1663 = vld [vmem:[%s412 + $0x58] sm:$0xff]
      %v1664 = vld [vmem:[%s412 + $0x60] sm:$0xff]
      %v1665 = vld [vmem:[%s412 + $0x68] sm:$0xff]
      %v1666 = vld [vmem:[%s412 + $0x70] sm:$0xff]
      %v1667 = vld [vmem:[%s412 + $0x78] sm:$0xff]
      %v1668 = vld [vmem:[%s412 + $0x80] sm:$0xff]
      %v1669 = vld [vmem:[%s412 + $0x88] sm:$0xff]
      %v1670 = vld [vmem:[%s412 + $0x90] sm:$0xff]
      %v1671 = vld [vmem:[%s412 + $0x98] sm:$0xff]
      %v1672 = vld [vmem:[%s412 + $0xa0] sm:$0xff]
      %v1673 = vld [vmem:[%s412 + $0xa8] sm:$0xff]
      %v1674 = vld [vmem:[%s412 + $0xb0] sm:$0xff]
      %v1675 = vld [vmem:[%s412 + $0xb8] sm:$0xff]
      %v1676 = vld [vmem:[%s412 + $0xc0] sm:$0xff]
      %v1677 = vld [vmem:[%s412 + $0xc8] sm:$0xff]
      %v1678 = vld [vmem:[%s412 + $0xd0] sm:$0xff]
      %v1679 = vld [vmem:[%s412 + $0xd8] sm:$0xff]
      %v1680 = vld [vmem:[%s412 + $0xe0] sm:$0xff]
      %v1681 = vld [vmem:[%s412 + $0xe8] sm:$0xff]
      %v1682 = vld [vmem:[%s412 + $0xf0] sm:$0xff]
      %v1683 = vld [vmem:[%s412 + $0xf8] sm:$0xff]
      %v1684 = vld [vmem:[%s412 + $0x100] sm:$0xff]
      %v1685 = vld [vmem:[%s412 + $0x108] sm:$0xff]
      %v1686 = vld [vmem:[%s412 + $0x110] sm:$0xff]
      %v1687 = vld [vmem:[%s412 + $0x118] sm:$0xff]
      %v1688 = vld [vmem:[%s412 + $0x120] sm:$0xff]
      %v1689 = vld [vmem:[%s412 + $0x128] sm:$0xff]
      %v1690 = vld [vmem:[%s412 + $0x130] sm:$0xff]
      %v1691 = vld [vmem:[%s412 + $0x138] sm:$0xff]
      %v1692 = vld [vmem:[%s412 + $0x140] sm:$0xff]
      %v1693 = vld [vmem:[%s412 + $0x148] sm:$0xff]
      %v1694 = vld [vmem:[%s412 + $0x150] sm:$0xff]
      %v1695 = vld [vmem:[%s412 + $0x158] sm:$0xff]
      %v1696 = vld [vmem:[%s412 + $0x160] sm:$0xff]
      %v1697 = vld [vmem:[%s412 + $0x168] sm:$0xff]
      %v1698 = vld [vmem:[%s412 + $0x170] sm:$0xff]
      %v1699 = vld [vmem:[%s412 + $0x178] sm:$0xff]
      %v1700 = vld [vmem:[%s412 + $0x180] sm:$0xff]
      %v1701 = vld [vmem:[%s412 + $0x188] sm:$0xff]
      %v1702 = vld [vmem:[%s412 + $0x190] sm:$0xff]
      %v1703 = vld [vmem:[%s412 + $0x198] sm:$0xff]
      %v1704 = vld [vmem:[%s412 + $0x1a0] sm:$0xff]
      %v1705 = vld [vmem:[%s412 + $0x1a8] sm:$0xff]
      %v1706 = vld [vmem:[%s412 + $0x1b0] sm:$0xff]
      %v1707 = vld [vmem:[%s412 + $0x1b8] sm:$0xff]
      %v1708 = vld [vmem:[%s412 + $0x1c0] sm:$0xff]
      %v1709 = vld [vmem:[%s412 + $0x1c8] sm:$0xff]
      %v1710 = vld [vmem:[%s412 + $0x1d0] sm:$0xff]
      %v1711 = vld [vmem:[%s412 + $0x1d8] sm:$0xff]
      %v1712 = vld [vmem:[%s412 + $0x1e0] sm:$0xff]
      %v1713 = vld [vmem:[%s412 + $0x1e8] sm:$0xff]
      %v1714 = vld [vmem:[%s412 + $0x1f0] sm:$0xff]
      %v1715 = vld [vmem:[%s412 + $0x1f8] sm:$0xff]
      %v1716 = vld [vmem:[%s412 + $0x200] sm:$0xff]
      %v1717 = vld [vmem:[%s412 + $0x208] sm:$0xff]
      %v1718 = vld [vmem:[%s412 + $0x210] sm:$0xff]
      %v1719 = vld [vmem:[%s412 + $0x218] sm:$0xff]
      %v1720 = vld [vmem:[%s412 + $0x220] sm:$0xff]
      %v1721 = vld [vmem:[%s412 + $0x228] sm:$0xff]
      %v1722 = vld [vmem:[%s412 + $0x230] sm:$0xff]
      %v1723 = vld [vmem:[%s412 + $0x238] sm:$0xff]
      %v1724 = vld [vmem:[%s412 + $0x240] sm:$0xff]
      %v1725 = vld [vmem:[%s412 + $0x248] sm:$0xff]
      %v1726 = vld [vmem:[%s412 + $0x250] sm:$0xff]
      %v1727 = vld [vmem:[%s412 + $0x258] sm:$0xff]
      %v1728 = vld [vmem:[%s412 + $0x260] sm:$0xff]
      %v1729 = vld [vmem:[%s412 + $0x268] sm:$0xff]
      %v1730 = vld [vmem:[%s412 + $0x270] sm:$0xff]
      %v1731 = vld [vmem:[%s412 + $0x278] sm:$0xff]
      %v1732 = vld [vmem:[%s412 + $0x280] sm:$0xff]
      %v1733 = vld [vmem:[%s412 + $0x288] sm:$0xff]
      %v1734 = vld [vmem:[%s412 + $0x290] sm:$0xff]
      %v1735 = vld [vmem:[%s412 + $0x298] sm:$0xff]
      %v1736 = vld [vmem:[%s412 + $0x2a0] sm:$0xff]
      %v1737 = vld [vmem:[%s412 + $0x2a8] sm:$0xff]
      %v1738 = vld [vmem:[%s412 + $0x2b0] sm:$0xff]
      %v1739 = vld [vmem:[%s412 + $0x2b8] sm:$0xff]
      %v1740 = vld [vmem:[%s412 + $0x2c0] sm:$0xff]
      %v1741 = vld [vmem:[%s412 + $0x2c8] sm:$0xff]
      %v1742 = vld [vmem:[%s412 + $0x2d0] sm:$0xff]
      %v1743 = vld [vmem:[%s412 + $0x2d8] sm:$0xff]
      %v1744 = vld [vmem:[%s412 + $0x2e0] sm:$0xff]
      %v1745 = vld [vmem:[%s412 + $0x2e8] sm:$0xff]
      %v1746 = vld [vmem:[%s412 + $0x2f0] sm:$0xff]
      %v1747 = vld [vmem:[%s412 + $0x2f8] sm:$0xff]
      %v1748 = vld [vmem:[%s412 + $0x300] sm:$0xff]
      %v1749 = vld [vmem:[%s412 + $0x308] sm:$0xff]
      %v1750 = vld [vmem:[%s412 + $0x310] sm:$0xff]
      %v1751 = vld [vmem:[%s412 + $0x318] sm:$0xff]
      %v1752 = vld [vmem:[%s412 + $0x320] sm:$0xff]
      %v1753 = vld [vmem:[%s412 + $0x328] sm:$0xff]
      %v1754 = vld [vmem:[%s412 + $0x330] sm:$0xff]
      %v1755 = vld [vmem:[%s412 + $0x338] sm:$0xff]
      %v1756 = vld [vmem:[%s412 + $0x340] sm:$0xff]
      %v1757 = vld [vmem:[%s412 + $0x348] sm:$0xff]
      %v1758 = vld [vmem:[%s412 + $0x350] sm:$0xff]
      %v1759 = vld [vmem:[%s412 + $0x358] sm:$0xff]
      %v1760 = vld [vmem:[%s412 + $0x360] sm:$0xff]
      %v1761 = vld [vmem:[%s412 + $0x368] sm:$0xff]
      %v1762 = vld [vmem:[%s412 + $0x370] sm:$0xff]
      %v1763 = vld [vmem:[%s412 + $0x378] sm:$0xff]
      %v1764 = vld [vmem:[%s412 + $0x380] sm:$0xff]
      %v1765 = vld [vmem:[%s412 + $0x388] sm:$0xff]
      %v1766 = vld [vmem:[%s412 + $0x390] sm:$0xff]
      %v1767 = vld [vmem:[%s412 + $0x398] sm:$0xff]
      %v1768 = vld [vmem:[%s412 + $0x3a0] sm:$0xff]
      %v1769 = vld [vmem:[%s412 + $0x3a8] sm:$0xff]
      %v1770 = vld [vmem:[%s412 + $0x3b0] sm:$0xff]
      %v1771 = vld [vmem:[%s412 + $0x3b8] sm:$0xff]
      %v1772 = vld [vmem:[%s1] sm:$0xff]
      %v1773 = vld [vmem:[%s1 + $0x8] sm:$0xff]
      %v1774 = vld [vmem:[%s1 + $0x10] sm:$0xff]
      %v1775 = vld [vmem:[%s1 + $0x18] sm:$0xff]
      %v1776 = vld [vmem:[%s1 + $0x20] sm:$0xff]
      %v1777 = vld [vmem:[%s1 + $0x28] sm:$0xff]
      %v1778 = vld [vmem:[%s1 + $0x30] sm:$0xff]
      %v1779 = vld [vmem:[%s1 + $0x38] sm:$0xff]
      %v1780 = vld [vmem:[%s1 + $0x40] sm:$0xff]
      %v1781 = vld [vmem:[%s1 + $0x48] sm:$0xff]
      %v1782 = vld [vmem:[%s1 + $0x50] sm:$0xff]
      %v1783 = vld [vmem:[%s1 + $0x58] sm:$0xff]
      %v1784 = vld [vmem:[%s1 + $0x60] sm:$0xff]
      %v1785 = vld [vmem:[%s1 + $0x68] sm:$0xff]
      %v1786 = vld [vmem:[%s1 + $0x70] sm:$0xff]
      %v1787 = vld [vmem:[%s1 + $0x78] sm:$0xff]
      %v1788 = vld [vmem:[%s1 + $0x80] sm:$0xff]
      %v1789 = vld [vmem:[%s1 + $0x88] sm:$0xff]
      %v1790 = vld [vmem:[%s1 + $0x90] sm:$0xff]
      %v1791 = vld [vmem:[%s1 + $0x98] sm:$0xff]
      %v1792 = vld [vmem:[%s1 + $0xa0] sm:$0xff]
      %v1793 = vld [vmem:[%s1 + $0xa8] sm:$0xff]
      %v1794 = vld [vmem:[%s1 + $0xb0] sm:$0xff]
      %v1795 = vld [vmem:[%s1 + $0xb8] sm:$0xff]
      %v1796 = vld [vmem:[%s1 + $0xc0] sm:$0xff]
      %v1797 = vld [vmem:[%s1 + $0xc8] sm:$0xff]
      %v1798 = vld [vmem:[%s1 + $0xd0] sm:$0xff]
      %v1799 = vld [vmem:[%s1 + $0xd8] sm:$0xff]
      %v1800 = vld [vmem:[%s1 + $0xe0] sm:$0xff]
      %v1801 = vld [vmem:[%s1 + $0xe8] sm:$0xff]
      %v1802 = vld [vmem:[%s1 + $0xf0] sm:$0xff]
      %v1803 = vld [vmem:[%s1 + $0xf8] sm:$0xff]
      %v1804 = vld [vmem:[%s1 + $0x100] sm:$0xff]
      %v1805 = vld [vmem:[%s1 + $0x108] sm:$0xff]
      %v1806 = vld [vmem:[%s1 + $0x110] sm:$0xff]
      %v1807 = vld [vmem:[%s1 + $0x118] sm:$0xff]
      %v1808 = vld [vmem:[%s1 + $0x120] sm:$0xff]
      %v1809 = vld [vmem:[%s1 + $0x128] sm:$0xff]
      %v1810 = vld [vmem:[%s1 + $0x130] sm:$0xff]
      %v1811 = vld [vmem:[%s1 + $0x138] sm:$0xff]
      %v1812 = vld [vmem:[%s1 + $0x140] sm:$0xff]
      %v1813 = vld [vmem:[%s1 + $0x148] sm:$0xff]
      %v1814 = vld [vmem:[%s1 + $0x150] sm:$0xff]
      %v1815 = vld [vmem:[%s1 + $0x158] sm:$0xff]
      %v1816 = vld [vmem:[%s1 + $0x160] sm:$0xff]
      %v1817 = vld [vmem:[%s1 + $0x168] sm:$0xff]
      %v1818 = vld [vmem:[%s1 + $0x170] sm:$0xff]
      %v1819 = vld [vmem:[%s1 + $0x178] sm:$0xff]
      %v1820 = vld [vmem:[%s1 + $0x180] sm:$0xff]
      %v1821 = vld [vmem:[%s1 + $0x188] sm:$0xff]
      %v1822 = vld [vmem:[%s1 + $0x190] sm:$0xff]
      %v1823 = vld [vmem:[%s1 + $0x198] sm:$0xff]
      %v1824 = vld [vmem:[%s1 + $0x1a0] sm:$0xff]
      %v1825 = vld [vmem:[%s1 + $0x1a8] sm:$0xff]
      %v1826 = vld [vmem:[%s1 + $0x1b0] sm:$0xff]
      %v1827 = vld [vmem:[%s1 + $0x1b8] sm:$0xff]
      %v1828 = vld [vmem:[%s1 + $0x1c0] sm:$0xff]
      %v1829 = vld [vmem:[%s1 + $0x1c8] sm:$0xff]
      %v1830 = vld [vmem:[%s1 + $0x1d0] sm:$0xff]
      %v1831 = vld [vmem:[%s1 + $0x1d8] sm:$0xff]
      %v1832 = vld [vmem:[%s1 + $0x1e0] sm:$0xff]
      %v1833 = vld [vmem:[%s1 + $0x1e8] sm:$0xff]
      %v1834 = vld [vmem:[%s1 + $0x1f0] sm:$0xff]
      %v1835 = vld [vmem:[%s1 + $0x1f8] sm:$0xff]
      %v1836 = vld [vmem:[%s1 + $0x200] sm:$0xff]
      %v1837 = vld [vmem:[%s1 + $0x208] sm:$0xff]
      %v1838 = vld [vmem:[%s1 + $0x210] sm:$0xff]
      %v1839 = vld [vmem:[%s1 + $0x218] sm:$0xff]
      %v1840 = vld [vmem:[%s1 + $0x220] sm:$0xff]
      %v1841 = vld [vmem:[%s1 + $0x228] sm:$0xff]
      %v1842 = vld [vmem:[%s1 + $0x230] sm:$0xff]
      %v1843 = vld [vmem:[%s1 + $0x238] sm:$0xff]
      %v1844 = vld [vmem:[%s1 + $0x240] sm:$0xff]
      %v1845 = vld [vmem:[%s1 + $0x248] sm:$0xff]
      %v1846 = vld [vmem:[%s1 + $0x250] sm:$0xff]
      %v1847 = vld [vmem:[%s1 + $0x258] sm:$0xff]
      %v1848 = vld [vmem:[%s1 + $0x260] sm:$0xff]
      %v1849 = vld [vmem:[%s1 + $0x268] sm:$0xff]
      %v1850 = vld [vmem:[%s1 + $0x270] sm:$0xff]
      %v1851 = vld [vmem:[%s1 + $0x278] sm:$0xff]
      %v1852 = vld [vmem:[%s1 + $0x280] sm:$0xff]
      %v1853 = vld [vmem:[%s1 + $0x288] sm:$0xff]
      %v1854 = vld [vmem:[%s1 + $0x290] sm:$0xff]
      %v1855 = vld [vmem:[%s1 + $0x298] sm:$0xff]
      %v1856 = vld [vmem:[%s1 + $0x2a0] sm:$0xff]
      %v1857 = vld [vmem:[%s1 + $0x2a8] sm:$0xff]
      %v1858 = vld [vmem:[%s1 + $0x2b0] sm:$0xff]
      %v1859 = vld [vmem:[%s1 + $0x2b8] sm:$0xff]
      %v1860 = vld [vmem:[%s1 + $0x2c0] sm:$0xff]
      %v1861 = vld [vmem:[%s1 + $0x2c8] sm:$0xff]
      %v1862 = vld [vmem:[%s1 + $0x2d0] sm:$0xff]
      %v1863 = vld [vmem:[%s1 + $0x2d8] sm:$0xff]
      %v1864 = vld [vmem:[%s1 + $0x2e0] sm:$0xff]
      %v1865 = vld [vmem:[%s1 + $0x2e8] sm:$0xff]
      %v1866 = vld [vmem:[%s1 + $0x2f0] sm:$0xff]
      %v1867 = vld [vmem:[%s1 + $0x2f8] sm:$0xff]
      %v1868 = vld [vmem:[%s1 + $0x300] sm:$0xff]
      %v1869 = vld [vmem:[%s1 + $0x308] sm:$0xff]
      %v1870 = vld [vmem:[%s1 + $0x310] sm:$0xff]
      %v1871 = vld [vmem:[%s1 + $0x318] sm:$0xff]
      %v1872 = vld [vmem:[%s1 + $0x320] sm:$0xff]
      %v1873 = vld [vmem:[%s1 + $0x328] sm:$0xff]
      %v1874 = vld [vmem:[%s1 + $0x330] sm:$0xff]
      %v1875 = vld [vmem:[%s1 + $0x338] sm:$0xff]
      %v1876 = vld [vmem:[%s1 + $0x340] sm:$0xff]
      %v1877 = vld [vmem:[%s1 + $0x348] sm:$0xff]
      %v1878 = vld [vmem:[%s1 + $0x350] sm:$0xff]
      %v1879 = vld [vmem:[%s1 + $0x358] sm:$0xff]
      %v1880 = vld [vmem:[%s1 + $0x360] sm:$0xff]
      %v1881 = vld [vmem:[%s1 + $0x368] sm:$0xff]
      %v1882 = vld [vmem:[%s1 + $0x370] sm:$0xff]
      %v1883 = vld [vmem:[%s1 + $0x378] sm:$0xff]
      %v1884 = vld [vmem:[%s1 + $0x380] sm:$0xff]
      %v1885 = vld [vmem:[%s1 + $0x388] sm:$0xff]
      %v1886 = vld [vmem:[%s1 + $0x390] sm:$0xff]
      %v1887 = vld [vmem:[%s1 + $0x398] sm:$0xff]
      %v1888 = vld [vmem:[%s1 + $0x3a0] sm:$0xff]
      %v1889 = vld [vmem:[%s1 + $0x3a8] sm:$0xff]
      %v1890 = vld [vmem:[%s1 + $0x3b0] sm:$0xff]
      %v1891 = vld [vmem:[%s1 + $0x3b8] sm:$0xff]
      %v1892 = vld [vmem:[%s1 + $0x3c0] sm:$0xff]
      %v1893 = vld [vmem:[%s1 + $0x3c8] sm:$0xff]
      %v1894 = vld [vmem:[%s1 + $0x3d0] sm:$0xff]
      %v1895 = vld [vmem:[%s1 + $0x3d8] sm:$0xff]
      %v1896 = vld [vmem:[%s1 + $0x3e0] sm:$0xff]
      %v1897 = vld [vmem:[%s1 + $0x3e8] sm:$0xff]
      %v1898 = vld [vmem:[%s1 + $0x3f0] sm:$0xff]
      %v1899 = vld [vmem:[%s1 + $0x3f8] sm:$0xff]
      %v2020 = vunpack.c.l.b16 %v1652
      %v2021 = vunpack.c.h.b16 %v1652
      %v2022 = vunpack.c.l.b16 %v1653
      %v2023 = vunpack.c.h.b16 %v1653
      %v2024 = vunpack.c.l.b16 %v1654
      %v2025 = vunpack.c.h.b16 %v1654
      %v2026 = vunpack.c.l.b16 %v1655
      %v2027 = vunpack.c.h.b16 %v1655
      %v2028 = vunpack.c.l.b16 %v1656
      %v2029 = vunpack.c.h.b16 %v1656
      %v2030 = vunpack.c.l.b16 %v1657
      %v2031 = vunpack.c.h.b16 %v1657
      %v2032 = vunpack.c.l.b16 %v1658
      %v2033 = vunpack.c.h.b16 %v1658
      %v2034 = vunpack.c.l.b16 %v1659
      %v2035 = vunpack.c.h.b16 %v1659
      %v2036 = vunpack.c.l.b16 %v1660
      %v2037 = vunpack.c.h.b16 %v1660
      %v2038 = vunpack.c.l.b16 %v1661
      %v2039 = vunpack.c.h.b16 %v1661
      %v2040 = vunpack.c.l.b16 %v1662
      %v2041 = vunpack.c.h.b16 %v1662
      %v2042 = vunpack.c.l.b16 %v1663
      %v2043 = vunpack.c.h.b16 %v1663
      %v2044 = vunpack.c.l.b16 %v1664
      %v2045 = vunpack.c.h.b16 %v1664
      %v2046 = vunpack.c.l.b16 %v1665
      %v2047 = vunpack.c.h.b16 %v1665
      %v2048 = vunpack.c.l.b16 %v1666
      %v2049 = vunpack.c.h.b16 %v1666
      %v2050 = vunpack.c.l.b16 %v1667
      %v2051 = vunpack.c.h.b16 %v1667
      %v2052 = vunpack.c.l.b16 %v1668
      %v2053 = vunpack.c.h.b16 %v1668
      %v2054 = vunpack.c.l.b16 %v1669
      %v2055 = vunpack.c.h.b16 %v1669
      %v2056 = vunpack.c.l.b16 %v1670
      %v2057 = vunpack.c.h.b16 %v1670
      %v2058 = vunpack.c.l.b16 %v1671
      %v2059 = vunpack.c.h.b16 %v1671
      %v2060 = vunpack.c.l.b16 %v1672
      %v2061 = vunpack.c.h.b16 %v1672
      %v2062 = vunpack.c.l.b16 %v1673
      %v2063 = vunpack.c.h.b16 %v1673
      %v2064 = vunpack.c.l.b16 %v1674
      %v2065 = vunpack.c.h.b16 %v1674
      %v2066 = vunpack.c.l.b16 %v1675
      %v2067 = vunpack.c.h.b16 %v1675
      %v2068 = vunpack.c.l.b16 %v1676
      %v2069 = vunpack.c.h.b16 %v1676
      %v2070 = vunpack.c.l.b16 %v1677
      %v2071 = vunpack.c.h.b16 %v1677
      %v2072 = vunpack.c.l.b16 %v1678
      %v2073 = vunpack.c.h.b16 %v1678
      %v2074 = vunpack.c.l.b16 %v1679
      %v2075 = vunpack.c.h.b16 %v1679
      %v2076 = vunpack.c.l.b16 %v1680
      %v2077 = vunpack.c.h.b16 %v1680
      %v2078 = vunpack.c.l.b16 %v1681
      %v2079 = vunpack.c.h.b16 %v1681
      %v2080 = vunpack.c.l.b16 %v1682
      %v2081 = vunpack.c.h.b16 %v1682
      %v2082 = vunpack.c.l.b16 %v1683
      %v2083 = vunpack.c.h.b16 %v1683
      %v2084 = vunpack.c.l.b16 %v1684
      %v2085 = vunpack.c.h.b16 %v1684
      %v2086 = vunpack.c.l.b16 %v1685
      %v2087 = vunpack.c.h.b16 %v1685
      %v2088 = vunpack.c.l.b16 %v1686
      %v2089 = vunpack.c.h.b16 %v1686
      %v2090 = vunpack.c.l.b16 %v1687
      %v2091 = vunpack.c.h.b16 %v1687
      %v2092 = vunpack.c.l.b16 %v1688
      %v2093 = vunpack.c.h.b16 %v1688
      %v2094 = vunpack.c.l.b16 %v1689
      %v2095 = vunpack.c.h.b16 %v1689
      %v2096 = vunpack.c.l.b16 %v1690
      %v2097 = vunpack.c.h.b16 %v1690
      %v2098 = vunpack.c.l.b16 %v1691
      %v2099 = vunpack.c.h.b16 %v1691
      %v2100 = vunpack.c.l.b16 %v1692
      %v2101 = vunpack.c.h.b16 %v1692
      %v2102 = vunpack.c.l.b16 %v1693
      %v2103 = vunpack.c.h.b16 %v1693
      %v2104 = vunpack.c.l.b16 %v1694
      %v2105 = vunpack.c.h.b16 %v1694
      %v2106 = vunpack.c.l.b16 %v1695
      %v2107 = vunpack.c.h.b16 %v1695
      %v2108 = vunpack.c.l.b16 %v1696
      %v2109 = vunpack.c.h.b16 %v1696
      %v2110 = vunpack.c.l.b16 %v1697
      %v2111 = vunpack.c.h.b16 %v1697
      %v2112 = vunpack.c.l.b16 %v1698
      %v2113 = vunpack.c.h.b16 %v1698
      %v2114 = vunpack.c.l.b16 %v1699
      %v2115 = vunpack.c.h.b16 %v1699
      %v2116 = vunpack.c.l.b16 %v1700
      %v2117 = vunpack.c.h.b16 %v1700
      %v2118 = vunpack.c.l.b16 %v1701
      %v2119 = vunpack.c.h.b16 %v1701
      %v2120 = vunpack.c.l.b16 %v1702
      %v2121 = vunpack.c.h.b16 %v1702
      %v2122 = vunpack.c.l.b16 %v1703
      %v2123 = vunpack.c.h.b16 %v1703
      %v2124 = vunpack.c.l.b16 %v1704
      %v2125 = vunpack.c.h.b16 %v1704
      %v2126 = vunpack.c.l.b16 %v1705
      %v2127 = vunpack.c.h.b16 %v1705
      %v2128 = vunpack.c.l.b16 %v1706
      %v2129 = vunpack.c.h.b16 %v1706
      %v2130 = vunpack.c.l.b16 %v1707
      %v2131 = vunpack.c.h.b16 %v1707
      %v2132 = vunpack.c.l.b16 %v1708
      %v2133 = vunpack.c.h.b16 %v1708
      %v2134 = vunpack.c.l.b16 %v1709
      %v2135 = vunpack.c.h.b16 %v1709
      %v2136 = vunpack.c.l.b16 %v1710
      %v2137 = vunpack.c.h.b16 %v1710
      %v2138 = vunpack.c.l.b16 %v1711
      %v2139 = vunpack.c.h.b16 %v1711
      %v2140 = vunpack.c.l.b16 %v1712
      %v2141 = vunpack.c.h.b16 %v1712
      %v2142 = vunpack.c.l.b16 %v1713
      %v2143 = vunpack.c.h.b16 %v1713
      %v2144 = vunpack.c.l.b16 %v1714
      %v2145 = vunpack.c.h.b16 %v1714
      %v2146 = vunpack.c.l.b16 %v1715
      %v2147 = vunpack.c.h.b16 %v1715
      %v2148 = vunpack.c.l.b16 %v1716
      %v2149 = vunpack.c.h.b16 %v1716
      %v2150 = vunpack.c.l.b16 %v1717
      %v2151 = vunpack.c.h.b16 %v1717
      %v2152 = vunpack.c.l.b16 %v1718
      %v2153 = vunpack.c.h.b16 %v1718
      %v2154 = vunpack.c.l.b16 %v1719
      %v2155 = vunpack.c.h.b16 %v1719
      %v2156 = vunpack.c.l.b16 %v1720
      %v2157 = vunpack.c.h.b16 %v1720
      %v2158 = vunpack.c.l.b16 %v1721
      %v2159 = vunpack.c.h.b16 %v1721
      %v2160 = vunpack.c.l.b16 %v1722
      %v2161 = vunpack.c.h.b16 %v1722
      %v2162 = vunpack.c.l.b16 %v1723
      %v2163 = vunpack.c.h.b16 %v1723
      %v2164 = vunpack.c.l.b16 %v1724
      %v2165 = vunpack.c.h.b16 %v1724
      %v2166 = vunpack.c.l.b16 %v1725
      %v2167 = vunpack.c.h.b16 %v1725
      %v2168 = vunpack.c.l.b16 %v1726
      %v2169 = vunpack.c.h.b16 %v1726
      %v2170 = vunpack.c.l.b16 %v1727
      %v2171 = vunpack.c.h.b16 %v1727
      %v2172 = vunpack.c.l.b16 %v1728
      %v2173 = vunpack.c.h.b16 %v1728
      %v2174 = vunpack.c.l.b16 %v1729
      %v2175 = vunpack.c.h.b16 %v1729
      %v2176 = vunpack.c.l.b16 %v1730
      %v2177 = vunpack.c.h.b16 %v1730
      %v2178 = vunpack.c.l.b16 %v1731
      %v2179 = vunpack.c.h.b16 %v1731
      %v2180 = vunpack.c.l.b16 %v1732
      %v2181 = vunpack.c.h.b16 %v1732
      %v2182 = vunpack.c.l.b16 %v1733
      %v2183 = vunpack.c.h.b16 %v1733
      %v2184 = vunpack.c.l.b16 %v1734
      %v2185 = vunpack.c.h.b16 %v1734
      %v2186 = vunpack.c.l.b16 %v1735
      %v2187 = vunpack.c.h.b16 %v1735
      %v2188 = vunpack.c.l.b16 %v1736
      %v2189 = vunpack.c.h.b16 %v1736
      %v2190 = vunpack.c.l.b16 %v1737
      %v2191 = vunpack.c.h.b16 %v1737
      %v2192 = vunpack.c.l.b16 %v1738
      %v2193 = vunpack.c.h.b16 %v1738
      %v2194 = vunpack.c.l.b16 %v1739
      %v2195 = vunpack.c.h.b16 %v1739
      %v2196 = vunpack.c.l.b16 %v1740
      %v2197 = vunpack.c.h.b16 %v1740
      %v2198 = vunpack.c.l.b16 %v1741
      %v2199 = vunpack.c.h.b16 %v1741
      %v2200 = vunpack.c.l.b16 %v1742
      %v2201 = vunpack.c.h.b16 %v1742
      %v2202 = vunpack.c.l.b16 %v1743
      %v2203 = vunpack.c.h.b16 %v1743
      %v2204 = vunpack.c.l.b16 %v1744
      %v2205 = vunpack.c.h.b16 %v1744
      %v2206 = vunpack.c.l.b16 %v1745
      %v2207 = vunpack.c.h.b16 %v1745
      %v2208 = vunpack.c.l.b16 %v1746
      %v2209 = vunpack.c.h.b16 %v1746
      %v2210 = vunpack.c.l.b16 %v1747
      %v2211 = vunpack.c.h.b16 %v1747
      %v2212 = vunpack.c.l.b16 %v1748
      %v2213 = vunpack.c.h.b16 %v1748
      %v2214 = vunpack.c.l.b16 %v1749
      %v2215 = vunpack.c.h.b16 %v1749
      %v2216 = vunpack.c.l.b16 %v1750
      %v2217 = vunpack.c.h.b16 %v1750
      %v2218 = vunpack.c.l.b16 %v1751
      %v2219 = vunpack.c.h.b16 %v1751
      %v2220 = vunpack.c.l.b16 %v1752
      %v2221 = vunpack.c.h.b16 %v1752
      %v2222 = vunpack.c.l.b16 %v1753
      %v2223 = vunpack.c.h.b16 %v1753
      %v2224 = vunpack.c.l.b16 %v1754
      %v2225 = vunpack.c.h.b16 %v1754
      %v2226 = vunpack.c.l.b16 %v1755
      %v2227 = vunpack.c.h.b16 %v1755
      %v2228 = vunpack.c.l.b16 %v1756
      %v2229 = vunpack.c.h.b16 %v1756
      %v2230 = vunpack.c.l.b16 %v1757
      %v2231 = vunpack.c.h.b16 %v1757
      %v2232 = vunpack.c.l.b16 %v1758
      %v2233 = vunpack.c.h.b16 %v1758
      %v2234 = vunpack.c.l.b16 %v1759
      %v2235 = vunpack.c.h.b16 %v1759
      %v2236 = vunpack.c.l.b16 %v1760
      %v2237 = vunpack.c.h.b16 %v1760
      %v2238 = vunpack.c.l.b16 %v1761
      %v2239 = vunpack.c.h.b16 %v1761
      %v2240 = vunpack.c.l.b16 %v1762
      %v2241 = vunpack.c.h.b16 %v1762
      %v2242 = vunpack.c.l.b16 %v1763
      %v2243 = vunpack.c.h.b16 %v1763
      %v2244 = vunpack.c.l.b16 %v1764
      %v2245 = vunpack.c.h.b16 %v1764
      %v2246 = vunpack.c.l.b16 %v1765
      %v2247 = vunpack.c.h.b16 %v1765
      %v2248 = vunpack.c.l.b16 %v1766
      %v2249 = vunpack.c.h.b16 %v1766
      %v2250 = vunpack.c.l.b16 %v1767
      %v2251 = vunpack.c.h.b16 %v1767
      %v2252 = vunpack.c.l.b16 %v1768
      %v2253 = vunpack.c.h.b16 %v1768
      %v2254 = vunpack.c.l.b16 %v1769
      %v2255 = vunpack.c.h.b16 %v1769
      %v2256 = vunpack.c.l.b16 %v1770
      %v2257 = vunpack.c.h.b16 %v1770
      %v2258 = vunpack.c.l.b16 %v1771
      %v2259 = vunpack.c.h.b16 %v1771
      %v2260 = vpack.c.b16 %v2028, %v2020
      %v2261 = vpack.c.b16 %v2029, %v2021
      %v2262 = vpack.c.b16 %v2030, %v2022
      %v2263 = vpack.c.b16 %v2031, %v2023
      %v2264 = vpack.c.b16 %v2032, %v2024
      %v2265 = vpack.c.b16 %v2033, %v2025
      %v2266 = vpack.c.b16 %v2034, %v2026
      %v2267 = vpack.c.b16 %v2035, %v2027
      %v2268 = vpack.c.b16 %v2044, %v2036
      %v2269 = vpack.c.b16 %v2045, %v2037
      %v2270 = vpack.c.b16 %v2046, %v2038
      %v2271 = vpack.c.b16 %v2047, %v2039
      %v2272 = vpack.c.b16 %v2048, %v2040
      %v2273 = vpack.c.b16 %v2049, %v2041
      %v2274 = vpack.c.b16 %v2050, %v2042
      %v2275 = vpack.c.b16 %v2051, %v2043
      %v2276 = vpack.c.b16 %v2060, %v2052
      %v2277 = vpack.c.b16 %v2061, %v2053
      %v2278 = vpack.c.b16 %v2062, %v2054
      %v2279 = vpack.c.b16 %v2063, %v2055
      %v2280 = vpack.c.b16 %v2064, %v2056
      %v2281 = vpack.c.b16 %v2065, %v2057
      %v2282 = vpack.c.b16 %v2066, %v2058
      %v2283 = vpack.c.b16 %v2067, %v2059
      %v2284 = vpack.c.b16 %v2076, %v2068
      %v2285 = vpack.c.b16 %v2077, %v2069
      %v2286 = vpack.c.b16 %v2078, %v2070
      %v2287 = vpack.c.b16 %v2079, %v2071
      %v2288 = vpack.c.b16 %v2080, %v2072
      %v2289 = vpack.c.b16 %v2081, %v2073
      %v2290 = vpack.c.b16 %v2082, %v2074
      %v2291 = vpack.c.b16 %v2083, %v2075
      %v2292 = vpack.c.b16 %v2092, %v2084
      %v2293 = vpack.c.b16 %v2093, %v2085
      %v2294 = vpack.c.b16 %v2094, %v2086
      %v2295 = vpack.c.b16 %v2095, %v2087
      %v2296 = vpack.c.b16 %v2096, %v2088
      %v2297 = vpack.c.b16 %v2097, %v2089
      %v2298 = vpack.c.b16 %v2098, %v2090
      %v2299 = vpack.c.b16 %v2099, %v2091
      %v2300 = vpack.c.b16 %v2108, %v2100
      %v2301 = vpack.c.b16 %v2109, %v2101
      %v2302 = vpack.c.b16 %v2110, %v2102
      %v2303 = vpack.c.b16 %v2111, %v2103
      %v2304 = vpack.c.b16 %v2112, %v2104
      %v2305 = vpack.c.b16 %v2113, %v2105
      %v2306 = vpack.c.b16 %v2114, %v2106
      %v2307 = vpack.c.b16 %v2115, %v2107
      %v2308 = vpack.c.b16 %v2124, %v2116
      %v2309 = vpack.c.b16 %v2125, %v2117
      %v2310 = vpack.c.b16 %v2126, %v2118
      %v2311 = vpack.c.b16 %v2127, %v2119
      %v2312 = vpack.c.b16 %v2128, %v2120
      %v2313 = vpack.c.b16 %v2129, %v2121
      %v2314 = vpack.c.b16 %v2130, %v2122
      %v2315 = vpack.c.b16 %v2131, %v2123
      %v2316 = vpack.c.b16 %v2140, %v2132
      %v2317 = vpack.c.b16 %v2141, %v2133
      %v2318 = vpack.c.b16 %v2142, %v2134
      %v2319 = vpack.c.b16 %v2143, %v2135
      %v2320 = vpack.c.b16 %v2144, %v2136
      %v2321 = vpack.c.b16 %v2145, %v2137
      %v2322 = vpack.c.b16 %v2146, %v2138
      %v2323 = vpack.c.b16 %v2147, %v2139
      %v2324 = vpack.c.b16 %v2156, %v2148
      %v2325 = vpack.c.b16 %v2157, %v2149
      %v2326 = vpack.c.b16 %v2158, %v2150
      %v2327 = vpack.c.b16 %v2159, %v2151
      %v2328 = vpack.c.b16 %v2160, %v2152
      %v2329 = vpack.c.b16 %v2161, %v2153
      %v2330 = vpack.c.b16 %v2162, %v2154
      %v2331 = vpack.c.b16 %v2163, %v2155
      %v2332 = vpack.c.b16 %v2172, %v2164
      %v2333 = vpack.c.b16 %v2173, %v2165
      %v2334 = vpack.c.b16 %v2174, %v2166
      %v2335 = vpack.c.b16 %v2175, %v2167
      %v2336 = vpack.c.b16 %v2176, %v2168
      %v2337 = vpack.c.b16 %v2177, %v2169
      %v2338 = vpack.c.b16 %v2178, %v2170
      %v2339 = vpack.c.b16 %v2179, %v2171
      %v2340 = vpack.c.b16 %v2188, %v2180
      %v2341 = vpack.c.b16 %v2189, %v2181
      %v2342 = vpack.c.b16 %v2190, %v2182
      %v2343 = vpack.c.b16 %v2191, %v2183
      %v2344 = vpack.c.b16 %v2192, %v2184
      %v2345 = vpack.c.b16 %v2193, %v2185
      %v2346 = vpack.c.b16 %v2194, %v2186
      %v2347 = vpack.c.b16 %v2195, %v2187
      %v2348 = vpack.c.b16 %v2204, %v2196
      %v2349 = vpack.c.b16 %v2205, %v2197
      %v2350 = vpack.c.b16 %v2206, %v2198
      %v2351 = vpack.c.b16 %v2207, %v2199
      %v2352 = vpack.c.b16 %v2208, %v2200
      %v2353 = vpack.c.b16 %v2209, %v2201
      %v2354 = vpack.c.b16 %v2210, %v2202
      %v2355 = vpack.c.b16 %v2211, %v2203
      %v2356 = vpack.c.b16 %v2220, %v2212
      %v2357 = vpack.c.b16 %v2221, %v2213
      %v2358 = vpack.c.b16 %v2222, %v2214
      %v2359 = vpack.c.b16 %v2223, %v2215
      %v2360 = vpack.c.b16 %v2224, %v2216
      %v2361 = vpack.c.b16 %v2225, %v2217
      %v2362 = vpack.c.b16 %v2226, %v2218
      %v2363 = vpack.c.b16 %v2227, %v2219
      %v2364 = vpack.c.b16 %v2236, %v2228
      %v2365 = vpack.c.b16 %v2237, %v2229
      %v2366 = vpack.c.b16 %v2238, %v2230
      %v2367 = vpack.c.b16 %v2239, %v2231
      %v2368 = vpack.c.b16 %v2240, %v2232
      %v2369 = vpack.c.b16 %v2241, %v2233
      %v2370 = vpack.c.b16 %v2242, %v2234
      %v2371 = vpack.c.b16 %v2243, %v2235
      %v2372 = vpack.c.b16 %v2252, %v2244
      %v2373 = vpack.c.b16 %v2253, %v2245
      %v2374 = vpack.c.b16 %v2254, %v2246
      %v2375 = vpack.c.b16 %v2255, %v2247
      %v2376 = vpack.c.b16 %v2256, %v2248
      %v2377 = vpack.c.b16 %v2257, %v2249
      %v2378 = vpack.c.b16 %v2258, %v2250
      %v2379 = vpack.c.b16 %v2259, %v2251
      %v2628 = vunpack.c.l.b16 %v1772
      %v2629 = vunpack.c.h.b16 %v1772
      %v2630 = vunpack.c.l.b16 %v1773
      %v2631 = vunpack.c.h.b16 %v1773
      %v2632 = vunpack.c.l.b16 %v1774
      %v2633 = vunpack.c.h.b16 %v1774
      %v2634 = vunpack.c.l.b16 %v1775
      %v2635 = vunpack.c.h.b16 %v1775
      %v2636 = vunpack.c.l.b16 %v1776
      %v2637 = vunpack.c.h.b16 %v1776
      %v2638 = vunpack.c.l.b16 %v1777
      %v2639 = vunpack.c.h.b16 %v1777
      %v2640 = vunpack.c.l.b16 %v1778
      %v2641 = vunpack.c.h.b16 %v1778
      %v2642 = vunpack.c.l.b16 %v1779
      %v2643 = vunpack.c.h.b16 %v1779
      %v2644 = vunpack.c.l.b16 %v1780
      %v2645 = vunpack.c.h.b16 %v1780
      %v2646 = vunpack.c.l.b16 %v1781
      %v2647 = vunpack.c.h.b16 %v1781
      %v2648 = vunpack.c.l.b16 %v1782
      %v2649 = vunpack.c.h.b16 %v1782
      %v2650 = vunpack.c.l.b16 %v1783
      %v2651 = vunpack.c.h.b16 %v1783
      %v2652 = vunpack.c.l.b16 %v1784
      %v2653 = vunpack.c.h.b16 %v1784
      %v2654 = vunpack.c.l.b16 %v1785
      %v2655 = vunpack.c.h.b16 %v1785
      %v2656 = vunpack.c.l.b16 %v1786
      %v2657 = vunpack.c.h.b16 %v1786
      %v2658 = vunpack.c.l.b16 %v1787
      %v2659 = vunpack.c.h.b16 %v1787
      %v2660 = vunpack.c.l.b16 %v1788
      %v2661 = vunpack.c.h.b16 %v1788
      %v2662 = vunpack.c.l.b16 %v1789
      %v2663 = vunpack.c.h.b16 %v1789
      %v2664 = vunpack.c.l.b16 %v1790
      %v2665 = vunpack.c.h.b16 %v1790
      %v2666 = vunpack.c.l.b16 %v1791
      %v2667 = vunpack.c.h.b16 %v1791
      %v2668 = vunpack.c.l.b16 %v1792
      %v2669 = vunpack.c.h.b16 %v1792
      %v2670 = vunpack.c.l.b16 %v1793
      %v2671 = vunpack.c.h.b16 %v1793
      %v2672 = vunpack.c.l.b16 %v1794
      %v2673 = vunpack.c.h.b16 %v1794
      %v2674 = vunpack.c.l.b16 %v1795
      %v2675 = vunpack.c.h.b16 %v1795
      %v2676 = vunpack.c.l.b16 %v1796
      %v2677 = vunpack.c.h.b16 %v1796
      %v2678 = vunpack.c.l.b16 %v1797
      %v2679 = vunpack.c.h.b16 %v1797
      %v2680 = vunpack.c.l.b16 %v1798
      %v2681 = vunpack.c.h.b16 %v1798
      %v2682 = vunpack.c.l.b16 %v1799
      %v2683 = vunpack.c.h.b16 %v1799
      %v2684 = vunpack.c.l.b16 %v1800
      %v2685 = vunpack.c.h.b16 %v1800
      %v2686 = vunpack.c.l.b16 %v1801
      %v2687 = vunpack.c.h.b16 %v1801
      %v2688 = vunpack.c.l.b16 %v1802
      %v2689 = vunpack.c.h.b16 %v1802
      %v2690 = vunpack.c.l.b16 %v1803
      %v2691 = vunpack.c.h.b16 %v1803
      %v2692 = vunpack.c.l.b16 %v1804
      %v2693 = vunpack.c.h.b16 %v1804
      %v2694 = vunpack.c.l.b16 %v1805
      %v2695 = vunpack.c.h.b16 %v1805
      %v2696 = vunpack.c.l.b16 %v1806
      %v2697 = vunpack.c.h.b16 %v1806
      %v2698 = vunpack.c.l.b16 %v1807
      %v2699 = vunpack.c.h.b16 %v1807
      %v2700 = vunpack.c.l.b16 %v1808
      %v2701 = vunpack.c.h.b16 %v1808
      %v2702 = vunpack.c.l.b16 %v1809
      %v2703 = vunpack.c.h.b16 %v1809
      %v2704 = vunpack.c.l.b16 %v1810
      %v2705 = vunpack.c.h.b16 %v1810
      %v2706 = vunpack.c.l.b16 %v1811
      %v2707 = vunpack.c.h.b16 %v1811
      %v2708 = vunpack.c.l.b16 %v1812
      %v2709 = vunpack.c.h.b16 %v1812
      %v2710 = vunpack.c.l.b16 %v1813
      %v2711 = vunpack.c.h.b16 %v1813
      %v2712 = vunpack.c.l.b16 %v1814
      %v2713 = vunpack.c.h.b16 %v1814
      %v2714 = vunpack.c.l.b16 %v1815
      %v2715 = vunpack.c.h.b16 %v1815
      %v2716 = vunpack.c.l.b16 %v1816
      %v2717 = vunpack.c.h.b16 %v1816
      %v2718 = vunpack.c.l.b16 %v1817
      %v2719 = vunpack.c.h.b16 %v1817
      %v2720 = vunpack.c.l.b16 %v1818
      %v2721 = vunpack.c.h.b16 %v1818
      %v2722 = vunpack.c.l.b16 %v1819
      %v2723 = vunpack.c.h.b16 %v1819
      %v2724 = vunpack.c.l.b16 %v1820
      %v2725 = vunpack.c.h.b16 %v1820
      %v2726 = vunpack.c.l.b16 %v1821
      %v2727 = vunpack.c.h.b16 %v1821
      %v2728 = vunpack.c.l.b16 %v1822
      %v2729 = vunpack.c.h.b16 %v1822
      %v2730 = vunpack.c.l.b16 %v1823
      %v2731 = vunpack.c.h.b16 %v1823
      %v2732 = vunpack.c.l.b16 %v1824
      %v2733 = vunpack.c.h.b16 %v1824
      %v2734 = vunpack.c.l.b16 %v1825
      %v2735 = vunpack.c.h.b16 %v1825
      %v2736 = vunpack.c.l.b16 %v1826
      %v2737 = vunpack.c.h.b16 %v1826
      %v2738 = vunpack.c.l.b16 %v1827
      %v2739 = vunpack.c.h.b16 %v1827
      %v2740 = vunpack.c.l.b16 %v1828
      %v2741 = vunpack.c.h.b16 %v1828
      %v2742 = vunpack.c.l.b16 %v1829
      %v2743 = vunpack.c.h.b16 %v1829
      %v2744 = vunpack.c.l.b16 %v1830
      %v2745 = vunpack.c.h.b16 %v1830
      %v2746 = vunpack.c.l.b16 %v1831
      %v2747 = vunpack.c.h.b16 %v1831
      %v2748 = vunpack.c.l.b16 %v1832
      %v2749 = vunpack.c.h.b16 %v1832
      %v2750 = vunpack.c.l.b16 %v1833
      %v2751 = vunpack.c.h.b16 %v1833
      %v2752 = vunpack.c.l.b16 %v1834
      %v2753 = vunpack.c.h.b16 %v1834
      %v2754 = vunpack.c.l.b16 %v1835
      %v2755 = vunpack.c.h.b16 %v1835
      %v2756 = vunpack.c.l.b16 %v1836
      %v2757 = vunpack.c.h.b16 %v1836
      %v2758 = vunpack.c.l.b16 %v1837
      %v2759 = vunpack.c.h.b16 %v1837
      %v2760 = vunpack.c.l.b16 %v1838
      %v2761 = vunpack.c.h.b16 %v1838
      %v2762 = vunpack.c.l.b16 %v1839
      %v2763 = vunpack.c.h.b16 %v1839
      %v2764 = vunpack.c.l.b16 %v1840
      %v2765 = vunpack.c.h.b16 %v1840
      %v2766 = vunpack.c.l.b16 %v1841
      %v2767 = vunpack.c.h.b16 %v1841
      %v2768 = vunpack.c.l.b16 %v1842
      %v2769 = vunpack.c.h.b16 %v1842
      %v2770 = vunpack.c.l.b16 %v1843
      %v2771 = vunpack.c.h.b16 %v1843
      %v2772 = vunpack.c.l.b16 %v1844
      %v2773 = vunpack.c.h.b16 %v1844
      %v2774 = vunpack.c.l.b16 %v1845
      %v2775 = vunpack.c.h.b16 %v1845
      %v2776 = vunpack.c.l.b16 %v1846
      %v2777 = vunpack.c.h.b16 %v1846
      %v2778 = vunpack.c.l.b16 %v1847
      %v2779 = vunpack.c.h.b16 %v1847
      %v2780 = vunpack.c.l.b16 %v1848
      %v2781 = vunpack.c.h.b16 %v1848
      %v2782 = vunpack.c.l.b16 %v1849
      %v2783 = vunpack.c.h.b16 %v1849
      %v2784 = vunpack.c.l.b16 %v1850
      %v2785 = vunpack.c.h.b16 %v1850
      %v2786 = vunpack.c.l.b16 %v1851
      %v2787 = vunpack.c.h.b16 %v1851
      %v2788 = vunpack.c.l.b16 %v1852
      %v2789 = vunpack.c.h.b16 %v1852
      %v2790 = vunpack.c.l.b16 %v1853
      %v2791 = vunpack.c.h.b16 %v1853
      %v2792 = vunpack.c.l.b16 %v1854
      %v2793 = vunpack.c.h.b16 %v1854
      %v2794 = vunpack.c.l.b16 %v1855
      %v2795 = vunpack.c.h.b16 %v1855
      %v2796 = vunpack.c.l.b16 %v1856
      %v2797 = vunpack.c.h.b16 %v1856
      %v2798 = vunpack.c.l.b16 %v1857
      %v2799 = vunpack.c.h.b16 %v1857
      %v2800 = vunpack.c.l.b16 %v1858
      %v2801 = vunpack.c.h.b16 %v1858
      %v2802 = vunpack.c.l.b16 %v1859
      %v2803 = vunpack.c.h.b16 %v1859
      %v2804 = vunpack.c.l.b16 %v1860
      %v2805 = vunpack.c.h.b16 %v1860
      %v2806 = vunpack.c.l.b16 %v1861
      %v2807 = vunpack.c.h.b16 %v1861
      %v2808 = vunpack.c.l.b16 %v1862
      %v2809 = vunpack.c.h.b16 %v1862
      %v2810 = vunpack.c.l.b16 %v1863
      %v2811 = vunpack.c.h.b16 %v1863
      %v2812 = vunpack.c.l.b16 %v1864
      %v2813 = vunpack.c.h.b16 %v1864
      %v2814 = vunpack.c.l.b16 %v1865
      %v2815 = vunpack.c.h.b16 %v1865
      %v2816 = vunpack.c.l.b16 %v1866
      %v2817 = vunpack.c.h.b16 %v1866
      %v2818 = vunpack.c.l.b16 %v1867
      %v2819 = vunpack.c.h.b16 %v1867
      %v2820 = vunpack.c.l.b16 %v1868
      %v2821 = vunpack.c.h.b16 %v1868
      %v2822 = vunpack.c.l.b16 %v1869
      %v2823 = vunpack.c.h.b16 %v1869
      %v2824 = vunpack.c.l.b16 %v1870
      %v2825 = vunpack.c.h.b16 %v1870
      %v2826 = vunpack.c.l.b16 %v1871
      %v2827 = vunpack.c.h.b16 %v1871
      %v2828 = vunpack.c.l.b16 %v1872
      %v2829 = vunpack.c.h.b16 %v1872
      %v2830 = vunpack.c.l.b16 %v1873
      %v2831 = vunpack.c.h.b16 %v1873
      %v2832 = vunpack.c.l.b16 %v1874
      %v2833 = vunpack.c.h.b16 %v1874
      %v2834 = vunpack.c.l.b16 %v1875
      %v2835 = vunpack.c.h.b16 %v1875
      %v2836 = vunpack.c.l.b16 %v1876
      %v2837 = vunpack.c.h.b16 %v1876
      %v2838 = vunpack.c.l.b16 %v1877
      %v2839 = vunpack.c.h.b16 %v1877
      %v2840 = vunpack.c.l.b16 %v1878
      %v2841 = vunpack.c.h.b16 %v1878
      %v2842 = vunpack.c.l.b16 %v1879
      %v2843 = vunpack.c.h.b16 %v1879
      %v2844 = vunpack.c.l.b16 %v1880
      %v2845 = vunpack.c.h.b16 %v1880
      %v2846 = vunpack.c.l.b16 %v1881
      %v2847 = vunpack.c.h.b16 %v1881
      %v2848 = vunpack.c.l.b16 %v1882
      %v2849 = vunpack.c.h.b16 %v1882
      %v2850 = vunpack.c.l.b16 %v1883
      %v2851 = vunpack.c.h.b16 %v1883
      %v2852 = vunpack.c.l.b16 %v1884
      %v2853 = vunpack.c.h.b16 %v1884
      %v2854 = vunpack.c.l.b16 %v1885
      %v2855 = vunpack.c.h.b16 %v1885
      %v2856 = vunpack.c.l.b16 %v1886
      %v2857 = vunpack.c.h.b16 %v1886
      %v2858 = vunpack.c.l.b16 %v1887
      %v2859 = vunpack.c.h.b16 %v1887
      %v2860 = vunpack.c.l.b16 %v1888
      %v2861 = vunpack.c.h.b16 %v1888
      %v2862 = vunpack.c.l.b16 %v1889
      %v2863 = vunpack.c.h.b16 %v1889
      %v2864 = vunpack.c.l.b16 %v1890
      %v2865 = vunpack.c.h.b16 %v1890
      %v2866 = vunpack.c.l.b16 %v1891
      %v2867 = vunpack.c.h.b16 %v1891
      %v2868 = vunpack.c.l.b16 %v1892
      %v2869 = vunpack.c.h.b16 %v1892
      %v2870 = vunpack.c.l.b16 %v1893
      %v2871 = vunpack.c.h.b16 %v1893
      %v2872 = vunpack.c.l.b16 %v1894
      %v2873 = vunpack.c.h.b16 %v1894
      %v2874 = vunpack.c.l.b16 %v1895
      %v2875 = vunpack.c.h.b16 %v1895
      %v2876 = vunpack.c.l.b16 %v1896
      %v2877 = vunpack.c.h.b16 %v1896
      %v2878 = vunpack.c.l.b16 %v1897
      %v2879 = vunpack.c.h.b16 %v1897
      %v2880 = vunpack.c.l.b16 %v1898
      %v2881 = vunpack.c.h.b16 %v1898
      %v2882 = vunpack.c.l.b16 %v1899
      %v2883 = vunpack.c.h.b16 %v1899
      %v2884 = vpack.c.b16 %v2630, %v2628
      %v2885 = vpack.c.b16 %v2631, %v2629
      %v2886 = vpack.c.b16 %v2634, %v2632
      %v2887 = vpack.c.b16 %v2635, %v2633
      %v2888 = vpack.c.b16 %v2638, %v2636
      %v2889 = vpack.c.b16 %v2639, %v2637
      %v2890 = vpack.c.b16 %v2642, %v2640
      %v2891 = vpack.c.b16 %v2643, %v2641
      %v2892 = vpack.c.b16 %v2646, %v2644
      %v2893 = vpack.c.b16 %v2647, %v2645
      %v2894 = vpack.c.b16 %v2650, %v2648
      %v2895 = vpack.c.b16 %v2651, %v2649
      %v2896 = vpack.c.b16 %v2654, %v2652
      %v2897 = vpack.c.b16 %v2655, %v2653
      %v2898 = vpack.c.b16 %v2658, %v2656
      %v2899 = vpack.c.b16 %v2659, %v2657
      %v2900 = vpack.c.b16 %v2662, %v2660
      %v2901 = vpack.c.b16 %v2663, %v2661
      %v2902 = vpack.c.b16 %v2666, %v2664
      %v2903 = vpack.c.b16 %v2667, %v2665
      %v2904 = vpack.c.b16 %v2670, %v2668
      %v2905 = vpack.c.b16 %v2671, %v2669
      %v2906 = vpack.c.b16 %v2674, %v2672
      %v2907 = vpack.c.b16 %v2675, %v2673
      %v2908 = vpack.c.b16 %v2678, %v2676
      %v2909 = vpack.c.b16 %v2679, %v2677
      %v2910 = vpack.c.b16 %v2682, %v2680
      %v2911 = vpack.c.b16 %v2683, %v2681
      %v2912 = vpack.c.b16 %v2686, %v2684
      %v2913 = vpack.c.b16 %v2687, %v2685
      %v2914 = vpack.c.b16 %v2690, %v2688
      %v2915 = vpack.c.b16 %v2691, %v2689
      %v2916 = vpack.c.b16 %v2694, %v2692
      %v2917 = vpack.c.b16 %v2695, %v2693
      %v2918 = vpack.c.b16 %v2698, %v2696
      %v2919 = vpack.c.b16 %v2699, %v2697
      %v2920 = vpack.c.b16 %v2702, %v2700
      %v2921 = vpack.c.b16 %v2703, %v2701
      %v2922 = vpack.c.b16 %v2706, %v2704
      %v2923 = vpack.c.b16 %v2707, %v2705
      %v2924 = vpack.c.b16 %v2710, %v2708
      %v2925 = vpack.c.b16 %v2711, %v2709
      %v2926 = vpack.c.b16 %v2714, %v2712
      %v2927 = vpack.c.b16 %v2715, %v2713
      %v2928 = vpack.c.b16 %v2718, %v2716
      %v2929 = vpack.c.b16 %v2719, %v2717
      %v2930 = vpack.c.b16 %v2722, %v2720
      %v2931 = vpack.c.b16 %v2723, %v2721
      %v2932 = vpack.c.b16 %v2726, %v2724
      %v2933 = vpack.c.b16 %v2727, %v2725
      %v2934 = vpack.c.b16 %v2730, %v2728
      %v2935 = vpack.c.b16 %v2731, %v2729
      %v2936 = vpack.c.b16 %v2734, %v2732
      %v2937 = vpack.c.b16 %v2735, %v2733
      %v2938 = vpack.c.b16 %v2738, %v2736
      %v2939 = vpack.c.b16 %v2739, %v2737
      %v2940 = vpack.c.b16 %v2742, %v2740
      %v2941 = vpack.c.b16 %v2743, %v2741
      %v2942 = vpack.c.b16 %v2746, %v2744
      %v2943 = vpack.c.b16 %v2747, %v2745
      %v2944 = vpack.c.b16 %v2750, %v2748
      %v2945 = vpack.c.b16 %v2751, %v2749
      %v2946 = vpack.c.b16 %v2754, %v2752
      %v2947 = vpack.c.b16 %v2755, %v2753
      %v2948 = vpack.c.b16 %v2758, %v2756
      %v2949 = vpack.c.b16 %v2759, %v2757
      %v2950 = vpack.c.b16 %v2762, %v2760
      %v2951 = vpack.c.b16 %v2763, %v2761
      %v2952 = vpack.c.b16 %v2766, %v2764
      %v2953 = vpack.c.b16 %v2767, %v2765
      %v2954 = vpack.c.b16 %v2770, %v2768
      %v2955 = vpack.c.b16 %v2771, %v2769
      %v2956 = vpack.c.b16 %v2774, %v2772
      %v2957 = vpack.c.b16 %v2775, %v2773
      %v2958 = vpack.c.b16 %v2778, %v2776
      %v2959 = vpack.c.b16 %v2779, %v2777
      %v2960 = vpack.c.b16 %v2782, %v2780
      %v2961 = vpack.c.b16 %v2783, %v2781
      %v2962 = vpack.c.b16 %v2786, %v2784
      %v2963 = vpack.c.b16 %v2787, %v2785
      %v2964 = vpack.c.b16 %v2790, %v2788
      %v2965 = vpack.c.b16 %v2791, %v2789
      %v2966 = vpack.c.b16 %v2794, %v2792
      %v2967 = vpack.c.b16 %v2795, %v2793
      %v2968 = vpack.c.b16 %v2798, %v2796
      %v2969 = vpack.c.b16 %v2799, %v2797
      %v2970 = vpack.c.b16 %v2802, %v2800
      %v2971 = vpack.c.b16 %v2803, %v2801
      %v2972 = vpack.c.b16 %v2806, %v2804
      %v2973 = vpack.c.b16 %v2807, %v2805
      %v2974 = vpack.c.b16 %v2810, %v2808
      %v2975 = vpack.c.b16 %v2811, %v2809
      %v2976 = vpack.c.b16 %v2814, %v2812
      %v2977 = vpack.c.b16 %v2815, %v2813
      %v2978 = vpack.c.b16 %v2818, %v2816
      %v2979 = vpack.c.b16 %v2819, %v2817
      %v2980 = vpack.c.b16 %v2822, %v2820
      %v2981 = vpack.c.b16 %v2823, %v2821
      %v2982 = vpack.c.b16 %v2826, %v2824
      %v2983 = vpack.c.b16 %v2827, %v2825
      %v2984 = vpack.c.b16 %v2830, %v2828
      %v2985 = vpack.c.b16 %v2831, %v2829
      %v2986 = vpack.c.b16 %v2834, %v2832
      %v2987 = vpack.c.b16 %v2835, %v2833
      %v2988 = vpack.c.b16 %v2838, %v2836
      %v2989 = vpack.c.b16 %v2839, %v2837
      %v2990 = vpack.c.b16 %v2842, %v2840
      %v2991 = vpack.c.b16 %v2843, %v2841
      %v2992 = vpack.c.b16 %v2846, %v2844
      %v2993 = vpack.c.b16 %v2847, %v2845
      %v2994 = vpack.c.b16 %v2850, %v2848
      %v2995 = vpack.c.b16 %v2851, %v2849
      %v2996 = vpack.c.b16 %v2854, %v2852
      %v2997 = vpack.c.b16 %v2855, %v2853
      %v2998 = vpack.c.b16 %v2858, %v2856
      %v2999 = vpack.c.b16 %v2859, %v2857
      %v3000 = vpack.c.b16 %v2862, %v2860
      %v3001 = vpack.c.b16 %v2863, %v2861
      %v3002 = vpack.c.b16 %v2866, %v2864
      %v3003 = vpack.c.b16 %v2867, %v2865
      %v3004 = vpack.c.b16 %v2870, %v2868
      %v3005 = vpack.c.b16 %v2871, %v2869
      %v3006 = vpack.c.b16 %v2874, %v2872
      %v3007 = vpack.c.b16 %v2875, %v2873
      %v3008 = vpack.c.b16 %v2878, %v2876
      %v3009 = vpack.c.b16 %v2879, %v2877
      %v3010 = vpack.c.b16 %v2882, %v2880
      %v3011 = vpack.c.b16 %v2883, %v2881
      %3140 = vmatpush.bf16.msra.mxu0 %v2898
      %3141 = vmatpush.bf16.msra.mxu0 %v2896
      %3142 = vmatpush.bf16.msra.mxu0 %v2894
      %3143 = vmatpush.bf16.msra.mxu0 %v2892
      %3144 = vmatpush.bf16.msra.mxu0 %v2890
      %3145 = vmatpush.bf16.msra.mxu0 %v2888
      %3146 = vmatpush.bf16.msra.mxu0 %v2886
      %3147 = vmatpush.bf16.msra.mxu0 %v2884
      %3148 = vmatmul.bf16.gmra.mxu0 %v2260
      %v3149 = vpop.f32.mrf.mxu0
      %v3150 = vadd.f32 0.0, %v3149
      %v3151 = vpop.f32.mrf.mxu0
      %v3152 = vadd.f32 0.0, %v3151
      %3153 = vmatmul.bf16.gmra.mxu0 %v2268
      %v3154 = vpop.f32.mrf.mxu0
      %v3155 = vadd.f32 0.0, %v3154
      %v3156 = vpop.f32.mrf.mxu0
      %v3157 = vadd.f32 0.0, %v3156
      %3158 = vmatmul.bf16.gmra.mxu0 %v2276
      %v3159 = vpop.f32.mrf.mxu0
      %v3160 = vadd.f32 0.0, %v3159
      %v3161 = vpop.f32.mrf.mxu0
      %v3162 = vadd.f32 0.0, %v3161
      %3163 = vmatmul.bf16.gmra.mxu0 %v2284
      %v3164 = vpop.f32.mrf.mxu0
      %v3165 = vadd.f32 0.0, %v3164
      %v3166 = vpop.f32.mrf.mxu0
      %v3167 = vadd.f32 0.0, %v3166
      %3168 = vmatmul.bf16.gmra.mxu0 %v2292
      %v3169 = vpop.f32.mrf.mxu0
      %v3170 = vadd.f32 0.0, %v3169
      %v3171 = vpop.f32.mrf.mxu0
      %v3172 = vadd.f32 0.0, %v3171
      %3173 = vmatmul.bf16.gmra.mxu0 %v2300
      %v3174 = vpop.f32.mrf.mxu0
      %v3175 = vadd.f32 0.0, %v3174
      %v3176 = vpop.f32.mrf.mxu0
      %v3177 = vadd.f32 0.0, %v3176
      %3178 = vmatmul.bf16.gmra.mxu0 %v2308
      %v3179 = vpop.f32.mrf.mxu0
      %v3180 = vadd.f32 0.0, %v3179
      %v3181 = vpop.f32.mrf.mxu0
      %v3182 = vadd.f32 0.0, %v3181
      %3183 = vmatmul.bf16.gmra.mxu0 %v2316
      %v3184 = vpop.f32.mrf.mxu0
      %v3185 = vadd.f32 0.0, %v3184
      %v3186 = vpop.f32.mrf.mxu0
      %v3187 = vadd.f32 0.0, %v3186
      %3188 = vmatmul.bf16.gmra.mxu0 %v2324
      %v3189 = vpop.f32.mrf.mxu0
      %v3190 = vadd.f32 0.0, %v3189
      %v3191 = vpop.f32.mrf.mxu0
      %v3192 = vadd.f32 0.0, %v3191
      %3193 = vmatmul.bf16.gmra.mxu0 %v2332
      %v3194 = vpop.f32.mrf.mxu0
      %v3195 = vadd.f32 0.0, %v3194
      %v3196 = vpop.f32.mrf.mxu0
      %v3197 = vadd.f32 0.0, %v3196
      %3198 = vmatmul.bf16.gmra.mxu0 %v2340
      %v3199 = vpop.f32.mrf.mxu0
      %v3200 = vadd.f32 0.0, %v3199
      %v3201 = vpop.f32.mrf.mxu0
      %v3202 = vadd.f32 0.0, %v3201
      %3203 = vmatmul.bf16.gmra.mxu0 %v2348
      %v3204 = vpop.f32.mrf.mxu0
      %v3205 = vadd.f32 0.0, %v3204
      %v3206 = vpop.f32.mrf.mxu0
      %v3207 = vadd.f32 0.0, %v3206
      %3208 = vmatmul.bf16.gmra.mxu0 %v2356
      %v3209 = vpop.f32.mrf.mxu0
      %v3210 = vadd.f32 0.0, %v3209
      %v3211 = vpop.f32.mrf.mxu0
      %v3212 = vadd.f32 0.0, %v3211
      %3213 = vmatmul.bf16.gmra.mxu0 %v2364
      %v3214 = vpop.f32.mrf.mxu0
      %v3215 = vadd.f32 0.0, %v3214
      %v3216 = vpop.f32.mrf.mxu0
      %v3217 = vadd.f32 0.0, %v3216
      %3218 = vmatmul.bf16.gmra.mxu0 %v2372
      %v3219 = vpop.f32.mrf.mxu0
      %v3220 = vadd.f32 0.0, %v3219
      %v3221 = vpop.f32.mrf.mxu0
      %v3222 = vadd.f32 0.0, %v3221
      %3223 = vdwg.mxu0
      %3224 = vmatpush.bf16.msra.mxu0 %v2914
      %3225 = vmatpush.bf16.msra.mxu0 %v2912
      %3226 = vmatpush.bf16.msra.mxu0 %v2910
      %3227 = vmatpush.bf16.msra.mxu0 %v2908
      %3228 = vmatpush.bf16.msra.mxu0 %v2906
      %3229 = vmatpush.bf16.msra.mxu0 %v2904
      %3230 = vmatpush.bf16.msra.mxu0 %v2902
      %3231 = vmatpush.bf16.msra.mxu0 %v2900
      %3232 = vmatmul.bf16.gmra.mxu0 %v2261
      %v3233 = vpop.f32.mrf.mxu0
      %v3234 = vadd.f32 %v3150, %v3233
      %v3235 = vpop.f32.mrf.mxu0
      %v3236 = vadd.f32 %v3152, %v3235
      %3237 = vmatmul.bf16.gmra.mxu0 %v2269
      %v3238 = vpop.f32.mrf.mxu0
      %v3239 = vadd.f32 %v3155, %v3238
      %v3240 = vpop.f32.mrf.mxu0
      %v3241 = vadd.f32 %v3157, %v3240
      %3242 = vmatmul.bf16.gmra.mxu0 %v2277
      %v3243 = vpop.f32.mrf.mxu0
      %v3244 = vadd.f32 %v3160, %v3243
      %v3245 = vpop.f32.mrf.mxu0
      %v3246 = vadd.f32 %v3162, %v3245
      %3247 = vmatmul.bf16.gmra.mxu0 %v2285
      %v3248 = vpop.f32.mrf.mxu0
      %v3249 = vadd.f32 %v3165, %v3248
      %v3250 = vpop.f32.mrf.mxu0
      %v3251 = vadd.f32 %v3167, %v3250
      %3252 = vmatmul.bf16.gmra.mxu0 %v2293
      %v3253 = vpop.f32.mrf.mxu0
      %v3254 = vadd.f32 %v3170, %v3253
      %v3255 = vpop.f32.mrf.mxu0
      %v3256 = vadd.f32 %v3172, %v3255
      %3257 = vmatmul.bf16.gmra.mxu0 %v2301
      %v3258 = vpop.f32.mrf.mxu0
      %v3259 = vadd.f32 %v3175, %v3258
      %v3260 = vpop.f32.mrf.mxu0
      %v3261 = vadd.f32 %v3177, %v3260
      %3262 = vmatmul.bf16.gmra.mxu0 %v2309
      %v3263 = vpop.f32.mrf.mxu0
      %v3264 = vadd.f32 %v3180, %v3263
      %v3265 = vpop.f32.mrf.mxu0
      %v3266 = vadd.f32 %v3182, %v3265
      %3267 = vmatmul.bf16.gmra.mxu0 %v2317
      %v3268 = vpop.f32.mrf.mxu0
      %v3269 = vadd.f32 %v3185, %v3268
      %v3270 = vpop.f32.mrf.mxu0
      %v3271 = vadd.f32 %v3187, %v3270
      %3272 = vmatmul.bf16.gmra.mxu0 %v2325
      %v3273 = vpop.f32.mrf.mxu0
      %v3274 = vadd.f32 %v3190, %v3273
      %v3275 = vpop.f32.mrf.mxu0
      %v3276 = vadd.f32 %v3192, %v3275
      %3277 = vmatmul.bf16.gmra.mxu0 %v2333
      %v3278 = vpop.f32.mrf.mxu0
      %v3279 = vadd.f32 %v3195, %v3278
      %v3280 = vpop.f32.mrf.mxu0
      %v3281 = vadd.f32 %v3197, %v3280
      %3282 = vmatmul.bf16.gmra.mxu0 %v2341
      %v3283 = vpop.f32.mrf.mxu0
      %v3284 = vadd.f32 %v3200, %v3283
      %v3285 = vpop.f32.mrf.mxu0
      %v3286 = vadd.f32 %v3202, %v3285
      %3287 = vmatmul.bf16.gmra.mxu0 %v2349
      %v3288 = vpop.f32.mrf.mxu0
      %v3289 = vadd.f32 %v3205, %v3288
      %v3290 = vpop.f32.mrf.mxu0
      %v3291 = vadd.f32 %v3207, %v3290
      %3292 = vmatmul.bf16.gmra.mxu0 %v2357
      %v3293 = vpop.f32.mrf.mxu0
      %v3294 = vadd.f32 %v3210, %v3293
      %v3295 = vpop.f32.mrf.mxu0
      %v3296 = vadd.f32 %v3212, %v3295
      %3297 = vmatmul.bf16.gmra.mxu0 %v2365
      %v3298 = vpop.f32.mrf.mxu0
      %v3299 = vadd.f32 %v3215, %v3298
      %v3300 = vpop.f32.mrf.mxu0
      %v3301 = vadd.f32 %v3217, %v3300
      %3302 = vmatmul.bf16.gmra.mxu0 %v2373
      %v3303 = vpop.f32.mrf.mxu0
      %v3304 = vadd.f32 %v3220, %v3303
      %v3305 = vpop.f32.mrf.mxu0
      %v3306 = vadd.f32 %v3222, %v3305
      %3307 = vdwg.mxu0
      %3308 = vmatpush.bf16.msra.mxu0 %v2930
      %3309 = vmatpush.bf16.msra.mxu0 %v2928
      %3310 = vmatpush.bf16.msra.mxu0 %v2926
      %3311 = vmatpush.bf16.msra.mxu0 %v2924
      %3312 = vmatpush.bf16.msra.mxu0 %v2922
      %3313 = vmatpush.bf16.msra.mxu0 %v2920
      %3314 = vmatpush.bf16.msra.mxu0 %v2918
      %3315 = vmatpush.bf16.msra.mxu0 %v2916
      %3316 = vmatmul.bf16.gmra.mxu0 %v2262
      %v3317 = vpop.f32.mrf.mxu0
      %v3318 = vadd.f32 %v3234, %v3317
      %v3319 = vpop.f32.mrf.mxu0
      %v3320 = vadd.f32 %v3236, %v3319
      %3321 = vmatmul.bf16.gmra.mxu0 %v2270
      %v3322 = vpop.f32.mrf.mxu0
      %v3323 = vadd.f32 %v3239, %v3322
      %v3324 = vpop.f32.mrf.mxu0
      %v3325 = vadd.f32 %v3241, %v3324
      %3326 = vmatmul.bf16.gmra.mxu0 %v2278
      %v3327 = vpop.f32.mrf.mxu0
      %v3328 = vadd.f32 %v3244, %v3327
      %v3329 = vpop.f32.mrf.mxu0
      %v3330 = vadd.f32 %v3246, %v3329
      %3331 = vmatmul.bf16.gmra.mxu0 %v2286
      %v3332 = vpop.f32.mrf.mxu0
      %v3333 = vadd.f32 %v3249, %v3332
      %v3334 = vpop.f32.mrf.mxu0
      %v3335 = vadd.f32 %v3251, %v3334
      %3336 = vmatmul.bf16.gmra.mxu0 %v2294
      %v3337 = vpop.f32.mrf.mxu0
      %v3338 = vadd.f32 %v3254, %v3337
      %v3339 = vpop.f32.mrf.mxu0
      %v3340 = vadd.f32 %v3256, %v3339
      %3341 = vmatmul.bf16.gmra.mxu0 %v2302
      %v3342 = vpop.f32.mrf.mxu0
      %v3343 = vadd.f32 %v3259, %v3342
      %v3344 = vpop.f32.mrf.mxu0
      %v3345 = vadd.f32 %v3261, %v3344
      %3346 = vmatmul.bf16.gmra.mxu0 %v2310
      %v3347 = vpop.f32.mrf.mxu0
      %v3348 = vadd.f32 %v3264, %v3347
      %v3349 = vpop.f32.mrf.mxu0
      %v3350 = vadd.f32 %v3266, %v3349
      %3351 = vmatmul.bf16.gmra.mxu0 %v2318
      %v3352 = vpop.f32.mrf.mxu0
      %v3353 = vadd.f32 %v3269, %v3352
      %v3354 = vpop.f32.mrf.mxu0
      %v3355 = vadd.f32 %v3271, %v3354
      %3356 = vmatmul.bf16.gmra.mxu0 %v2326
      %v3357 = vpop.f32.mrf.mxu0
      %v3358 = vadd.f32 %v3274, %v3357
      %v3359 = vpop.f32.mrf.mxu0
      %v3360 = vadd.f32 %v3276, %v3359
      %3361 = vmatmul.bf16.gmra.mxu0 %v2334
      %v3362 = vpop.f32.mrf.mxu0
      %v3363 = vadd.f32 %v3279, %v3362
      %v3364 = vpop.f32.mrf.mxu0
      %v3365 = vadd.f32 %v3281, %v3364
      %3366 = vmatmul.bf16.gmra.mxu0 %v2342
      %v3367 = vpop.f32.mrf.mxu0
      %v3368 = vadd.f32 %v3284, %v3367
      %v3369 = vpop.f32.mrf.mxu0
      %v3370 = vadd.f32 %v3286, %v3369
      %3371 = vmatmul.bf16.gmra.mxu0 %v2350
      %v3372 = vpop.f32.mrf.mxu0
      %v3373 = vadd.f32 %v3289, %v3372
      %v3374 = vpop.f32.mrf.mxu0
      %v3375 = vadd.f32 %v3291, %v3374
      %3376 = vmatmul.bf16.gmra.mxu0 %v2358
      %v3377 = vpop.f32.mrf.mxu0
      %v3378 = vadd.f32 %v3294, %v3377
      %v3379 = vpop.f32.mrf.mxu0
      %v3380 = vadd.f32 %v3296, %v3379
      %3381 = vmatmul.bf16.gmra.mxu0 %v2366
      %v3382 = vpop.f32.mrf.mxu0
      %v3383 = vadd.f32 %v3299, %v3382
      %v3384 = vpop.f32.mrf.mxu0
      %v3385 = vadd.f32 %v3301, %v3384
      %3386 = vmatmul.bf16.gmra.mxu0 %v2374
      %v3387 = vpop.f32.mrf.mxu0
      %v3388 = vadd.f32 %v3304, %v3387
      %v3389 = vpop.f32.mrf.mxu0
      %v3390 = vadd.f32 %v3306, %v3389
      %3391 = vdwg.mxu0
      %3392 = vmatpush.bf16.msra.mxu0 %v2946
      %3393 = vmatpush.bf16.msra.mxu0 %v2944
      %3394 = vmatpush.bf16.msra.mxu0 %v2942
      %3395 = vmatpush.bf16.msra.mxu0 %v2940
      %3396 = vmatpush.bf16.msra.mxu0 %v2938
      %3397 = vmatpush.bf16.msra.mxu0 %v2936
      %3398 = vmatpush.bf16.msra.mxu0 %v2934
      %3399 = vmatpush.bf16.msra.mxu0 %v2932
      %3400 = vmatmul.bf16.gmra.mxu0 %v2263
      %v3401 = vpop.f32.mrf.mxu0
      %v3402 = vadd.f32 %v3318, %v3401
      %v3403 = vpop.f32.mrf.mxu0
      %v3404 = vadd.f32 %v3320, %v3403
      %3405 = vmatmul.bf16.gmra.mxu0 %v2271
      %v3406 = vpop.f32.mrf.mxu0
      %v3407 = vadd.f32 %v3323, %v3406
      %v3408 = vpop.f32.mrf.mxu0
      %v3409 = vadd.f32 %v3325, %v3408
      %3410 = vmatmul.bf16.gmra.mxu0 %v2279
      %v3411 = vpop.f32.mrf.mxu0
      %v3412 = vadd.f32 %v3328, %v3411
      %v3413 = vpop.f32.mrf.mxu0
      %v3414 = vadd.f32 %v3330, %v3413
      %3415 = vmatmul.bf16.gmra.mxu0 %v2287
      %v3416 = vpop.f32.mrf.mxu0
      %v3417 = vadd.f32 %v3333, %v3416
      %v3418 = vpop.f32.mrf.mxu0
      %v3419 = vadd.f32 %v3335, %v3418
      %3420 = vmatmul.bf16.gmra.mxu0 %v2295
      %v3421 = vpop.f32.mrf.mxu0
      %v3422 = vadd.f32 %v3338, %v3421
      %v3423 = vpop.f32.mrf.mxu0
      %v3424 = vadd.f32 %v3340, %v3423
      %3425 = vmatmul.bf16.gmra.mxu0 %v2303
      %v3426 = vpop.f32.mrf.mxu0
      %v3427 = vadd.f32 %v3343, %v3426
      %v3428 = vpop.f32.mrf.mxu0
      %v3429 = vadd.f32 %v3345, %v3428
      %3430 = vmatmul.bf16.gmra.mxu0 %v2311
      %v3431 = vpop.f32.mrf.mxu0
      %v3432 = vadd.f32 %v3348, %v3431
      %v3433 = vpop.f32.mrf.mxu0
      %v3434 = vadd.f32 %v3350, %v3433
      %3435 = vmatmul.bf16.gmra.mxu0 %v2319
      %v3436 = vpop.f32.mrf.mxu0
      %v3437 = vadd.f32 %v3353, %v3436
      %v3438 = vpop.f32.mrf.mxu0
      %v3439 = vadd.f32 %v3355, %v3438
      %3440 = vmatmul.bf16.gmra.mxu0 %v2327
      %v3441 = vpop.f32.mrf.mxu0
      %v3442 = vadd.f32 %v3358, %v3441
      %v3443 = vpop.f32.mrf.mxu0
      %v3444 = vadd.f32 %v3360, %v3443
      %3445 = vmatmul.bf16.gmra.mxu0 %v2335
      %v3446 = vpop.f32.mrf.mxu0
      %v3447 = vadd.f32 %v3363, %v3446
      %v3448 = vpop.f32.mrf.mxu0
      %v3449 = vadd.f32 %v3365, %v3448
      %3450 = vmatmul.bf16.gmra.mxu0 %v2343
      %v3451 = vpop.f32.mrf.mxu0
      %v3452 = vadd.f32 %v3368, %v3451
      %v3453 = vpop.f32.mrf.mxu0
      %v3454 = vadd.f32 %v3370, %v3453
      %3455 = vmatmul.bf16.gmra.mxu0 %v2351
      %v3456 = vpop.f32.mrf.mxu0
      %v3457 = vadd.f32 %v3373, %v3456
      %v3458 = vpop.f32.mrf.mxu0
      %v3459 = vadd.f32 %v3375, %v3458
      %3460 = vmatmul.bf16.gmra.mxu0 %v2359
      %v3461 = vpop.f32.mrf.mxu0
      %v3462 = vadd.f32 %v3378, %v3461
      %v3463 = vpop.f32.mrf.mxu0
      %v3464 = vadd.f32 %v3380, %v3463
      %3465 = vmatmul.bf16.gmra.mxu0 %v2367
      %v3466 = vpop.f32.mrf.mxu0
      %v3467 = vadd.f32 %v3383, %v3466
      %v3468 = vpop.f32.mrf.mxu0
      %v3469 = vadd.f32 %v3385, %v3468
      %3470 = vmatmul.bf16.gmra.mxu0 %v2375
      %v3471 = vpop.f32.mrf.mxu0
      %v3472 = vadd.f32 %v3388, %v3471
      %v3473 = vpop.f32.mrf.mxu0
      %v3474 = vadd.f32 %v3390, %v3473
      %3475 = vdwg.mxu0
      %3476 = vmatpush.bf16.msra.mxu0 %v2962
      %3477 = vmatpush.bf16.msra.mxu0 %v2960
      %3478 = vmatpush.bf16.msra.mxu0 %v2958
      %3479 = vmatpush.bf16.msra.mxu0 %v2956
      %3480 = vmatpush.bf16.msra.mxu0 %v2954
      %3481 = vmatpush.bf16.msra.mxu0 %v2952
      %3482 = vmatpush.bf16.msra.mxu0 %v2950
      %3483 = vmatpush.bf16.msra.mxu0 %v2948
      %3484 = vmatmul.bf16.gmra.mxu0 %v2264
      %v3485 = vpop.f32.mrf.mxu0
      %v3486 = vadd.f32 %v3402, %v3485
      %v3487 = vpop.f32.mrf.mxu0
      %v3488 = vadd.f32 %v3404, %v3487
      %3489 = vmatmul.bf16.gmra.mxu0 %v2272
      %v3490 = vpop.f32.mrf.mxu0
      %v3491 = vadd.f32 %v3407, %v3490
      %v3492 = vpop.f32.mrf.mxu0
      %v3493 = vadd.f32 %v3409, %v3492
      %3494 = vmatmul.bf16.gmra.mxu0 %v2280
      %v3495 = vpop.f32.mrf.mxu0
      %v3496 = vadd.f32 %v3412, %v3495
      %v3497 = vpop.f32.mrf.mxu0
      %v3498 = vadd.f32 %v3414, %v3497
      %3499 = vmatmul.bf16.gmra.mxu0 %v2288
      %v3500 = vpop.f32.mrf.mxu0
      %v3501 = vadd.f32 %v3417, %v3500
      %v3502 = vpop.f32.mrf.mxu0
      %v3503 = vadd.f32 %v3419, %v3502
      %3504 = vmatmul.bf16.gmra.mxu0 %v2296
      %v3505 = vpop.f32.mrf.mxu0
      %v3506 = vadd.f32 %v3422, %v3505
      %v3507 = vpop.f32.mrf.mxu0
      %v3508 = vadd.f32 %v3424, %v3507
      %3509 = vmatmul.bf16.gmra.mxu0 %v2304
      %v3510 = vpop.f32.mrf.mxu0
      %v3511 = vadd.f32 %v3427, %v3510
      %v3512 = vpop.f32.mrf.mxu0
      %v3513 = vadd.f32 %v3429, %v3512
      %3514 = vmatmul.bf16.gmra.mxu0 %v2312
      %v3515 = vpop.f32.mrf.mxu0
      %v3516 = vadd.f32 %v3432, %v3515
      %v3517 = vpop.f32.mrf.mxu0
      %v3518 = vadd.f32 %v3434, %v3517
      %3519 = vmatmul.bf16.gmra.mxu0 %v2320
      %v3520 = vpop.f32.mrf.mxu0
      %v3521 = vadd.f32 %v3437, %v3520
      %v3522 = vpop.f32.mrf.mxu0
      %v3523 = vadd.f32 %v3439, %v3522
      %3524 = vmatmul.bf16.gmra.mxu0 %v2328
      %v3525 = vpop.f32.mrf.mxu0
      %v3526 = vadd.f32 %v3442, %v3525
      %v3527 = vpop.f32.mrf.mxu0
      %v3528 = vadd.f32 %v3444, %v3527
      %3529 = vmatmul.bf16.gmra.mxu0 %v2336
      %v3530 = vpop.f32.mrf.mxu0
      %v3531 = vadd.f32 %v3447, %v3530
      %v3532 = vpop.f32.mrf.mxu0
      %v3533 = vadd.f32 %v3449, %v3532
      %3534 = vmatmul.bf16.gmra.mxu0 %v2344
      %v3535 = vpop.f32.mrf.mxu0
      %v3536 = vadd.f32 %v3452, %v3535
      %v3537 = vpop.f32.mrf.mxu0
      %v3538 = vadd.f32 %v3454, %v3537
      %3539 = vmatmul.bf16.gmra.mxu0 %v2352
      %v3540 = vpop.f32.mrf.mxu0
      %v3541 = vadd.f32 %v3457, %v3540
      %v3542 = vpop.f32.mrf.mxu0
      %v3543 = vadd.f32 %v3459, %v3542
      %3544 = vmatmul.bf16.gmra.mxu0 %v2360
      %v3545 = vpop.f32.mrf.mxu0
      %v3546 = vadd.f32 %v3462, %v3545
      %v3547 = vpop.f32.mrf.mxu0
      %v3548 = vadd.f32 %v3464, %v3547
      %3549 = vmatmul.bf16.gmra.mxu0 %v2368
      %v3550 = vpop.f32.mrf.mxu0
      %v3551 = vadd.f32 %v3467, %v3550
      %v3552 = vpop.f32.mrf.mxu0
      %v3553 = vadd.f32 %v3469, %v3552
      %3554 = vmatmul.bf16.gmra.mxu0 %v2376
      %v3555 = vpop.f32.mrf.mxu0
      %v3556 = vadd.f32 %v3472, %v3555
      %v3557 = vpop.f32.mrf.mxu0
      %v3558 = vadd.f32 %v3474, %v3557
      %3559 = vdwg.mxu0
      %3560 = vmatpush.bf16.msra.mxu0 %v2978
      %3561 = vmatpush.bf16.msra.mxu0 %v2976
      %3562 = vmatpush.bf16.msra.mxu0 %v2974
      %3563 = vmatpush.bf16.msra.mxu0 %v2972
      %3564 = vmatpush.bf16.msra.mxu0 %v2970
      %3565 = vmatpush.bf16.msra.mxu0 %v2968
      %3566 = vmatpush.bf16.msra.mxu0 %v2966
      %3567 = vmatpush.bf16.msra.mxu0 %v2964
      %3568 = vmatmul.bf16.gmra.mxu0 %v2265
      %v3569 = vpop.f32.mrf.mxu0
      %v3570 = vadd.f32 %v3486, %v3569
      %v3571 = vpop.f32.mrf.mxu0
      %v3572 = vadd.f32 %v3488, %v3571
      %3573 = vmatmul.bf16.gmra.mxu0 %v2273
      %v3574 = vpop.f32.mrf.mxu0
      %v3575 = vadd.f32 %v3491, %v3574
      %v3576 = vpop.f32.mrf.mxu0
      %v3577 = vadd.f32 %v3493, %v3576
      %3578 = vmatmul.bf16.gmra.mxu0 %v2281
      %v3579 = vpop.f32.mrf.mxu0
      %v3580 = vadd.f32 %v3496, %v3579
      %v3581 = vpop.f32.mrf.mxu0
      %v3582 = vadd.f32 %v3498, %v3581
      %3583 = vmatmul.bf16.gmra.mxu0 %v2289
      %v3584 = vpop.f32.mrf.mxu0
      %v3585 = vadd.f32 %v3501, %v3584
      %v3586 = vpop.f32.mrf.mxu0
      %v3587 = vadd.f32 %v3503, %v3586
      %3588 = vmatmul.bf16.gmra.mxu0 %v2297
      %v3589 = vpop.f32.mrf.mxu0
      %v3590 = vadd.f32 %v3506, %v3589
      %v3591 = vpop.f32.mrf.mxu0
      %v3592 = vadd.f32 %v3508, %v3591
      %3593 = vmatmul.bf16.gmra.mxu0 %v2305
      %v3594 = vpop.f32.mrf.mxu0
      %v3595 = vadd.f32 %v3511, %v3594
      %v3596 = vpop.f32.mrf.mxu0
      %v3597 = vadd.f32 %v3513, %v3596
      %3598 = vmatmul.bf16.gmra.mxu0 %v2313
      %v3599 = vpop.f32.mrf.mxu0
      %v3600 = vadd.f32 %v3516, %v3599
      %v3601 = vpop.f32.mrf.mxu0
      %v3602 = vadd.f32 %v3518, %v3601
      %3603 = vmatmul.bf16.gmra.mxu0 %v2321
      %v3604 = vpop.f32.mrf.mxu0
      %v3605 = vadd.f32 %v3521, %v3604
      %v3606 = vpop.f32.mrf.mxu0
      %v3607 = vadd.f32 %v3523, %v3606
      %3608 = vmatmul.bf16.gmra.mxu0 %v2329
      %v3609 = vpop.f32.mrf.mxu0
      %v3610 = vadd.f32 %v3526, %v3609
      %v3611 = vpop.f32.mrf.mxu0
      %v3612 = vadd.f32 %v3528, %v3611
      %3613 = vmatmul.bf16.gmra.mxu0 %v2337
      %v3614 = vpop.f32.mrf.mxu0
      %v3615 = vadd.f32 %v3531, %v3614
      %v3616 = vpop.f32.mrf.mxu0
      %v3617 = vadd.f32 %v3533, %v3616
      %3618 = vmatmul.bf16.gmra.mxu0 %v2345
      %v3619 = vpop.f32.mrf.mxu0
      %v3620 = vadd.f32 %v3536, %v3619
      %v3621 = vpop.f32.mrf.mxu0
      %v3622 = vadd.f32 %v3538, %v3621
      %3623 = vmatmul.bf16.gmra.mxu0 %v2353
      %v3624 = vpop.f32.mrf.mxu0
      %v3625 = vadd.f32 %v3541, %v3624
      %v3626 = vpop.f32.mrf.mxu0
      %v3627 = vadd.f32 %v3543, %v3626
      %3628 = vmatmul.bf16.gmra.mxu0 %v2361
      %v3629 = vpop.f32.mrf.mxu0
      %v3630 = vadd.f32 %v3546, %v3629
      %v3631 = vpop.f32.mrf.mxu0
      %v3632 = vadd.f32 %v3548, %v3631
      %3633 = vmatmul.bf16.gmra.mxu0 %v2369
      %v3634 = vpop.f32.mrf.mxu0
      %v3635 = vadd.f32 %v3551, %v3634
      %v3636 = vpop.f32.mrf.mxu0
      %v3637 = vadd.f32 %v3553, %v3636
      %3638 = vmatmul.bf16.gmra.mxu0 %v2377
      %v3639 = vpop.f32.mrf.mxu0
      %v3640 = vadd.f32 %v3556, %v3639
      %v3641 = vpop.f32.mrf.mxu0
      %v3642 = vadd.f32 %v3558, %v3641
      %3643 = vdwg.mxu0
      %3644 = vmatpush.bf16.msra.mxu0 %v2994
      %3645 = vmatpush.bf16.msra.mxu0 %v2992
      %3646 = vmatpush.bf16.msra.mxu0 %v2990
      %3647 = vmatpush.bf16.msra.mxu0 %v2988
      %3648 = vmatpush.bf16.msra.mxu0 %v2986
      %3649 = vmatpush.bf16.msra.mxu0 %v2984
      %3650 = vmatpush.bf16.msra.mxu0 %v2982
      %3651 = vmatpush.bf16.msra.mxu0 %v2980
      %3652 = vmatmul.bf16.gmra.mxu0 %v2266
      %v3653 = vpop.f32.mrf.mxu0
      %v3654 = vadd.f32 %v3570, %v3653
      %v3655 = vpop.f32.mrf.mxu0
      %v3656 = vadd.f32 %v3572, %v3655
      %3657 = vmatmul.bf16.gmra.mxu0 %v2274
      %v3658 = vpop.f32.mrf.mxu0
      %v3659 = vadd.f32 %v3575, %v3658
      %v3660 = vpop.f32.mrf.mxu0
      %v3661 = vadd.f32 %v3577, %v3660
      %3662 = vmatmul.bf16.gmra.mxu0 %v2282
      %v3663 = vpop.f32.mrf.mxu0
      %v3664 = vadd.f32 %v3580, %v3663
      %v3665 = vpop.f32.mrf.mxu0
      %v3666 = vadd.f32 %v3582, %v3665
      %3667 = vmatmul.bf16.gmra.mxu0 %v2290
      %v3668 = vpop.f32.mrf.mxu0
      %v3669 = vadd.f32 %v3585, %v3668
      %v3670 = vpop.f32.mrf.mxu0
      %v3671 = vadd.f32 %v3587, %v3670
      %3672 = vmatmul.bf16.gmra.mxu0 %v2298
      %v3673 = vpop.f32.mrf.mxu0
      %v3674 = vadd.f32 %v3590, %v3673
      %v3675 = vpop.f32.mrf.mxu0
      %v3676 = vadd.f32 %v3592, %v3675
      %3677 = vmatmul.bf16.gmra.mxu0 %v2306
      %v3678 = vpop.f32.mrf.mxu0
      %v3679 = vadd.f32 %v3595, %v3678
      %v3680 = vpop.f32.mrf.mxu0
      %v3681 = vadd.f32 %v3597, %v3680
      %3682 = vmatmul.bf16.gmra.mxu0 %v2314
      %v3683 = vpop.f32.mrf.mxu0
      %v3684 = vadd.f32 %v3600, %v3683
      %v3685 = vpop.f32.mrf.mxu0
      %v3686 = vadd.f32 %v3602, %v3685
      %3687 = vmatmul.bf16.gmra.mxu0 %v2322
      %v3688 = vpop.f32.mrf.mxu0
      %v3689 = vadd.f32 %v3605, %v3688
      %v3690 = vpop.f32.mrf.mxu0
      %v3691 = vadd.f32 %v3607, %v3690
      %3692 = vmatmul.bf16.gmra.mxu0 %v2330
      %v3693 = vpop.f32.mrf.mxu0
      %v3694 = vadd.f32 %v3610, %v3693
      %v3695 = vpop.f32.mrf.mxu0
      %v3696 = vadd.f32 %v3612, %v3695
      %3697 = vmatmul.bf16.gmra.mxu0 %v2338
      %v3698 = vpop.f32.mrf.mxu0
      %v3699 = vadd.f32 %v3615, %v3698
      %v3700 = vpop.f32.mrf.mxu0
      %v3701 = vadd.f32 %v3617, %v3700
      %3702 = vmatmul.bf16.gmra.mxu0 %v2346
      %v3703 = vpop.f32.mrf.mxu0
      %v3704 = vadd.f32 %v3620, %v3703
      %v3705 = vpop.f32.mrf.mxu0
      %v3706 = vadd.f32 %v3622, %v3705
      %3707 = vmatmul.bf16.gmra.mxu0 %v2354
      %v3708 = vpop.f32.mrf.mxu0
      %v3709 = vadd.f32 %v3625, %v3708
      %v3710 = vpop.f32.mrf.mxu0
      %v3711 = vadd.f32 %v3627, %v3710
      %3712 = vmatmul.bf16.gmra.mxu0 %v2362
      %v3713 = vpop.f32.mrf.mxu0
      %v3714 = vadd.f32 %v3630, %v3713
      %v3715 = vpop.f32.mrf.mxu0
      %v3716 = vadd.f32 %v3632, %v3715
      %3717 = vmatmul.bf16.gmra.mxu0 %v2370
      %v3718 = vpop.f32.mrf.mxu0
      %v3719 = vadd.f32 %v3635, %v3718
      %v3720 = vpop.f32.mrf.mxu0
      %v3721 = vadd.f32 %v3637, %v3720
      %3722 = vmatmul.bf16.gmra.mxu0 %v2378
      %v3723 = vpop.f32.mrf.mxu0
      %v3724 = vadd.f32 %v3640, %v3723
      %v3725 = vpop.f32.mrf.mxu0
      %v3726 = vadd.f32 %v3642, %v3725
      %3727 = vdwg.mxu0
      %3728 = vmatpush.bf16.msra.mxu0 %v3010
      %3729 = vmatpush.bf16.msra.mxu0 %v3008
      %3730 = vmatpush.bf16.msra.mxu0 %v3006
      %3731 = vmatpush.bf16.msra.mxu0 %v3004
      %3732 = vmatpush.bf16.msra.mxu0 %v3002
      %3733 = vmatpush.bf16.msra.mxu0 %v3000
      %3734 = vmatpush.bf16.msra.mxu0 %v2998
      %3735 = vmatpush.bf16.msra.mxu0 %v2996
      %3736 = vmatmul.bf16.gmra.mxu0 %v2267
      %v3737 = vpop.f32.mrf.mxu0
      %v3738 = vadd.f32 %v3654, %v3737
      %v3739 = vpop.f32.mrf.mxu0
      %v3740 = vadd.f32 %v3656, %v3739
      %3741 = vmatmul.bf16.gmra.mxu0 %v2275
      %v3742 = vpop.f32.mrf.mxu0
      %v3743 = vadd.f32 %v3659, %v3742
      %v3744 = vpop.f32.mrf.mxu0
      %v3745 = vadd.f32 %v3661, %v3744
      %3746 = vmatmul.bf16.gmra.mxu0 %v2283
      %v3747 = vpop.f32.mrf.mxu0
      %v3748 = vadd.f32 %v3664, %v3747
      %v3749 = vpop.f32.mrf.mxu0
      %v3750 = vadd.f32 %v3666, %v3749
      %3751 = vmatmul.bf16.gmra.mxu0 %v2291
      %v3752 = vpop.f32.mrf.mxu0
      %v3753 = vadd.f32 %v3669, %v3752
      %v3754 = vpop.f32.mrf.mxu0
      %v3755 = vadd.f32 %v3671, %v3754
      %3756 = vmatmul.bf16.gmra.mxu0 %v2299
      %v3757 = vpop.f32.mrf.mxu0
      %v3758 = vadd.f32 %v3674, %v3757
      %v3759 = vpop.f32.mrf.mxu0
      %v3760 = vadd.f32 %v3676, %v3759
      %3761 = vmatmul.bf16.gmra.mxu0 %v2307
      %v3762 = vpop.f32.mrf.mxu0
      %v3763 = vadd.f32 %v3679, %v3762
      %v3764 = vpop.f32.mrf.mxu0
      %v3765 = vadd.f32 %v3681, %v3764
      %3766 = vmatmul.bf16.gmra.mxu0 %v2315
      %v3767 = vpop.f32.mrf.mxu0
      %v3768 = vadd.f32 %v3684, %v3767
      %v3769 = vpop.f32.mrf.mxu0
      %v3770 = vadd.f32 %v3686, %v3769
      %3771 = vmatmul.bf16.gmra.mxu0 %v2323
      %v3772 = vpop.f32.mrf.mxu0
      %v3773 = vadd.f32 %v3689, %v3772
      %v3774 = vpop.f32.mrf.mxu0
      %v3775 = vadd.f32 %v3691, %v3774
      %3776 = vmatmul.bf16.gmra.mxu0 %v2331
      %v3777 = vpop.f32.mrf.mxu0
      %v3778 = vadd.f32 %v3694, %v3777
      %v3779 = vpop.f32.mrf.mxu0
      %v3780 = vadd.f32 %v3696, %v3779
      %3781 = vmatmul.bf16.gmra.mxu0 %v2339
      %v3782 = vpop.f32.mrf.mxu0
      %v3783 = vadd.f32 %v3699, %v3782
      %v3784 = vpop.f32.mrf.mxu0
      %v3785 = vadd.f32 %v3701, %v3784
      %3786 = vmatmul.bf16.gmra.mxu0 %v2347
      %v3787 = vpop.f32.mrf.mxu0
      %v3788 = vadd.f32 %v3704, %v3787
      %v3789 = vpop.f32.mrf.mxu0
      %v3790 = vadd.f32 %v3706, %v3789
      %3791 = vmatmul.bf16.gmra.mxu0 %v2355
      %v3792 = vpop.f32.mrf.mxu0
      %v3793 = vadd.f32 %v3709, %v3792
      %v3794 = vpop.f32.mrf.mxu0
      %v3795 = vadd.f32 %v3711, %v3794
      %3796 = vmatmul.bf16.gmra.mxu0 %v2363
      %v3797 = vpop.f32.mrf.mxu0
      %v3798 = vadd.f32 %v3714, %v3797
      %v3799 = vpop.f32.mrf.mxu0
      %v3800 = vadd.f32 %v3716, %v3799
      %3801 = vmatmul.bf16.gmra.mxu0 %v2371
      %v3802 = vpop.f32.mrf.mxu0
      %v3803 = vadd.f32 %v3719, %v3802
      %v3804 = vpop.f32.mrf.mxu0
      %v3805 = vadd.f32 %v3721, %v3804
      %3806 = vmatmul.bf16.gmra.mxu0 %v2379
      %v3807 = vpop.f32.mrf.mxu0
      %v3808 = vadd.f32 %v3724, %v3807
      %v3809 = vpop.f32.mrf.mxu0
      %v3810 = vadd.f32 %v3726, %v3809
      %3811 = vdwg.mxu0
      %3812 = vmatpush.bf16.msra.mxu0 %v2899
      %3813 = vmatpush.bf16.msra.mxu0 %v2897
      %3814 = vmatpush.bf16.msra.mxu0 %v2895
      %3815 = vmatpush.bf16.msra.mxu0 %v2893
      %3816 = vmatpush.bf16.msra.mxu0 %v2891
      %3817 = vmatpush.bf16.msra.mxu0 %v2889
      %3818 = vmatpush.bf16.msra.mxu0 %v2887
      %3819 = vmatpush.bf16.msra.mxu0 %v2885
      %3820 = vmatmul.bf16.gmra.mxu0 %v2260
      %v3821 = vpop.f32.mrf.mxu0
      %v3822 = vadd.f32 0.0, %v3821
      %v3823 = vpop.f32.mrf.mxu0
      %v3824 = vadd.f32 0.0, %v3823
      %3825 = vmatmul.bf16.gmra.mxu0 %v2268
      %v3826 = vpop.f32.mrf.mxu0
      %v3827 = vadd.f32 0.0, %v3826
      %v3828 = vpop.f32.mrf.mxu0
      %v3829 = vadd.f32 0.0, %v3828
      %3830 = vmatmul.bf16.gmra.mxu0 %v2276
      %v3831 = vpop.f32.mrf.mxu0
      %v3832 = vadd.f32 0.0, %v3831
      %v3833 = vpop.f32.mrf.mxu0
      %v3834 = vadd.f32 0.0, %v3833
      %3835 = vmatmul.bf16.gmra.mxu0 %v2284
      %v3836 = vpop.f32.mrf.mxu0
      %v3837 = vadd.f32 0.0, %v3836
      %v3838 = vpop.f32.mrf.mxu0
      %v3839 = vadd.f32 0.0, %v3838
      %3840 = vmatmul.bf16.gmra.mxu0 %v2292
      %v3841 = vpop.f32.mrf.mxu0
      %v3842 = vadd.f32 0.0, %v3841
      %v3843 = vpop.f32.mrf.mxu0
      %v3844 = vadd.f32 0.0, %v3843
      %3845 = vmatmul.bf16.gmra.mxu0 %v2300
      %v3846 = vpop.f32.mrf.mxu0
      %v3847 = vadd.f32 0.0, %v3846
      %v3848 = vpop.f32.mrf.mxu0
      %v3849 = vadd.f32 0.0, %v3848
      %3850 = vmatmul.bf16.gmra.mxu0 %v2308
      %v3851 = vpop.f32.mrf.mxu0
      %v3852 = vadd.f32 0.0, %v3851
      %v3853 = vpop.f32.mrf.mxu0
      %v3854 = vadd.f32 0.0, %v3853
      %3855 = vmatmul.bf16.gmra.mxu0 %v2316
      %v3856 = vpop.f32.mrf.mxu0
      %v3857 = vadd.f32 0.0, %v3856
      %v3858 = vpop.f32.mrf.mxu0
      %v3859 = vadd.f32 0.0, %v3858
      %3860 = vmatmul.bf16.gmra.mxu0 %v2324
      %v3861 = vpop.f32.mrf.mxu0
      %v3862 = vadd.f32 0.0, %v3861
      %v3863 = vpop.f32.mrf.mxu0
      %v3864 = vadd.f32 0.0, %v3863
      %3865 = vmatmul.bf16.gmra.mxu0 %v2332
      %v3866 = vpop.f32.mrf.mxu0
      %v3867 = vadd.f32 0.0, %v3866
      %v3868 = vpop.f32.mrf.mxu0
      %v3869 = vadd.f32 0.0, %v3868
      %3870 = vmatmul.bf16.gmra.mxu0 %v2340
      %v3871 = vpop.f32.mrf.mxu0
      %v3872 = vadd.f32 0.0, %v3871
      %v3873 = vpop.f32.mrf.mxu0
      %v3874 = vadd.f32 0.0, %v3873
      %3875 = vmatmul.bf16.gmra.mxu0 %v2348
      %v3876 = vpop.f32.mrf.mxu0
      %v3877 = vadd.f32 0.0, %v3876
      %v3878 = vpop.f32.mrf.mxu0
      %v3879 = vadd.f32 0.0, %v3878
      %3880 = vmatmul.bf16.gmra.mxu0 %v2356
      %v3881 = vpop.f32.mrf.mxu0
      %v3882 = vadd.f32 0.0, %v3881
      %v3883 = vpop.f32.mrf.mxu0
      %v3884 = vadd.f32 0.0, %v3883
      %3885 = vmatmul.bf16.gmra.mxu0 %v2364
      %v3886 = vpop.f32.mrf.mxu0
      %v3887 = vadd.f32 0.0, %v3886
      %v3888 = vpop.f32.mrf.mxu0
      %v3889 = vadd.f32 0.0, %v3888
      %3890 = vmatmul.bf16.gmra.mxu0 %v2372
      %v3891 = vpop.f32.mrf.mxu0
      %v3892 = vadd.f32 0.0, %v3891
      %v3893 = vpop.f32.mrf.mxu0
      %v3894 = vadd.f32 0.0, %v3893
      %3895 = vdwg.mxu0
      %3896 = vmatpush.bf16.msra.mxu0 %v2915
      %3897 = vmatpush.bf16.msra.mxu0 %v2913
      %3898 = vmatpush.bf16.msra.mxu0 %v2911
      %3899 = vmatpush.bf16.msra.mxu0 %v2909
      %3900 = vmatpush.bf16.msra.mxu0 %v2907
      %3901 = vmatpush.bf16.msra.mxu0 %v2905
      %3902 = vmatpush.bf16.msra.mxu0 %v2903
      %3903 = vmatpush.bf16.msra.mxu0 %v2901
      %3904 = vmatmul.bf16.gmra.mxu0 %v2261
      %v3905 = vpop.f32.mrf.mxu0
      %v3906 = vadd.f32 %v3822, %v3905
      %v3907 = vpop.f32.mrf.mxu0
      %v3908 = vadd.f32 %v3824, %v3907
      %3909 = vmatmul.bf16.gmra.mxu0 %v2269
      %v3910 = vpop.f32.mrf.mxu0
      %v3911 = vadd.f32 %v3827, %v3910
      %v3912 = vpop.f32.mrf.mxu0
      %v3913 = vadd.f32 %v3829, %v3912
      %3914 = vmatmul.bf16.gmra.mxu0 %v2277
      %v3915 = vpop.f32.mrf.mxu0
      %v3916 = vadd.f32 %v3832, %v3915
      %v3917 = vpop.f32.mrf.mxu0
      %v3918 = vadd.f32 %v3834, %v3917
      %3919 = vmatmul.bf16.gmra.mxu0 %v2285
      %v3920 = vpop.f32.mrf.mxu0
      %v3921 = vadd.f32 %v3837, %v3920
      %v3922 = vpop.f32.mrf.mxu0
      %v3923 = vadd.f32 %v3839, %v3922
      %3924 = vmatmul.bf16.gmra.mxu0 %v2293
      %v3925 = vpop.f32.mrf.mxu0
      %v3926 = vadd.f32 %v3842, %v3925
      %v3927 = vpop.f32.mrf.mxu0
      %v3928 = vadd.f32 %v3844, %v3927
      %3929 = vmatmul.bf16.gmra.mxu0 %v2301
      %v3930 = vpop.f32.mrf.mxu0
      %v3931 = vadd.f32 %v3847, %v3930
      %v3932 = vpop.f32.mrf.mxu0
      %v3933 = vadd.f32 %v3849, %v3932
      %3934 = vmatmul.bf16.gmra.mxu0 %v2309
      %v3935 = vpop.f32.mrf.mxu0
      %v3936 = vadd.f32 %v3852, %v3935
      %v3937 = vpop.f32.mrf.mxu0
      %v3938 = vadd.f32 %v3854, %v3937
      %3939 = vmatmul.bf16.gmra.mxu0 %v2317
      %v3940 = vpop.f32.mrf.mxu0
      %v3941 = vadd.f32 %v3857, %v3940
      %v3942 = vpop.f32.mrf.mxu0
      %v3943 = vadd.f32 %v3859, %v3942
      %3944 = vmatmul.bf16.gmra.mxu0 %v2325
      %v3945 = vpop.f32.mrf.mxu0
      %v3946 = vadd.f32 %v3862, %v3945
      %v3947 = vpop.f32.mrf.mxu0
      %v3948 = vadd.f32 %v3864, %v3947
      %3949 = vmatmul.bf16.gmra.mxu0 %v2333
      %v3950 = vpop.f32.mrf.mxu0
      %v3951 = vadd.f32 %v3867, %v3950
      %v3952 = vpop.f32.mrf.mxu0
      %v3953 = vadd.f32 %v3869, %v3952
      %3954 = vmatmul.bf16.gmra.mxu0 %v2341
      %v3955 = vpop.f32.mrf.mxu0
      %v3956 = vadd.f32 %v3872, %v3955
      %v3957 = vpop.f32.mrf.mxu0
      %v3958 = vadd.f32 %v3874, %v3957
      %3959 = vmatmul.bf16.gmra.mxu0 %v2349
      %v3960 = vpop.f32.mrf.mxu0
      %v3961 = vadd.f32 %v3877, %v3960
      %v3962 = vpop.f32.mrf.mxu0
      %v3963 = vadd.f32 %v3879, %v3962
      %3964 = vmatmul.bf16.gmra.mxu0 %v2357
      %v3965 = vpop.f32.mrf.mxu0
      %v3966 = vadd.f32 %v3882, %v3965
      %v3967 = vpop.f32.mrf.mxu0
      %v3968 = vadd.f32 %v3884, %v3967
      %3969 = vmatmul.bf16.gmra.mxu0 %v2365
      %v3970 = vpop.f32.mrf.mxu0
      %v3971 = vadd.f32 %v3887, %v3970
      %v3972 = vpop.f32.mrf.mxu0
      %v3973 = vadd.f32 %v3889, %v3972
      %3974 = vmatmul.bf16.gmra.mxu0 %v2373
      %v3975 = vpop.f32.mrf.mxu0
      %v3976 = vadd.f32 %v3892, %v3975
      %v3977 = vpop.f32.mrf.mxu0
      %v3978 = vadd.f32 %v3894, %v3977
      %3979 = vdwg.mxu0
      %3980 = vmatpush.bf16.msra.mxu0 %v2931
      %3981 = vmatpush.bf16.msra.mxu0 %v2929
      %3982 = vmatpush.bf16.msra.mxu0 %v2927
      %3983 = vmatpush.bf16.msra.mxu0 %v2925
      %3984 = vmatpush.bf16.msra.mxu0 %v2923
      %3985 = vmatpush.bf16.msra.mxu0 %v2921
      %3986 = vmatpush.bf16.msra.mxu0 %v2919
      %3987 = vmatpush.bf16.msra.mxu0 %v2917
      %3988 = vmatmul.bf16.gmra.mxu0 %v2262
      %v3989 = vpop.f32.mrf.mxu0
      %v3990 = vadd.f32 %v3906, %v3989
      %v3991 = vpop.f32.mrf.mxu0
      %v3992 = vadd.f32 %v3908, %v3991
      %3993 = vmatmul.bf16.gmra.mxu0 %v2270
      %v3994 = vpop.f32.mrf.mxu0
      %v3995 = vadd.f32 %v3911, %v3994
      %v3996 = vpop.f32.mrf.mxu0
      %v3997 = vadd.f32 %v3913, %v3996
      %3998 = vmatmul.bf16.gmra.mxu0 %v2278
      %v3999 = vpop.f32.mrf.mxu0
      %v4000 = vadd.f32 %v3916, %v3999
      %v4001 = vpop.f32.mrf.mxu0
      %v4002 = vadd.f32 %v3918, %v4001
      %4003 = vmatmul.bf16.gmra.mxu0 %v2286
      %v4004 = vpop.f32.mrf.mxu0
      %v4005 = vadd.f32 %v3921, %v4004
      %v4006 = vpop.f32.mrf.mxu0
      %v4007 = vadd.f32 %v3923, %v4006
      %4008 = vmatmul.bf16.gmra.mxu0 %v2294
      %v4009 = vpop.f32.mrf.mxu0
      %v4010 = vadd.f32 %v3926, %v4009
      %v4011 = vpop.f32.mrf.mxu0
      %v4012 = vadd.f32 %v3928, %v4011
      %4013 = vmatmul.bf16.gmra.mxu0 %v2302
      %v4014 = vpop.f32.mrf.mxu0
      %v4015 = vadd.f32 %v3931, %v4014
      %v4016 = vpop.f32.mrf.mxu0
      %v4017 = vadd.f32 %v3933, %v4016
      %4018 = vmatmul.bf16.gmra.mxu0 %v2310
      %v4019 = vpop.f32.mrf.mxu0
      %v4020 = vadd.f32 %v3936, %v4019
      %v4021 = vpop.f32.mrf.mxu0
      %v4022 = vadd.f32 %v3938, %v4021
      %4023 = vmatmul.bf16.gmra.mxu0 %v2318
      %v4024 = vpop.f32.mrf.mxu0
      %v4025 = vadd.f32 %v3941, %v4024
      %v4026 = vpop.f32.mrf.mxu0
      %v4027 = vadd.f32 %v3943, %v4026
      %4028 = vmatmul.bf16.gmra.mxu0 %v2326
      %v4029 = vpop.f32.mrf.mxu0
      %v4030 = vadd.f32 %v3946, %v4029
      %v4031 = vpop.f32.mrf.mxu0
      %v4032 = vadd.f32 %v3948, %v4031
      %4033 = vmatmul.bf16.gmra.mxu0 %v2334
      %v4034 = vpop.f32.mrf.mxu0
      %v4035 = vadd.f32 %v3951, %v4034
      %v4036 = vpop.f32.mrf.mxu0
      %v4037 = vadd.f32 %v3953, %v4036
      %4038 = vmatmul.bf16.gmra.mxu0 %v2342
      %v4039 = vpop.f32.mrf.mxu0
      %v4040 = vadd.f32 %v3956, %v4039
      %v4041 = vpop.f32.mrf.mxu0
      %v4042 = vadd.f32 %v3958, %v4041
      %4043 = vmatmul.bf16.gmra.mxu0 %v2350
      %v4044 = vpop.f32.mrf.mxu0
      %v4045 = vadd.f32 %v3961, %v4044
      %v4046 = vpop.f32.mrf.mxu0
      %v4047 = vadd.f32 %v3963, %v4046
      %4048 = vmatmul.bf16.gmra.mxu0 %v2358
      %v4049 = vpop.f32.mrf.mxu0
      %v4050 = vadd.f32 %v3966, %v4049
      %v4051 = vpop.f32.mrf.mxu0
      %v4052 = vadd.f32 %v3968, %v4051
      %4053 = vmatmul.bf16.gmra.mxu0 %v2366
      %v4054 = vpop.f32.mrf.mxu0
      %v4055 = vadd.f32 %v3971, %v4054
      %v4056 = vpop.f32.mrf.mxu0
      %v4057 = vadd.f32 %v3973, %v4056
      %4058 = vmatmul.bf16.gmra.mxu0 %v2374
      %v4059 = vpop.f32.mrf.mxu0
      %v4060 = vadd.f32 %v3976, %v4059
      %v4061 = vpop.f32.mrf.mxu0
      %v4062 = vadd.f32 %v3978, %v4061
      %4063 = vdwg.mxu0
      %4064 = vmatpush.bf16.msra.mxu0 %v2947
      %4065 = vmatpush.bf16.msra.mxu0 %v2945
      %4066 = vmatpush.bf16.msra.mxu0 %v2943
      %4067 = vmatpush.bf16.msra.mxu0 %v2941
      %4068 = vmatpush.bf16.msra.mxu0 %v2939
      %4069 = vmatpush.bf16.msra.mxu0 %v2937
      %4070 = vmatpush.bf16.msra.mxu0 %v2935
      %4071 = vmatpush.bf16.msra.mxu0 %v2933
      %4072 = vmatmul.bf16.gmra.mxu0 %v2263
      %v4073 = vpop.f32.mrf.mxu0
      %v4074 = vadd.f32 %v3990, %v4073
      %v4075 = vpop.f32.mrf.mxu0
      %v4076 = vadd.f32 %v3992, %v4075
      %4077 = vmatmul.bf16.gmra.mxu0 %v2271
      %v4078 = vpop.f32.mrf.mxu0
      %v4079 = vadd.f32 %v3995, %v4078
      %v4080 = vpop.f32.mrf.mxu0
      %v4081 = vadd.f32 %v3997, %v4080
      %4082 = vmatmul.bf16.gmra.mxu0 %v2279
      %v4083 = vpop.f32.mrf.mxu0
      %v4084 = vadd.f32 %v4000, %v4083
      %v4085 = vpop.f32.mrf.mxu0
      %v4086 = vadd.f32 %v4002, %v4085
      %4087 = vmatmul.bf16.gmra.mxu0 %v2287
      %v4088 = vpop.f32.mrf.mxu0
      %v4089 = vadd.f32 %v4005, %v4088
      %v4090 = vpop.f32.mrf.mxu0
      %v4091 = vadd.f32 %v4007, %v4090
      %4092 = vmatmul.bf16.gmra.mxu0 %v2295
      %v4093 = vpop.f32.mrf.mxu0
      %v4094 = vadd.f32 %v4010, %v4093
      %v4095 = vpop.f32.mrf.mxu0
      %v4096 = vadd.f32 %v4012, %v4095
      %4097 = vmatmul.bf16.gmra.mxu0 %v2303
      %v4098 = vpop.f32.mrf.mxu0
      %v4099 = vadd.f32 %v4015, %v4098
      %v4100 = vpop.f32.mrf.mxu0
      %v4101 = vadd.f32 %v4017, %v4100
      %4102 = vmatmul.bf16.gmra.mxu0 %v2311
      %v4103 = vpop.f32.mrf.mxu0
      %v4104 = vadd.f32 %v4020, %v4103
      %v4105 = vpop.f32.mrf.mxu0
      %v4106 = vadd.f32 %v4022, %v4105
      %4107 = vmatmul.bf16.gmra.mxu0 %v2319
      %v4108 = vpop.f32.mrf.mxu0
      %v4109 = vadd.f32 %v4025, %v4108
      %v4110 = vpop.f32.mrf.mxu0
      %v4111 = vadd.f32 %v4027, %v4110
      %4112 = vmatmul.bf16.gmra.mxu0 %v2327
      %v4113 = vpop.f32.mrf.mxu0
      %v4114 = vadd.f32 %v4030, %v4113
      %v4115 = vpop.f32.mrf.mxu0
      %v4116 = vadd.f32 %v4032, %v4115
      %4117 = vmatmul.bf16.gmra.mxu0 %v2335
      %v4118 = vpop.f32.mrf.mxu0
      %v4119 = vadd.f32 %v4035, %v4118
      %v4120 = vpop.f32.mrf.mxu0
      %v4121 = vadd.f32 %v4037, %v4120
      %4122 = vmatmul.bf16.gmra.mxu0 %v2343
      %v4123 = vpop.f32.mrf.mxu0
      %v4124 = vadd.f32 %v4040, %v4123
      %v4125 = vpop.f32.mrf.mxu0
      %v4126 = vadd.f32 %v4042, %v4125
      %4127 = vmatmul.bf16.gmra.mxu0 %v2351
      %v4128 = vpop.f32.mrf.mxu0
      %v4129 = vadd.f32 %v4045, %v4128
      %v4130 = vpop.f32.mrf.mxu0
      %v4131 = vadd.f32 %v4047, %v4130
      %4132 = vmatmul.bf16.gmra.mxu0 %v2359
      %v4133 = vpop.f32.mrf.mxu0
      %v4134 = vadd.f32 %v4050, %v4133
      %v4135 = vpop.f32.mrf.mxu0
      %v4136 = vadd.f32 %v4052, %v4135
      %4137 = vmatmul.bf16.gmra.mxu0 %v2367
      %v4138 = vpop.f32.mrf.mxu0
      %v4139 = vadd.f32 %v4055, %v4138
      %v4140 = vpop.f32.mrf.mxu0
      %v4141 = vadd.f32 %v4057, %v4140
      %4142 = vmatmul.bf16.gmra.mxu0 %v2375
      %v4143 = vpop.f32.mrf.mxu0
      %v4144 = vadd.f32 %v4060, %v4143
      %v4145 = vpop.f32.mrf.mxu0
      %v4146 = vadd.f32 %v4062, %v4145
      %4147 = vdwg.mxu0
      %4148 = vmatpush.bf16.msra.mxu0 %v2963
      %4149 = vmatpush.bf16.msra.mxu0 %v2961
      %4150 = vmatpush.bf16.msra.mxu0 %v2959
      %4151 = vmatpush.bf16.msra.mxu0 %v2957
      %4152 = vmatpush.bf16.msra.mxu0 %v2955
      %4153 = vmatpush.bf16.msra.mxu0 %v2953
      %4154 = vmatpush.bf16.msra.mxu0 %v2951
      %4155 = vmatpush.bf16.msra.mxu0 %v2949
      %4156 = vmatmul.bf16.gmra.mxu0 %v2264
      %v4157 = vpop.f32.mrf.mxu0
      %v4158 = vadd.f32 %v4074, %v4157
      %v4159 = vpop.f32.mrf.mxu0
      %v4160 = vadd.f32 %v4076, %v4159
      %4161 = vmatmul.bf16.gmra.mxu0 %v2272
      %v4162 = vpop.f32.mrf.mxu0
      %v4163 = vadd.f32 %v4079, %v4162
      %v4164 = vpop.f32.mrf.mxu0
      %v4165 = vadd.f32 %v4081, %v4164
      %4166 = vmatmul.bf16.gmra.mxu0 %v2280
      %v4167 = vpop.f32.mrf.mxu0
      %v4168 = vadd.f32 %v4084, %v4167
      %v4169 = vpop.f32.mrf.mxu0
      %v4170 = vadd.f32 %v4086, %v4169
      %4171 = vmatmul.bf16.gmra.mxu0 %v2288
      %v4172 = vpop.f32.mrf.mxu0
      %v4173 = vadd.f32 %v4089, %v4172
      %v4174 = vpop.f32.mrf.mxu0
      %v4175 = vadd.f32 %v4091, %v4174
      %4176 = vmatmul.bf16.gmra.mxu0 %v2296
      %v4177 = vpop.f32.mrf.mxu0
      %v4178 = vadd.f32 %v4094, %v4177
      %v4179 = vpop.f32.mrf.mxu0
      %v4180 = vadd.f32 %v4096, %v4179
      %4181 = vmatmul.bf16.gmra.mxu0 %v2304
      %v4182 = vpop.f32.mrf.mxu0
      %v4183 = vadd.f32 %v4099, %v4182
      %v4184 = vpop.f32.mrf.mxu0
      %v4185 = vadd.f32 %v4101, %v4184
      %4186 = vmatmul.bf16.gmra.mxu0 %v2312
      %v4187 = vpop.f32.mrf.mxu0
      %v4188 = vadd.f32 %v4104, %v4187
      %v4189 = vpop.f32.mrf.mxu0
      %v4190 = vadd.f32 %v4106, %v4189
      %4191 = vmatmul.bf16.gmra.mxu0 %v2320
      %v4192 = vpop.f32.mrf.mxu0
      %v4193 = vadd.f32 %v4109, %v4192
      %v4194 = vpop.f32.mrf.mxu0
      %v4195 = vadd.f32 %v4111, %v4194
      %4196 = vmatmul.bf16.gmra.mxu0 %v2328
      %v4197 = vpop.f32.mrf.mxu0
      %v4198 = vadd.f32 %v4114, %v4197
      %v4199 = vpop.f32.mrf.mxu0
      %v4200 = vadd.f32 %v4116, %v4199
      %4201 = vmatmul.bf16.gmra.mxu0 %v2336
      %v4202 = vpop.f32.mrf.mxu0
      %v4203 = vadd.f32 %v4119, %v4202
      %v4204 = vpop.f32.mrf.mxu0
      %v4205 = vadd.f32 %v4121, %v4204
      %4206 = vmatmul.bf16.gmra.mxu0 %v2344
      %v4207 = vpop.f32.mrf.mxu0
      %v4208 = vadd.f32 %v4124, %v4207
      %v4209 = vpop.f32.mrf.mxu0
      %v4210 = vadd.f32 %v4126, %v4209
      %4211 = vmatmul.bf16.gmra.mxu0 %v2352
      %v4212 = vpop.f32.mrf.mxu0
      %v4213 = vadd.f32 %v4129, %v4212
      %v4214 = vpop.f32.mrf.mxu0
      %v4215 = vadd.f32 %v4131, %v4214
      %4216 = vmatmul.bf16.gmra.mxu0 %v2360
      %v4217 = vpop.f32.mrf.mxu0
      %v4218 = vadd.f32 %v4134, %v4217
      %v4219 = vpop.f32.mrf.mxu0
      %v4220 = vadd.f32 %v4136, %v4219
      %4221 = vmatmul.bf16.gmra.mxu0 %v2368
      %v4222 = vpop.f32.mrf.mxu0
      %v4223 = vadd.f32 %v4139, %v4222
      %v4224 = vpop.f32.mrf.mxu0
      %v4225 = vadd.f32 %v4141, %v4224
      %4226 = vmatmul.bf16.gmra.mxu0 %v2376
      %v4227 = vpop.f32.mrf.mxu0
      %v4228 = vadd.f32 %v4144, %v4227
      %v4229 = vpop.f32.mrf.mxu0
      %v4230 = vadd.f32 %v4146, %v4229
      %4231 = vdwg.mxu0
      %4232 = vmatpush.bf16.msra.mxu0 %v2979
      %4233 = vmatpush.bf16.msra.mxu0 %v2977
      %4234 = vmatpush.bf16.msra.mxu0 %v2975
      %4235 = vmatpush.bf16.msra.mxu0 %v2973
      %4236 = vmatpush.bf16.msra.mxu0 %v2971
      %4237 = vmatpush.bf16.msra.mxu0 %v2969
      %4238 = vmatpush.bf16.msra.mxu0 %v2967
      %4239 = vmatpush.bf16.msra.mxu0 %v2965
      %4240 = vmatmul.bf16.gmra.mxu0 %v2265
      %v4241 = vpop.f32.mrf.mxu0
      %v4242 = vadd.f32 %v4158, %v4241
      %v4243 = vpop.f32.mrf.mxu0
      %v4244 = vadd.f32 %v4160, %v4243
      %4245 = vmatmul.bf16.gmra.mxu0 %v2273
      %v4246 = vpop.f32.mrf.mxu0
      %v4247 = vadd.f32 %v4163, %v4246
      %v4248 = vpop.f32.mrf.mxu0
      %v4249 = vadd.f32 %v4165, %v4248
      %4250 = vmatmul.bf16.gmra.mxu0 %v2281
      %v4251 = vpop.f32.mrf.mxu0
      %v4252 = vadd.f32 %v4168, %v4251
      %v4253 = vpop.f32.mrf.mxu0
      %v4254 = vadd.f32 %v4170, %v4253
      %4255 = vmatmul.bf16.gmra.mxu0 %v2289
      %v4256 = vpop.f32.mrf.mxu0
      %v4257 = vadd.f32 %v4173, %v4256
      %v4258 = vpop.f32.mrf.mxu0
      %v4259 = vadd.f32 %v4175, %v4258
      %4260 = vmatmul.bf16.gmra.mxu0 %v2297
      %v4261 = vpop.f32.mrf.mxu0
      %v4262 = vadd.f32 %v4178, %v4261
      %v4263 = vpop.f32.mrf.mxu0
      %v4264 = vadd.f32 %v4180, %v4263
      %4265 = vmatmul.bf16.gmra.mxu0 %v2305
      %v4266 = vpop.f32.mrf.mxu0
      %v4267 = vadd.f32 %v4183, %v4266
      %v4268 = vpop.f32.mrf.mxu0
      %v4269 = vadd.f32 %v4185, %v4268
      %4270 = vmatmul.bf16.gmra.mxu0 %v2313
      %v4271 = vpop.f32.mrf.mxu0
      %v4272 = vadd.f32 %v4188, %v4271
      %v4273 = vpop.f32.mrf.mxu0
      %v4274 = vadd.f32 %v4190, %v4273
      %4275 = vmatmul.bf16.gmra.mxu0 %v2321
      %v4276 = vpop.f32.mrf.mxu0
      %v4277 = vadd.f32 %v4193, %v4276
      %v4278 = vpop.f32.mrf.mxu0
      %v4279 = vadd.f32 %v4195, %v4278
      %4280 = vmatmul.bf16.gmra.mxu0 %v2329
      %v4281 = vpop.f32.mrf.mxu0
      %v4282 = vadd.f32 %v4198, %v4281
      %v4283 = vpop.f32.mrf.mxu0
      %v4284 = vadd.f32 %v4200, %v4283
      %4285 = vmatmul.bf16.gmra.mxu0 %v2337
      %v4286 = vpop.f32.mrf.mxu0
      %v4287 = vadd.f32 %v4203, %v4286
      %v4288 = vpop.f32.mrf.mxu0
      %v4289 = vadd.f32 %v4205, %v4288
      %4290 = vmatmul.bf16.gmra.mxu0 %v2345
      %v4291 = vpop.f32.mrf.mxu0
      %v4292 = vadd.f32 %v4208, %v4291
      %v4293 = vpop.f32.mrf.mxu0
      %v4294 = vadd.f32 %v4210, %v4293
      %4295 = vmatmul.bf16.gmra.mxu0 %v2353
      %v4296 = vpop.f32.mrf.mxu0
      %v4297 = vadd.f32 %v4213, %v4296
      %v4298 = vpop.f32.mrf.mxu0
      %v4299 = vadd.f32 %v4215, %v4298
      %4300 = vmatmul.bf16.gmra.mxu0 %v2361
      %v4301 = vpop.f32.mrf.mxu0
      %v4302 = vadd.f32 %v4218, %v4301
      %v4303 = vpop.f32.mrf.mxu0
      %v4304 = vadd.f32 %v4220, %v4303
      %4305 = vmatmul.bf16.gmra.mxu0 %v2369
      %v4306 = vpop.f32.mrf.mxu0
      %v4307 = vadd.f32 %v4223, %v4306
      %v4308 = vpop.f32.mrf.mxu0
      %v4309 = vadd.f32 %v4225, %v4308
      %4310 = vmatmul.bf16.gmra.mxu0 %v2377
      %v4311 = vpop.f32.mrf.mxu0
      %v4312 = vadd.f32 %v4228, %v4311
      %v4313 = vpop.f32.mrf.mxu0
      %v4314 = vadd.f32 %v4230, %v4313
      %4315 = vdwg.mxu0
      %4316 = vmatpush.bf16.msra.mxu0 %v2995
      %4317 = vmatpush.bf16.msra.mxu0 %v2993
      %4318 = vmatpush.bf16.msra.mxu0 %v2991
      %4319 = vmatpush.bf16.msra.mxu0 %v2989
      %4320 = vmatpush.bf16.msra.mxu0 %v2987
      %4321 = vmatpush.bf16.msra.mxu0 %v2985
      %4322 = vmatpush.bf16.msra.mxu0 %v2983
      %4323 = vmatpush.bf16.msra.mxu0 %v2981
      %4324 = vmatmul.bf16.gmra.mxu0 %v2266
      %v4325 = vpop.f32.mrf.mxu0
      %v4326 = vadd.f32 %v4242, %v4325
      %v4327 = vpop.f32.mrf.mxu0
      %v4328 = vadd.f32 %v4244, %v4327
      %4329 = vmatmul.bf16.gmra.mxu0 %v2274
      %v4330 = vpop.f32.mrf.mxu0
      %v4331 = vadd.f32 %v4247, %v4330
      %v4332 = vpop.f32.mrf.mxu0
      %v4333 = vadd.f32 %v4249, %v4332
      %4334 = vmatmul.bf16.gmra.mxu0 %v2282
      %v4335 = vpop.f32.mrf.mxu0
      %v4336 = vadd.f32 %v4252, %v4335
      %v4337 = vpop.f32.mrf.mxu0
      %v4338 = vadd.f32 %v4254, %v4337
      %4339 = vmatmul.bf16.gmra.mxu0 %v2290
      %v4340 = vpop.f32.mrf.mxu0
      %v4341 = vadd.f32 %v4257, %v4340
      %v4342 = vpop.f32.mrf.mxu0
      %v4343 = vadd.f32 %v4259, %v4342
      %4344 = vmatmul.bf16.gmra.mxu0 %v2298
      %v4345 = vpop.f32.mrf.mxu0
      %v4346 = vadd.f32 %v4262, %v4345
      %v4347 = vpop.f32.mrf.mxu0
      %v4348 = vadd.f32 %v4264, %v4347
      %4349 = vmatmul.bf16.gmra.mxu0 %v2306
      %v4350 = vpop.f32.mrf.mxu0
      %v4351 = vadd.f32 %v4267, %v4350
      %v4352 = vpop.f32.mrf.mxu0
      %v4353 = vadd.f32 %v4269, %v4352
      %4354 = vmatmul.bf16.gmra.mxu0 %v2314
      %v4355 = vpop.f32.mrf.mxu0
      %v4356 = vadd.f32 %v4272, %v4355
      %v4357 = vpop.f32.mrf.mxu0
      %v4358 = vadd.f32 %v4274, %v4357
      %4359 = vmatmul.bf16.gmra.mxu0 %v2322
      %v4360 = vpop.f32.mrf.mxu0
      %v4361 = vadd.f32 %v4277, %v4360
      %v4362 = vpop.f32.mrf.mxu0
      %v4363 = vadd.f32 %v4279, %v4362
      %4364 = vmatmul.bf16.gmra.mxu0 %v2330
      %v4365 = vpop.f32.mrf.mxu0
      %v4366 = vadd.f32 %v4282, %v4365
      %v4367 = vpop.f32.mrf.mxu0
      %v4368 = vadd.f32 %v4284, %v4367
      %4369 = vmatmul.bf16.gmra.mxu0 %v2338
      %v4370 = vpop.f32.mrf.mxu0
      %v4371 = vadd.f32 %v4287, %v4370
      %v4372 = vpop.f32.mrf.mxu0
      %v4373 = vadd.f32 %v4289, %v4372
      %4374 = vmatmul.bf16.gmra.mxu0 %v2346
      %v4375 = vpop.f32.mrf.mxu0
      %v4376 = vadd.f32 %v4292, %v4375
      %v4377 = vpop.f32.mrf.mxu0
      %v4378 = vadd.f32 %v4294, %v4377
      %4379 = vmatmul.bf16.gmra.mxu0 %v2354
      %v4380 = vpop.f32.mrf.mxu0
      %v4381 = vadd.f32 %v4297, %v4380
      %v4382 = vpop.f32.mrf.mxu0
      %v4383 = vadd.f32 %v4299, %v4382
      %4384 = vmatmul.bf16.gmra.mxu0 %v2362
      %v4385 = vpop.f32.mrf.mxu0
      %v4386 = vadd.f32 %v4302, %v4385
      %v4387 = vpop.f32.mrf.mxu0
      %v4388 = vadd.f32 %v4304, %v4387
      %4389 = vmatmul.bf16.gmra.mxu0 %v2370
      %v4390 = vpop.f32.mrf.mxu0
      %v4391 = vadd.f32 %v4307, %v4390
      %v4392 = vpop.f32.mrf.mxu0
      %v4393 = vadd.f32 %v4309, %v4392
      %4394 = vmatmul.bf16.gmra.mxu0 %v2378
      %v4395 = vpop.f32.mrf.mxu0
      %v4396 = vadd.f32 %v4312, %v4395
      %v4397 = vpop.f32.mrf.mxu0
      %v4398 = vadd.f32 %v4314, %v4397
      %4399 = vdwg.mxu0
      %4400 = vmatpush.bf16.msra.mxu0 %v3011
      %4401 = vmatpush.bf16.msra.mxu0 %v3009
      %4402 = vmatpush.bf16.msra.mxu0 %v3007
      %4403 = vmatpush.bf16.msra.mxu0 %v3005
      %4404 = vmatpush.bf16.msra.mxu0 %v3003
      %4405 = vmatpush.bf16.msra.mxu0 %v3001
      %4406 = vmatpush.bf16.msra.mxu0 %v2999
      %4407 = vmatpush.bf16.msra.mxu0 %v2997
      %4408 = vmatmul.bf16.gmra.mxu0 %v2267
      %v4409 = vpop.f32.mrf.mxu0
      %v4410 = vadd.f32 %v4326, %v4409
      %v4411 = vpop.f32.mrf.mxu0
      %v4412 = vadd.f32 %v4328, %v4411
      %4413 = vmatmul.bf16.gmra.mxu0 %v2275
      %v4414 = vpop.f32.mrf.mxu0
      %v4415 = vadd.f32 %v4331, %v4414
      %v4416 = vpop.f32.mrf.mxu0
      %v4417 = vadd.f32 %v4333, %v4416
      %4418 = vmatmul.bf16.gmra.mxu0 %v2283
      %v4419 = vpop.f32.mrf.mxu0
      %v4420 = vadd.f32 %v4336, %v4419
      %v4421 = vpop.f32.mrf.mxu0
      %v4422 = vadd.f32 %v4338, %v4421
      %4423 = vmatmul.bf16.gmra.mxu0 %v2291
      %v4424 = vpop.f32.mrf.mxu0
      %v4425 = vadd.f32 %v4341, %v4424
      %v4426 = vpop.f32.mrf.mxu0
      %v4427 = vadd.f32 %v4343, %v4426
      %4428 = vmatmul.bf16.gmra.mxu0 %v2299
      %v4429 = vpop.f32.mrf.mxu0
      %v4430 = vadd.f32 %v4346, %v4429
      %v4431 = vpop.f32.mrf.mxu0
      %v4432 = vadd.f32 %v4348, %v4431
      %4433 = vmatmul.bf16.gmra.mxu0 %v2307
      %v4434 = vpop.f32.mrf.mxu0
      %v4435 = vadd.f32 %v4351, %v4434
      %v4436 = vpop.f32.mrf.mxu0
      %v4437 = vadd.f32 %v4353, %v4436
      %4438 = vmatmul.bf16.gmra.mxu0 %v2315
      %v4439 = vpop.f32.mrf.mxu0
      %v4440 = vadd.f32 %v4356, %v4439
      %v4441 = vpop.f32.mrf.mxu0
      %v4442 = vadd.f32 %v4358, %v4441
      %4443 = vmatmul.bf16.gmra.mxu0 %v2323
      %v4444 = vpop.f32.mrf.mxu0
      %v4445 = vadd.f32 %v4361, %v4444
      %v4446 = vpop.f32.mrf.mxu0
      %v4447 = vadd.f32 %v4363, %v4446
      %4448 = vmatmul.bf16.gmra.mxu0 %v2331
      %v4449 = vpop.f32.mrf.mxu0
      %v4450 = vadd.f32 %v4366, %v4449
      %v4451 = vpop.f32.mrf.mxu0
      %v4452 = vadd.f32 %v4368, %v4451
      %4453 = vmatmul.bf16.gmra.mxu0 %v2339
      %v4454 = vpop.f32.mrf.mxu0
      %v4455 = vadd.f32 %v4371, %v4454
      %v4456 = vpop.f32.mrf.mxu0
      %v4457 = vadd.f32 %v4373, %v4456
      %4458 = vmatmul.bf16.gmra.mxu0 %v2347
      %v4459 = vpop.f32.mrf.mxu0
      %v4460 = vadd.f32 %v4376, %v4459
      %v4461 = vpop.f32.mrf.mxu0
      %v4462 = vadd.f32 %v4378, %v4461
      %4463 = vmatmul.bf16.gmra.mxu0 %v2355
      %v4464 = vpop.f32.mrf.mxu0
      %v4465 = vadd.f32 %v4381, %v4464
      %v4466 = vpop.f32.mrf.mxu0
      %v4467 = vadd.f32 %v4383, %v4466
      %4468 = vmatmul.bf16.gmra.mxu0 %v2363
      %v4469 = vpop.f32.mrf.mxu0
      %v4470 = vadd.f32 %v4386, %v4469
      %v4471 = vpop.f32.mrf.mxu0
      %v4472 = vadd.f32 %v4388, %v4471
      %4473 = vmatmul.bf16.gmra.mxu0 %v2371
      %v4474 = vpop.f32.mrf.mxu0
      %v4475 = vadd.f32 %v4391, %v4474
      %v4476 = vpop.f32.mrf.mxu0
      %v4477 = vadd.f32 %v4393, %v4476
      %4478 = vmatmul.bf16.gmra.mxu0 %v2379
      %v4479 = vpop.f32.mrf.mxu0
      %v4480 = vadd.f32 %v4396, %v4479
      %v4481 = vpop.f32.mrf.mxu0
      %v4482 = vadd.f32 %v4398, %v4481
      %4483 = vdwg.mxu0
      %v4484 = vrot.slane %v3738, 7
      %v4485 = vrot.slane %v3740, 7
      %v4486 = vrot.slane %v3743, 7
      %v4487 = vrot.slane %v3745, 7
      %v4488 = vrot.slane %v3748, 7
      %v4489 = vrot.slane %v3750, 7
      %v4490 = vrot.slane %v3753, 7
      %v4491 = vrot.slane %v3755, 7
      %v4492 = vrot.slane %v3758, 7
      %v4493 = vrot.slane %v3760, 7
      %v4494 = vrot.slane %v3763, 7
      %v4495 = vrot.slane %v3765, 7
      %v4496 = vrot.slane %v3768, 7
      %v4497 = vrot.slane %v3770, 7
      %v4498 = vrot.slane %v3773, 7
      %v4499 = vrot.slane %v3775, 7
      %v4500 = vrot.slane %v3778, 7
      %v4501 = vrot.slane %v3780, 7
      %v4502 = vrot.slane %v3783, 7
      %v4503 = vrot.slane %v3785, 7
      %v4504 = vrot.slane %v3788, 7
      %v4505 = vrot.slane %v3790, 7
      %v4506 = vrot.slane %v3793, 7
      %v4507 = vrot.slane %v3795, 7
      %v4508 = vrot.slane %v3798, 7
      %v4509 = vrot.slane %v3800, 7
      %v4510 = vrot.slane %v3803, 7
      %v4511 = vrot.slane %v3805, 7
      %v4512 = vrot.slane %v3808, 7
      %v4513 = vrot.slane %v3810, 7
      %vm4514 = vcmp.lt.s32.totalorder %v422, 1
      %v4515 = vsel %vm4514, %v4512, %v4513
      %v4516 = vsel %vm4514, %v4511, %v4512
      %v4517 = vsel %vm4514, %v4510, %v4511
      %v4518 = vsel %vm4514, %v4509, %v4510
      %v4519 = vsel %vm4514, %v4508, %v4509
      %v4520 = vsel %vm4514, %v4507, %v4508
      %v4521 = vsel %vm4514, %v4506, %v4507
      %v4522 = vsel %vm4514, %v4505, %v4506
      %v4523 = vsel %vm4514, %v4504, %v4505
      %v4524 = vsel %vm4514, %v4503, %v4504
      %v4525 = vsel %vm4514, %v4502, %v4503
      %v4526 = vsel %vm4514, %v4501, %v4502
      %v4527 = vsel %vm4514, %v4500, %v4501
      %v4528 = vsel %vm4514, %v4499, %v4500
      %v4529 = vsel %vm4514, %v4498, %v4499
      %v4530 = vsel %vm4514, %v4497, %v4498
      %v4531 = vsel %vm4514, %v4496, %v4497
      %v4532 = vsel %vm4514, %v4495, %v4496
      %v4533 = vsel %vm4514, %v4494, %v4495
      %v4534 = vsel %vm4514, %v4493, %v4494
      %v4535 = vsel %vm4514, %v4492, %v4493
      %v4536 = vsel %vm4514, %v4491, %v4492
      %v4537 = vsel %vm4514, %v4490, %v4491
      %v4538 = vsel %vm4514, %v4489, %v4490
      %v4539 = vsel %vm4514, %v4488, %v4489
      %v4540 = vsel %vm4514, %v4487, %v4488
      %v4541 = vsel %vm4514, %v4486, %v4487
      %v4542 = vsel %vm4514, %v4485, %v4486
      %v4543 = vsel %vm4514, %v4484, %v4485
      %v4544 = vsel %vm4514, %v4513, %v4484
      %v4545 = vmul.f32 %v1532, %v4544
      %v4546 = vmul.f32 %v1533, %v4543
      %v4547 = vmul.f32 %v1534, %v4542
      %v4548 = vmul.f32 %v1535, %v4541
      %v4549 = vmul.f32 %v1536, %v4540
      %v4550 = vmul.f32 %v1537, %v4539
      %v4551 = vmul.f32 %v1538, %v4538
      %v4552 = vmul.f32 %v1539, %v4537
      %v4553 = vmul.f32 %v1540, %v4536
      %v4554 = vmul.f32 %v1541, %v4535
      %v4555 = vmul.f32 %v1542, %v4534
      %v4556 = vmul.f32 %v1543, %v4533
      %v4557 = vmul.f32 %v1544, %v4532
      %v4558 = vmul.f32 %v1545, %v4531
      %v4559 = vmul.f32 %v1546, %v4530
      %v4560 = vmul.f32 %v1547, %v4529
      %v4561 = vmul.f32 %v1548, %v4528
      %v4562 = vmul.f32 %v1549, %v4527
      %v4563 = vmul.f32 %v1550, %v4526
      %v4564 = vmul.f32 %v1551, %v4525
      %v4565 = vmul.f32 %v1552, %v4524
      %v4566 = vmul.f32 %v1553, %v4523
      %v4567 = vmul.f32 %v1554, %v4522
      %v4568 = vmul.f32 %v1555, %v4521
      %v4569 = vmul.f32 %v1556, %v4520
      %v4570 = vmul.f32 %v1557, %v4519
      %v4571 = vmul.f32 %v1558, %v4518
      %v4572 = vmul.f32 %v1559, %v4517
      %v4573 = vmul.f32 %v1560, %v4516
      %v4574 = vmul.f32 %v1561, %v4515
      %4605 = vrot.lane.b32.xlu0 %v4545, 64
      %v4606 = vpop.permute.xlu0 %4605
      %4607 = vrot.lane.b32.xlu0 %v4546, 64
      %v4608 = vpop.permute.xlu0 %4607
      %4609 = vrot.lane.b32.xlu0 %v4547, 64
      %v4610 = vpop.permute.xlu0 %4609
      %4611 = vrot.lane.b32.xlu0 %v4548, 64
      %v4612 = vpop.permute.xlu0 %4611
      %4613 = vrot.lane.b32.xlu0 %v4549, 64
      %v4614 = vpop.permute.xlu0 %4613
      %4615 = vrot.lane.b32.xlu0 %v4550, 64
      %v4616 = vpop.permute.xlu0 %4615
      %4617 = vrot.lane.b32.xlu0 %v4551, 64
      %v4618 = vpop.permute.xlu0 %4617
      %4619 = vrot.lane.b32.xlu0 %v4552, 64
      %v4620 = vpop.permute.xlu0 %4619
      %4621 = vrot.lane.b32.xlu0 %v4553, 64
      %v4622 = vpop.permute.xlu0 %4621
      %4623 = vrot.lane.b32.xlu0 %v4554, 64
      %v4624 = vpop.permute.xlu0 %4623
      %4625 = vrot.lane.b32.xlu0 %v4555, 64
      %v4626 = vpop.permute.xlu0 %4625
      %4627 = vrot.lane.b32.xlu0 %v4556, 64
      %v4628 = vpop.permute.xlu0 %4627
      %4629 = vrot.lane.b32.xlu0 %v4557, 64
      %v4630 = vpop.permute.xlu0 %4629
      %4631 = vrot.lane.b32.xlu0 %v4558, 64
      %v4632 = vpop.permute.xlu0 %4631
      %4633 = vrot.lane.b32.xlu0 %v4559, 64
      %v4634 = vpop.permute.xlu0 %4633
      %4635 = vrot.lane.b32.xlu0 %v4560, 64
      %v4636 = vpop.permute.xlu0 %4635
      %4637 = vrot.lane.b32.xlu0 %v4561, 64
      %v4638 = vpop.permute.xlu0 %4637
      %4639 = vrot.lane.b32.xlu0 %v4562, 64
      %v4640 = vpop.permute.xlu0 %4639
      %4641 = vrot.lane.b32.xlu0 %v4563, 64
      %v4642 = vpop.permute.xlu0 %4641
      %4643 = vrot.lane.b32.xlu0 %v4564, 64
      %v4644 = vpop.permute.xlu0 %4643
      %4645 = vrot.lane.b32.xlu0 %v4565, 64
      %v4646 = vpop.permute.xlu0 %4645
      %4647 = vrot.lane.b32.xlu0 %v4566, 64
      %v4648 = vpop.permute.xlu0 %4647
      %4649 = vrot.lane.b32.xlu0 %v4567, 64
      %v4650 = vpop.permute.xlu0 %4649
      %4651 = vrot.lane.b32.xlu0 %v4568, 64
      %v4652 = vpop.permute.xlu0 %4651
      %4653 = vrot.lane.b32.xlu0 %v4569, 64
      %v4654 = vpop.permute.xlu0 %4653
      %4655 = vrot.lane.b32.xlu0 %v4570, 64
      %v4656 = vpop.permute.xlu0 %4655
      %4657 = vrot.lane.b32.xlu0 %v4571, 64
      %v4658 = vpop.permute.xlu0 %4657
      %4659 = vrot.lane.b32.xlu0 %v4572, 64
      %v4660 = vpop.permute.xlu0 %4659
      %4661 = vrot.lane.b32.xlu0 %v4573, 64
      %v4662 = vpop.permute.xlu0 %4661
      %4663 = vrot.lane.b32.xlu0 %v4574, 64
      %v4664 = vpop.permute.xlu0 %4663
      %v4695 = vadd.f32 %v3738, %v4606
      %v4696 = vadd.f32 %v3740, %v4608
      %v4697 = vadd.f32 %v3743, %v4610
      %v4698 = vadd.f32 %v3745, %v4612
      %v4699 = vadd.f32 %v3748, %v4614
      %v4700 = vadd.f32 %v3750, %v4616
      %v4701 = vadd.f32 %v3753, %v4618
      %v4702 = vadd.f32 %v3755, %v4620
      %v4703 = vadd.f32 %v3758, %v4622
      %v4704 = vadd.f32 %v3760, %v4624
      %v4705 = vadd.f32 %v3763, %v4626
      %v4706 = vadd.f32 %v3765, %v4628
      %v4707 = vadd.f32 %v3768, %v4630
      %v4708 = vadd.f32 %v3770, %v4632
      %v4709 = vadd.f32 %v3773, %v4634
      %v4710 = vadd.f32 %v3775, %v4636
      %v4711 = vadd.f32 %v3778, %v4638
      %v4712 = vadd.f32 %v3780, %v4640
      %v4713 = vadd.f32 %v3783, %v4642
      %v4714 = vadd.f32 %v3785, %v4644
      %v4715 = vadd.f32 %v3788, %v4646
      %v4716 = vadd.f32 %v3790, %v4648
      %v4717 = vadd.f32 %v3793, %v4650
      %v4718 = vadd.f32 %v3795, %v4652
      %v4719 = vadd.f32 %v3798, %v4654
      %v4720 = vadd.f32 %v3800, %v4656
      %v4721 = vadd.f32 %v3803, %v4658
      %v4722 = vadd.f32 %v3805, %v4660
      %v4723 = vadd.f32 %v3808, %v4662
      %v4724 = vadd.f32 %v3810, %v4664
      %v4725 = vrot.slane %v4410, 1
      %v4726 = vrot.slane %v4412, 1
      %v4727 = vrot.slane %v4415, 1
      %v4728 = vrot.slane %v4417, 1
      %v4729 = vrot.slane %v4420, 1
      %v4730 = vrot.slane %v4422, 1
      %v4731 = vrot.slane %v4425, 1
      %v4732 = vrot.slane %v4427, 1
      %v4733 = vrot.slane %v4430, 1
      %v4734 = vrot.slane %v4432, 1
      %v4735 = vrot.slane %v4435, 1
      %v4736 = vrot.slane %v4437, 1
      %v4737 = vrot.slane %v4440, 1
      %v4738 = vrot.slane %v4442, 1
      %v4739 = vrot.slane %v4445, 1
      %v4740 = vrot.slane %v4447, 1
      %v4741 = vrot.slane %v4450, 1
      %v4742 = vrot.slane %v4452, 1
      %v4743 = vrot.slane %v4455, 1
      %v4744 = vrot.slane %v4457, 1
      %v4745 = vrot.slane %v4460, 1
      %v4746 = vrot.slane %v4462, 1
      %v4747 = vrot.slane %v4465, 1
      %v4748 = vrot.slane %v4467, 1
      %v4749 = vrot.slane %v4470, 1
      %v4750 = vrot.slane %v4472, 1
      %v4751 = vrot.slane %v4475, 1
      %v4752 = vrot.slane %v4477, 1
      %v4753 = vrot.slane %v4480, 1
      %v4754 = vrot.slane %v4482, 1
      %vm4755 = vcmp.lt.s32.totalorder %v422, 7
      %v4756 = vsel %vm4755, %v4753, %v4754
      %v4757 = vsel %vm4755, %v4752, %v4753
      %v4758 = vsel %vm4755, %v4751, %v4752
      %v4759 = vsel %vm4755, %v4750, %v4751
      %v4760 = vsel %vm4755, %v4749, %v4750
      %v4761 = vsel %vm4755, %v4748, %v4749
      %v4762 = vsel %vm4755, %v4747, %v4748
      %v4763 = vsel %vm4755, %v4746, %v4747
      %v4764 = vsel %vm4755, %v4745, %v4746
      %v4765 = vsel %vm4755, %v4744, %v4745
      %v4766 = vsel %vm4755, %v4743, %v4744
      %v4767 = vsel %vm4755, %v4742, %v4743
      %v4768 = vsel %vm4755, %v4741, %v4742
      %v4769 = vsel %vm4755, %v4740, %v4741
      %v4770 = vsel %vm4755, %v4739, %v4740
      %v4771 = vsel %vm4755, %v4738, %v4739
      %v4772 = vsel %vm4755, %v4737, %v4738
      %v4773 = vsel %vm4755, %v4736, %v4737
      %v4774 = vsel %vm4755, %v4735, %v4736
      %v4775 = vsel %vm4755, %v4734, %v4735
      %v4776 = vsel %vm4755, %v4733, %v4734
      %v4777 = vsel %vm4755, %v4732, %v4733
      %v4778 = vsel %vm4755, %v4731, %v4732
      %v4779 = vsel %vm4755, %v4730, %v4731
      %v4780 = vsel %vm4755, %v4729, %v4730
      %v4781 = vsel %vm4755, %v4728, %v4729
      %v4782 = vsel %vm4755, %v4727, %v4728
      %v4783 = vsel %vm4755, %v4726, %v4727
      %v4784 = vsel %vm4755, %v4725, %v4726
      %v4785 = vsel %vm4755, %v4754, %v4725
      %v4786 = vmul.f32 %v1622, %v4784
      %v4787 = vmul.f32 %v1623, %v4783
      %v4788 = vmul.f32 %v1624, %v4782
      %v4789 = vmul.f32 %v1625, %v4781
      %v4790 = vmul.f32 %v1626, %v4780
      %v4791 = vmul.f32 %v1627, %v4779
      %v4792 = vmul.f32 %v1628, %v4778
      %v4793 = vmul.f32 %v1629, %v4777
      %v4794 = vmul.f32 %v1630, %v4776
      %v4795 = vmul.f32 %v1631, %v4775
      %v4796 = vmul.f32 %v1632, %v4774
      %v4797 = vmul.f32 %v1633, %v4773
      %v4798 = vmul.f32 %v1634, %v4772
      %v4799 = vmul.f32 %v1635, %v4771
      %v4800 = vmul.f32 %v1636, %v4770
      %v4801 = vmul.f32 %v1637, %v4769
      %v4802 = vmul.f32 %v1638, %v4768
      %v4803 = vmul.f32 %v1639, %v4767
      %v4804 = vmul.f32 %v1640, %v4766
      %v4805 = vmul.f32 %v1641, %v4765
      %v4806 = vmul.f32 %v1642, %v4764
      %v4807 = vmul.f32 %v1643, %v4763
      %v4808 = vmul.f32 %v1644, %v4762
      %v4809 = vmul.f32 %v1645, %v4761
      %v4810 = vmul.f32 %v1646, %v4760
      %v4811 = vmul.f32 %v1647, %v4759
      %v4812 = vmul.f32 %v1648, %v4758
      %v4813 = vmul.f32 %v1649, %v4757
      %v4814 = vmul.f32 %v1650, %v4756
      %v4815 = vmul.f32 %v1651, %v4785
      %4846 = vrot.lane.b32.xlu0 %v4786, 64
      %v4847 = vpop.permute.xlu0 %4846
      %4848 = vrot.lane.b32.xlu0 %v4787, 64
      %v4849 = vpop.permute.xlu0 %4848
      %4850 = vrot.lane.b32.xlu0 %v4788, 64
      %v4851 = vpop.permute.xlu0 %4850
      %4852 = vrot.lane.b32.xlu0 %v4789, 64
      %v4853 = vpop.permute.xlu0 %4852
      %4854 = vrot.lane.b32.xlu0 %v4790, 64
      %v4855 = vpop.permute.xlu0 %4854
      %4856 = vrot.lane.b32.xlu0 %v4791, 64
      %v4857 = vpop.permute.xlu0 %4856
      %4858 = vrot.lane.b32.xlu0 %v4792, 64
      %v4859 = vpop.permute.xlu0 %4858
      %4860 = vrot.lane.b32.xlu0 %v4793, 64
      %v4861 = vpop.permute.xlu0 %4860
      %4862 = vrot.lane.b32.xlu0 %v4794, 64
      %v4863 = vpop.permute.xlu0 %4862
      %4864 = vrot.lane.b32.xlu0 %v4795, 64
      %v4865 = vpop.permute.xlu0 %4864
      %4866 = vrot.lane.b32.xlu0 %v4796, 64
      %v4867 = vpop.permute.xlu0 %4866
      %4868 = vrot.lane.b32.xlu0 %v4797, 64
      %v4869 = vpop.permute.xlu0 %4868
      %4870 = vrot.lane.b32.xlu0 %v4798, 64
      %v4871 = vpop.permute.xlu0 %4870
      %4872 = vrot.lane.b32.xlu0 %v4799, 64
      %v4873 = vpop.permute.xlu0 %4872
      %4874 = vrot.lane.b32.xlu0 %v4800, 64
      %v4875 = vpop.permute.xlu0 %4874
      %4876 = vrot.lane.b32.xlu0 %v4801, 64
      %v4877 = vpop.permute.xlu0 %4876
      %4878 = vrot.lane.b32.xlu0 %v4802, 64
      %v4879 = vpop.permute.xlu0 %4878
      %4880 = vrot.lane.b32.xlu0 %v4803, 64
      %v4881 = vpop.permute.xlu0 %4880
      %4882 = vrot.lane.b32.xlu0 %v4804, 64
      %v4883 = vpop.permute.xlu0 %4882
      %4884 = vrot.lane.b32.xlu0 %v4805, 64
      %v4885 = vpop.permute.xlu0 %4884
      %4886 = vrot.lane.b32.xlu0 %v4806, 64
      %v4887 = vpop.permute.xlu0 %4886
      %4888 = vrot.lane.b32.xlu0 %v4807, 64
      %v4889 = vpop.permute.xlu0 %4888
      %4890 = vrot.lane.b32.xlu0 %v4808, 64
      %v4891 = vpop.permute.xlu0 %4890
      %4892 = vrot.lane.b32.xlu0 %v4809, 64
      %v4893 = vpop.permute.xlu0 %4892
      %4894 = vrot.lane.b32.xlu0 %v4810, 64
      %v4895 = vpop.permute.xlu0 %4894
      %4896 = vrot.lane.b32.xlu0 %v4811, 64
      %v4897 = vpop.permute.xlu0 %4896
      %4898 = vrot.lane.b32.xlu0 %v4812, 64
      %v4899 = vpop.permute.xlu0 %4898
      %4900 = vrot.lane.b32.xlu0 %v4813, 64
      %v4901 = vpop.permute.xlu0 %4900
      %4902 = vrot.lane.b32.xlu0 %v4814, 64
      %v4903 = vpop.permute.xlu0 %4902
      %4904 = vrot.lane.b32.xlu0 %v4815, 64
      %v4905 = vpop.permute.xlu0 %4904
      %v4936 = vadd.f32 %v4695, %v4847
      %v4937 = vadd.f32 %v4696, %v4849
      %v4938 = vadd.f32 %v4697, %v4851
      %v4939 = vadd.f32 %v4698, %v4853
      %v4940 = vadd.f32 %v4699, %v4855
      %v4941 = vadd.f32 %v4700, %v4857
      %v4942 = vadd.f32 %v4701, %v4859
      %v4943 = vadd.f32 %v4702, %v4861
      %v4944 = vadd.f32 %v4703, %v4863
      %v4945 = vadd.f32 %v4704, %v4865
      %v4946 = vadd.f32 %v4705, %v4867
      %v4947 = vadd.f32 %v4706, %v4869
      %v4948 = vadd.f32 %v4707, %v4871
      %v4949 = vadd.f32 %v4708, %v4873
      %v4950 = vadd.f32 %v4709, %v4875
      %v4951 = vadd.f32 %v4710, %v4877
      %v4952 = vadd.f32 %v4711, %v4879
      %v4953 = vadd.f32 %v4712, %v4881
      %v4954 = vadd.f32 %v4713, %v4883
      %v4955 = vadd.f32 %v4714, %v4885
      %v4956 = vadd.f32 %v4715, %v4887
      %v4957 = vadd.f32 %v4716, %v4889
      %v4958 = vadd.f32 %v4717, %v4891
      %v4959 = vadd.f32 %v4718, %v4893
      %v4960 = vadd.f32 %v4719, %v4895
      %v4961 = vadd.f32 %v4720, %v4897
      %v4962 = vadd.f32 %v4721, %v4899
      %v4963 = vadd.f32 %v4722, %v4901
      %v4964 = vadd.f32 %v4723, %v4903
      %v4965 = vadd.f32 %v4724, %v4905
      %v4966 = vld [vmem:[%s2] sm:$0x1]
      %v4968 = vperm.slane %v4966, 0
      %4969 = vrot.lane.b32.xlu0 %v4968, 64
      %v4970 = vpop.permute.xlu0 %4969
      %v4972 = vadd.f32 %v4936, %v4970
      %v4973 = vadd.f32 %v4937, %v4970
      %v4974 = vadd.f32 %v4938, %v4970
      %v4975 = vadd.f32 %v4939, %v4970
      %v4976 = vadd.f32 %v4940, %v4970
      %v4977 = vadd.f32 %v4941, %v4970
      %v4978 = vadd.f32 %v4942, %v4970
      %v4979 = vadd.f32 %v4943, %v4970
      %v4980 = vadd.f32 %v4944, %v4970
      %v4981 = vadd.f32 %v4945, %v4970
      %v4982 = vadd.f32 %v4946, %v4970
      %v4983 = vadd.f32 %v4947, %v4970
      %v4984 = vadd.f32 %v4948, %v4970
      %v4985 = vadd.f32 %v4949, %v4970
      %v4986 = vadd.f32 %v4950, %v4970
      %v4987 = vadd.f32 %v4951, %v4970
      %v4988 = vadd.f32 %v4952, %v4970
      %v4989 = vadd.f32 %v4953, %v4970
      %v4990 = vadd.f32 %v4954, %v4970
      %v4991 = vadd.f32 %v4955, %v4970
      %v4992 = vadd.f32 %v4956, %v4970
      %v4993 = vadd.f32 %v4957, %v4970
      %v4994 = vadd.f32 %v4958, %v4970
      %v4995 = vadd.f32 %v4959, %v4970
      %v4996 = vadd.f32 %v4960, %v4970
      %v4997 = vadd.f32 %v4961, %v4970
      %v4998 = vadd.f32 %v4962, %v4970
      %v4999 = vadd.f32 %v4963, %v4970
      %v5000 = vadd.f32 %v4964, %v4970
      %v5001 = vadd.f32 %v4965, %v4970
      %v5002 = vmax.f32 %v4972, 0.0
      %v5003 = vmax.f32 %v4973, 0.0
      %v5004 = vmax.f32 %v4974, 0.0
      %v5005 = vmax.f32 %v4975, 0.0
      %v5006 = vmax.f32 %v4976, 0.0
      %v5007 = vmax.f32 %v4977, 0.0
      %v5008 = vmax.f32 %v4978, 0.0
      %v5009 = vmax.f32 %v4979, 0.0
      %v5010 = vmax.f32 %v4980, 0.0
      %v5011 = vmax.f32 %v4981, 0.0
      %v5012 = vmax.f32 %v4982, 0.0
      %v5013 = vmax.f32 %v4983, 0.0
      %v5014 = vmax.f32 %v4984, 0.0
      %v5015 = vmax.f32 %v4985, 0.0
      %v5016 = vmax.f32 %v4986, 0.0
      %v5017 = vmax.f32 %v4987, 0.0
      %v5018 = vmax.f32 %v4988, 0.0
      %v5019 = vmax.f32 %v4989, 0.0
      %v5020 = vmax.f32 %v4990, 0.0
      %v5021 = vmax.f32 %v4991, 0.0
      %v5022 = vmax.f32 %v4992, 0.0
      %v5023 = vmax.f32 %v4993, 0.0
      %v5024 = vmax.f32 %v4994, 0.0
      %v5025 = vmax.f32 %v4995, 0.0
      %v5026 = vmax.f32 %v4996, 0.0
      %v5027 = vmax.f32 %v4997, 0.0
      %v5028 = vmax.f32 %v4998, 0.0
      %v5029 = vmax.f32 %v4999, 0.0
      %v5030 = vmax.f32 %v5000, 0.0
      %v5031 = vmax.f32 %v5001, 0.0
      %v5032 = vpack.c.bf16 %v5003, %v5002
      %v5033 = vpack.c.bf16 %v5005, %v5004
      %v5034 = vpack.c.bf16 %v5007, %v5006
      %v5035 = vpack.c.bf16 %v5009, %v5008
      %v5036 = vpack.c.bf16 %v5011, %v5010
      %v5037 = vpack.c.bf16 %v5013, %v5012
      %v5038 = vpack.c.bf16 %v5015, %v5014
      %v5039 = vpack.c.bf16 %v5017, %v5016
      %v5040 = vpack.c.bf16 %v5019, %v5018
      %v5041 = vpack.c.bf16 %v5021, %v5020
      %v5042 = vpack.c.bf16 %v5023, %v5022
      %v5043 = vpack.c.bf16 %v5025, %v5024
      %v5044 = vpack.c.bf16 %v5027, %v5026
      %v5045 = vpack.c.bf16 %v5029, %v5028
      %v5046 = vpack.c.bf16 %v5031, %v5030
      %v5047 = vld [vmem:[%s3] sm:$0xff]
      %v5048 = vld [vmem:[%s3 + $0x8] sm:$0xff]
      %v5049 = vld [vmem:[%s3 + $0x10] sm:$0xff]
      %v5050 = vld [vmem:[%s3 + $0x18] sm:$0xff]
      %v5051 = vld [vmem:[%s3 + $0x20] sm:$0xff]
      %v5052 = vld [vmem:[%s3 + $0x28] sm:$0xff]
      %v5053 = vld [vmem:[%s3 + $0x30] sm:$0xff]
      %v5054 = vld [vmem:[%s3 + $0x38] sm:$0xff]
      %5070 = vrot.lane.b32.xlu0 %v5032, 64
      %v5071 = vpop.permute.xlu0 %5070
      %5072 = vrot.lane.b32.xlu0 %v5033, 64
      %v5073 = vpop.permute.xlu0 %5072
      %5074 = vrot.lane.b32.xlu0 %v5034, 64
      %v5075 = vpop.permute.xlu0 %5074
      %5076 = vrot.lane.b32.xlu0 %v5035, 64
      %v5077 = vpop.permute.xlu0 %5076
      %5078 = vrot.lane.b32.xlu0 %v5036, 64
      %v5079 = vpop.permute.xlu0 %5078
      %5080 = vrot.lane.b32.xlu0 %v5037, 64
      %v5081 = vpop.permute.xlu0 %5080
      %5082 = vrot.lane.b32.xlu0 %v5038, 64
      %v5083 = vpop.permute.xlu0 %5082
      %5084 = vrot.lane.b32.xlu0 %v5039, 64
      %v5085 = vpop.permute.xlu0 %5084
      %5086 = vrot.lane.b32.xlu0 %v5040, 64
      %v5087 = vpop.permute.xlu0 %5086
      %5088 = vrot.lane.b32.xlu0 %v5041, 64
      %v5089 = vpop.permute.xlu0 %5088
      %5090 = vrot.lane.b32.xlu0 %v5042, 64
      %v5091 = vpop.permute.xlu0 %5090
      %5092 = vrot.lane.b32.xlu0 %v5043, 64
      %v5093 = vpop.permute.xlu0 %5092
      %5094 = vrot.lane.b32.xlu0 %v5044, 64
      %v5095 = vpop.permute.xlu0 %5094
      %5096 = vrot.lane.b32.xlu0 %v5045, 64
      %v5097 = vpop.permute.xlu0 %5096
      %5098 = vrot.lane.b32.xlu0 %v5046, 64
      %v5099 = vpop.permute.xlu0 %5098
      %v5108 = vunpack.c.l.b16 %v5047
      %v5109 = vunpack.c.h.b16 %v5047
      %v5110 = vunpack.c.l.b16 %v5048
      %v5111 = vunpack.c.h.b16 %v5048
      %v5112 = vunpack.c.l.b16 %v5049
      %v5113 = vunpack.c.h.b16 %v5049
      %v5114 = vunpack.c.l.b16 %v5050
      %v5115 = vunpack.c.h.b16 %v5050
      %v5116 = vunpack.c.l.b16 %v5051
      %v5117 = vunpack.c.h.b16 %v5051
      %v5118 = vunpack.c.l.b16 %v5052
      %v5119 = vunpack.c.h.b16 %v5052
      %v5120 = vunpack.c.l.b16 %v5053
      %v5121 = vunpack.c.h.b16 %v5053
      %v5122 = vunpack.c.l.b16 %v5054
      %v5123 = vunpack.c.h.b16 %v5054
      %v5124 = vpack.c.b16 %v5110, %v5108
      %v5125 = vpack.c.b16 %v5111, %v5109
      %v5126 = vpack.c.b16 %v5114, %v5112
      %v5127 = vpack.c.b16 %v5115, %v5113
      %v5128 = vpack.c.b16 %v5118, %v5116
      %v5129 = vpack.c.b16 %v5119, %v5117
      %v5130 = vpack.c.b16 %v5122, %v5120
      %v5131 = vpack.c.b16 %v5123, %v5121
      %vm5140 = vcmask 523264
      %v5142 = vsel %vm5140, %v5071, 0
      %v5145 = vsel %vm5140, %v5073, 0
      %v5148 = vsel %vm5140, %v5075, 0
      %v5151 = vsel %vm5140, %v5077, 0
      %v5154 = vsel %vm5140, %v5079, 0
      %v5157 = vsel %vm5140, %v5081, 0
      %v5160 = vsel %vm5140, %v5083, 0
      %v5163 = vsel %vm5140, %v5085, 0
      %v5166 = vsel %vm5140, %v5087, 0
      %v5169 = vsel %vm5140, %v5089, 0
      %v5172 = vsel %vm5140, %v5091, 0
      %v5175 = vsel %vm5140, %v5093, 0
      %v5178 = vsel %vm5140, %v5095, 0
      %v5181 = vsel %vm5140, %v5097, 0
      %v5184 = vsel %vm5140, %v5099, 0
      %5186 = vmatpush.bf16.msra.mxu0 0
      %5187 = vmatpush.bf16.msra.mxu0 0
      %5188 = vmatpush.bf16.msra.mxu0 0
      %5189 = vmatpush.bf16.msra.mxu0 0
      %5190 = vmatpush.bf16.msra.mxu0 %v5130
      %5191 = vmatpush.bf16.msra.mxu0 %v5128
      %5192 = vmatpush.bf16.msra.mxu0 %v5126
      %5193 = vmatpush.bf16.msra.mxu0 %v5124
      %5194 = vmatmul.bf16.gmra.mxu0 %v5142
      %v5195 = vpop.f32.mrf.mxu0
      %v5196 = vadd.f32 0.0, %v5195
      %v5197 = vpop.f32.mrf.mxu0
      %v5198 = vadd.f32 0.0, %v5197
      %5199 = vmatmul.bf16.gmra.mxu0 %v5145
      %v5200 = vpop.f32.mrf.mxu0
      %v5201 = vadd.f32 0.0, %v5200
      %v5202 = vpop.f32.mrf.mxu0
      %v5203 = vadd.f32 0.0, %v5202
      %5204 = vmatmul.bf16.gmra.mxu0 %v5148
      %v5205 = vpop.f32.mrf.mxu0
      %v5206 = vadd.f32 0.0, %v5205
      %v5207 = vpop.f32.mrf.mxu0
      %v5208 = vadd.f32 0.0, %v5207
      %5209 = vmatmul.bf16.gmra.mxu0 %v5151
      %v5210 = vpop.f32.mrf.mxu0
      %v5211 = vadd.f32 0.0, %v5210
      %v5212 = vpop.f32.mrf.mxu0
      %v5213 = vadd.f32 0.0, %v5212
      %5214 = vmatmul.bf16.gmra.mxu0 %v5154
      %v5215 = vpop.f32.mrf.mxu0
      %v5216 = vadd.f32 0.0, %v5215
      %v5217 = vpop.f32.mrf.mxu0
      %v5218 = vadd.f32 0.0, %v5217
      %5219 = vmatmul.bf16.gmra.mxu0 %v5157
      %v5220 = vpop.f32.mrf.mxu0
      %v5221 = vadd.f32 0.0, %v5220
      %v5222 = vpop.f32.mrf.mxu0
      %v5223 = vadd.f32 0.0, %v5222
      %5224 = vmatmul.bf16.gmra.mxu0 %v5160
      %v5225 = vpop.f32.mrf.mxu0
      %v5226 = vadd.f32 0.0, %v5225
      %v5227 = vpop.f32.mrf.mxu0
      %v5228 = vadd.f32 0.0, %v5227
      %5229 = vmatmul.bf16.gmra.mxu0 %v5163
      %v5230 = vpop.f32.mrf.mxu0
      %v5231 = vadd.f32 0.0, %v5230
      %v5232 = vpop.f32.mrf.mxu0
      %v5233 = vadd.f32 0.0, %v5232
      %5234 = vmatmul.bf16.gmra.mxu0 %v5166
      %v5235 = vpop.f32.mrf.mxu0
      %v5236 = vadd.f32 0.0, %v5235
      %v5237 = vpop.f32.mrf.mxu0
      %v5238 = vadd.f32 0.0, %v5237
      %5239 = vmatmul.bf16.gmra.mxu0 %v5169
      %v5240 = vpop.f32.mrf.mxu0
      %v5241 = vadd.f32 0.0, %v5240
      %v5242 = vpop.f32.mrf.mxu0
      %v5243 = vadd.f32 0.0, %v5242
      %5244 = vmatmul.bf16.gmra.mxu0 %v5172
      %v5245 = vpop.f32.mrf.mxu0
      %v5246 = vadd.f32 0.0, %v5245
      %v5247 = vpop.f32.mrf.mxu0
      %v5248 = vadd.f32 0.0, %v5247
      %5249 = vmatmul.bf16.gmra.mxu0 %v5175
      %v5250 = vpop.f32.mrf.mxu0
      %v5251 = vadd.f32 0.0, %v5250
      %v5252 = vpop.f32.mrf.mxu0
      %v5253 = vadd.f32 0.0, %v5252
      %5254 = vmatmul.bf16.gmra.mxu0 %v5178
      %v5255 = vpop.f32.mrf.mxu0
      %v5256 = vadd.f32 0.0, %v5255
      %v5257 = vpop.f32.mrf.mxu0
      %v5258 = vadd.f32 0.0, %v5257
      %5259 = vmatmul.bf16.gmra.mxu0 %v5181
      %v5260 = vpop.f32.mrf.mxu0
      %v5261 = vadd.f32 0.0, %v5260
      %v5262 = vpop.f32.mrf.mxu0
      %v5263 = vadd.f32 0.0, %v5262
      %5264 = vmatmul.bf16.gmra.mxu0 %v5184
      %v5265 = vpop.f32.mrf.mxu0
      %v5266 = vadd.f32 0.0, %v5265
      %v5267 = vpop.f32.mrf.mxu0
      %v5268 = vadd.f32 0.0, %v5267
      %5269 = vdwg.mxu0
      %5270 = vmatpush.bf16.msra.mxu0 0
      %5271 = vmatpush.bf16.msra.mxu0 0
      %5272 = vmatpush.bf16.msra.mxu0 0
      %5273 = vmatpush.bf16.msra.mxu0 0
      %5274 = vmatpush.bf16.msra.mxu0 %v5131
      %5275 = vmatpush.bf16.msra.mxu0 %v5129
      %5276 = vmatpush.bf16.msra.mxu0 %v5127
      %5277 = vmatpush.bf16.msra.mxu0 %v5125
      %5278 = vmatmul.bf16.gmra.mxu0 %v5142
      %v5279 = vpop.f32.mrf.mxu0
      %v5280 = vadd.f32 0.0, %v5279
      %v5281 = vpop.f32.mrf.mxu0
      %v5282 = vadd.f32 0.0, %v5281
      %5283 = vmatmul.bf16.gmra.mxu0 %v5145
      %v5284 = vpop.f32.mrf.mxu0
      %v5285 = vadd.f32 0.0, %v5284
      %v5286 = vpop.f32.mrf.mxu0
      %v5287 = vadd.f32 0.0, %v5286
      %5288 = vmatmul.bf16.gmra.mxu0 %v5148
      %v5289 = vpop.f32.mrf.mxu0
      %v5290 = vadd.f32 0.0, %v5289
      %v5291 = vpop.f32.mrf.mxu0
      %v5292 = vadd.f32 0.0, %v5291
      %5293 = vmatmul.bf16.gmra.mxu0 %v5151
      %v5294 = vpop.f32.mrf.mxu0
      %v5295 = vadd.f32 0.0, %v5294
      %v5296 = vpop.f32.mrf.mxu0
      %v5297 = vadd.f32 0.0, %v5296
      %5298 = vmatmul.bf16.gmra.mxu0 %v5154
      %v5299 = vpop.f32.mrf.mxu0
      %v5300 = vadd.f32 0.0, %v5299
      %v5301 = vpop.f32.mrf.mxu0
      %v5302 = vadd.f32 0.0, %v5301
      %5303 = vmatmul.bf16.gmra.mxu0 %v5157
      %v5304 = vpop.f32.mrf.mxu0
      %v5305 = vadd.f32 0.0, %v5304
      %v5306 = vpop.f32.mrf.mxu0
      %v5307 = vadd.f32 0.0, %v5306
      %5308 = vmatmul.bf16.gmra.mxu0 %v5160
      %v5309 = vpop.f32.mrf.mxu0
      %v5310 = vadd.f32 0.0, %v5309
      %v5311 = vpop.f32.mrf.mxu0
      %v5312 = vadd.f32 0.0, %v5311
      %5313 = vmatmul.bf16.gmra.mxu0 %v5163
      %v5314 = vpop.f32.mrf.mxu0
      %v5315 = vadd.f32 0.0, %v5314
      %v5316 = vpop.f32.mrf.mxu0
      %v5317 = vadd.f32 0.0, %v5316
      %5318 = vmatmul.bf16.gmra.mxu0 %v5166
      %v5319 = vpop.f32.mrf.mxu0
      %v5320 = vadd.f32 0.0, %v5319
      %v5321 = vpop.f32.mrf.mxu0
      %v5322 = vadd.f32 0.0, %v5321
      %5323 = vmatmul.bf16.gmra.mxu0 %v5169
      %v5324 = vpop.f32.mrf.mxu0
      %v5325 = vadd.f32 0.0, %v5324
      %v5326 = vpop.f32.mrf.mxu0
      %v5327 = vadd.f32 0.0, %v5326
      %5328 = vmatmul.bf16.gmra.mxu0 %v5172
      %v5329 = vpop.f32.mrf.mxu0
      %v5330 = vadd.f32 0.0, %v5329
      %v5331 = vpop.f32.mrf.mxu0
      %v5332 = vadd.f32 0.0, %v5331
      %5333 = vmatmul.bf16.gmra.mxu0 %v5175
      %v5334 = vpop.f32.mrf.mxu0
      %v5335 = vadd.f32 0.0, %v5334
      %v5336 = vpop.f32.mrf.mxu0
      %v5337 = vadd.f32 0.0, %v5336
      %5338 = vmatmul.bf16.gmra.mxu0 %v5178
      %v5339 = vpop.f32.mrf.mxu0
      %v5340 = vadd.f32 0.0, %v5339
      %v5341 = vpop.f32.mrf.mxu0
      %v5342 = vadd.f32 0.0, %v5341
      %5343 = vmatmul.bf16.gmra.mxu0 %v5181
      %v5344 = vpop.f32.mrf.mxu0
      %v5345 = vadd.f32 0.0, %v5344
      %v5346 = vpop.f32.mrf.mxu0
      %v5347 = vadd.f32 0.0, %v5346
      %5348 = vmatmul.bf16.gmra.mxu0 %v5184
      %v5349 = vpop.f32.mrf.mxu0
      %v5350 = vadd.f32 0.0, %v5349
      %v5351 = vpop.f32.mrf.mxu0
      %v5352 = vadd.f32 0.0, %v5351
      %5353 = vdwg.mxu0
      %v5354 = vrot.slane %v5196, 7
      %v5355 = vrot.slane %v5198, 7
      %v5356 = vrot.slane %v5201, 7
      %v5357 = vrot.slane %v5203, 7
      %v5358 = vrot.slane %v5206, 7
      %v5359 = vrot.slane %v5208, 7
      %v5360 = vrot.slane %v5211, 7
      %v5361 = vrot.slane %v5213, 7
      %v5362 = vrot.slane %v5216, 7
      %v5363 = vrot.slane %v5218, 7
      %v5364 = vrot.slane %v5221, 7
      %v5365 = vrot.slane %v5223, 7
      %v5366 = vrot.slane %v5226, 7
      %v5367 = vrot.slane %v5228, 7
      %v5368 = vrot.slane %v5231, 7
      %v5369 = vrot.slane %v5233, 7
      %v5370 = vrot.slane %v5236, 7
      %v5371 = vrot.slane %v5238, 7
      %v5372 = vrot.slane %v5241, 7
      %v5373 = vrot.slane %v5243, 7
      %v5374 = vrot.slane %v5246, 7
      %v5375 = vrot.slane %v5248, 7
      %v5376 = vrot.slane %v5251, 7
      %v5377 = vrot.slane %v5253, 7
      %v5378 = vrot.slane %v5256, 7
      %v5379 = vrot.slane %v5258, 7
      %v5380 = vrot.slane %v5261, 7
      %v5381 = vrot.slane %v5263, 7
      %v5382 = vrot.slane %v5266, 7
      %v5383 = vrot.slane %v5268, 7
      %v5384 = vsel %vm4514, %v5382, %v5383
      %v5385 = vsel %vm4514, %v5381, %v5382
      %v5386 = vsel %vm4514, %v5380, %v5381
      %v5387 = vsel %vm4514, %v5379, %v5380
      %v5388 = vsel %vm4514, %v5378, %v5379
      %v5389 = vsel %vm4514, %v5377, %v5378
      %v5390 = vsel %vm4514, %v5376, %v5377
      %v5391 = vsel %vm4514, %v5375, %v5376
      %v5392 = vsel %vm4514, %v5374, %v5375
      %v5393 = vsel %vm4514, %v5373, %v5374
      %v5394 = vsel %vm4514, %v5372, %v5373
      %v5395 = vsel %vm4514, %v5371, %v5372
      %v5396 = vsel %vm4514, %v5370, %v5371
      %v5397 = vsel %vm4514, %v5369, %v5370
      %v5398 = vsel %vm4514, %v5368, %v5369
      %v5399 = vsel %vm4514, %v5367, %v5368
      %v5400 = vsel %vm4514, %v5366, %v5367
      %v5401 = vsel %vm4514, %v5365, %v5366
      %v5402 = vsel %vm4514, %v5364, %v5365
      %v5403 = vsel %vm4514, %v5363, %v5364
      %v5404 = vsel %vm4514, %v5362, %v5363
      %v5405 = vsel %vm4514, %v5361, %v5362
      %v5406 = vsel %vm4514, %v5360, %v5361
      %v5407 = vsel %vm4514, %v5359, %v5360
      %v5408 = vsel %vm4514, %v5358, %v5359
      %v5409 = vsel %vm4514, %v5357, %v5358
      %v5410 = vsel %vm4514, %v5356, %v5357
      %v5411 = vsel %vm4514, %v5355, %v5356
      %v5412 = vsel %vm4514, %v5354, %v5355
      %v5413 = vsel %vm4514, %v5383, %v5354
      %v5414 = vmul.f32 %v1532, %v5413
      %v5415 = vmul.f32 %v1533, %v5412
      %v5416 = vmul.f32 %v1534, %v5411
      %v5417 = vmul.f32 %v1535, %v5410
      %v5418 = vmul.f32 %v1536, %v5409
      %v5419 = vmul.f32 %v1537, %v5408
      %v5420 = vmul.f32 %v1538, %v5407
      %v5421 = vmul.f32 %v1539, %v5406
      %v5422 = vmul.f32 %v1540, %v5405
      %v5423 = vmul.f32 %v1541, %v5404
      %v5424 = vmul.f32 %v1542, %v5403
      %v5425 = vmul.f32 %v1543, %v5402
      %v5426 = vmul.f32 %v1544, %v5401
      %v5427 = vmul.f32 %v1545, %v5400
      %v5428 = vmul.f32 %v1546, %v5399
      %v5429 = vmul.f32 %v1547, %v5398
      %v5430 = vmul.f32 %v1548, %v5397
      %v5431 = vmul.f32 %v1549, %v5396
      %v5432 = vmul.f32 %v1550, %v5395
      %v5433 = vmul.f32 %v1551, %v5394
      %v5434 = vmul.f32 %v1552, %v5393
      %v5435 = vmul.f32 %v1553, %v5392
      %v5436 = vmul.f32 %v1554, %v5391
      %v5437 = vmul.f32 %v1555, %v5390
      %v5438 = vmul.f32 %v1556, %v5389
      %v5439 = vmul.f32 %v1557, %v5388
      %v5440 = vmul.f32 %v1558, %v5387
      %v5441 = vmul.f32 %v1559, %v5386
      %v5442 = vmul.f32 %v1560, %v5385
      %v5443 = vmul.f32 %v1561, %v5384
      %5474 = vrot.lane.b32.xlu0 %v5414, 64
      %v5475 = vpop.permute.xlu0 %5474
      %5476 = vrot.lane.b32.xlu0 %v5415, 64
      %v5477 = vpop.permute.xlu0 %5476
      %5478 = vrot.lane.b32.xlu0 %v5416, 64
      %v5479 = vpop.permute.xlu0 %5478
      %5480 = vrot.lane.b32.xlu0 %v5417, 64
      %v5481 = vpop.permute.xlu0 %5480
      %5482 = vrot.lane.b32.xlu0 %v5418, 64
      %v5483 = vpop.permute.xlu0 %5482
      %5484 = vrot.lane.b32.xlu0 %v5419, 64
      %v5485 = vpop.permute.xlu0 %5484
      %5486 = vrot.lane.b32.xlu0 %v5420, 64
      %v5487 = vpop.permute.xlu0 %5486
      %5488 = vrot.lane.b32.xlu0 %v5421, 64
      %v5489 = vpop.permute.xlu0 %5488
      %5490 = vrot.lane.b32.xlu0 %v5422, 64
      %v5491 = vpop.permute.xlu0 %5490
      %5492 = vrot.lane.b32.xlu0 %v5423, 64
      %v5493 = vpop.permute.xlu0 %5492
      %5494 = vrot.lane.b32.xlu0 %v5424, 64
      %v5495 = vpop.permute.xlu0 %5494
      %5496 = vrot.lane.b32.xlu0 %v5425, 64
      %v5497 = vpop.permute.xlu0 %5496
      %5498 = vrot.lane.b32.xlu0 %v5426, 64
      %v5499 = vpop.permute.xlu0 %5498
      %5500 = vrot.lane.b32.xlu0 %v5427, 64
      %v5501 = vpop.permute.xlu0 %5500
      %5502 = vrot.lane.b32.xlu0 %v5428, 64
      %v5503 = vpop.permute.xlu0 %5502
      %5504 = vrot.lane.b32.xlu0 %v5429, 64
      %v5505 = vpop.permute.xlu0 %5504
      %5506 = vrot.lane.b32.xlu0 %v5430, 64
      %v5507 = vpop.permute.xlu0 %5506
      %5508 = vrot.lane.b32.xlu0 %v5431, 64
      %v5509 = vpop.permute.xlu0 %5508
      %5510 = vrot.lane.b32.xlu0 %v5432, 64
      %v5511 = vpop.permute.xlu0 %5510
      %5512 = vrot.lane.b32.xlu0 %v5433, 64
      %v5513 = vpop.permute.xlu0 %5512
      %5514 = vrot.lane.b32.xlu0 %v5434, 64
      %v5515 = vpop.permute.xlu0 %5514
      %5516 = vrot.lane.b32.xlu0 %v5435, 64
      %v5517 = vpop.permute.xlu0 %5516
      %5518 = vrot.lane.b32.xlu0 %v5436, 64
      %v5519 = vpop.permute.xlu0 %5518
      %5520 = vrot.lane.b32.xlu0 %v5437, 64
      %v5521 = vpop.permute.xlu0 %5520
      %5522 = vrot.lane.b32.xlu0 %v5438, 64
      %v5523 = vpop.permute.xlu0 %5522
      %5524 = vrot.lane.b32.xlu0 %v5439, 64
      %v5525 = vpop.permute.xlu0 %5524
      %5526 = vrot.lane.b32.xlu0 %v5440, 64
      %v5527 = vpop.permute.xlu0 %5526
      %5528 = vrot.lane.b32.xlu0 %v5441, 64
      %v5529 = vpop.permute.xlu0 %5528
      %5530 = vrot.lane.b32.xlu0 %v5442, 64
      %v5531 = vpop.permute.xlu0 %5530
      %5532 = vrot.lane.b32.xlu0 %v5443, 64
      %v5533 = vpop.permute.xlu0 %5532
      %v5564 = vadd.f32 %v5196, %v5475
      %v5565 = vadd.f32 %v5198, %v5477
      %v5566 = vadd.f32 %v5201, %v5479
      %v5567 = vadd.f32 %v5203, %v5481
      %v5568 = vadd.f32 %v5206, %v5483
      %v5569 = vadd.f32 %v5208, %v5485
      %v5570 = vadd.f32 %v5211, %v5487
      %v5571 = vadd.f32 %v5213, %v5489
      %v5572 = vadd.f32 %v5216, %v5491
      %v5573 = vadd.f32 %v5218, %v5493
      %v5574 = vadd.f32 %v5221, %v5495
      %v5575 = vadd.f32 %v5223, %v5497
      %v5576 = vadd.f32 %v5226, %v5499
      %v5577 = vadd.f32 %v5228, %v5501
      %v5578 = vadd.f32 %v5231, %v5503
      %v5579 = vadd.f32 %v5233, %v5505
      %v5580 = vadd.f32 %v5236, %v5507
      %v5581 = vadd.f32 %v5238, %v5509
      %v5582 = vadd.f32 %v5241, %v5511
      %v5583 = vadd.f32 %v5243, %v5513
      %v5584 = vadd.f32 %v5246, %v5515
      %v5585 = vadd.f32 %v5248, %v5517
      %v5586 = vadd.f32 %v5251, %v5519
      %v5587 = vadd.f32 %v5253, %v5521
      %v5588 = vadd.f32 %v5256, %v5523
      %v5589 = vadd.f32 %v5258, %v5525
      %v5590 = vadd.f32 %v5261, %v5527
      %v5591 = vadd.f32 %v5263, %v5529
      %v5592 = vadd.f32 %v5266, %v5531
      %v5593 = vadd.f32 %v5268, %v5533
      %v5594 = vrot.slane %v5280, 1
      %v5595 = vrot.slane %v5282, 1
      %v5596 = vrot.slane %v5285, 1
      %v5597 = vrot.slane %v5287, 1
      %v5598 = vrot.slane %v5290, 1
      %v5599 = vrot.slane %v5292, 1
      %v5600 = vrot.slane %v5295, 1
      %v5601 = vrot.slane %v5297, 1
      %v5602 = vrot.slane %v5300, 1
      %v5603 = vrot.slane %v5302, 1
      %v5604 = vrot.slane %v5305, 1
      %v5605 = vrot.slane %v5307, 1
      %v5606 = vrot.slane %v5310, 1
      %v5607 = vrot.slane %v5312, 1
      %v5608 = vrot.slane %v5315, 1
      %v5609 = vrot.slane %v5317, 1
      %v5610 = vrot.slane %v5320, 1
      %v5611 = vrot.slane %v5322, 1
      %v5612 = vrot.slane %v5325, 1
      %v5613 = vrot.slane %v5327, 1
      %v5614 = vrot.slane %v5330, 1
      %v5615 = vrot.slane %v5332, 1
      %v5616 = vrot.slane %v5335, 1
      %v5617 = vrot.slane %v5337, 1
      %v5618 = vrot.slane %v5340, 1
      %v5619 = vrot.slane %v5342, 1
      %v5620 = vrot.slane %v5345, 1
      %v5621 = vrot.slane %v5347, 1
      %v5622 = vrot.slane %v5350, 1
      %v5623 = vrot.slane %v5352, 1
      %v5624 = vsel %vm4755, %v5622, %v5623
      %v5625 = vsel %vm4755, %v5621, %v5622
      %v5626 = vsel %vm4755, %v5620, %v5621
      %v5627 = vsel %vm4755, %v5619, %v5620
      %v5628 = vsel %vm4755, %v5618, %v5619
      %v5629 = vsel %vm4755, %v5617, %v5618
      %v5630 = vsel %vm4755, %v5616, %v5617
      %v5631 = vsel %vm4755, %v5615, %v5616
      %v5632 = vsel %vm4755, %v5614, %v5615
      %v5633 = vsel %vm4755, %v5613, %v5614
      %v5634 = vsel %vm4755, %v5612, %v5613
      %v5635 = vsel %vm4755, %v5611, %v5612
      %v5636 = vsel %vm4755, %v5610, %v5611
      %v5637 = vsel %vm4755, %v5609, %v5610
      %v5638 = vsel %vm4755, %v5608, %v5609
      %v5639 = vsel %vm4755, %v5607, %v5608
      %v5640 = vsel %vm4755, %v5606, %v5607
      %v5641 = vsel %vm4755, %v5605, %v5606
      %v5642 = vsel %vm4755, %v5604, %v5605
      %v5643 = vsel %vm4755, %v5603, %v5604
      %v5644 = vsel %vm4755, %v5602, %v5603
      %v5645 = vsel %vm4755, %v5601, %v5602
      %v5646 = vsel %vm4755, %v5600, %v5601
      %v5647 = vsel %vm4755, %v5599, %v5600
      %v5648 = vsel %vm4755, %v5598, %v5599
      %v5649 = vsel %vm4755, %v5597, %v5598
      %v5650 = vsel %vm4755, %v5596, %v5597
      %v5651 = vsel %vm4755, %v5595, %v5596
      %v5652 = vsel %vm4755, %v5594, %v5595
      %v5653 = vsel %vm4755, %v5623, %v5594
      %v5654 = vmul.f32 %v1622, %v5652
      %v5655 = vmul.f32 %v1623, %v5651
      %v5656 = vmul.f32 %v1624, %v5650
      %v5657 = vmul.f32 %v1625, %v5649
      %v5658 = vmul.f32 %v1626, %v5648
      %v5659 = vmul.f32 %v1627, %v5647
      %v5660 = vmul.f32 %v1628, %v5646
      %v5661 = vmul.f32 %v1629, %v5645
      %v5662 = vmul.f32 %v1630, %v5644
      %v5663 = vmul.f32 %v1631, %v5643
      %v5664 = vmul.f32 %v1632, %v5642
      %v5665 = vmul.f32 %v1633, %v5641
      %v5666 = vmul.f32 %v1634, %v5640
      %v5667 = vmul.f32 %v1635, %v5639
      %v5668 = vmul.f32 %v1636, %v5638
      %v5669 = vmul.f32 %v1637, %v5637
      %v5670 = vmul.f32 %v1638, %v5636
      %v5671 = vmul.f32 %v1639, %v5635
      %v5672 = vmul.f32 %v1640, %v5634
      %v5673 = vmul.f32 %v1641, %v5633
      %v5674 = vmul.f32 %v1642, %v5632
      %v5675 = vmul.f32 %v1643, %v5631
      %v5676 = vmul.f32 %v1644, %v5630
      %v5677 = vmul.f32 %v1645, %v5629
      %v5678 = vmul.f32 %v1646, %v5628
      %v5679 = vmul.f32 %v1647, %v5627
      %v5680 = vmul.f32 %v1648, %v5626
      %v5681 = vmul.f32 %v1649, %v5625
      %v5682 = vmul.f32 %v1650, %v5624
      %v5683 = vmul.f32 %v1651, %v5653
      %5714 = vrot.lane.b32.xlu0 %v5654, 64
      %v5715 = vpop.permute.xlu0 %5714
      %5716 = vrot.lane.b32.xlu0 %v5655, 64
      %v5717 = vpop.permute.xlu0 %5716
      %5718 = vrot.lane.b32.xlu0 %v5656, 64
      %v5719 = vpop.permute.xlu0 %5718
      %5720 = vrot.lane.b32.xlu0 %v5657, 64
      %v5721 = vpop.permute.xlu0 %5720
      %5722 = vrot.lane.b32.xlu0 %v5658, 64
      %v5723 = vpop.permute.xlu0 %5722
      %5724 = vrot.lane.b32.xlu0 %v5659, 64
      %v5725 = vpop.permute.xlu0 %5724
      %5726 = vrot.lane.b32.xlu0 %v5660, 64
      %v5727 = vpop.permute.xlu0 %5726
      %5728 = vrot.lane.b32.xlu0 %v5661, 64
      %v5729 = vpop.permute.xlu0 %5728
      %5730 = vrot.lane.b32.xlu0 %v5662, 64
      %v5731 = vpop.permute.xlu0 %5730
      %5732 = vrot.lane.b32.xlu0 %v5663, 64
      %v5733 = vpop.permute.xlu0 %5732
      %5734 = vrot.lane.b32.xlu0 %v5664, 64
      %v5735 = vpop.permute.xlu0 %5734
      %5736 = vrot.lane.b32.xlu0 %v5665, 64
      %v5737 = vpop.permute.xlu0 %5736
      %5738 = vrot.lane.b32.xlu0 %v5666, 64
      %v5739 = vpop.permute.xlu0 %5738
      %5740 = vrot.lane.b32.xlu0 %v5667, 64
      %v5741 = vpop.permute.xlu0 %5740
      %5742 = vrot.lane.b32.xlu0 %v5668, 64
      %v5743 = vpop.permute.xlu0 %5742
      %5744 = vrot.lane.b32.xlu0 %v5669, 64
      %v5745 = vpop.permute.xlu0 %5744
      %5746 = vrot.lane.b32.xlu0 %v5670, 64
      %v5747 = vpop.permute.xlu0 %5746
      %5748 = vrot.lane.b32.xlu0 %v5671, 64
      %v5749 = vpop.permute.xlu0 %5748
      %5750 = vrot.lane.b32.xlu0 %v5672, 64
      %v5751 = vpop.permute.xlu0 %5750
      %5752 = vrot.lane.b32.xlu0 %v5673, 64
      %v5753 = vpop.permute.xlu0 %5752
      %5754 = vrot.lane.b32.xlu0 %v5674, 64
      %v5755 = vpop.permute.xlu0 %5754
      %5756 = vrot.lane.b32.xlu0 %v5675, 64
      %v5757 = vpop.permute.xlu0 %5756
      %5758 = vrot.lane.b32.xlu0 %v5676, 64
      %v5759 = vpop.permute.xlu0 %5758
      %5760 = vrot.lane.b32.xlu0 %v5677, 64
      %v5761 = vpop.permute.xlu0 %5760
      %5762 = vrot.lane.b32.xlu0 %v5678, 64
      %v5763 = vpop.permute.xlu0 %5762
      %5764 = vrot.lane.b32.xlu0 %v5679, 64
      %v5765 = vpop.permute.xlu0 %5764
      %5766 = vrot.lane.b32.xlu0 %v5680, 64
      %v5767 = vpop.permute.xlu0 %5766
      %5768 = vrot.lane.b32.xlu0 %v5681, 64
      %v5769 = vpop.permute.xlu0 %5768
      %5770 = vrot.lane.b32.xlu0 %v5682, 64
      %v5771 = vpop.permute.xlu0 %5770
      %5772 = vrot.lane.b32.xlu0 %v5683, 64
      %v5773 = vpop.permute.xlu0 %5772
      %v5804 = vadd.f32 %v5564, %v5715
      %v5805 = vadd.f32 %v5565, %v5717
      %v5806 = vadd.f32 %v5566, %v5719
      %v5807 = vadd.f32 %v5567, %v5721
      %v5808 = vadd.f32 %v5568, %v5723
      %v5809 = vadd.f32 %v5569, %v5725
      %v5810 = vadd.f32 %v5570, %v5727
      %v5811 = vadd.f32 %v5571, %v5729
      %v5812 = vadd.f32 %v5572, %v5731
      %v5813 = vadd.f32 %v5573, %v5733
      %v5814 = vadd.f32 %v5574, %v5735
      %v5815 = vadd.f32 %v5575, %v5737
      %v5816 = vadd.f32 %v5576, %v5739
      %v5817 = vadd.f32 %v5577, %v5741
      %v5818 = vadd.f32 %v5578, %v5743
      %v5819 = vadd.f32 %v5579, %v5745
      %v5820 = vadd.f32 %v5580, %v5747
      %v5821 = vadd.f32 %v5581, %v5749
      %v5822 = vadd.f32 %v5582, %v5751
      %v5823 = vadd.f32 %v5583, %v5753
      %v5824 = vadd.f32 %v5584, %v5755
      %v5825 = vadd.f32 %v5585, %v5757
      %v5826 = vadd.f32 %v5586, %v5759
      %v5827 = vadd.f32 %v5587, %v5761
      %v5828 = vadd.f32 %v5588, %v5763
      %v5829 = vadd.f32 %v5589, %v5765
      %v5830 = vadd.f32 %v5590, %v5767
      %v5831 = vadd.f32 %v5591, %v5769
      %v5832 = vadd.f32 %v5592, %v5771
      %v5833 = vadd.f32 %v5593, %v5773
      %v5834 = vld [vmem:[%s4] sm:$0x1]
      %v5836 = vperm.slane %v5834, 0
      %5837 = vrot.lane.b32.xlu0 %v5836, 64
      %v5838 = vpop.permute.xlu0 %5837
      %v5840 = vadd.f32 %v5804, %v5838
      %v5841 = vadd.f32 %v5805, %v5838
      %v5842 = vadd.f32 %v5806, %v5838
      %v5843 = vadd.f32 %v5807, %v5838
      %v5844 = vadd.f32 %v5808, %v5838
      %v5845 = vadd.f32 %v5809, %v5838
      %v5846 = vadd.f32 %v5810, %v5838
      %v5847 = vadd.f32 %v5811, %v5838
      %v5848 = vadd.f32 %v5812, %v5838
      %v5849 = vadd.f32 %v5813, %v5838
      %v5850 = vadd.f32 %v5814, %v5838
      %v5851 = vadd.f32 %v5815, %v5838
      %v5852 = vadd.f32 %v5816, %v5838
      %v5853 = vadd.f32 %v5817, %v5838
      %v5854 = vadd.f32 %v5818, %v5838
      %v5855 = vadd.f32 %v5819, %v5838
      %v5856 = vadd.f32 %v5820, %v5838
      %v5857 = vadd.f32 %v5821, %v5838
      %v5858 = vadd.f32 %v5822, %v5838
      %v5859 = vadd.f32 %v5823, %v5838
      %v5860 = vadd.f32 %v5824, %v5838
      %v5861 = vadd.f32 %v5825, %v5838
      %v5862 = vadd.f32 %v5826, %v5838
      %v5863 = vadd.f32 %v5827, %v5838
      %v5864 = vadd.f32 %v5828, %v5838
      %v5865 = vadd.f32 %v5829, %v5838
      %v5866 = vadd.f32 %v5830, %v5838
      %v5867 = vadd.f32 %v5831, %v5838
      %v5868 = vadd.f32 %v5832, %v5838
      %v5869 = vadd.f32 %v5833, %v5838
      %v5870 = vmax.f32 %v5840, 0.0
      %v5871 = vmax.f32 %v5841, 0.0
      %v5872 = vmax.f32 %v5842, 0.0
      %v5873 = vmax.f32 %v5843, 0.0
      %v5874 = vmax.f32 %v5844, 0.0
      %v5875 = vmax.f32 %v5845, 0.0
      %v5876 = vmax.f32 %v5846, 0.0
      %v5877 = vmax.f32 %v5847, 0.0
      %v5878 = vmax.f32 %v5848, 0.0
      %v5879 = vmax.f32 %v5849, 0.0
      %v5880 = vmax.f32 %v5850, 0.0
      %v5881 = vmax.f32 %v5851, 0.0
      %v5882 = vmax.f32 %v5852, 0.0
      %v5883 = vmax.f32 %v5853, 0.0
      %v5884 = vmax.f32 %v5854, 0.0
      %v5885 = vmax.f32 %v5855, 0.0
      %v5886 = vmax.f32 %v5856, 0.0
      %v5887 = vmax.f32 %v5857, 0.0
      %v5888 = vmax.f32 %v5858, 0.0
      %v5889 = vmax.f32 %v5859, 0.0
      %v5890 = vmax.f32 %v5860, 0.0
      %v5891 = vmax.f32 %v5861, 0.0
      %v5892 = vmax.f32 %v5862, 0.0
      %v5893 = vmax.f32 %v5863, 0.0
      %v5894 = vmax.f32 %v5864, 0.0
      %v5895 = vmax.f32 %v5865, 0.0
      %v5896 = vmax.f32 %v5866, 0.0
      %v5897 = vmax.f32 %v5867, 0.0
      %v5898 = vmax.f32 %v5868, 0.0
      %v5899 = vmax.f32 %v5869, 0.0
      %v5900 = vpack.c.bf16 %v5871, %v5870
      %v5901 = vpack.c.bf16 %v5873, %v5872
      %v5902 = vpack.c.bf16 %v5875, %v5874
      %v5903 = vpack.c.bf16 %v5877, %v5876
      %v5904 = vpack.c.bf16 %v5879, %v5878
      %v5905 = vpack.c.bf16 %v5881, %v5880
      %v5906 = vpack.c.bf16 %v5883, %v5882
      %v5907 = vpack.c.bf16 %v5885, %v5884
      %v5908 = vpack.c.bf16 %v5887, %v5886
      %v5909 = vpack.c.bf16 %v5889, %v5888
      %v5910 = vpack.c.bf16 %v5891, %v5890
      %v5911 = vpack.c.bf16 %v5893, %v5892
      %v5912 = vpack.c.bf16 %v5895, %v5894
      %v5913 = vpack.c.bf16 %v5897, %v5896
      %v5914 = vpack.c.bf16 %v5899, %v5898
      %v5915 = vld [vmem:[%s5] sm:$0xff]
      %v5916 = vld [vmem:[%s5 + $0x8] sm:$0xf]
      %v5917 = vld [vmem:[%s5 + $0xc] sm:$0xff]
      %v5918 = vld [vmem:[%s5 + $0x14] sm:$0xf]
      %v5919 = vld [vmem:[%s5 + $0x18] sm:$0xff]
      %v5920 = vld [vmem:[%s5 + $0x20] sm:$0xf]
      %v5921 = vld [vmem:[%s5 + $0x24] sm:$0xff]
      %v5922 = vld [vmem:[%s5 + $0x2c] sm:$0xf]
      %v5923 = vld [vmem:[%s5 + $0x30] sm:$0xff]
      %v5924 = vld [vmem:[%s5 + $0x38] sm:$0xf]
      %v5925 = vld [vmem:[%s5 + $0x3c] sm:$0xff]
      %v5926 = vld [vmem:[%s5 + $0x44] sm:$0xf]
      %v5927 = vld [vmem:[%s5 + $0x48] sm:$0xff]
      %v5928 = vld [vmem:[%s5 + $0x50] sm:$0xf]
      %v5929 = vld [vmem:[%s5 + $0x54] sm:$0xff]
      %v5930 = vld [vmem:[%s5 + $0x5c] sm:$0xf]
      %5946 = vrot.lane.b32.xlu0 %v5900, 64
      %v5947 = vpop.permute.xlu0 %5946
      %5948 = vrot.lane.b32.xlu0 %v5901, 64
      %v5949 = vpop.permute.xlu0 %5948
      %5950 = vrot.lane.b32.xlu0 %v5902, 64
      %v5951 = vpop.permute.xlu0 %5950
      %5952 = vrot.lane.b32.xlu0 %v5903, 64
      %v5953 = vpop.permute.xlu0 %5952
      %5954 = vrot.lane.b32.xlu0 %v5904, 64
      %v5955 = vpop.permute.xlu0 %5954
      %5956 = vrot.lane.b32.xlu0 %v5905, 64
      %v5957 = vpop.permute.xlu0 %5956
      %5958 = vrot.lane.b32.xlu0 %v5906, 64
      %v5959 = vpop.permute.xlu0 %5958
      %5960 = vrot.lane.b32.xlu0 %v5907, 64
      %v5961 = vpop.permute.xlu0 %5960
      %5962 = vrot.lane.b32.xlu0 %v5908, 64
      %v5963 = vpop.permute.xlu0 %5962
      %5964 = vrot.lane.b32.xlu0 %v5909, 64
      %v5965 = vpop.permute.xlu0 %5964
      %5966 = vrot.lane.b32.xlu0 %v5910, 64
      %v5967 = vpop.permute.xlu0 %5966
      %5968 = vrot.lane.b32.xlu0 %v5911, 64
      %v5969 = vpop.permute.xlu0 %5968
      %5970 = vrot.lane.b32.xlu0 %v5912, 64
      %v5971 = vpop.permute.xlu0 %5970
      %5972 = vrot.lane.b32.xlu0 %v5913, 64
      %v5973 = vpop.permute.xlu0 %5972
      %5974 = vrot.lane.b32.xlu0 %v5914, 64
      %v5975 = vpop.permute.xlu0 %5974
      %v5992 = vunpack.c.l.b16 %v5915
      %v5993 = vunpack.c.h.b16 %v5915
      %v5994 = vunpack.c.l.b16 %v5916
      %v5995 = vunpack.c.l.b16 %v5917
      %v5996 = vunpack.c.h.b16 %v5917
      %v5997 = vunpack.c.l.b16 %v5918
      %v5998 = vunpack.c.l.b16 %v5919
      %v5999 = vunpack.c.h.b16 %v5919
      %v6000 = vunpack.c.l.b16 %v5920
      %v6001 = vunpack.c.l.b16 %v5921
      %v6002 = vunpack.c.h.b16 %v5921
      %v6003 = vunpack.c.l.b16 %v5922
      %v6004 = vunpack.c.l.b16 %v5923
      %v6005 = vunpack.c.h.b16 %v5923
      %v6006 = vunpack.c.l.b16 %v5924
      %v6007 = vunpack.c.l.b16 %v5925
      %v6008 = vunpack.c.h.b16 %v5925
      %v6009 = vunpack.c.l.b16 %v5926
      %v6010 = vunpack.c.l.b16 %v5927
      %v6011 = vunpack.c.h.b16 %v5927
      %v6012 = vunpack.c.l.b16 %v5928
      %v6013 = vunpack.c.l.b16 %v5929
      %v6014 = vunpack.c.h.b16 %v5929
      %v6015 = vunpack.c.l.b16 %v5930
      %v6016 = vpack.c.b16 %v5995, %v5992
      %v6017 = vpack.c.b16 %v5996, %v5993
      %v6018 = vpack.c.b16 %v5997, %v5994
      %v6019 = vpack.c.b16 %v6001, %v5998
      %v6020 = vpack.c.b16 %v6002, %v5999
      %v6021 = vpack.c.b16 %v6003, %v6000
      %v6022 = vpack.c.b16 %v6007, %v6004
      %v6023 = vpack.c.b16 %v6008, %v6005
      %v6024 = vpack.c.b16 %v6009, %v6006
      %v6025 = vpack.c.b16 %v6013, %v6010
      %v6026 = vpack.c.b16 %v6014, %v6011
      %v6027 = vpack.c.b16 %v6015, %v6012
      %v6041 = vsel %vm5140, %v5947, 0
      %v6044 = vsel %vm5140, %v5949, 0
      %v6047 = vsel %vm5140, %v5951, 0
      %v6050 = vsel %vm5140, %v5953, 0
      %v6053 = vsel %vm5140, %v5955, 0
      %v6056 = vsel %vm5140, %v5957, 0
      %v6059 = vsel %vm5140, %v5959, 0
      %v6062 = vsel %vm5140, %v5961, 0
      %v6065 = vsel %vm5140, %v5963, 0
      %v6068 = vsel %vm5140, %v5965, 0
      %v6071 = vsel %vm5140, %v5967, 0
      %v6074 = vsel %vm5140, %v5969, 0
      %v6077 = vsel %vm5140, %v5971, 0
      %v6080 = vsel %vm5140, %v5973, 0
      %v6083 = vsel %vm5140, %v5975, 0
      %6085 = vmatpush.bf16.msra.mxu0 0
      %6086 = vmatpush.bf16.msra.mxu0 0
      %6087 = vmatpush.bf16.msra.mxu0 0
      %6088 = vmatpush.bf16.msra.mxu0 0
      %6089 = vmatpush.bf16.msra.mxu0 %v6025
      %6090 = vmatpush.bf16.msra.mxu0 %v6022
      %6091 = vmatpush.bf16.msra.mxu0 %v6019
      %6092 = vmatpush.bf16.msra.mxu0 %v6016
      %6093 = vmatmul.bf16.gmra.mxu0 %v6041
      %v6094 = vpop.f32.mrf.mxu0
      %v6095 = vadd.f32 0.0, %v6094
      %v6096 = vpop.f32.mrf.mxu0
      %v6097 = vadd.f32 0.0, %v6096
      %6098 = vmatmul.bf16.gmra.mxu0 %v6044
      %v6099 = vpop.f32.mrf.mxu0
      %v6100 = vadd.f32 0.0, %v6099
      %v6101 = vpop.f32.mrf.mxu0
      %v6102 = vadd.f32 0.0, %v6101
      %6103 = vmatmul.bf16.gmra.mxu0 %v6047
      %v6104 = vpop.f32.mrf.mxu0
      %v6105 = vadd.f32 0.0, %v6104
      %v6106 = vpop.f32.mrf.mxu0
      %v6107 = vadd.f32 0.0, %v6106
      %6108 = vmatmul.bf16.gmra.mxu0 %v6050
      %v6109 = vpop.f32.mrf.mxu0
      %v6110 = vadd.f32 0.0, %v6109
      %v6111 = vpop.f32.mrf.mxu0
      %v6112 = vadd.f32 0.0, %v6111
      %6113 = vmatmul.bf16.gmra.mxu0 %v6053
      %v6114 = vpop.f32.mrf.mxu0
      %v6115 = vadd.f32 0.0, %v6114
      %v6116 = vpop.f32.mrf.mxu0
      %v6117 = vadd.f32 0.0, %v6116
      %6118 = vmatmul.bf16.gmra.mxu0 %v6056
      %v6119 = vpop.f32.mrf.mxu0
      %v6120 = vadd.f32 0.0, %v6119
      %v6121 = vpop.f32.mrf.mxu0
      %v6122 = vadd.f32 0.0, %v6121
      %6123 = vmatmul.bf16.gmra.mxu0 %v6059
      %v6124 = vpop.f32.mrf.mxu0
      %v6125 = vadd.f32 0.0, %v6124
      %v6126 = vpop.f32.mrf.mxu0
      %v6127 = vadd.f32 0.0, %v6126
      %6128 = vmatmul.bf16.gmra.mxu0 %v6062
      %v6129 = vpop.f32.mrf.mxu0
      %v6130 = vadd.f32 0.0, %v6129
      %v6131 = vpop.f32.mrf.mxu0
      %v6132 = vadd.f32 0.0, %v6131
      %6133 = vmatmul.bf16.gmra.mxu0 %v6065
      %v6134 = vpop.f32.mrf.mxu0
      %v6135 = vadd.f32 0.0, %v6134
      %v6136 = vpop.f32.mrf.mxu0
      %v6137 = vadd.f32 0.0, %v6136
      %6138 = vmatmul.bf16.gmra.mxu0 %v6068
      %v6139 = vpop.f32.mrf.mxu0
      %v6140 = vadd.f32 0.0, %v6139
      %v6141 = vpop.f32.mrf.mxu0
      %v6142 = vadd.f32 0.0, %v6141
      %6143 = vmatmul.bf16.gmra.mxu0 %v6071
      %v6144 = vpop.f32.mrf.mxu0
      %v6145 = vadd.f32 0.0, %v6144
      %v6146 = vpop.f32.mrf.mxu0
      %v6147 = vadd.f32 0.0, %v6146
      %6148 = vmatmul.bf16.gmra.mxu0 %v6074
      %v6149 = vpop.f32.mrf.mxu0
      %v6150 = vadd.f32 0.0, %v6149
      %v6151 = vpop.f32.mrf.mxu0
      %v6152 = vadd.f32 0.0, %v6151
      %6153 = vmatmul.bf16.gmra.mxu0 %v6077
      %v6154 = vpop.f32.mrf.mxu0
      %v6155 = vadd.f32 0.0, %v6154
      %v6156 = vpop.f32.mrf.mxu0
      %v6157 = vadd.f32 0.0, %v6156
      %6158 = vmatmul.bf16.gmra.mxu0 %v6080
      %v6159 = vpop.f32.mrf.mxu0
      %v6160 = vadd.f32 0.0, %v6159
      %v6161 = vpop.f32.mrf.mxu0
      %v6162 = vadd.f32 0.0, %v6161
      %6163 = vmatmul.bf16.gmra.mxu0 %v6083
      %v6164 = vpop.f32.mrf.mxu0
      %v6165 = vadd.f32 0.0, %v6164
      %v6166 = vpop.f32.mrf.mxu0
      %v6167 = vadd.f32 0.0, %v6166
      %6168 = vdwg.mxu0
      %6169 = vmatpush.bf16.msra.mxu0 0
      %6170 = vmatpush.bf16.msra.mxu0 0
      %6171 = vmatpush.bf16.msra.mxu0 0
      %6172 = vmatpush.bf16.msra.mxu0 0
      %6173 = vmatpush.bf16.msra.mxu0 %v6026
      %6174 = vmatpush.bf16.msra.mxu0 %v6023
      %6175 = vmatpush.bf16.msra.mxu0 %v6020
      %6176 = vmatpush.bf16.msra.mxu0 %v6017
      %6177 = vmatmul.bf16.gmra.mxu0 %v6041
      %v6178 = vpop.f32.mrf.mxu0
      %v6179 = vadd.f32 0.0, %v6178
      %v6180 = vpop.f32.mrf.mxu0
      %v6181 = vadd.f32 0.0, %v6180
      %6182 = vmatmul.bf16.gmra.mxu0 %v6044
      %v6183 = vpop.f32.mrf.mxu0
      %v6184 = vadd.f32 0.0, %v6183
      %v6185 = vpop.f32.mrf.mxu0
      %v6186 = vadd.f32 0.0, %v6185
      %6187 = vmatmul.bf16.gmra.mxu0 %v6047
      %v6188 = vpop.f32.mrf.mxu0
      %v6189 = vadd.f32 0.0, %v6188
      %v6190 = vpop.f32.mrf.mxu0
      %v6191 = vadd.f32 0.0, %v6190
      %6192 = vmatmul.bf16.gmra.mxu0 %v6050
      %v6193 = vpop.f32.mrf.mxu0
      %v6194 = vadd.f32 0.0, %v6193
      %v6195 = vpop.f32.mrf.mxu0
      %v6196 = vadd.f32 0.0, %v6195
      %6197 = vmatmul.bf16.gmra.mxu0 %v6053
      %v6198 = vpop.f32.mrf.mxu0
      %v6199 = vadd.f32 0.0, %v6198
      %v6200 = vpop.f32.mrf.mxu0
      %v6201 = vadd.f32 0.0, %v6200
      %6202 = vmatmul.bf16.gmra.mxu0 %v6056
      %v6203 = vpop.f32.mrf.mxu0
      %v6204 = vadd.f32 0.0, %v6203
      %v6205 = vpop.f32.mrf.mxu0
      %v6206 = vadd.f32 0.0, %v6205
      %6207 = vmatmul.bf16.gmra.mxu0 %v6059
      %v6208 = vpop.f32.mrf.mxu0
      %v6209 = vadd.f32 0.0, %v6208
      %v6210 = vpop.f32.mrf.mxu0
      %v6211 = vadd.f32 0.0, %v6210
      %6212 = vmatmul.bf16.gmra.mxu0 %v6062
      %v6213 = vpop.f32.mrf.mxu0
      %v6214 = vadd.f32 0.0, %v6213
      %v6215 = vpop.f32.mrf.mxu0
      %v6216 = vadd.f32 0.0, %v6215
      %6217 = vmatmul.bf16.gmra.mxu0 %v6065
      %v6218 = vpop.f32.mrf.mxu0
      %v6219 = vadd.f32 0.0, %v6218
      %v6220 = vpop.f32.mrf.mxu0
      %v6221 = vadd.f32 0.0, %v6220
      %6222 = vmatmul.bf16.gmra.mxu0 %v6068
      %v6223 = vpop.f32.mrf.mxu0
      %v6224 = vadd.f32 0.0, %v6223
      %v6225 = vpop.f32.mrf.mxu0
      %v6226 = vadd.f32 0.0, %v6225
      %6227 = vmatmul.bf16.gmra.mxu0 %v6071
      %v6228 = vpop.f32.mrf.mxu0
      %v6229 = vadd.f32 0.0, %v6228
      %v6230 = vpop.f32.mrf.mxu0
      %v6231 = vadd.f32 0.0, %v6230
      %6232 = vmatmul.bf16.gmra.mxu0 %v6074
      %v6233 = vpop.f32.mrf.mxu0
      %v6234 = vadd.f32 0.0, %v6233
      %v6235 = vpop.f32.mrf.mxu0
      %v6236 = vadd.f32 0.0, %v6235
      %6237 = vmatmul.bf16.gmra.mxu0 %v6077
      %v6238 = vpop.f32.mrf.mxu0
      %v6239 = vadd.f32 0.0, %v6238
      %v6240 = vpop.f32.mrf.mxu0
      %v6241 = vadd.f32 0.0, %v6240
      %6242 = vmatmul.bf16.gmra.mxu0 %v6080
      %v6243 = vpop.f32.mrf.mxu0
      %v6244 = vadd.f32 0.0, %v6243
      %v6245 = vpop.f32.mrf.mxu0
      %v6246 = vadd.f32 0.0, %v6245
      %6247 = vmatmul.bf16.gmra.mxu0 %v6083
      %v6248 = vpop.f32.mrf.mxu0
      %v6249 = vadd.f32 0.0, %v6248
      %v6250 = vpop.f32.mrf.mxu0
      %v6251 = vadd.f32 0.0, %v6250
      %6252 = vdwg.mxu0
      %6253 = vmatpush.bf16.msra.mxu0 0
      %6254 = vmatpush.bf16.msra.mxu0 0
      %6255 = vmatpush.bf16.msra.mxu0 0
      %6256 = vmatpush.bf16.msra.mxu0 0
      %6257 = vmatpush.bf16.msra.mxu0 %v6027
      %6258 = vmatpush.bf16.msra.mxu0 %v6024
      %6259 = vmatpush.bf16.msra.mxu0 %v6021
      %6260 = vmatpush.bf16.msra.mxu0 %v6018
      %6261 = vmatmul.bf16.gmra.mxu0 %v6041
      %v6262 = vpop.f32.mrf.mxu0
      %v6263 = vadd.f32 0.0, %v6262
      %v6264 = vpop.f32.mrf.mxu0
      %v6265 = vadd.f32 0.0, %v6264
      %6266 = vmatmul.bf16.gmra.mxu0 %v6044
      %v6267 = vpop.f32.mrf.mxu0
      %v6268 = vadd.f32 0.0, %v6267
      %v6269 = vpop.f32.mrf.mxu0
      %v6270 = vadd.f32 0.0, %v6269
      %6271 = vmatmul.bf16.gmra.mxu0 %v6047
      %v6272 = vpop.f32.mrf.mxu0
      %v6273 = vadd.f32 0.0, %v6272
      %v6274 = vpop.f32.mrf.mxu0
      %v6275 = vadd.f32 0.0, %v6274
      %6276 = vmatmul.bf16.gmra.mxu0 %v6050
      %v6277 = vpop.f32.mrf.mxu0
      %v6278 = vadd.f32 0.0, %v6277
      %v6279 = vpop.f32.mrf.mxu0
      %v6280 = vadd.f32 0.0, %v6279
      %6281 = vmatmul.bf16.gmra.mxu0 %v6053
      %v6282 = vpop.f32.mrf.mxu0
      %v6283 = vadd.f32 0.0, %v6282
      %v6284 = vpop.f32.mrf.mxu0
      %v6285 = vadd.f32 0.0, %v6284
      %6286 = vmatmul.bf16.gmra.mxu0 %v6056
      %v6287 = vpop.f32.mrf.mxu0
      %v6288 = vadd.f32 0.0, %v6287
      %v6289 = vpop.f32.mrf.mxu0
      %v6290 = vadd.f32 0.0, %v6289
      %6291 = vmatmul.bf16.gmra.mxu0 %v6059
      %v6292 = vpop.f32.mrf.mxu0
      %v6293 = vadd.f32 0.0, %v6292
      %v6294 = vpop.f32.mrf.mxu0
      %v6295 = vadd.f32 0.0, %v6294
      %6296 = vmatmul.bf16.gmra.mxu0 %v6062
      %v6297 = vpop.f32.mrf.mxu0
      %v6298 = vadd.f32 0.0, %v6297
      %v6299 = vpop.f32.mrf.mxu0
      %v6300 = vadd.f32 0.0, %v6299
      %6301 = vmatmul.bf16.gmra.mxu0 %v6065
      %v6302 = vpop.f32.mrf.mxu0
      %v6303 = vadd.f32 0.0, %v6302
      %v6304 = vpop.f32.mrf.mxu0
      %v6305 = vadd.f32 0.0, %v6304
      %6306 = vmatmul.bf16.gmra.mxu0 %v6068
      %v6307 = vpop.f32.mrf.mxu0
      %v6308 = vadd.f32 0.0, %v6307
      %v6309 = vpop.f32.mrf.mxu0
      %v6310 = vadd.f32 0.0, %v6309
      %6311 = vmatmul.bf16.gmra.mxu0 %v6071
      %v6312 = vpop.f32.mrf.mxu0
      %v6313 = vadd.f32 0.0, %v6312
      %v6314 = vpop.f32.mrf.mxu0
      %v6315 = vadd.f32 0.0, %v6314
      %6316 = vmatmul.bf16.gmra.mxu0 %v6074
      %v6317 = vpop.f32.mrf.mxu0
      %v6318 = vadd.f32 0.0, %v6317
      %v6319 = vpop.f32.mrf.mxu0
      %v6320 = vadd.f32 0.0, %v6319
      %6321 = vmatmul.bf16.gmra.mxu0 %v6077
      %v6322 = vpop.f32.mrf.mxu0
      %v6323 = vadd.f32 0.0, %v6322
      %v6324 = vpop.f32.mrf.mxu0
      %v6325 = vadd.f32 0.0, %v6324
      %6326 = vmatmul.bf16.gmra.mxu0 %v6080
      %v6327 = vpop.f32.mrf.mxu0
      %v6328 = vadd.f32 0.0, %v6327
      %v6329 = vpop.f32.mrf.mxu0
      %v6330 = vadd.f32 0.0, %v6329
      %6331 = vmatmul.bf16.gmra.mxu0 %v6083
      %v6332 = vpop.f32.mrf.mxu0
      %v6333 = vadd.f32 0.0, %v6332
      %v6334 = vpop.f32.mrf.mxu0
      %v6335 = vadd.f32 0.0, %v6334
      %6336 = vdwg.mxu0
      %v6337 = vrot.slane %v6095, 7
      %v6338 = vrot.slane %v6097, 7
      %v6339 = vrot.slane %v6100, 7
      %v6340 = vrot.slane %v6102, 7
      %v6341 = vrot.slane %v6105, 7
      %v6342 = vrot.slane %v6107, 7
      %v6343 = vrot.slane %v6110, 7
      %v6344 = vrot.slane %v6112, 7
      %v6345 = vrot.slane %v6115, 7
      %v6346 = vrot.slane %v6117, 7
      %v6347 = vrot.slane %v6120, 7
      %v6348 = vrot.slane %v6122, 7
      %v6349 = vrot.slane %v6125, 7
      %v6350 = vrot.slane %v6127, 7
      %v6351 = vrot.slane %v6130, 7
      %v6352 = vrot.slane %v6132, 7
      %v6353 = vrot.slane %v6135, 7
      %v6354 = vrot.slane %v6137, 7
      %v6355 = vrot.slane %v6140, 7
      %v6356 = vrot.slane %v6142, 7
      %v6357 = vrot.slane %v6145, 7
      %v6358 = vrot.slane %v6147, 7
      %v6359 = vrot.slane %v6150, 7
      %v6360 = vrot.slane %v6152, 7
      %v6361 = vrot.slane %v6155, 7
      %v6362 = vrot.slane %v6157, 7
      %v6363 = vrot.slane %v6160, 7
      %v6364 = vrot.slane %v6162, 7
      %v6365 = vrot.slane %v6165, 7
      %v6366 = vrot.slane %v6167, 7
      %v6367 = vsel %vm4514, %v6365, %v6366
      %v6368 = vsel %vm4514, %v6364, %v6365
      %v6369 = vsel %vm4514, %v6363, %v6364
      %v6370 = vsel %vm4514, %v6362, %v6363
      %v6371 = vsel %vm4514, %v6361, %v6362
      %v6372 = vsel %vm4514, %v6360, %v6361
      %v6373 = vsel %vm4514, %v6359, %v6360
      %v6374 = vsel %vm4514, %v6358, %v6359
      %v6375 = vsel %vm4514, %v6357, %v6358
      %v6376 = vsel %vm4514, %v6356, %v6357
      %v6377 = vsel %vm4514, %v6355, %v6356
      %v6378 = vsel %vm4514, %v6354, %v6355
      %v6379 = vsel %vm4514, %v6353, %v6354
      %v6380 = vsel %vm4514, %v6352, %v6353
      %v6381 = vsel %vm4514, %v6351, %v6352
      %v6382 = vsel %vm4514, %v6350, %v6351
      %v6383 = vsel %vm4514, %v6349, %v6350
      %v6384 = vsel %vm4514, %v6348, %v6349
      %v6385 = vsel %vm4514, %v6347, %v6348
      %v6386 = vsel %vm4514, %v6346, %v6347
      %v6387 = vsel %vm4514, %v6345, %v6346
      %v6388 = vsel %vm4514, %v6344, %v6345
      %v6389 = vsel %vm4514, %v6343, %v6344
      %v6390 = vsel %vm4514, %v6342, %v6343
      %v6391 = vsel %vm4514, %v6341, %v6342
      %v6392 = vsel %vm4514, %v6340, %v6341
      %v6393 = vsel %vm4514, %v6339, %v6340
      %v6394 = vsel %vm4514, %v6338, %v6339
      %v6395 = vsel %vm4514, %v6337, %v6338
      %v6396 = vsel %vm4514, %v6366, %v6337
      %v6397 = vmul.f32 %v1532, %v6396
      %v6398 = vmul.f32 %v1533, %v6395
      %v6399 = vmul.f32 %v1534, %v6394
      %v6400 = vmul.f32 %v1535, %v6393
      %v6401 = vmul.f32 %v1536, %v6392
      %v6402 = vmul.f32 %v1537, %v6391
      %v6403 = vmul.f32 %v1538, %v6390
      %v6404 = vmul.f32 %v1539, %v6389
      %v6405 = vmul.f32 %v1540, %v6388
      %v6406 = vmul.f32 %v1541, %v6387
      %v6407 = vmul.f32 %v1542, %v6386
      %v6408 = vmul.f32 %v1543, %v6385
      %v6409 = vmul.f32 %v1544, %v6384
      %v6410 = vmul.f32 %v1545, %v6383
      %v6411 = vmul.f32 %v1546, %v6382
      %v6412 = vmul.f32 %v1547, %v6381
      %v6413 = vmul.f32 %v1548, %v6380
      %v6414 = vmul.f32 %v1549, %v6379
      %v6415 = vmul.f32 %v1550, %v6378
      %v6416 = vmul.f32 %v1551, %v6377
      %v6417 = vmul.f32 %v1552, %v6376
      %v6418 = vmul.f32 %v1553, %v6375
      %v6419 = vmul.f32 %v1554, %v6374
      %v6420 = vmul.f32 %v1555, %v6373
      %v6421 = vmul.f32 %v1556, %v6372
      %v6422 = vmul.f32 %v1557, %v6371
      %v6423 = vmul.f32 %v1558, %v6370
      %v6424 = vmul.f32 %v1559, %v6369
      %v6425 = vmul.f32 %v1560, %v6368
      %v6426 = vmul.f32 %v1561, %v6367
      %v6427 = vadd.f32 %v6179, %v6397
      %v6428 = vadd.f32 %v6181, %v6398
      %v6429 = vadd.f32 %v6184, %v6399
      %v6430 = vadd.f32 %v6186, %v6400
      %v6431 = vadd.f32 %v6189, %v6401
      %v6432 = vadd.f32 %v6191, %v6402
      %v6433 = vadd.f32 %v6194, %v6403
      %v6434 = vadd.f32 %v6196, %v6404
      %v6435 = vadd.f32 %v6199, %v6405
      %v6436 = vadd.f32 %v6201, %v6406
      %v6437 = vadd.f32 %v6204, %v6407
      %v6438 = vadd.f32 %v6206, %v6408
      %v6439 = vadd.f32 %v6209, %v6409
      %v6440 = vadd.f32 %v6211, %v6410
      %v6441 = vadd.f32 %v6214, %v6411
      %v6442 = vadd.f32 %v6216, %v6412
      %v6443 = vadd.f32 %v6219, %v6413
      %v6444 = vadd.f32 %v6221, %v6414
      %v6445 = vadd.f32 %v6224, %v6415
      %v6446 = vadd.f32 %v6226, %v6416
      %v6447 = vadd.f32 %v6229, %v6417
      %v6448 = vadd.f32 %v6231, %v6418
      %v6449 = vadd.f32 %v6234, %v6419
      %v6450 = vadd.f32 %v6236, %v6420
      %v6451 = vadd.f32 %v6239, %v6421
      %v6452 = vadd.f32 %v6241, %v6422
      %v6453 = vadd.f32 %v6244, %v6423
      %v6454 = vadd.f32 %v6246, %v6424
      %v6455 = vadd.f32 %v6249, %v6425
      %v6456 = vadd.f32 %v6251, %v6426
      %v6457 = vrot.slane %v6263, 1
      %v6458 = vrot.slane %v6265, 1
      %v6459 = vrot.slane %v6268, 1
      %v6460 = vrot.slane %v6270, 1
      %v6461 = vrot.slane %v6273, 1
      %v6462 = vrot.slane %v6275, 1
      %v6463 = vrot.slane %v6278, 1
      %v6464 = vrot.slane %v6280, 1
      %v6465 = vrot.slane %v6283, 1
      %v6466 = vrot.slane %v6285, 1
      %v6467 = vrot.slane %v6288, 1
      %v6468 = vrot.slane %v6290, 1
      %v6469 = vrot.slane %v6293, 1
      %v6470 = vrot.slane %v6295, 1
      %v6471 = vrot.slane %v6298, 1
      %v6472 = vrot.slane %v6300, 1
      %v6473 = vrot.slane %v6303, 1
      %v6474 = vrot.slane %v6305, 1
      %v6475 = vrot.slane %v6308, 1
      %v6476 = vrot.slane %v6310, 1
      %v6477 = vrot.slane %v6313, 1
      %v6478 = vrot.slane %v6315, 1
      %v6479 = vrot.slane %v6318, 1
      %v6480 = vrot.slane %v6320, 1
      %v6481 = vrot.slane %v6323, 1
      %v6482 = vrot.slane %v6325, 1
      %v6483 = vrot.slane %v6328, 1
      %v6484 = vrot.slane %v6330, 1
      %v6485 = vrot.slane %v6333, 1
      %v6486 = vrot.slane %v6335, 1
      %v6487 = vsel %vm4755, %v6485, %v6486
      %v6488 = vsel %vm4755, %v6484, %v6485
      %v6489 = vsel %vm4755, %v6483, %v6484
      %v6490 = vsel %vm4755, %v6482, %v6483
      %v6491 = vsel %vm4755, %v6481, %v6482
      %v6492 = vsel %vm4755, %v6480, %v6481
      %v6493 = vsel %vm4755, %v6479, %v6480
      %v6494 = vsel %vm4755, %v6478, %v6479
      %v6495 = vsel %vm4755, %v6477, %v6478
      %v6496 = vsel %vm4755, %v6476, %v6477
      %v6497 = vsel %vm4755, %v6475, %v6476
      %v6498 = vsel %vm4755, %v6474, %v6475
      %v6499 = vsel %vm4755, %v6473, %v6474
      %v6500 = vsel %vm4755, %v6472, %v6473
      %v6501 = vsel %vm4755, %v6471, %v6472
      %v6502 = vsel %vm4755, %v6470, %v6471
      %v6503 = vsel %vm4755, %v6469, %v6470
      %v6504 = vsel %vm4755, %v6468, %v6469
      %v6505 = vsel %vm4755, %v6467, %v6468
      %v6506 = vsel %vm4755, %v6466, %v6467
      %v6507 = vsel %vm4755, %v6465, %v6466
      %v6508 = vsel %vm4755, %v6464, %v6465
      %v6509 = vsel %vm4755, %v6463, %v6464
      %v6510 = vsel %vm4755, %v6462, %v6463
      %v6511 = vsel %vm4755, %v6461, %v6462
      %v6512 = vsel %vm4755, %v6460, %v6461
      %v6513 = vsel %vm4755, %v6459, %v6460
      %v6514 = vsel %vm4755, %v6458, %v6459
      %v6515 = vsel %vm4755, %v6457, %v6458
      %v6516 = vsel %vm4755, %v6486, %v6457
      %v6517 = vmul.f32 %v1622, %v6515
      %v6518 = vmul.f32 %v1623, %v6514
      %v6519 = vmul.f32 %v1624, %v6513
      %v6520 = vmul.f32 %v1625, %v6512
      %v6521 = vmul.f32 %v1626, %v6511
      %v6522 = vmul.f32 %v1627, %v6510
      %v6523 = vmul.f32 %v1628, %v6509
      %v6524 = vmul.f32 %v1629, %v6508
      %v6525 = vmul.f32 %v1630, %v6507
      %v6526 = vmul.f32 %v1631, %v6506
      %v6527 = vmul.f32 %v1632, %v6505
      %v6528 = vmul.f32 %v1633, %v6504
      %v6529 = vmul.f32 %v1634, %v6503
      %v6530 = vmul.f32 %v1635, %v6502
      %v6531 = vmul.f32 %v1636, %v6501
      %v6532 = vmul.f32 %v1637, %v6500
      %v6533 = vmul.f32 %v1638, %v6499
      %v6534 = vmul.f32 %v1639, %v6498
      %v6535 = vmul.f32 %v1640, %v6497
      %v6536 = vmul.f32 %v1641, %v6496
      %v6537 = vmul.f32 %v1642, %v6495
      %v6538 = vmul.f32 %v1643, %v6494
      %v6539 = vmul.f32 %v1644, %v6493
      %v6540 = vmul.f32 %v1645, %v6492
      %v6541 = vmul.f32 %v1646, %v6491
      %v6542 = vmul.f32 %v1647, %v6490
      %v6543 = vmul.f32 %v1648, %v6489
      %v6544 = vmul.f32 %v1649, %v6488
      %v6545 = vmul.f32 %v1650, %v6487
      %v6546 = vmul.f32 %v1651, %v6516
      %v6547 = vadd.f32 %v6427, %v6517
      %v6548 = vadd.f32 %v6428, %v6518
      %v6549 = vadd.f32 %v6429, %v6519
      %v6550 = vadd.f32 %v6430, %v6520
      %v6551 = vadd.f32 %v6431, %v6521
      %v6552 = vadd.f32 %v6432, %v6522
      %v6553 = vadd.f32 %v6433, %v6523
      %v6554 = vadd.f32 %v6434, %v6524
      %v6555 = vadd.f32 %v6435, %v6525
      %v6556 = vadd.f32 %v6436, %v6526
      %v6557 = vadd.f32 %v6437, %v6527
      %v6558 = vadd.f32 %v6438, %v6528
      %v6559 = vadd.f32 %v6439, %v6529
      %v6560 = vadd.f32 %v6440, %v6530
      %v6561 = vadd.f32 %v6441, %v6531
      %v6562 = vadd.f32 %v6442, %v6532
      %v6563 = vadd.f32 %v6443, %v6533
      %v6564 = vadd.f32 %v6444, %v6534
      %v6565 = vadd.f32 %v6445, %v6535
      %v6566 = vadd.f32 %v6446, %v6536
      %v6567 = vadd.f32 %v6447, %v6537
      %v6568 = vadd.f32 %v6448, %v6538
      %v6569 = vadd.f32 %v6449, %v6539
      %v6570 = vadd.f32 %v6450, %v6540
      %v6571 = vadd.f32 %v6451, %v6541
      %v6572 = vadd.f32 %v6452, %v6542
      %v6573 = vadd.f32 %v6453, %v6543
      %v6574 = vadd.f32 %v6454, %v6544
      %v6575 = vadd.f32 %v6455, %v6545
      %v6576 = vadd.f32 %v6456, %v6546
      %v6577 = vld [vmem:[%s6] sm:$0x1]
      %v6579 = vperm.slane %v6577, 0
      %v6581 = vadd.f32 %v6547, %v6579
      %v6582 = vadd.f32 %v6548, %v6579
      %v6583 = vadd.f32 %v6549, %v6579
      %v6584 = vadd.f32 %v6550, %v6579
      %v6585 = vadd.f32 %v6551, %v6579
      %v6586 = vadd.f32 %v6552, %v6579
      %v6587 = vadd.f32 %v6553, %v6579
      %v6588 = vadd.f32 %v6554, %v6579
      %v6589 = vadd.f32 %v6555, %v6579
      %v6590 = vadd.f32 %v6556, %v6579
      %v6591 = vadd.f32 %v6557, %v6579
      %v6592 = vadd.f32 %v6558, %v6579
      %v6593 = vadd.f32 %v6559, %v6579
      %v6594 = vadd.f32 %v6560, %v6579
      %v6595 = vadd.f32 %v6561, %v6579
      %v6596 = vadd.f32 %v6562, %v6579
      %v6597 = vadd.f32 %v6563, %v6579
      %v6598 = vadd.f32 %v6564, %v6579
      %v6599 = vadd.f32 %v6565, %v6579
      %v6600 = vadd.f32 %v6566, %v6579
      %v6601 = vadd.f32 %v6567, %v6579
      %v6602 = vadd.f32 %v6568, %v6579
      %v6603 = vadd.f32 %v6569, %v6579
      %v6604 = vadd.f32 %v6570, %v6579
      %v6605 = vadd.f32 %v6571, %v6579
      %v6606 = vadd.f32 %v6572, %v6579
      %v6607 = vadd.f32 %v6573, %v6579
      %v6608 = vadd.f32 %v6574, %v6579
      %v6609 = vadd.f32 %v6575, %v6579
      %v6610 = vadd.f32 %v6576, %v6579
      %v6611 = vmax.f32 %v6581, 0.0
      %v6612 = vmax.f32 %v6582, 0.0
      %v6613 = vmax.f32 %v6583, 0.0
      %v6614 = vmax.f32 %v6584, 0.0
      %v6615 = vmax.f32 %v6585, 0.0
      %v6616 = vmax.f32 %v6586, 0.0
      %v6617 = vmax.f32 %v6587, 0.0
      %v6618 = vmax.f32 %v6588, 0.0
      %v6619 = vmax.f32 %v6589, 0.0
      %v6620 = vmax.f32 %v6590, 0.0
      %v6621 = vmax.f32 %v6591, 0.0
      %v6622 = vmax.f32 %v6592, 0.0
      %v6623 = vmax.f32 %v6593, 0.0
      %v6624 = vmax.f32 %v6594, 0.0
      %v6625 = vmax.f32 %v6595, 0.0
      %v6626 = vmax.f32 %v6596, 0.0
      %v6627 = vmax.f32 %v6597, 0.0
      %v6628 = vmax.f32 %v6598, 0.0
      %v6629 = vmax.f32 %v6599, 0.0
      %v6630 = vmax.f32 %v6600, 0.0
      %v6631 = vmax.f32 %v6601, 0.0
      %v6632 = vmax.f32 %v6602, 0.0
      %v6633 = vmax.f32 %v6603, 0.0
      %v6634 = vmax.f32 %v6604, 0.0
      %v6635 = vmax.f32 %v6605, 0.0
      %v6636 = vmax.f32 %v6606, 0.0
      %v6637 = vmax.f32 %v6607, 0.0
      %v6638 = vmax.f32 %v6608, 0.0
      %v6639 = vmax.f32 %v6609, 0.0
      %v6640 = vmax.f32 %v6610, 0.0
      %v6641 = vpack.c.bf16 %v6612, %v6611
      %v6642 = vpack.c.bf16 %v6614, %v6613
      %v6643 = vpack.c.bf16 %v6616, %v6615
      %v6644 = vpack.c.bf16 %v6618, %v6617
      %v6645 = vpack.c.bf16 %v6620, %v6619
      %v6646 = vpack.c.bf16 %v6622, %v6621
      %v6647 = vpack.c.bf16 %v6624, %v6623
      %v6648 = vpack.c.bf16 %v6626, %v6625
      %v6649 = vpack.c.bf16 %v6628, %v6627
      %v6650 = vpack.c.bf16 %v6630, %v6629
      %v6651 = vpack.c.bf16 %v6632, %v6631
      %v6652 = vpack.c.bf16 %v6634, %v6633
      %v6653 = vpack.c.bf16 %v6636, %v6635
      %v6654 = vpack.c.bf16 %v6638, %v6637
      %v6655 = vpack.c.bf16 %v6640, %v6639
      %v6656 = vld [vmem:[%s7] sm:$0xff]
      %v6657 = vld [vmem:[%s7 + $0x8] sm:$0xf]
      %v6658 = vld [vmem:[%s7 + $0xc] sm:$0xff]
      %v6659 = vld [vmem:[%s7 + $0x14] sm:$0xf]
      %v6660 = vld [vmem:[%s7 + $0x18] sm:$0xff]
      %v6661 = vld [vmem:[%s7 + $0x20] sm:$0xf]
      %v6662 = vld [vmem:[%s7 + $0x24] sm:$0xff]
      %v6663 = vld [vmem:[%s7 + $0x2c] sm:$0xf]
      %v6664 = vld [vmem:[%s7 + $0x30] sm:$0xff]
      %v6665 = vld [vmem:[%s7 + $0x38] sm:$0xf]
      %v6666 = vld [vmem:[%s7 + $0x3c] sm:$0xff]
      %v6667 = vld [vmem:[%s7 + $0x44] sm:$0xf]
      %v6668 = vld [vmem:[%s7 + $0x48] sm:$0xff]
      %v6669 = vld [vmem:[%s7 + $0x50] sm:$0xf]
      %v6670 = vld [vmem:[%s7 + $0x54] sm:$0xff]
      %v6671 = vld [vmem:[%s7 + $0x5c] sm:$0xf]
      %v6672 = vld [vmem:[%s7 + $0x60] sm:$0xff]
      %v6673 = vld [vmem:[%s7 + $0x68] sm:$0xf]
      %v6674 = vld [vmem:[%s7 + $0x6c] sm:$0xff]
      %v6675 = vld [vmem:[%s7 + $0x74] sm:$0xf]
      %v6676 = vld [vmem:[%s7 + $0x78] sm:$0xff]
      %v6677 = vld [vmem:[%s7 + $0x80] sm:$0xf]
      %v6678 = vld [vmem:[%s7 + $0x84] sm:$0xff]
      %v6679 = vld [vmem:[%s7 + $0x8c] sm:$0xf]
      %v6680 = vld [vmem:[%s7 + $0x90] sm:$0xff]
      %v6681 = vld [vmem:[%s7 + $0x98] sm:$0xf]
      %v6682 = vld [vmem:[%s7 + $0x9c] sm:$0xff]
      %v6683 = vld [vmem:[%s7 + $0xa4] sm:$0xf]
      %v6684 = vld [vmem:[%s7 + $0xa8] sm:$0xff]
      %v6685 = vld [vmem:[%s7 + $0xb0] sm:$0xf]
      %v6686 = vld [vmem:[%s7 + $0xb4] sm:$0xff]
      %v6687 = vld [vmem:[%s7 + $0xbc] sm:$0xf]
      %v6720 = vunpack.c.l.b16 %v6656
      %v6721 = vunpack.c.h.b16 %v6656
      %v6722 = vunpack.c.l.b16 %v6657
      %v6723 = vunpack.c.l.b16 %v6658
      %v6724 = vunpack.c.h.b16 %v6658
      %v6725 = vunpack.c.l.b16 %v6659
      %v6726 = vunpack.c.l.b16 %v6660
      %v6727 = vunpack.c.h.b16 %v6660
      %v6728 = vunpack.c.l.b16 %v6661
      %v6729 = vunpack.c.l.b16 %v6662
      %v6730 = vunpack.c.h.b16 %v6662
      %v6731 = vunpack.c.l.b16 %v6663
      %v6732 = vunpack.c.l.b16 %v6664
      %v6733 = vunpack.c.h.b16 %v6664
      %v6734 = vunpack.c.l.b16 %v6665
      %v6735 = vunpack.c.l.b16 %v6666
      %v6736 = vunpack.c.h.b16 %v6666
      %v6737 = vunpack.c.l.b16 %v6667
      %v6738 = vunpack.c.l.b16 %v6668
      %v6739 = vunpack.c.h.b16 %v6668
      %v6740 = vunpack.c.l.b16 %v6669
      %v6741 = vunpack.c.l.b16 %v6670
      %v6742 = vunpack.c.h.b16 %v6670
      %v6743 = vunpack.c.l.b16 %v6671
      %v6744 = vunpack.c.l.b16 %v6672
      %v6745 = vunpack.c.h.b16 %v6672
      %v6746 = vunpack.c.l.b16 %v6673
      %v6747 = vunpack.c.l.b16 %v6674
      %v6748 = vunpack.c.h.b16 %v6674
      %v6749 = vunpack.c.l.b16 %v6675
      %v6750 = vunpack.c.l.b16 %v6676
      %v6751 = vunpack.c.h.b16 %v6676
      %v6752 = vunpack.c.l.b16 %v6677
      %v6753 = vunpack.c.l.b16 %v6678
      %v6754 = vunpack.c.h.b16 %v6678
      %v6755 = vunpack.c.l.b16 %v6679
      %v6756 = vunpack.c.l.b16 %v6680
      %v6757 = vunpack.c.h.b16 %v6680
      %v6758 = vunpack.c.l.b16 %v6681
      %v6759 = vunpack.c.l.b16 %v6682
      %v6760 = vunpack.c.h.b16 %v6682
      %v6761 = vunpack.c.l.b16 %v6683
      %v6762 = vunpack.c.l.b16 %v6684
      %v6763 = vunpack.c.h.b16 %v6684
      %v6764 = vunpack.c.l.b16 %v6685
      %v6765 = vunpack.c.l.b16 %v6686
      %v6766 = vunpack.c.h.b16 %v6686
      %v6767 = vunpack.c.l.b16 %v6687
      %v6768 = vpack.c.b16 %v6723, %v6720
      %v6769 = vpack.c.b16 %v6724, %v6721
      %v6770 = vpack.c.b16 %v6725, %v6722
      %v6771 = vpack.c.b16 %v6729, %v6726
      %v6772 = vpack.c.b16 %v6730, %v6727
      %v6773 = vpack.c.b16 %v6731, %v6728
      %v6774 = vpack.c.b16 %v6735, %v6732
      %v6775 = vpack.c.b16 %v6736, %v6733
      %v6776 = vpack.c.b16 %v6737, %v6734
      %v6777 = vpack.c.b16 %v6741, %v6738
      %v6778 = vpack.c.b16 %v6742, %v6739
      %v6779 = vpack.c.b16 %v6743, %v6740
      %v6780 = vpack.c.b16 %v6747, %v6744
      %v6781 = vpack.c.b16 %v6748, %v6745
      %v6782 = vpack.c.b16 %v6749, %v6746
      %v6783 = vpack.c.b16 %v6753, %v6750
      %v6784 = vpack.c.b16 %v6754, %v6751
      %v6785 = vpack.c.b16 %v6755, %v6752
      %v6786 = vpack.c.b16 %v6759, %v6756
      %v6787 = vpack.c.b16 %v6760, %v6757
      %v6788 = vpack.c.b16 %v6761, %v6758
      %v6789 = vpack.c.b16 %v6765, %v6762
      %v6790 = vpack.c.b16 %v6766, %v6763
      %v6791 = vpack.c.b16 %v6767, %v6764
      %6816 = vmatpush.bf16.msra.mxu0 %v6789
      %6817 = vmatpush.bf16.msra.mxu0 %v6786
      %6818 = vmatpush.bf16.msra.mxu0 %v6783
      %6819 = vmatpush.bf16.msra.mxu0 %v6780
      %6820 = vmatpush.bf16.msra.mxu0 %v6777
      %6821 = vmatpush.bf16.msra.mxu0 %v6774
      %6822 = vmatpush.bf16.msra.mxu0 %v6771
      %6823 = vmatpush.bf16.msra.mxu0 %v6768
      %6824 = vmatmul.bf16.gmra.mxu0 %v6641
      %v6825 = vpop.f32.mrf.mxu0
      %v6826 = vadd.f32 0.0, %v6825
      %v6827 = vpop.f32.mrf.mxu0
      %v6828 = vadd.f32 0.0, %v6827
      %6829 = vmatmul.bf16.gmra.mxu0 %v6642
      %v6830 = vpop.f32.mrf.mxu0
      %v6831 = vadd.f32 0.0, %v6830
      %v6832 = vpop.f32.mrf.mxu0
      %v6833 = vadd.f32 0.0, %v6832
      %6834 = vmatmul.bf16.gmra.mxu0 %v6643
      %v6835 = vpop.f32.mrf.mxu0
      %v6836 = vadd.f32 0.0, %v6835
      %v6837 = vpop.f32.mrf.mxu0
      %v6838 = vadd.f32 0.0, %v6837
      %6839 = vmatmul.bf16.gmra.mxu0 %v6644
      %v6840 = vpop.f32.mrf.mxu0
      %v6841 = vadd.f32 0.0, %v6840
      %v6842 = vpop.f32.mrf.mxu0
      %v6843 = vadd.f32 0.0, %v6842
      %6844 = vmatmul.bf16.gmra.mxu0 %v6645
      %v6845 = vpop.f32.mrf.mxu0
      %v6846 = vadd.f32 0.0, %v6845
      %v6847 = vpop.f32.mrf.mxu0
      %v6848 = vadd.f32 0.0, %v6847
      %6849 = vmatmul.bf16.gmra.mxu0 %v6646
      %v6850 = vpop.f32.mrf.mxu0
      %v6851 = vadd.f32 0.0, %v6850
      %v6852 = vpop.f32.mrf.mxu0
      %v6853 = vadd.f32 0.0, %v6852
      %6854 = vmatmul.bf16.gmra.mxu0 %v6647
      %v6855 = vpop.f32.mrf.mxu0
      %v6856 = vadd.f32 0.0, %v6855
      %v6857 = vpop.f32.mrf.mxu0
      %v6858 = vadd.f32 0.0, %v6857
      %6859 = vmatmul.bf16.gmra.mxu0 %v6648
      %v6860 = vpop.f32.mrf.mxu0
      %v6861 = vadd.f32 0.0, %v6860
      %v6862 = vpop.f32.mrf.mxu0
      %v6863 = vadd.f32 0.0, %v6862
      %6864 = vmatmul.bf16.gmra.mxu0 %v6649
      %v6865 = vpop.f32.mrf.mxu0
      %v6866 = vadd.f32 0.0, %v6865
      %v6867 = vpop.f32.mrf.mxu0
      %v6868 = vadd.f32 0.0, %v6867
      %6869 = vmatmul.bf16.gmra.mxu0 %v6650
      %v6870 = vpop.f32.mrf.mxu0
      %v6871 = vadd.f32 0.0, %v6870
      %v6872 = vpop.f32.mrf.mxu0
      %v6873 = vadd.f32 0.0, %v6872
      %6874 = vmatmul.bf16.gmra.mxu0 %v6651
      %v6875 = vpop.f32.mrf.mxu0
      %v6876 = vadd.f32 0.0, %v6875
      %v6877 = vpop.f32.mrf.mxu0
      %v6878 = vadd.f32 0.0, %v6877
      %6879 = vmatmul.bf16.gmra.mxu0 %v6652
      %v6880 = vpop.f32.mrf.mxu0
      %v6881 = vadd.f32 0.0, %v6880
      %v6882 = vpop.f32.mrf.mxu0
      %v6883 = vadd.f32 0.0, %v6882
      %6884 = vmatmul.bf16.gmra.mxu0 %v6653
      %v6885 = vpop.f32.mrf.mxu0
      %v6886 = vadd.f32 0.0, %v6885
      %v6887 = vpop.f32.mrf.mxu0
      %v6888 = vadd.f32 0.0, %v6887
      %6889 = vmatmul.bf16.gmra.mxu0 %v6654
      %v6890 = vpop.f32.mrf.mxu0
      %v6891 = vadd.f32 0.0, %v6890
      %v6892 = vpop.f32.mrf.mxu0
      %v6893 = vadd.f32 0.0, %v6892
      %6894 = vmatmul.bf16.gmra.mxu0 %v6655
      %v6895 = vpop.f32.mrf.mxu0
      %v6896 = vadd.f32 0.0, %v6895
      %v6897 = vpop.f32.mrf.mxu0
      %v6898 = vadd.f32 0.0, %v6897
      %6899 = vdwg.mxu0
      %6900 = vmatpush.bf16.msra.mxu0 %v6790
      %6901 = vmatpush.bf16.msra.mxu0 %v6787
      %6902 = vmatpush.bf16.msra.mxu0 %v6784
      %6903 = vmatpush.bf16.msra.mxu0 %v6781
      %6904 = vmatpush.bf16.msra.mxu0 %v6778
      %6905 = vmatpush.bf16.msra.mxu0 %v6775
      %6906 = vmatpush.bf16.msra.mxu0 %v6772
      %6907 = vmatpush.bf16.msra.mxu0 %v6769
      %6908 = vmatmul.bf16.gmra.mxu0 %v6641
      %v6909 = vpop.f32.mrf.mxu0
      %v6910 = vadd.f32 0.0, %v6909
      %v6911 = vpop.f32.mrf.mxu0
      %v6912 = vadd.f32 0.0, %v6911
      %6913 = vmatmul.bf16.gmra.mxu0 %v6642
      %v6914 = vpop.f32.mrf.mxu0
      %v6915 = vadd.f32 0.0, %v6914
      %v6916 = vpop.f32.mrf.mxu0
      %v6917 = vadd.f32 0.0, %v6916
      %6918 = vmatmul.bf16.gmra.mxu0 %v6643
      %v6919 = vpop.f32.mrf.mxu0
      %v6920 = vadd.f32 0.0, %v6919
      %v6921 = vpop.f32.mrf.mxu0
      %v6922 = vadd.f32 0.0, %v6921
      %6923 = vmatmul.bf16.gmra.mxu0 %v6644
      %v6924 = vpop.f32.mrf.mxu0
      %v6925 = vadd.f32 0.0, %v6924
      %v6926 = vpop.f32.mrf.mxu0
      %v6927 = vadd.f32 0.0, %v6926
      %6928 = vmatmul.bf16.gmra.mxu0 %v6645
      %v6929 = vpop.f32.mrf.mxu0
      %v6930 = vadd.f32 0.0, %v6929
      %v6931 = vpop.f32.mrf.mxu0
      %v6932 = vadd.f32 0.0, %v6931
      %6933 = vmatmul.bf16.gmra.mxu0 %v6646
      %v6934 = vpop.f32.mrf.mxu0
      %v6935 = vadd.f32 0.0, %v6934
      %v6936 = vpop.f32.mrf.mxu0
      %v6937 = vadd.f32 0.0, %v6936
      %6938 = vmatmul.bf16.gmra.mxu0 %v6647
      %v6939 = vpop.f32.mrf.mxu0
      %v6940 = vadd.f32 0.0, %v6939
      %v6941 = vpop.f32.mrf.mxu0
      %v6942 = vadd.f32 0.0, %v6941
      %6943 = vmatmul.bf16.gmra.mxu0 %v6648
      %v6944 = vpop.f32.mrf.mxu0
      %v6945 = vadd.f32 0.0, %v6944
      %v6946 = vpop.f32.mrf.mxu0
      %v6947 = vadd.f32 0.0, %v6946
      %6948 = vmatmul.bf16.gmra.mxu0 %v6649
      %v6949 = vpop.f32.mrf.mxu0
      %v6950 = vadd.f32 0.0, %v6949
      %v6951 = vpop.f32.mrf.mxu0
      %v6952 = vadd.f32 0.0, %v6951
      %6953 = vmatmul.bf16.gmra.mxu0 %v6650
      %v6954 = vpop.f32.mrf.mxu0
      %v6955 = vadd.f32 0.0, %v6954
      %v6956 = vpop.f32.mrf.mxu0
      %v6957 = vadd.f32 0.0, %v6956
      %6958 = vmatmul.bf16.gmra.mxu0 %v6651
      %v6959 = vpop.f32.mrf.mxu0
      %v6960 = vadd.f32 0.0, %v6959
      %v6961 = vpop.f32.mrf.mxu0
      %v6962 = vadd.f32 0.0, %v6961
      %6963 = vmatmul.bf16.gmra.mxu0 %v6652
      %v6964 = vpop.f32.mrf.mxu0
      %v6965 = vadd.f32 0.0, %v6964
      %v6966 = vpop.f32.mrf.mxu0
      %v6967 = vadd.f32 0.0, %v6966
      %6968 = vmatmul.bf16.gmra.mxu0 %v6653
      %v6969 = vpop.f32.mrf.mxu0
      %v6970 = vadd.f32 0.0, %v6969
      %v6971 = vpop.f32.mrf.mxu0
      %v6972 = vadd.f32 0.0, %v6971
      %6973 = vmatmul.bf16.gmra.mxu0 %v6654
      %v6974 = vpop.f32.mrf.mxu0
      %v6975 = vadd.f32 0.0, %v6974
      %v6976 = vpop.f32.mrf.mxu0
      %v6977 = vadd.f32 0.0, %v6976
      %6978 = vmatmul.bf16.gmra.mxu0 %v6655
      %v6979 = vpop.f32.mrf.mxu0
      %v6980 = vadd.f32 0.0, %v6979
      %v6981 = vpop.f32.mrf.mxu0
      %v6982 = vadd.f32 0.0, %v6981
      %6983 = vdwg.mxu0
      %6984 = vmatpush.bf16.msra.mxu0 %v6791
      %6985 = vmatpush.bf16.msra.mxu0 %v6788
      %6986 = vmatpush.bf16.msra.mxu0 %v6785
      %6987 = vmatpush.bf16.msra.mxu0 %v6782
      %6988 = vmatpush.bf16.msra.mxu0 %v6779
      %6989 = vmatpush.bf16.msra.mxu0 %v6776
      %6990 = vmatpush.bf16.msra.mxu0 %v6773
      %6991 = vmatpush.bf16.msra.mxu0 %v6770
      %6992 = vmatmul.bf16.gmra.mxu0 %v6641
      %v6993 = vpop.f32.mrf.mxu0
      %v6994 = vadd.f32 0.0, %v6993
      %v6995 = vpop.f32.mrf.mxu0
      %v6996 = vadd.f32 0.0, %v6995
      %6997 = vmatmul.bf16.gmra.mxu0 %v6642
      %v6998 = vpop.f32.mrf.mxu0
      %v6999 = vadd.f32 0.0, %v6998
      %v7000 = vpop.f32.mrf.mxu0
      %v7001 = vadd.f32 0.0, %v7000
      %7002 = vmatmul.bf16.gmra.mxu0 %v6643
      %v7003 = vpop.f32.mrf.mxu0
      %v7004 = vadd.f32 0.0, %v7003
      %v7005 = vpop.f32.mrf.mxu0
      %v7006 = vadd.f32 0.0, %v7005
      %7007 = vmatmul.bf16.gmra.mxu0 %v6644
      %v7008 = vpop.f32.mrf.mxu0
      %v7009 = vadd.f32 0.0, %v7008
      %v7010 = vpop.f32.mrf.mxu0
      %v7011 = vadd.f32 0.0, %v7010
      %7012 = vmatmul.bf16.gmra.mxu0 %v6645
      %v7013 = vpop.f32.mrf.mxu0
      %v7014 = vadd.f32 0.0, %v7013
      %v7015 = vpop.f32.mrf.mxu0
      %v7016 = vadd.f32 0.0, %v7015
      %7017 = vmatmul.bf16.gmra.mxu0 %v6646
      %v7018 = vpop.f32.mrf.mxu0
      %v7019 = vadd.f32 0.0, %v7018
      %v7020 = vpop.f32.mrf.mxu0
      %v7021 = vadd.f32 0.0, %v7020
      %7022 = vmatmul.bf16.gmra.mxu0 %v6647
      %v7023 = vpop.f32.mrf.mxu0
      %v7024 = vadd.f32 0.0, %v7023
      %v7025 = vpop.f32.mrf.mxu0
      %v7026 = vadd.f32 0.0, %v7025
      %7027 = vmatmul.bf16.gmra.mxu0 %v6648
      %v7028 = vpop.f32.mrf.mxu0
      %v7029 = vadd.f32 0.0, %v7028
      %v7030 = vpop.f32.mrf.mxu0
      %v7031 = vadd.f32 0.0, %v7030
      %7032 = vmatmul.bf16.gmra.mxu0 %v6649
      %v7033 = vpop.f32.mrf.mxu0
      %v7034 = vadd.f32 0.0, %v7033
      %v7035 = vpop.f32.mrf.mxu0
      %v7036 = vadd.f32 0.0, %v7035
      %7037 = vmatmul.bf16.gmra.mxu0 %v6650
      %v7038 = vpop.f32.mrf.mxu0
      %v7039 = vadd.f32 0.0, %v7038
      %v7040 = vpop.f32.mrf.mxu0
      %v7041 = vadd.f32 0.0, %v7040
      %7042 = vmatmul.bf16.gmra.mxu0 %v6651
      %v7043 = vpop.f32.mrf.mxu0
      %v7044 = vadd.f32 0.0, %v7043
      %v7045 = vpop.f32.mrf.mxu0
      %v7046 = vadd.f32 0.0, %v7045
      %7047 = vmatmul.bf16.gmra.mxu0 %v6652
      %v7048 = vpop.f32.mrf.mxu0
      %v7049 = vadd.f32 0.0, %v7048
      %v7050 = vpop.f32.mrf.mxu0
      %v7051 = vadd.f32 0.0, %v7050
      %7052 = vmatmul.bf16.gmra.mxu0 %v6653
      %v7053 = vpop.f32.mrf.mxu0
      %v7054 = vadd.f32 0.0, %v7053
      %v7055 = vpop.f32.mrf.mxu0
      %v7056 = vadd.f32 0.0, %v7055
      %7057 = vmatmul.bf16.gmra.mxu0 %v6654
      %v7058 = vpop.f32.mrf.mxu0
      %v7059 = vadd.f32 0.0, %v7058
      %v7060 = vpop.f32.mrf.mxu0
      %v7061 = vadd.f32 0.0, %v7060
      %7062 = vmatmul.bf16.gmra.mxu0 %v6655
      %v7063 = vpop.f32.mrf.mxu0
      %v7064 = vadd.f32 0.0, %v7063
      %v7065 = vpop.f32.mrf.mxu0
      %v7066 = vadd.f32 0.0, %v7065
      %7067 = vdwg.mxu0
      %v7068 = vrot.slane %v6826, 7
      %v7069 = vrot.slane %v6828, 7
      %v7070 = vrot.slane %v6831, 7
      %v7071 = vrot.slane %v6833, 7
      %v7072 = vrot.slane %v6836, 7
      %v7073 = vrot.slane %v6838, 7
      %v7074 = vrot.slane %v6841, 7
      %v7075 = vrot.slane %v6843, 7
      %v7076 = vrot.slane %v6846, 7
      %v7077 = vrot.slane %v6848, 7
      %v7078 = vrot.slane %v6851, 7
      %v7079 = vrot.slane %v6853, 7
      %v7080 = vrot.slane %v6856, 7
      %v7081 = vrot.slane %v6858, 7
      %v7082 = vrot.slane %v6861, 7
      %v7083 = vrot.slane %v6863, 7
      %v7084 = vrot.slane %v6866, 7
      %v7085 = vrot.slane %v6868, 7
      %v7086 = vrot.slane %v6871, 7
      %v7087 = vrot.slane %v6873, 7
      %v7088 = vrot.slane %v6876, 7
      %v7089 = vrot.slane %v6878, 7
      %v7090 = vrot.slane %v6881, 7
      %v7091 = vrot.slane %v6883, 7
      %v7092 = vrot.slane %v6886, 7
      %v7093 = vrot.slane %v6888, 7
      %v7094 = vrot.slane %v6891, 7
      %v7095 = vrot.slane %v6893, 7
      %v7096 = vrot.slane %v6896, 7
      %v7097 = vrot.slane %v6898, 7
      %v7098 = vsel %vm4514, %v7096, %v7097
      %v7099 = vsel %vm4514, %v7095, %v7096
      %v7100 = vsel %vm4514, %v7094, %v7095
      %v7101 = vsel %vm4514, %v7093, %v7094
      %v7102 = vsel %vm4514, %v7092, %v7093
      %v7103 = vsel %vm4514, %v7091, %v7092
      %v7104 = vsel %vm4514, %v7090, %v7091
      %v7105 = vsel %vm4514, %v7089, %v7090
      %v7106 = vsel %vm4514, %v7088, %v7089
      %v7107 = vsel %vm4514, %v7087, %v7088
      %v7108 = vsel %vm4514, %v7086, %v7087
      %v7109 = vsel %vm4514, %v7085, %v7086
      %v7110 = vsel %vm4514, %v7084, %v7085
      %v7111 = vsel %vm4514, %v7083, %v7084
      %v7112 = vsel %vm4514, %v7082, %v7083
      %v7113 = vsel %vm4514, %v7081, %v7082
      %v7114 = vsel %vm4514, %v7080, %v7081
      %v7115 = vsel %vm4514, %v7079, %v7080
      %v7116 = vsel %vm4514, %v7078, %v7079
      %v7117 = vsel %vm4514, %v7077, %v7078
      %v7118 = vsel %vm4514, %v7076, %v7077
      %v7119 = vsel %vm4514, %v7075, %v7076
      %v7120 = vsel %vm4514, %v7074, %v7075
      %v7121 = vsel %vm4514, %v7073, %v7074
      %v7122 = vsel %vm4514, %v7072, %v7073
      %v7123 = vsel %vm4514, %v7071, %v7072
      %v7124 = vsel %vm4514, %v7070, %v7071
      %v7125 = vsel %vm4514, %v7069, %v7070
      %v7126 = vsel %vm4514, %v7068, %v7069
      %v7127 = vsel %vm4514, %v7097, %v7068
      %v7128 = vmul.f32 %v1532, %v7127
      %v7129 = vmul.f32 %v1533, %v7126
      %v7130 = vmul.f32 %v1534, %v7125
      %v7131 = vmul.f32 %v1535, %v7124
      %v7132 = vmul.f32 %v1536, %v7123
      %v7133 = vmul.f32 %v1537, %v7122
      %v7134 = vmul.f32 %v1538, %v7121
      %v7135 = vmul.f32 %v1539, %v7120
      %v7136 = vmul.f32 %v1540, %v7119
      %v7137 = vmul.f32 %v1541, %v7118
      %v7138 = vmul.f32 %v1542, %v7117
      %v7139 = vmul.f32 %v1543, %v7116
      %v7140 = vmul.f32 %v1544, %v7115
      %v7141 = vmul.f32 %v1545, %v7114
      %v7142 = vmul.f32 %v1546, %v7113
      %v7143 = vmul.f32 %v1547, %v7112
      %v7144 = vmul.f32 %v1548, %v7111
      %v7145 = vmul.f32 %v1549, %v7110
      %v7146 = vmul.f32 %v1550, %v7109
      %v7147 = vmul.f32 %v1551, %v7108
      %v7148 = vmul.f32 %v1552, %v7107
      %v7149 = vmul.f32 %v1553, %v7106
      %v7150 = vmul.f32 %v1554, %v7105
      %v7151 = vmul.f32 %v1555, %v7104
      %v7152 = vmul.f32 %v1556, %v7103
      %v7153 = vmul.f32 %v1557, %v7102
      %v7154 = vmul.f32 %v1558, %v7101
      %v7155 = vmul.f32 %v1559, %v7100
      %v7156 = vmul.f32 %v1560, %v7099
      %v7157 = vmul.f32 %v1561, %v7098
      %v7158 = vadd.f32 %v6910, %v7128
      %v7159 = vadd.f32 %v6912, %v7129
      %v7160 = vadd.f32 %v6915, %v7130
      %v7161 = vadd.f32 %v6917, %v7131
      %v7162 = vadd.f32 %v6920, %v7132
      %v7163 = vadd.f32 %v6922, %v7133
      %v7164 = vadd.f32 %v6925, %v7134
      %v7165 = vadd.f32 %v6927, %v7135
      %v7166 = vadd.f32 %v6930, %v7136
      %v7167 = vadd.f32 %v6932, %v7137
      %v7168 = vadd.f32 %v6935, %v7138
      %v7169 = vadd.f32 %v6937, %v7139
      %v7170 = vadd.f32 %v6940, %v7140
      %v7171 = vadd.f32 %v6942, %v7141
      %v7172 = vadd.f32 %v6945, %v7142
      %v7173 = vadd.f32 %v6947, %v7143
      %v7174 = vadd.f32 %v6950, %v7144
      %v7175 = vadd.f32 %v6952, %v7145
      %v7176 = vadd.f32 %v6955, %v7146
      %v7177 = vadd.f32 %v6957, %v7147
      %v7178 = vadd.f32 %v6960, %v7148
      %v7179 = vadd.f32 %v6962, %v7149
      %v7180 = vadd.f32 %v6965, %v7150
      %v7181 = vadd.f32 %v6967, %v7151
      %v7182 = vadd.f32 %v6970, %v7152
      %v7183 = vadd.f32 %v6972, %v7153
      %v7184 = vadd.f32 %v6975, %v7154
      %v7185 = vadd.f32 %v6977, %v7155
      %v7186 = vadd.f32 %v6980, %v7156
      %v7187 = vadd.f32 %v6982, %v7157
      %v7188 = vrot.slane %v6994, 1
      %v7189 = vrot.slane %v6996, 1
      %v7190 = vrot.slane %v6999, 1
      %v7191 = vrot.slane %v7001, 1
      %v7192 = vrot.slane %v7004, 1
      %v7193 = vrot.slane %v7006, 1
      %v7194 = vrot.slane %v7009, 1
      %v7195 = vrot.slane %v7011, 1
      %v7196 = vrot.slane %v7014, 1
      %v7197 = vrot.slane %v7016, 1
      %v7198 = vrot.slane %v7019, 1
      %v7199 = vrot.slane %v7021, 1
      %v7200 = vrot.slane %v7024, 1
      %v7201 = vrot.slane %v7026, 1
      %v7202 = vrot.slane %v7029, 1
      %v7203 = vrot.slane %v7031, 1
      %v7204 = vrot.slane %v7034, 1
      %v7205 = vrot.slane %v7036, 1
      %v7206 = vrot.slane %v7039, 1
      %v7207 = vrot.slane %v7041, 1
      %v7208 = vrot.slane %v7044, 1
      %v7209 = vrot.slane %v7046, 1
      %v7210 = vrot.slane %v7049, 1
      %v7211 = vrot.slane %v7051, 1
      %v7212 = vrot.slane %v7054, 1
      %v7213 = vrot.slane %v7056, 1
      %v7214 = vrot.slane %v7059, 1
      %v7215 = vrot.slane %v7061, 1
      %v7216 = vrot.slane %v7064, 1
      %v7217 = vrot.slane %v7066, 1
      %v7218 = vsel %vm4755, %v7216, %v7217
      %v7219 = vsel %vm4755, %v7215, %v7216
      %v7220 = vsel %vm4755, %v7214, %v7215
      %v7221 = vsel %vm4755, %v7213, %v7214
      %v7222 = vsel %vm4755, %v7212, %v7213
      %v7223 = vsel %vm4755, %v7211, %v7212
      %v7224 = vsel %vm4755, %v7210, %v7211
      %v7225 = vsel %vm4755, %v7209, %v7210
      %v7226 = vsel %vm4755, %v7208, %v7209
      %v7227 = vsel %vm4755, %v7207, %v7208
      %v7228 = vsel %vm4755, %v7206, %v7207
      %v7229 = vsel %vm4755, %v7205, %v7206
      %v7230 = vsel %vm4755, %v7204, %v7205
      %v7231 = vsel %vm4755, %v7203, %v7204
      %v7232 = vsel %vm4755, %v7202, %v7203
      %v7233 = vsel %vm4755, %v7201, %v7202
      %v7234 = vsel %vm4755, %v7200, %v7201
      %v7235 = vsel %vm4755, %v7199, %v7200
      %v7236 = vsel %vm4755, %v7198, %v7199
      %v7237 = vsel %vm4755, %v7197, %v7198
      %v7238 = vsel %vm4755, %v7196, %v7197
      %v7239 = vsel %vm4755, %v7195, %v7196
      %v7240 = vsel %vm4755, %v7194, %v7195
      %v7241 = vsel %vm4755, %v7193, %v7194
      %v7242 = vsel %vm4755, %v7192, %v7193
      %v7243 = vsel %vm4755, %v7191, %v7192
      %v7244 = vsel %vm4755, %v7190, %v7191
      %v7245 = vsel %vm4755, %v7189, %v7190
      %v7246 = vsel %vm4755, %v7188, %v7189
      %v7247 = vsel %vm4755, %v7217, %v7188
      %v7248 = vmul.f32 %v1622, %v7246
      %v7249 = vmul.f32 %v1623, %v7245
      %v7250 = vmul.f32 %v1624, %v7244
      %v7251 = vmul.f32 %v1625, %v7243
      %v7252 = vmul.f32 %v1626, %v7242
      %v7253 = vmul.f32 %v1627, %v7241
      %v7254 = vmul.f32 %v1628, %v7240
      %v7255 = vmul.f32 %v1629, %v7239
      %v7256 = vmul.f32 %v1630, %v7238
      %v7257 = vmul.f32 %v1631, %v7237
      %v7258 = vmul.f32 %v1632, %v7236
      %v7259 = vmul.f32 %v1633, %v7235
      %v7260 = vmul.f32 %v1634, %v7234
      %v7261 = vmul.f32 %v1635, %v7233
      %v7262 = vmul.f32 %v1636, %v7232
      %v7263 = vmul.f32 %v1637, %v7231
      %v7264 = vmul.f32 %v1638, %v7230
      %v7265 = vmul.f32 %v1639, %v7229
      %v7266 = vmul.f32 %v1640, %v7228
      %v7267 = vmul.f32 %v1641, %v7227
      %v7268 = vmul.f32 %v1642, %v7226
      %v7269 = vmul.f32 %v1643, %v7225
      %v7270 = vmul.f32 %v1644, %v7224
      %v7271 = vmul.f32 %v1645, %v7223
      %v7272 = vmul.f32 %v1646, %v7222
      %v7273 = vmul.f32 %v1647, %v7221
      %v7274 = vmul.f32 %v1648, %v7220
      %v7275 = vmul.f32 %v1649, %v7219
      %v7276 = vmul.f32 %v1650, %v7218
      %v7277 = vmul.f32 %v1651, %v7247
      %v7278 = vadd.f32 %v7158, %v7248
      %v7279 = vadd.f32 %v7159, %v7249
      %v7280 = vadd.f32 %v7160, %v7250
      %v7281 = vadd.f32 %v7161, %v7251
      %v7282 = vadd.f32 %v7162, %v7252
      %v7283 = vadd.f32 %v7163, %v7253
      %v7284 = vadd.f32 %v7164, %v7254
      %v7285 = vadd.f32 %v7165, %v7255
      %v7286 = vadd.f32 %v7166, %v7256
      %v7287 = vadd.f32 %v7167, %v7257
      %v7288 = vadd.f32 %v7168, %v7258
      %v7289 = vadd.f32 %v7169, %v7259
      %v7290 = vadd.f32 %v7170, %v7260
      %v7291 = vadd.f32 %v7171, %v7261
      %v7292 = vadd.f32 %v7172, %v7262
      %v7293 = vadd.f32 %v7173, %v7263
      %v7294 = vadd.f32 %v7174, %v7264
      %v7295 = vadd.f32 %v7175, %v7265
      %v7296 = vadd.f32 %v7176, %v7266
      %v7297 = vadd.f32 %v7177, %v7267
      %v7298 = vadd.f32 %v7178, %v7268
      %v7299 = vadd.f32 %v7179, %v7269
      %v7300 = vadd.f32 %v7180, %v7270
      %v7301 = vadd.f32 %v7181, %v7271
      %v7302 = vadd.f32 %v7182, %v7272
      %v7303 = vadd.f32 %v7183, %v7273
      %v7304 = vadd.f32 %v7184, %v7274
      %v7305 = vadd.f32 %v7185, %v7275
      %v7306 = vadd.f32 %v7186, %v7276
      %v7307 = vadd.f32 %v7187, %v7277
      %v7308 = vld [vmem:[%s8] sm:$0x1]
      %v7310 = vperm.slane %v7308, 0
      %v7312 = vadd.f32 %v7278, %v7310
      %v7313 = vadd.f32 %v7279, %v7310
      %v7314 = vadd.f32 %v7280, %v7310
      %v7315 = vadd.f32 %v7281, %v7310
      %v7316 = vadd.f32 %v7282, %v7310
      %v7317 = vadd.f32 %v7283, %v7310
      %v7318 = vadd.f32 %v7284, %v7310
      %v7319 = vadd.f32 %v7285, %v7310
      %v7320 = vadd.f32 %v7286, %v7310
      %v7321 = vadd.f32 %v7287, %v7310
      %v7322 = vadd.f32 %v7288, %v7310
      %v7323 = vadd.f32 %v7289, %v7310
      %v7324 = vadd.f32 %v7290, %v7310
      %v7325 = vadd.f32 %v7291, %v7310
      %v7326 = vadd.f32 %v7292, %v7310
      %v7327 = vadd.f32 %v7293, %v7310
      %v7328 = vadd.f32 %v7294, %v7310
      %v7329 = vadd.f32 %v7295, %v7310
      %v7330 = vadd.f32 %v7296, %v7310
      %v7331 = vadd.f32 %v7297, %v7310
      %v7332 = vadd.f32 %v7298, %v7310
      %v7333 = vadd.f32 %v7299, %v7310
      %v7334 = vadd.f32 %v7300, %v7310
      %v7335 = vadd.f32 %v7301, %v7310
      %v7336 = vadd.f32 %v7302, %v7310
      %v7337 = vadd.f32 %v7303, %v7310
      %v7338 = vadd.f32 %v7304, %v7310
      %v7339 = vadd.f32 %v7305, %v7310
      %v7340 = vadd.f32 %v7306, %v7310
      %v7341 = vadd.f32 %v7307, %v7310
      %v7342 = vmax.f32 %v7312, 0.0
      %v7343 = vmax.f32 %v7313, 0.0
      %v7344 = vmax.f32 %v7314, 0.0
      %v7345 = vmax.f32 %v7315, 0.0
      %v7346 = vmax.f32 %v7316, 0.0
      %v7347 = vmax.f32 %v7317, 0.0
      %v7348 = vmax.f32 %v7318, 0.0
      %v7349 = vmax.f32 %v7319, 0.0
      %v7350 = vmax.f32 %v7320, 0.0
      %v7351 = vmax.f32 %v7321, 0.0
      %v7352 = vmax.f32 %v7322, 0.0
      %v7353 = vmax.f32 %v7323, 0.0
      %v7354 = vmax.f32 %v7324, 0.0
      %v7355 = vmax.f32 %v7325, 0.0
      %v7356 = vmax.f32 %v7326, 0.0
      %v7357 = vmax.f32 %v7327, 0.0
      %v7358 = vmax.f32 %v7328, 0.0
      %v7359 = vmax.f32 %v7329, 0.0
      %v7360 = vmax.f32 %v7330, 0.0
      %v7361 = vmax.f32 %v7331, 0.0
      %v7362 = vmax.f32 %v7332, 0.0
      %v7363 = vmax.f32 %v7333, 0.0
      %v7364 = vmax.f32 %v7334, 0.0
      %v7365 = vmax.f32 %v7335, 0.0
      %v7366 = vmax.f32 %v7336, 0.0
      %v7367 = vmax.f32 %v7337, 0.0
      %v7368 = vmax.f32 %v7338, 0.0
      %v7369 = vmax.f32 %v7339, 0.0
      %v7370 = vmax.f32 %v7340, 0.0
      %v7371 = vmax.f32 %v7341, 0.0
      %v7372 = vld [vmem:[%s11] sm:$0xff]
      %v7373 = vld [vmem:[%s11 + $0x8] sm:$0xff]
      %v7374 = vld [vmem:[%s11 + $0x10] sm:$0xff]
      %v7375 = vld [vmem:[%s11 + $0x18] sm:$0xff]
      %vm7376 = vcmask 916480
      %v7378 = vsel %vm7376, %v7373, 0
      %v7381 = vsel %vm7376, %v7375, 0
      %7383 = vmatpush.msra.mxu0 %v7357
      %7384 = vmatpush.msra.mxu0 %v7356
      %7385 = vmatpush.msra.mxu0 %v7355
      %7386 = vmatpush.msra.mxu0 %v7354
      %7387 = vmatpush.msra.mxu0 %v7353
      %7388 = vmatpush.msra.mxu0 %v7352
      %7389 = vmatpush.msra.mxu0 %v7351
      %7390 = vmatpush.msra.mxu0 %v7350
      %7391 = vmatpush.msra.mxu0 %v7349
      %7392 = vmatpush.msra.mxu0 %v7348
      %7393 = vmatpush.msra.mxu0 %v7347
      %7394 = vmatpush.msra.mxu0 %v7346
      %7395 = vmatpush.msra.mxu0 %v7345
      %7396 = vmatpush.msra.mxu0 %v7344
      %7397 = vmatpush.msra.mxu0 %v7343
      %7398 = vmatpush.msra.mxu0 %v7342
      %7399 = vmatmul.f32.gmra.mxu0 %v7372
      %v7400 = vpop.f32.mrf.mxu0
      %v7401 = vadd.f32 0.0, %v7400
      %7402 = vmatmul.f32.gmra.mxu0 %v7374
      %v7403 = vpop.f32.mrf.mxu0
      %v7404 = vadd.f32 0.0, %v7403
      %7405 = vdwg.mxu0
      %7406 = vmatpush.msra.mxu0 0.0
      %7407 = vmatpush.msra.mxu0 0.0
      %7408 = vmatpush.msra.mxu0 %v7371
      %7409 = vmatpush.msra.mxu0 %v7370
      %7410 = vmatpush.msra.mxu0 %v7369
      %7411 = vmatpush.msra.mxu0 %v7368
      %7412 = vmatpush.msra.mxu0 %v7367
      %7413 = vmatpush.msra.mxu0 %v7366
      %7414 = vmatpush.msra.mxu0 %v7365
      %7415 = vmatpush.msra.mxu0 %v7364
      %7416 = vmatpush.msra.mxu0 %v7363
      %7417 = vmatpush.msra.mxu0 %v7362
      %7418 = vmatpush.msra.mxu0 %v7361
      %7419 = vmatpush.msra.mxu0 %v7360
      %7420 = vmatpush.msra.mxu0 %v7359
      %7421 = vmatpush.msra.mxu0 %v7358
      %7422 = vmatmul.f32.gmra.mxu0 %v7378
      %v7423 = vpop.f32.mrf.mxu0
      %v7424 = vadd.f32 %v7401, %v7423
      %7425 = vmatmul.f32.gmra.mxu0 %v7381
      %v7426 = vpop.f32.mrf.mxu0
      %v7427 = vadd.f32 %v7404, %v7426
      %7428 = vdwg.mxu0
      %v7429 = vld [vmem:[%s9] sm:$0xff]
      %v7430 = vld [vmem:[%s9 + $0x8] sm:$0xff]
      %v7431 = vld [vmem:[%s9 + $0x10] sm:$0xff]
      %v7432 = vld [vmem:[%s9 + $0x18] sm:$0xff]
      %v7433 = vld [vmem:[%s9 + $0x20] sm:$0xff]
      %v7434 = vld [vmem:[%s9 + $0x28] sm:$0xff]
      %v7435 = vld [vmem:[%s9 + $0x30] sm:$0xff]
      %v7436 = vld [vmem:[%s9 + $0x38] sm:$0xff]
      %v7437 = vld [vmem:[%s9 + $0x40] sm:$0xff]
      %v7438 = vld [vmem:[%s9 + $0x48] sm:$0xff]
      %v7439 = vld [vmem:[%s9 + $0x50] sm:$0xff]
      %v7440 = vld [vmem:[%s9 + $0x58] sm:$0xff]
      %v7441 = vld [vmem:[%s9 + $0x60] sm:$0xff]
      %v7442 = vld [vmem:[%s9 + $0x68] sm:$0xff]
      %v7443 = vld [vmem:[%s9 + $0x70] sm:$0xff]
      %v7444 = vld [vmem:[%s9 + $0x78] sm:$0xff]
      %v7445 = vld [vmem:[%s10] sm:$0x1]
      %v7447 = vperm.slane %v7445, 0
      %7449 = vmatpush.msra.mxu0 %v7444
      %7450 = vmatpush.msra.mxu0 %v7443
      %7451 = vmatpush.msra.mxu0 %v7442
      %7452 = vmatpush.msra.mxu0 %v7441
      %7453 = vmatpush.msra.mxu0 %v7440
      %7454 = vmatpush.msra.mxu0 %v7439
      %7455 = vmatpush.msra.mxu0 %v7438
      %7456 = vmatpush.msra.mxu0 %v7437
      %7457 = vmatpush.msra.mxu0 %v7436
      %7458 = vmatpush.msra.mxu0 %v7435
      %7459 = vmatpush.msra.mxu0 %v7434
      %7460 = vmatpush.msra.mxu0 %v7433
      %7461 = vmatpush.msra.mxu0 %v7432
      %7462 = vmatpush.msra.mxu0 %v7431
      %7463 = vmatpush.msra.mxu0 %v7430
      %7464 = vmatpush.msra.mxu0 %v7429
      %7465 = vmatmul.f32.gmra.mxu0 %v7424
      %v7466 = vpop.f32.mrf.mxu0
      %v7467 = vadd.f32 %v7447, %v7466
      %7468 = vmatmul.f32.gmra.mxu0 %v7427
      %v7469 = vpop.f32.mrf.mxu0
      %v7470 = vadd.f32 %v7447, %v7469
      %7471 = vdwg.mxu0
      %vm7472 = vcmask 64512
      %7473 = vst.msk [vmem:[%s418] sm:$0xff] %vm7472, %v7467
      %7474 = vst.msk [vmem:[%s418 + $0x8] sm:$0xff] %vm7472, %v7470
      %s7475 = smul.u32 2, %s23
      %p7476 = scmp.lt.s32.totalorder %s7475, 3
      %s7477 = scalar_select %p7476, %s7475, 3
      %s7478 = smul.addr %s7477, 8
      %s7479 = scalar_lea.vmem %s12, %s7478
      // Predicated region
      $region69: #{video_emotion_forward.1} parent=67 // pred_check
        %p7480 = pneg %p298
      $region70: #{video_emotion_forward.1} parent=67 // pred_check_branch
        %7482 = sbr.rel (%p7480) target = $region72
      $region71: #{video_emotion_forward.1} parent=67 // pred_region
        %s7483 = smul.u32 2, %s23
      $region72: #{video_emotion_forward.1} parent=67 // pred_fallthru
        _
    $region68: #{video_emotion_forward.1} parent=5 // pred_fallthru
      _
    %p7484 = scmp.le.s32.totalorder 2, %s18
    // Predicated region
    $region73: #{video_emotion_forward.1} parent=5 // pred_check
      %p7485 = pneg %p7484
    $region74: #{video_emotion_forward.1} parent=5 // pred_check_branch
      %7487 = sbr.rel (%p7485) target = $region76
    $region75: #{video_emotion_forward.1} parent=5 // pred_region
      %s7488 = ssub.s32 %s18, 2
      // Predicated region
      $region77: #{video_emotion_forward.1} parent=75 // pred_check
        %p7489 = pneg %p304
      $region78: #{video_emotion_forward.1} parent=75 // pred_check_branch
        %7491 = sbr.rel (%p7489) target = $region80
      $region79: #{video_emotion_forward.1} parent=75 // pred_region
        %s7492 = smul.u32 2, %s24
        %p7493 = scmp.lt.s32.totalorder %s7492, 3
        %s7494 = scalar_select %p7493, %s7492, 3
        %s7495 = smul.addr %s7494, 8
        %s7496 = scalar_lea.vmem %s12, %s7495
      $region80: #{video_emotion_forward.1} parent=75 // pred_fallthru
        _
    $region76: #{video_emotion_forward.1} parent=5 // pred_fallthru
      _
  $region6: #{video_emotion_forward.1} parent=0 // loop_footer
    %s22 = sadd.s32 1, %s18
  $region7: #{video_emotion_forward.1} parent=0 // loop_footer_branch
    %17 = sbr.rel target = $region3
  $region8: #{video_emotion_forward.1} parent=0 // loop_exit
    _

</llo_original>
